<compile_context>
chip_gen: v7x
topology: tpu7x:2x2x1
jax: 0.10.0
libtpu: 0.0.40
codegen_flags: <defaults>
</compile_context>

<pallas_src>
import functools
import math

import numpy as np
import jax
import jax.numpy as jnp
from jax import lax
from jax.experimental import pallas as pl
from jax.experimental.pallas import tpu as pltpu

# ----------------------------- configuration ------------------------------
BATCH        = 2
FRAMES       = 8            # args.frames
N_JOINTS_IN  = 17           # args.n_joints
N_JOINTS_OUT = 17           # args.out_joints
CHANNEL      = 32           # args.channel
D_HID        = 64           # args.d_hid
LAYERS       = 2            # args.layers
SEM_LAYERS   = 1            # args.sem_layers
STRIDE_NUM   = (2, 2)       # args.stride_num
SPATIAL_MASK_NUM = 2
LIMB1_NUM    = 3
LIMB2_NUM    = 6
NUM_HEADS    = 4
DH           = CHANNEL // NUM_HEADS
ATTN_SCALE   = 1.0 / math.sqrt(DH)
BN_EPS       = 1e-5
LN_EPS       = 1e-5
NEG_SLOPE    = 0.2

ENC_IN     = 2 * N_JOINTS_IN            # 34
ENC_HID    = 2 * CHANNEL                # 64
ENC_LANES  = 4 * ENC_HID                # 256  (block-diagonal encoder width)
NX         = 3 * N_JOINTS_OUT           # 51
NV         = 3 * (N_JOINTS_OUT - 1)     # 48
HEAD_LANES = 128                        # lane-dense merged head output
FRAMES_RED = FRAMES // int(np.prod(STRIDE_NUM))


# --------------------------- host-side slab packing -------------------------
class _Packer:
    """Packs named 2D f32 arrays into one contiguous (rows, lanes) slab.

    Each entry starts at a sublane offset that is a multiple of 8; lanes beyond
    the entry's width are zero so full-lane-width reads flow zeros through the
    matmuls (no in-kernel lane slicing needed for weights/biases)."""

    def __init__(self, lanes):
        self.lanes = lanes
        self.parts = []
        self.index = {}
        self.rows = 0

    def add(self, name, arr):
        arr = jnp.asarray(arr, jnp.float32)
        if arr.ndim == 1:
            arr = arr[None, :]
        r, c = arr.shape
        assert c <= self.lanes, (name, arr.shape)
        rp = ((r + 7) // 8) * 8
        buf = jnp.zeros((rp, self.lanes), jnp.float32).at[:r, :c].set(arr)
        self.index[name] = (self.rows, r, c)
        self.parts.append(buf)
        self.rows += rp

    def pack(self):
        return jnp.concatenate(self.parts, axis=0), dict(self.index)


def _block_diag(blocks):
    rows = sum(b.shape[0] for b in blocks)
    cols = sum(b.shape[1] for b in blocks)
    out = jnp.zeros((rows, cols), jnp.float32)
    r = c = 0
    for b in blocks:
        out = out.at[r:r + b.shape[0], c:c + b.shape[1]].set(b)
        r += b.shape[0]
        c += b.shape[1]
    return out


def prepare_slabs(params):
    """Call ONCE (amortized across inference calls): fold eval-mode BatchNorm +
    conv biases, build the block-diagonal encoder stack, merge the prediction
    heads, precompute attention-mask biases / pooling matrices and pack
    everything into two contiguous f32 slabs."""
    C = CHANNEL

    def fold_convbn(w, b, scale, shift):        # y = (x @ w + b) * scale + shift
        return w * scale[None, :], b * scale + shift

    # ---- four FCBlock encoders merged into block-diagonal weights ----------
    encs = [params['encoder1'], params['encoder2'],
            params['encoder3'], params['encoder4']]
    w1b, b1b, w2b, b2b = [], [], [], []
    blk = [{'wa': [], 'ba': [], 'wb': [], 'bb': []} for _ in range(SEM_LAYERS)]
    for ep in encs:
        w, b = fold_convbn(ep['fc1_w'], ep['fc1_b'], ep['bn1_scale'], ep['bn1_shift'])
        w1b.append(w)
        b1b.append(b)
        for bi, bp in enumerate(ep['blocks']):
            wa, ba = fold_convbn(bp['w1'], bp['b1'], bp['bn_a_scale'], bp['bn_a_shift'])
            wb, bb = fold_convbn(bp['w2'], bp['b2'], bp['bn_b_scale'], bp['bn_b_shift'])
            blk[bi]['wa'].append(wa)
            blk[bi]['ba'].append(ba)
            blk[bi]['wb'].append(wb)
            blk[bi]['bb'].append(bb)
        w2b.append(ep['fc2_w'])
        b2b.append(ep['fc2_b'])

    pa = _Packer(ENC_LANES)
    w1_bd = _block_diag(w1b)                                        # (136, 256)
    w1_bd = jnp.pad(w1_bd, ((0, ENC_LANES - w1_bd.shape[0]), (0, 0)))
    pa.add('w1', w1_bd)
    pa.add('b1', jnp.concatenate(b1b))
    for bi in range(SEM_LAYERS):
        pa.add(f'wa{bi}', _block_diag(blk[bi]['wa']))               # (256, 256)
        pa.add(f'ba{bi}', jnp.concatenate(blk[bi]['ba']))
        pa.add(f'wb{bi}', _block_diag(blk[bi]['wb']))
        pa.add(f'bb{bi}', jnp.concatenate(blk[bi]['bb']))
    pa.add('w2', _block_diag(w2b))                                  # (256, 128)
    pa.add('b2', jnp.concatenate(b2b))
    slab_a, idx_a = pa.pack()

    # ---- transformer / heads / constants in a 128-lane slab ----------------
    pb = _Packer(128)
    pb.add('pos', jnp.tile(params['transformer']['pos'][0], (BATCH, 1)))   # (16,32)

    def attn_bias(frames):
        m = BATCH * frames
        r = np.arange(m)[:, None] // frames
        c = np.arange(m)[None, :] // frames
        return jnp.asarray(np.where(r == c, 0.0, -1e30), jnp.float32)

    need = {FRAMES}
    fr = FRAMES
    for li, s in enumerate(STRIDE_NUM):
        need.add(fr)
        m_old, m_new = BATCH * fr, BATCH * (fr // s)
        rr = np.arange(m_new)[:, None]
        cc = np.arange(m_old)[None, :]
        pb.add(f'pool{li}',
               jnp.asarray(np.where(cc // s == rr, 1.0 / s, 0.0), jnp.float32))
        fr //= s
    for f in sorted(need):
        pb.add(f'amask{f}', attn_bias(f))

    def add_tlayer(prefix, lyr):
        bqkv = lyr['bqkv'].at[C:2 * C].set(0.0)     # key bias is softmax-invariant
        pb.add(prefix + 'wqkv', lyr['wqkv'])        # (32, 96)
        pb.add(prefix + 'bqkv', bqkv)
        pb.add(prefix + 'wo', lyr['wo'])            # (32, 32)
        pb.add(prefix + 'bo', lyr['bo'])
        pb.add(prefix + 'ln1', jnp.stack([lyr['ln1_g'], lyr['ln1_b']]))
        pb.add(prefix + 'w1', lyr['w1'])            # (32, 64)
        pb.add(prefix + 'b1', lyr['b1'])
        pb.add(prefix + 'w2', lyr['w2'])            # (64, 32)
        pb.add(prefix + 'b2', lyr['b2'])
        pb.add(prefix + 'ln2', jnp.stack([lyr['ln2_g'], lyr['ln2_b']]))

    for i, lyr in enumerate(params['transformer']['layers']):
        add_tlayer(f'tf{i}_', lyr)
    for i, lyr in enumerate(params['transformer_reduce']['layers']):
        add_tlayer(f'tr{i}_', lyr)

    def fold_head(hp):        # nn.Sequential(BatchNorm1d(C), Conv1d(C,out,1))
        return (hp['bn_scale'][:, None] * hp['w'],
                hp['bn_shift'] @ hp['w'] + hp['b'])

    wx1, bx1 = fold_head(params['fcn_1'])
    wv1, bv1 = fold_head(params['fcn_vec1'])
    wx0, bx0 = fold_head(params['fcn'])
    wv0, bv0 = fold_head(params['fcn_vec'])
    pb.add('head_vte_w', jnp.concatenate([wx1, wv1], axis=1))       # (32, 99)
    pb.add('head_vte_b', jnp.concatenate([bx1, bv1]))
    pb.add('head_red_w', jnp.concatenate([wx0, wv0], axis=1))
    pb.add('head_red_b', jnp.concatenate([bx0, bv0]))
    slab_b, idx_b = pb.pack()
    return slab_a, idx_a, slab_b, idx_b


# --------------------------- in-kernel helpers ------------------------------
def _slab_get(ref, idx, name, trim=False):
    off, r, c = idx[name]
    v = ref[off:off + r, :]            # static 8-aligned sublane window
    return v[:, :c] if trim else v     # full lane width: padded zeros flow


def _mm(a, b):
    return jnp.dot(a, b, preferred_element_type=jnp.float32)


def _leaky(x):
    return jnp.where(x >= 0, x, NEG_SLOPE * x)


def _layer_norm(x, g, b):
    mu = jnp.mean(x, axis=-1, keepdims=True)
    var = jnp.mean((x - mu) ** 2, axis=-1, keepdims=True)
    return (x - mu) * lax.rsqrt(var + LN_EPS) * g + b


def _attention(x, gb, prefix, bias):
    """MHSA on a flat (batch*frames, CHANNEL) slab.

    One fused QKV matmul; a per-head score/PV loop; head outputs are lane-
    concatenated and folded through the original Wo in a single matmul.  The
    block-diagonal batch mask is an additive 0/-1e30 bias applied after the
    1/sqrt(dh) scale."""
    qkv = _mm(x, gb(prefix + 'wqkv')) + gb(prefix + 'bqkv')          # (m, 128)
    heads = []
    for h in range(NUM_HEADS):
        q = qkv[:, h * DH:(h + 1) * DH]
        k = qkv[:, CHANNEL + h * DH:CHANNEL + (h + 1) * DH]
        v = qkv[:, 2 * CHANNEL + h * DH:2 * CHANNEL + (h + 1) * DH]
        s = lax.dot_general(q, k, (((1,), (1,)), ((), ())),
                            preferred_element_type=jnp.float32) * ATTN_SCALE
        s = s + bias
        s = s - jnp.max(s, axis=-1, keepdims=True)
        e = jnp.exp(s)
        p = e * pl.reciprocal(jnp.sum(e, axis=-1, keepdims=True), approx=True)
        heads.append(_mm(p, v))                                      # (m, 8)
    o_cat = jnp.concatenate(heads, axis=-1)                          # (m, 32)
    out = _mm(o_cat, gb(prefix + 'wo')) + gb(prefix + 'bo')          # (m, 128)
    return out[:, :CHANNEL]


def _ffn_ln(x, gb, prefix):
    """Post-norm ReLU FFN + LayerNorm (residual included)."""
    f1 = jnp.maximum(_mm(x, gb(prefix + 'w1')) + gb(prefix + 'b1'), 0.0)  # (m,128)
    f2 = _mm(f1[:, :D_HID], gb(prefix + 'w2')) + gb(prefix + 'b2')        # (m,128)
    ln2 = gb(prefix + 'ln2', trim=True)                                   # (2, 32)
    return _layer_norm(x + f2[:, :CHANNEL], ln2[0:1], ln2[1:2])


# -------------------------- the single fused kernel --------------------------
def _model_kernel(idx_a, idx_b, enc_x_ref, slab_a_ref, slab_b_ref,
                  o_vte_ref, o_red_ref):
    ga = functools.partial(_slab_get, slab_a_ref, idx_a)
    gb = functools.partial(_slab_get, slab_b_ref, idx_b)
    C = CHANNEL

    # ---- four masked FCBlock encoders as one block-diagonal 256-wide stack --
    h = _leaky(_mm(enc_x_ref[...], ga('w1')) + ga('b1'))              # (16, 256)
    for bi in range(SEM_LAYERS):
        y = _leaky(_mm(h, ga(f'wa{bi}')) + ga(f'ba{bi}'))
        y = _leaky(_mm(y, ga(f'wb{bi}')) + ga(f'bb{bi}'))
        h = h + y
    e = _mm(h, ga('w2')) + ga('b2')                                   # (16, 256)
    x = e[:, 0:C] * e[:, C:2 * C] * e[:, 2 * C:3 * C] * e[:, 3 * C:4 * C]

    # ---- temporal transformer (full-length / VTE branch) --------------------
    # TODO(synk): Transformer / Transformer_reduce sources were not provided; a
    # standard post-norm encoder (+ strided mean-pool reduce) is assumed,
    # matching the in-script plain-JAX reference.
    x = x + gb('pos', trim=True)
    for i in range(LAYERS):
        p = f'tf{i}_'
        a = _attention(x, gb, p, gb(f'amask{FRAMES}', trim=True))
        ln1 = gb(p + 'ln1', trim=True)
        x = _layer_norm(x + a, ln1[0:1], ln1[1:2])
        x = _ffn_ln(x, gb, p)
    x_vte = x                                                         # (16, 32)

    # merged (fcn_1 | fcn_vec1) head: one lane-dense 128-wide store
    o_vte_ref[...] = _mm(x_vte, gb('head_vte_w')) + gb('head_vte_b')

    # ---- strided-reduce transformer ------------------------------------------
    xr = x_vte
    fr = FRAMES
    for li in range(len(STRIDE_NUM)):
        p = f'tr{li}_'
        a = _attention(xr, gb, p, gb(f'amask{fr}', trim=True))
        ln1 = gb(p + 'ln1', trim=True)
        xr = _layer_norm(xr + a, ln1[0:1], ln1[1:2])
        xr = _mm(gb(f'pool{li}', trim=True), xr)      # strided temporal mean-pool
        fr //= STRIDE_NUM[li]
        xr = _ffn_ln(xr, gb, p)

    # merged (fcn | fcn_vec) head
    o_red_ref[...] = _mm(xr, gb('head_red_w')) + gb('head_red_b')


# ------------------------------- model wrapper -------------------------------
def make_forward_fn(idx_a, idx_b):
    kern = functools.partial(_model_kernel, idx_a, idx_b)
    M = BATCH * FRAMES
    MR = BATCH * FRAMES_RED

    def forward(slab_a, slab_b, tokens, x_in, spatial_mask, bone_mask,
                limb_mask1, limb_mask2):
        # "mask" argument of the reference forward is unused there; dropped here.
        B, F, J, Jo = BATCH, FRAMES, N_JOINTS_IN, N_JOINTS_OUT
        # x_in: (B, 2, F, J, 1) -> channels-last (B, F, J, 2)   [permute(0,2,3,1)]
        x = x_in[:, :, :, :, 0].transpose(0, 2, 3, 1)
        masks = jnp.stack([spatial_mask, bone_mask, limb_mask1, limb_mask2])
        tok = tokens.reshape(4, 1, 1, 1, 2)
        x4 = jnp.where(masks[:, None, :, :, None], tok, x[None])      # (4,B,F,J,2)
        # lane-concatenate the four masked copies: (M, 4*34) padded to (M, 256)
        x4 = x4.reshape(4, B * F, 2 * J).transpose(1, 0, 2).reshape(B * F, 4 * 2 * J)
        enc_x = jnp.pad(x4, ((0, 0), (0, ENC_LANES - 4 * 2 * J))).astype(jnp.float32)

        o_vte, o_red = pl.pallas_call(
            kern,
            out_shape=(jax.ShapeDtypeStruct((M, HEAD_LANES), jnp.float32),
                       jax.ShapeDtypeStruct((MR, HEAD_LANES), jnp.float32)),
            compiler_params=pltpu.CompilerParams(
                vmem_limit_bytes=32 * 1024 * 1024),
        )(enc_x, slab_a, slab_b)

        def split(o, frames):
            xp = o[:, :NX].reshape(B, frames, Jo, 3).transpose(0, 3, 1, 2)[..., None]
            bp = o[:, NX:NX + NV].reshape(B, frames, Jo - 1, 3)
            bp = bp.transpose(0, 3, 1, 2)[..., None]
            return xp, bp

        x_vte, bone_vte = split(o_vte, F)
        x_red, bone_red = split(o_red, FRAMES_RED)
        return x_red, x_vte, bone_red, bone_vte

    return forward


# ----------------------- plain-JAX reference (cross-check) -------------------
def _ref_linear(x, w, b, scale=None, shift=None, neg_slope=1.0):
    y = x @ w + b
    if scale is not None:
        y = y * scale + shift
    if neg_slope != 1.0:
        y = jnp.where(y >= 0, y, neg_slope * y)
    return y


def _ref_fcblock(p, x):
    h = _ref_linear(x, p['fc1_w'], p['fc1_b'], p['bn1_scale'], p['bn1_shift'], 0.2)
    for blk in p['blocks']:
        y = _ref_linear(h, blk['w1'], blk['b1'], blk['bn_a_scale'], blk['bn_a_shift'], 0.2)
        y = _ref_linear(y, blk['w2'], blk['b2'], blk['bn_b_scale'], blk['bn_b_shift'], 0.2)
        h = h + y
    return _ref_linear(h, p['fc2_w'], p['fc2_b'])


def _ref_layer_norm(x, g, b, eps=LN_EPS):
    mu = jnp.mean(x, -1, keepdims=True)
    var = jnp.mean((x - mu) ** 2, -1, keepdims=True)
    return (x - mu) / jnp.sqrt(var + eps) * g + b


def _ref_mhsa(lyr, x):
    B, F, C = x.shape
    H, Dh = NUM_HEADS, C // NUM_HEADS
    qkv = (x.reshape(B * F, C) @ lyr['wqkv'] + lyr['bqkv']).reshape(B, F, 3, H, Dh)
    q = qkv[:, :, 0].transpose(0, 2, 1, 3)
    k = qkv[:, :, 1].transpose(0, 2, 1, 3)
    v = qkv[:, :, 2].transpose(0, 2, 1, 3)
    s = jnp.einsum('bhqd,bhkd->bhqk', q, k) / math.sqrt(Dh)
    p_attn = jax.nn.softmax(s, axis=-1)
    o = jnp.einsum('bhqk,bhkd->bhqd', p_attn, v)
    o = o.transpose(0, 2, 1, 3).reshape(B * F, C)
    return (o @ lyr['wo'] + lyr['bo']).reshape(B, F, C)


def _ref_transformer(p, x):
    B, F, C = x.shape
    x = x + p['pos'][:, :F]
    for lyr in p['layers']:
        a = _ref_mhsa(lyr, x)
        x = _ref_layer_norm(x + a, lyr['ln1_g'], lyr['ln1_b'])
        f1 = jnp.maximum(x.reshape(B * F, C) @ lyr['w1'] + lyr['b1'], 0.0)
        f2 = f1 @ lyr['w2'] + lyr['b2']
        x = _ref_layer_norm(x + f2.reshape(B, F, C), lyr['ln2_g'], lyr['ln2_b'])
    return x


def _ref_transformer_reduce(p, x):
    B, F, C = x.shape
    for lyr, s in zip(p['layers'], STRIDE_NUM):
        a = _ref_mhsa(lyr, x)
        x = _ref_layer_norm(x + a, lyr['ln1_g'], lyr['ln1_b'])
        F = F // s
        x = x.reshape(B, F, s, C).mean(axis=2)
        f1 = jnp.maximum(x.reshape(B * F, C) @ lyr['w1'] + lyr['b1'], 0.0)
        f2 = f1 @ lyr['w2'] + lyr['b2']
        x = _ref_layer_norm(x + f2.reshape(B, F, C), lyr['ln2_g'], lyr['ln2_b'])
    return x


def _ref_head(p, x):
    B, F, C = x.shape
    w_eff = p['bn_scale'][:, None] * p['w']
    b_eff = p['bn_shift'] @ p['w'] + p['b']
    return (x.reshape(B * F, C) @ w_eff + b_eff).reshape(B, F, -1)


def reference_forward(params, x_in, spatial_mask, bone_mask, limb_mask1, limb_mask2):
    x = x_in[:, :, :, :, 0].transpose(0, 2, 3, 1)
    B, F, J, _ = x.shape
    Jo = N_JOINTS_OUT

    def mask_it(mask, token):
        return jnp.where(mask[None, :, :, None], token.reshape(1, 1, 1, 2), x)

    xs = [mask_it(spatial_mask, params['spatial_mask_token']),
          mask_it(bone_mask, params['bone_mask_token']),
          mask_it(limb_mask1, params['limb_mask1_token']),
          mask_it(limb_mask2, params['limb_mask2_token'])]
    encs = [params['encoder1'], params['encoder2'],
            params['encoder3'], params['encoder4']]
    es = [_ref_fcblock(p, xm.reshape(B * F, 2 * J)).reshape(B, F, CHANNEL)
          for p, xm in zip(encs, xs)]
    xprod = es[0] * es[1] * es[2] * es[3]
    xt = _ref_transformer(params['transformer'], xprod)
    bv_vte = _ref_head(params['fcn_vec1'], xt).reshape(B, F, Jo - 1, 3)
    bv_vte = bv_vte.transpose(0, 3, 1, 2)[..., None]
    xv = _ref_head(params['fcn_1'], xt).reshape(B, F, Jo, 3)
    xv = xv.transpose(0, 3, 1, 2)[..., None]
    xr = _ref_transformer_reduce(params['transformer_reduce'], xt)
    Fr = xr.shape[1]
    bv = _ref_head(params['fcn_vec'], xr).reshape(B, Fr, Jo - 1, 3)
    bv = bv.transpose(0, 3, 1, 2)[..., None]
    xo = _ref_head(params['fcn'], xr).reshape(B, Fr, Jo, 3)
    xo = xo.transpose(0, 3, 1, 2)[..., None]
    return xo, xv, bv, bv_vte


# ---------------------------- parameter builders ----------------------------
def build_params(key):
    counter = [0]

    def randn(shape, scale=0.05):
        counter[0] += 1
        k = jax.random.fold_in(key, counter[0])
        return jax.random.normal(k, shape, jnp.float32) * scale

    def init_bn(n):
        gamma = 1.0 + randn((n,), 0.01)
        beta = randn((n,), 0.01)
        scale = gamma / jnp.sqrt(1.0 + BN_EPS)   # running_var=1, mean=0 (eval)
        return scale, beta

    def init_fcblock(cin, cout, lin, nblk):
        bn1_s, bn1_b = init_bn(lin)
        blocks = []
        for _ in range(nblk):
            a_s, a_b = init_bn(lin)
            b_s, b_b = init_bn(lin)
            blocks.append({'w1': randn((lin, lin)), 'b1': randn((lin,)),
                           'bn_a_scale': a_s, 'bn_a_shift': a_b,
                           'w2': randn((lin, lin)), 'b2': randn((lin,)),
                           'bn_b_scale': b_s, 'bn_b_shift': b_b})
        return {'fc1_w': randn((cin, lin)), 'fc1_b': randn((lin,)),
                'bn1_scale': bn1_s, 'bn1_shift': bn1_b,
                'blocks': blocks,
                'fc2_w': randn((lin, cout)), 'fc2_b': randn((cout,))}

    def init_tlayer(C, dh):
        return {'wqkv': randn((C, 3 * C)), 'bqkv': jnp.zeros((3 * C,)),
                'wo': randn((C, C)), 'bo': jnp.zeros((C,)),
                'ln1_g': jnp.ones((C,)), 'ln1_b': jnp.zeros((C,)),
                'w1': randn((C, dh)), 'b1': jnp.zeros((dh,)),
                'w2': randn((dh, C)), 'b2': jnp.zeros((C,)),
                'ln2_g': jnp.ones((C,)), 'ln2_b': jnp.zeros((C,))}

    def init_head(C, out):
        s, b = init_bn(C)
        return {'bn_scale': s, 'bn_shift': b,
                'w': randn((C, out)), 'b': randn((out,))}

    C, J = CHANNEL, N_JOINTS_IN
    return {
        'spatial_mask_token': randn((1, 1, 2), 1.0),
        'bone_mask_token': randn((1, 1, 2), 1.0),
        'limb_mask1_token': randn((1, 1, 2), 1.0),
        'limb_mask2_token': randn((1, 1, 2), 1.0),
        'encoder1': init_fcblock(2 * J, C, 2 * C, SEM_LAYERS),
        'encoder2': init_fcblock(2 * J, C, 2 * C, SEM_LAYERS),
        'encoder3': init_fcblock(2 * J, C, 2 * C, SEM_LAYERS),
        'encoder4': init_fcblock(2 * J, C, 2 * C, SEM_LAYERS),
        'transformer': {'pos': randn((1, FRAMES, C)),
                        'layers': [init_tlayer(C, D_HID) for _ in range(LAYERS)]},
        'transformer_reduce': {'layers': [init_tlayer(C, D_HID)
                                          for _ in range(len(STRIDE_NUM))]},
        'fcn': init_head(C, 3 * N_JOINTS_OUT),
        'fcn_1': init_head(C, 3 * N_JOINTS_OUT),
        'fcn_vec': init_head(C, 3 * (N_JOINTS_OUT - 1)),
        'fcn_vec1': init_head(C, 3 * (N_JOINTS_OUT - 1)),
    }


def make_mask(F, J, num_per_frame, offset):
    m = np.zeros((F, J), dtype=bool)
    for t in range(F):
        for k in range(num_per_frame):
            m[t, (offset + 2 * t + k) % J] = True
    return jnp.asarray(m)


# ---------------------------------- main ------------------------------------
if __name__ == "__main__":
    key = jax.random.PRNGKey(0)
    pkey, xkey = jax.random.split(key)
    params = build_params(pkey)

    x_in = jax.random.normal(
        xkey, (BATCH, 2, FRAMES, N_JOINTS_IN, 1), jnp.float32)

    spatial_mask = make_mask(FRAMES, N_JOINTS_IN, SPATIAL_MASK_NUM, 0)
    bone_mask = make_mask(FRAMES, N_JOINTS_IN, 1, 3)
    limb_mask1 = make_mask(FRAMES, N_JOINTS_IN, LIMB1_NUM, 5)
    limb_mask2 = make_mask(FRAMES, N_JOINTS_IN, LIMB2_NUM, 7)

    # fold / pack the weights ONCE (amortized across inference calls)
    slab_a, idx_a, slab_b, idx_b = prepare_slabs(params)
    slab_a, slab_b = jax.block_until_ready((slab_a, slab_b))
    tokens = jnp.concatenate([params['spatial_mask_token'].reshape(1, 2),
                              params['bone_mask_token'].reshape(1, 2),
                              params['limb_mask1_token'].reshape(1, 2),
                              params['limb_mask2_token'].reshape(1, 2)], axis=0)

    fwd = jax.jit(make_forward_fn(idx_a, idx_b))
    outs = jax.block_until_ready(
        fwd(slab_a, slab_b, tokens, x_in, spatial_mask, bone_mask,
            limb_mask1, limb_mask2))
    x, x_vte, bone_vec, bone_vec_vte = outs

    assert x.shape == (BATCH, 3, FRAMES_RED, N_JOINTS_OUT, 1)
    assert x_vte.shape == (BATCH, 3, FRAMES, N_JOINTS_OUT, 1)
    assert bone_vec.shape == (BATCH, 3, FRAMES_RED, N_JOINTS_OUT - 1, 1)
    assert bone_vec_vte.shape == (BATCH, 3, FRAMES, N_JOINTS_OUT - 1, 1)
    assert all(bool(jnp.all(jnp.isfinite(t))) for t in outs)

    # cross-check the fused Pallas kernel against a plain-JAX reference.
    # (kernel drops the softmax-invariant key bias and uses the approximate EUP
    #  reciprocal in the softmax, so agreement is near- but not bit-identical)
    ref_outs = jax.block_until_ready(
        jax.jit(reference_forward)(params, x_in, spatial_mask, bone_mask,
                                   limb_mask1, limb_mask2))
    for got, want in zip(outs, ref_outs):
        assert got.shape == want.shape
        assert float(jnp.max(jnp.abs(got - want))) < 5e-3

    print("KERNEL_OK")
</pallas_src>

<mosaic_0001>
module attributes {stable_mosaic.version = 11 : i64} {
  func.func @_model_kernel(%arg0: memref<16x256xf32, #tpu.memory_space<vmem>>, %arg1: memref<1056x256xf32, #tpu.memory_space<vmem>>, %arg2: memref<968x128xf32, #tpu.memory_space<vmem>>, %arg3: memref<16x128xf32, #tpu.memory_space<vmem>>, %arg4: memref<4x128xf32, #tpu.memory_space<vmem>>) attributes {dimension_semantics = [], scalar_prefetch = 0 : i64, scratch_operands = 0 : i64, tpu.core_type = #tpu.core_type<tc>} {
    %c0 = arith.constant 0 : index
    %c0_0 = arith.constant 0 : index
    %0 = vector.load %arg0[%c0, %c0_0] : memref<16x256xf32, #tpu.memory_space<vmem>>, vector<16x256xf32>
    %c0_1 = arith.constant 0 : index
    %c0_2 = arith.constant 0 : index
    %1 = vector.load %arg1[%c0_1, %c0_2] : memref<1056x256xf32, #tpu.memory_space<vmem>>, vector<256x256xf32>
    %cst = arith.constant dense<0.000000e+00> : vector<16x256xf32>
    %2 = tpu.matmul %0, %1, %cst {dimension_numbers = #tpu.dot_dimension_numbers<[1], [0], [0], [1], [0, 0, 1, 1], [], []>} : vector<16x256xf32>, vector<256x256xf32>, vector<16x256xf32> -> vector<16x256xf32>
    %c256 = arith.constant 256 : index
    %c0_3 = arith.constant 0 : index
    %3 = vector.load %arg1[%c256, %c0_3] : memref<1056x256xf32, #tpu.memory_space<vmem>>, vector<1x256xf32>
    %4 = vector.broadcast %3 : vector<1x256xf32> to vector<16x256xf32>
    %5 = arith.addf %2, %4 : vector<16x256xf32>
    %cst_4 = arith.constant 0.000000e+00 : f32
    %6 = vector.broadcast %cst_4 : f32 to vector<16x256xf32>
    %7 = arith.cmpf oge, %5, %6 : vector<16x256xf32>
    %cst_5 = arith.constant 2.000000e-01 : f32
    %8 = vector.broadcast %cst_5 : f32 to vector<16x256xf32>
    %9 = arith.mulf %8, %5 : vector<16x256xf32>
    %10 = arith.select %7, %5, %9 : vector<16x256xi1>, vector<16x256xf32>
    %c264 = arith.constant 264 : index
    %c0_6 = arith.constant 0 : index
    %11 = vector.load %arg1[%c264, %c0_6] : memref<1056x256xf32, #tpu.memory_space<vmem>>, vector<256x256xf32>
    %cst_7 = arith.constant dense<0.000000e+00> : vector<16x256xf32>
    %12 = tpu.matmul %10, %11, %cst_7 {dimension_numbers = #tpu.dot_dimension_numbers<[1], [0], [0], [1], [0, 0, 1, 1], [], []>} : vector<16x256xf32>, vector<256x256xf32>, vector<16x256xf32> -> vector<16x256xf32>
    %c520 = arith.constant 520 : index
    %c0_8 = arith.constant 0 : index
    %13 = vector.load %arg1[%c520, %c0_8] : memref<1056x256xf32, #tpu.memory_space<vmem>>, vector<1x256xf32>
    %14 = vector.broadcast %13 : vector<1x256xf32> to vector<16x256xf32>
    %15 = arith.addf %12, %14 : vector<16x256xf32>
    %cst_9 = arith.constant 0.000000e+00 : f32
    %16 = vector.broadcast %cst_9 : f32 to vector<16x256xf32>
    %17 = arith.cmpf oge, %15, %16 : vector<16x256xf32>
    %cst_10 = arith.constant 2.000000e-01 : f32
    %18 = vector.broadcast %cst_10 : f32 to vector<16x256xf32>
    %19 = arith.mulf %18, %15 : vector<16x256xf32>
    %20 = arith.select %17, %15, %19 : vector<16x256xi1>, vector<16x256xf32>
    %c528 = arith.constant 528 : index
    %c0_11 = arith.constant 0 : index
    %21 = vector.load %arg1[%c528, %c0_11] : memref<1056x256xf32, #tpu.memory_space<vmem>>, vector<256x256xf32>
    %cst_12 = arith.constant dense<0.000000e+00> : vector<16x256xf32>
    %22 = tpu.matmul %20, %21, %cst_12 {dimension_numbers = #tpu.dot_dimension_numbers<[1], [0], [0], [1], [0, 0, 1, 1], [], []>} : vector<16x256xf32>, vector<256x256xf32>, vector<16x256xf32> -> vector<16x256xf32>
    %c784 = arith.constant 784 : index
    %c0_13 = arith.constant 0 : index
    %23 = vector.load %arg1[%c784, %c0_13] : memref<1056x256xf32, #tpu.memory_space<vmem>>, vector<1x256xf32>
    %24 = vector.broadcast %23 : vector<1x256xf32> to vector<16x256xf32>
    %25 = arith.addf %22, %24 : vector<16x256xf32>
    %cst_14 = arith.constant 0.000000e+00 : f32
    %26 = vector.broadcast %cst_14 : f32 to vector<16x256xf32>
    %27 = arith.cmpf oge, %25, %26 : vector<16x256xf32>
    %cst_15 = arith.constant 2.000000e-01 : f32
    %28 = vector.broadcast %cst_15 : f32 to vector<16x256xf32>
    %29 = arith.mulf %28, %25 : vector<16x256xf32>
    %30 = arith.select %27, %25, %29 : vector<16x256xi1>, vector<16x256xf32>
    %31 = arith.addf %10, %30 : vector<16x256xf32>
    %c792 = arith.constant 792 : index
    %c0_16 = arith.constant 0 : index
    %32 = vector.load %arg1[%c792, %c0_16] : memref<1056x256xf32, #tpu.memory_space<vmem>>, vector<256x256xf32>
    %cst_17 = arith.constant dense<0.000000e+00> : vector<16x256xf32>
    %33 = tpu.matmul %31, %32, %cst_17 {dimension_numbers = #tpu.dot_dimension_numbers<[1], [0], [0], [1], [0, 0, 1, 1], [], []>} : vector<16x256xf32>, vector<256x256xf32>, vector<16x256xf32> -> vector<16x256xf32>
    %c1048 = arith.constant 1048 : index
    %c0_18 = arith.constant 0 : index
    %34 = vector.load %arg1[%c1048, %c0_18] : memref<1056x256xf32, #tpu.memory_space<vmem>>, vector<1x256xf32>
    %35 = vector.broadcast %34 : vector<1x256xf32> to vector<16x256xf32>
    %36 = arith.addf %33, %35 : vector<16x256xf32>
    %37 = vector.extract_strided_slice %36 {offsets = [0, 0], sizes = [16, 32], strides = [1, 1]} : vector<16x256xf32> to vector<16x32xf32>
    %38 = vector.extract_strided_slice %36 {offsets = [0, 32], sizes = [16, 32], strides = [1, 1]} : vector<16x256xf32> to vector<16x32xf32>
    %39 = arith.mulf %37, %38 : vector<16x32xf32>
    %40 = vector.extract_strided_slice %36 {offsets = [0, 64], sizes = [16, 32], strides = [1, 1]} : vector<16x256xf32> to vector<16x32xf32>
    %41 = arith.mulf %39, %40 : vector<16x32xf32>
    %42 = vector.extract_strided_slice %36 {offsets = [0, 96], sizes = [16, 32], strides = [1, 1]} : vector<16x256xf32> to vector<16x32xf32>
    %43 = arith.mulf %41, %42 : vector<16x32xf32>
    %c0_19 = arith.constant 0 : index
    %c0_20 = arith.constant 0 : index
    %44 = vector.load %arg2[%c0_19, %c0_20] : memref<968x128xf32, #tpu.memory_space<vmem>>, vector<16x128xf32>
    %45 = vector.extract_strided_slice %44 {offsets = [0, 0], sizes = [16, 32], strides = [1, 1]} : vector<16x128xf32> to vector<16x32xf32>
    %46 = arith.addf %43, %45 : vector<16x32xf32>
    %c40 = arith.constant 40 : index
    %c0_21 = arith.constant 0 : index
    %47 = vector.load %arg2[%c40, %c0_21] : memref<968x128xf32, #tpu.memory_space<vmem>>, vector<16x128xf32>
    %48 = vector.extract_strided_slice %47 {offsets = [0, 0], sizes = [16, 16], strides = [1, 1]} : vector<16x128xf32> to vector<16x16xf32>
    %c56 = arith.constant 56 : index
    %c0_22 = arith.constant 0 : index
    %49 = vector.load %arg2[%c56, %c0_22] : memref<968x128xf32, #tpu.memory_space<vmem>>, vector<32x128xf32>
    %cst_23 = arith.constant dense<0.000000e+00> : vector<16x128xf32>
    %50 = tpu.matmul %46, %49, %cst_23 {dimension_numbers = #tpu.dot_dimension_numbers<[1], [0], [0], [1], [0, 0, 1, 1], [], []>} : vector<16x32xf32>, vector<32x128xf32>, vector<16x128xf32> -> vector<16x128xf32>
    %c88 = arith.constant 88 : index
    %c0_24 = arith.constant 0 : index
    %51 = vector.load %arg2[%c88, %c0_24] : memref<968x128xf32, #tpu.memory_space<vmem>>, vector<1x128xf32>
    %52 = vector.broadcast %51 : vector<1x128xf32> to vector<16x128xf32>
    %53 = arith.addf %50, %52 : vector<16x128xf32>
    %54 = vector.extract_strided_slice %53 {offsets = [0, 0], sizes = [16, 8], strides = [1, 1]} : vector<16x128xf32> to vector<16x8xf32>
    %55 = vector.extract_strided_slice %53 {offsets = [0, 32], sizes = [16, 8], strides = [1, 1]} : vector<16x128xf32> to vector<16x8xf32>
    %56 = vector.extract_strided_slice %53 {offsets = [0, 64], sizes = [16, 8], strides = [1, 1]} : vector<16x128xf32> to vector<16x8xf32>
    %cst_25 = arith.constant dense<0.000000e+00> : vector<16x16xf32>
    %57 = tpu.matmul %54, %55, %cst_25 {dimension_numbers = #tpu.dot_dimension_numbers<[1], [1], [0], [0], [0, 0, 1, 0], [], []>} : vector<16x8xf32>, vector<16x8xf32>, vector<16x16xf32> -> vector<16x16xf32>
    %cst_26 = arith.constant 0.353553385 : f32
    %58 = vector.broadcast %cst_26 : f32 to vector<16x16xf32>
    %59 = arith.mulf %57, %58 : vector<16x16xf32>
    %60 = arith.addf %59, %48 : vector<16x16xf32>
    %cst_27 = arith.constant dense<0xFF800000> : vector<16xf32>
    %61 = vector.multi_reduction <maximumf>, %60, %cst_27 [1] : vector<16x16xf32> to vector<16xf32>
    %62 = vector.shape_cast %61 : vector<16xf32> to vector<16x1xf32>
    %63 = vector.broadcast %62 : vector<16x1xf32> to vector<16x16xf32>
    %64 = arith.subf %60, %63 : vector<16x16xf32>
    %65 = math.exp %64 : vector<16x16xf32>
    %cst_28 = arith.constant dense<0.000000e+00> : vector<16xf32>
    %66 = vector.multi_reduction <add>, %65, %cst_28 [1] : vector<16x16xf32> to vector<16xf32>
    %67 = vector.shape_cast %66 : vector<16xf32> to vector<16x1xf32>
    %68 = tpu.reciprocal %67 {approx = true} : vector<16x1xf32> -> vector<16x1xf32>
    %69 = vector.broadcast %68 : vector<16x1xf32> to vector<16x16xf32>
    %70 = arith.mulf %65, %69 : vector<16x16xf32>
    %cst_29 = arith.constant dense<0.000000e+00> : vector<16x8xf32>
    %71 = tpu.matmul %70, %56, %cst_29 {dimension_numbers = #tpu.dot_dimension_numbers<[1], [0], [0], [1], [0, 0, 1, 1], [], []>} : vector<16x16xf32>, vector<16x8xf32>, vector<16x8xf32> -> vector<16x8xf32>
    %72 = vector.extract_strided_slice %53 {offsets = [0, 8], sizes = [16, 8], strides = [1, 1]} : vector<16x128xf32> to vector<16x8xf32>
    %73 = vector.extract_strided_slice %53 {offsets = [0, 40], sizes = [16, 8], strides = [1, 1]} : vector<16x128xf32> to vector<16x8xf32>
    %74 = vector.extract_strided_slice %53 {offsets = [0, 72], sizes = [16, 8], strides = [1, 1]} : vector<16x128xf32> to vector<16x8xf32>
    %cst_30 = arith.constant dense<0.000000e+00> : vector<16x16xf32>
    %75 = tpu.matmul %72, %73, %cst_30 {dimension_numbers = #tpu.dot_dimension_numbers<[1], [1], [0], [0], [0, 0, 1, 0], [], []>} : vector<16x8xf32>, vector<16x8xf32>, vector<16x16xf32> -> vector<16x16xf32>
    %cst_31 = arith.constant 0.353553385 : f32
    %76 = vector.broadcast %cst_31 : f32 to vector<16x16xf32>
    %77 = arith.mulf %75, %76 : vector<16x16xf32>
    %78 = arith.addf %77, %48 : vector<16x16xf32>
    %cst_32 = arith.constant dense<0xFF800000> : vector<16xf32>
    %79 = vector.multi_reduction <maximumf>, %78, %cst_32 [1] : vector<16x16xf32> to vector<16xf32>
    %80 = vector.shape_cast %79 : vector<16xf32> to vector<16x1xf32>
    %81 = vector.broadcast %80 : vector<16x1xf32> to vector<16x16xf32>
    %82 = arith.subf %78, %81 : vector<16x16xf32>
    %83 = math.exp %82 : vector<16x16xf32>
    %cst_33 = arith.constant dense<0.000000e+00> : vector<16xf32>
    %84 = vector.multi_reduction <add>, %83, %cst_33 [1] : vector<16x16xf32> to vector<16xf32>
    %85 = vector.shape_cast %84 : vector<16xf32> to vector<16x1xf32>
    %86 = tpu.reciprocal %85 {approx = true} : vector<16x1xf32> -> vector<16x1xf32>
    %87 = vector.broadcast %86 : vector<16x1xf32> to vector<16x16xf32>
    %88 = arith.mulf %83, %87 : vector<16x16xf32>
    %cst_34 = arith.constant dense<0.000000e+00> : vector<16x8xf32>
    %89 = tpu.matmul %88, %74, %cst_34 {dimension_numbers = #tpu.dot_dimension_numbers<[1], [0], [0], [1], [0, 0, 1, 1], [], []>} : vector<16x16xf32>, vector<16x8xf32>, vector<16x8xf32> -> vector<16x8xf32>
    %90 = vector.extract_strided_slice %53 {offsets = [0, 16], sizes = [16, 8], strides = [1, 1]} : vector<16x128xf32> to vector<16x8xf32>
    %91 = vector.extract_strided_slice %53 {offsets = [0, 48], sizes = [16, 8], strides = [1, 1]} : vector<16x128xf32> to vector<16x8xf32>
    %92 = vector.extract_strided_slice %53 {offsets = [0, 80], sizes = [16, 8], strides = [1, 1]} : vector<16x128xf32> to vector<16x8xf32>
    %cst_35 = arith.constant dense<0.000000e+00> : vector<16x16xf32>
    %93 = tpu.matmul %90, %91, %cst_35 {dimension_numbers = #tpu.dot_dimension_numbers<[1], [1], [0], [0], [0, 0, 1, 0], [], []>} : vector<16x8xf32>, vector<16x8xf32>, vector<16x16xf32> -> vector<16x16xf32>
    %cst_36 = arith.constant 0.353553385 : f32
    %94 = vector.broadcast %cst_36 : f32 to vector<16x16xf32>
    %95 = arith.mulf %93, %94 : vector<16x16xf32>
    %96 = arith.addf %95, %48 : vector<16x16xf32>
    %cst_37 = arith.constant dense<0xFF800000> : vector<16xf32>
    %97 = vector.multi_reduction <maximumf>, %96, %cst_37 [1] : vector<16x16xf32> to vector<16xf32>
    %98 = vector.shape_cast %97 : vector<16xf32> to vector<16x1xf32>
    %99 = vector.broadcast %98 : vector<16x1xf32> to vector<16x16xf32>
    %100 = arith.subf %96, %99 : vector<16x16xf32>
    %101 = math.exp %100 : vector<16x16xf32>
    %cst_38 = arith.constant dense<0.000000e+00> : vector<16xf32>
    %102 = vector.multi_reduction <add>, %101, %cst_38 [1] : vector<16x16xf32> to vector<16xf32>
    %103 = vector.shape_cast %102 : vector<16xf32> to vector<16x1xf32>
    %104 = tpu.reciprocal %103 {approx = true} : vector<16x1xf32> -> vector<16x1xf32>
    %105 = vector.broadcast %104 : vector<16x1xf32> to vector<16x16xf32>
    %106 = arith.mulf %101, %105 : vector<16x16xf32>
    %cst_39 = arith.constant dense<0.000000e+00> : vector<16x8xf32>
    %107 = tpu.matmul %106, %92, %cst_39 {dimension_numbers = #tpu.dot_dimension_numbers<[1], [0], [0], [1], [0, 0, 1, 1], [], []>} : vector<16x16xf32>, vector<16x8xf32>, vector<16x8xf32> -> vector<16x8xf32>
    %108 = vector.extract_strided_slice %53 {offsets = [0, 24], sizes = [16, 8], strides = [1, 1]} : vector<16x128xf32> to vector<16x8xf32>
    %109 = vector.extract_strided_slice %53 {offsets = [0, 56], sizes = [16, 8], strides = [1, 1]} : vector<16x128xf32> to vector<16x8xf32>
    %110 = vector.extract_strided_slice %53 {offsets = [0, 88], sizes = [16, 8], strides = [1, 1]} : vector<16x128xf32> to vector<16x8xf32>
    %cst_40 = arith.constant dense<0.000000e+00> : vector<16x16xf32>
    %111 = tpu.matmul %108, %109, %cst_40 {dimension_numbers = #tpu.dot_dimension_numbers<[1], [1], [0], [0], [0, 0, 1, 0], [], []>} : vector<16x8xf32>, vector<16x8xf32>, vector<16x16xf32> -> vector<16x16xf32>
    %cst_41 = arith.constant 0.353553385 : f32
    %112 = vector.broadcast %cst_41 : f32 to vector<16x16xf32>
    %113 = arith.mulf %111, %112 : vector<16x16xf32>
    %114 = arith.addf %113, %48 : vector<16x16xf32>
    %cst_42 = arith.constant dense<0xFF800000> : vector<16xf32>
    %115 = vector.multi_reduction <maximumf>, %114, %cst_42 [1] : vector<16x16xf32> to vector<16xf32>
    %116 = vector.shape_cast %115 : vector<16xf32> to vector<16x1xf32>
    %117 = vector.broadcast %116 : vector<16x1xf32> to vector<16x16xf32>
    %118 = arith.subf %114, %117 : vector<16x16xf32>
    %119 = math.exp %118 : vector<16x16xf32>
    %cst_43 = arith.constant dense<0.000000e+00> : vector<16xf32>
    %120 = vector.multi_reduction <add>, %119, %cst_43 [1] : vector<16x16xf32> to vector<16xf32>
    %121 = vector.shape_cast %120 : vector<16xf32> to vector<16x1xf32>
    %122 = tpu.reciprocal %121 {approx = true} : vector<16x1xf32> -> vector<16x1xf32>
    %123 = vector.broadcast %122 : vector<16x1xf32> to vector<16x16xf32>
    %124 = arith.mulf %119, %123 : vector<16x16xf32>
    %cst_44 = arith.constant dense<0.000000e+00> : vector<16x8xf32>
    %125 = tpu.matmul %124, %110, %cst_44 {dimension_numbers = #tpu.dot_dimension_numbers<[1], [0], [0], [1], [0, 0, 1, 1], [], []>} : vector<16x16xf32>, vector<16x8xf32>, vector<16x8xf32> -> vector<16x8xf32>
    %126 = tpu.concatenate %71, %89, %107, %125 in 1 : vector<16x8xf32>, vector<16x8xf32>, vector<16x8xf32>, vector<16x8xf32> -> vector<16x32xf32>
    %c96 = arith.constant 96 : index
    %c0_45 = arith.constant 0 : index
    %127 = vector.load %arg2[%c96, %c0_45] : memref<968x128xf32, #tpu.memory_space<vmem>>, vector<32x128xf32>
    %cst_46 = arith.constant dense<0.000000e+00> : vector<16x128xf32>
    %128 = tpu.matmul %126, %127, %cst_46 {dimension_numbers = #tpu.dot_dimension_numbers<[1], [0], [0], [1], [0, 0, 1, 1], [], []>} : vector<16x32xf32>, vector<32x128xf32>, vector<16x128xf32> -> vector<16x128xf32>
    %c128 = arith.constant 128 : index
    %c0_47 = arith.constant 0 : index
    %129 = vector.load %arg2[%c128, %c0_47] : memref<968x128xf32, #tpu.memory_space<vmem>>, vector<1x128xf32>
    %130 = vector.broadcast %129 : vector<1x128xf32> to vector<16x128xf32>
    %131 = arith.addf %128, %130 : vector<16x128xf32>
    %132 = vector.extract_strided_slice %131 {offsets = [0, 0], sizes = [16, 32], strides = [1, 1]} : vector<16x128xf32> to vector<16x32xf32>
    %c136 = arith.constant 136 : index
    %c0_48 = arith.constant 0 : index
    %133 = vector.load %arg2[%c136, %c0_48] : memref<968x128xf32, #tpu.memory_space<vmem>>, vector<2x128xf32>
    %134 = vector.extract_strided_slice %133 {offsets = [0, 0], sizes = [2, 32], strides = [1, 1]} : vector<2x128xf32> to vector<2x32xf32>
    %135 = arith.addf %46, %132 : vector<16x32xf32>
    %136 = vector.extract_strided_slice %134 {offsets = [0, 0], sizes = [1, 32], strides = [1, 1]} : vector<2x32xf32> to vector<1x32xf32>
    %137 = vector.extract_strided_slice %134 {offsets = [1, 0], sizes = [1, 32], strides = [1, 1]} : vector<2x32xf32> to vector<1x32xf32>
    %cst_49 = arith.constant dense<0.000000e+00> : vector<16xf32>
    %138 = vector.multi_reduction <add>, %135, %cst_49 [1] : vector<16x32xf32> to vector<16xf32>
    %139 = vector.shape_cast %138 : vector<16xf32> to vector<16x1xf32>
    %cst_50 = arith.constant 3.200000e+01 : f32
    %140 = vector.broadcast %cst_50 : f32 to vector<16x1xf32>
    %141 = arith.divf %139, %140 : vector<16x1xf32>
    %142 = vector.broadcast %141 : vector<16x1xf32> to vector<16x32xf32>
    %143 = arith.subf %135, %142 : vector<16x32xf32>
    %144 = arith.mulf %143, %143 : vector<16x32xf32>
    %cst_51 = arith.constant dense<0.000000e+00> : vector<16xf32>
    %145 = vector.multi_reduction <add>, %144, %cst_51 [1] : vector<16x32xf32> to vector<16xf32>
    %146 = vector.shape_cast %145 : vector<16xf32> to vector<16x1xf32>
    %cst_52 = arith.constant 3.200000e+01 : f32
    %147 = vector.broadcast %cst_52 : f32 to vector<16x1xf32>
    %148 = arith.divf %146, %147 : vector<16x1xf32>
    %149 = vector.broadcast %141 : vector<16x1xf32> to vector<16x32xf32>
    %150 = arith.subf %135, %149 : vector<16x32xf32>
    %cst_53 = arith.constant 9.99999974E-6 : f32
    %151 = vector.broadcast %cst_53 : f32 to vector<16x1xf32>
    %152 = arith.addf %148, %151 : vector<16x1xf32>
    %153 = math.rsqrt %152 : vector<16x1xf32>
    %154 = vector.broadcast %153 : vector<16x1xf32> to vector<16x32xf32>
    %155 = arith.mulf %150, %154 : vector<16x32xf32>
    %156 = vector.broadcast %136 : vector<1x32xf32> to vector<16x32xf32>
    %157 = arith.mulf %155, %156 : vector<16x32xf32>
    %158 = vector.broadcast %137 : vector<1x32xf32> to vector<16x32xf32>
    %159 = arith.addf %157, %158 : vector<16x32xf32>
    %c144 = arith.constant 144 : index
    %c0_54 = arith.constant 0 : index
    %160 = vector.load %arg2[%c144, %c0_54] : memref<968x128xf32, #tpu.memory_space<vmem>>, vector<32x128xf32>
    %cst_55 = arith.constant dense<0.000000e+00> : vector<16x128xf32>
    %161 = tpu.matmul %159, %160, %cst_55 {dimension_numbers = #tpu.dot_dimension_numbers<[1], [0], [0], [1], [0, 0, 1, 1], [], []>} : vector<16x32xf32>, vector<32x128xf32>, vector<16x128xf32> -> vector<16x128xf32>
    %c176 = arith.constant 176 : index
    %c0_56 = arith.constant 0 : index
    %162 = vector.load %arg2[%c176, %c0_56] : memref<968x128xf32, #tpu.memory_space<vmem>>, vector<1x128xf32>
    %163 = vector.broadcast %162 : vector<1x128xf32> to vector<16x128xf32>
    %164 = arith.addf %161, %163 : vector<16x128xf32>
    %cst_57 = arith.constant 0.000000e+00 : f32
    %165 = vector.broadcast %cst_57 : f32 to vector<16x128xf32>
    %166 = arith.maximumf %164, %165 : vector<16x128xf32>
    %167 = vector.extract_strided_slice %166 {offsets = [0, 0], sizes = [16, 64], strides = [1, 1]} : vector<16x128xf32> to vector<16x64xf32>
    %c184 = arith.constant 184 : index
    %c0_58 = arith.constant 0 : index
    %168 = vector.load %arg2[%c184, %c0_58] : memref<968x128xf32, #tpu.memory_space<vmem>>, vector<64x128xf32>
    %cst_59 = arith.constant dense<0.000000e+00> : vector<16x128xf32>
    %169 = tpu.matmul %167, %168, %cst_59 {dimension_numbers = #tpu.dot_dimension_numbers<[1], [0], [0], [1], [0, 0, 1, 1], [], []>} : vector<16x64xf32>, vector<64x128xf32>, vector<16x128xf32> -> vector<16x128xf32>
    %c248 = arith.constant 248 : index
    %c0_60 = arith.constant 0 : index
    %170 = vector.load %arg2[%c248, %c0_60] : memref<968x128xf32, #tpu.memory_space<vmem>>, vector<1x128xf32>
    %171 = vector.broadcast %170 : vector<1x128xf32> to vector<16x128xf32>
    %172 = arith.addf %169, %171 : vector<16x128xf32>
    %c256_61 = arith.constant 256 : index
    %c0_62 = arith.constant 0 : index
    %173 = vector.load %arg2[%c256_61, %c0_62] : memref<968x128xf32, #tpu.memory_space<vmem>>, vector<2x128xf32>
    %174 = vector.extract_strided_slice %173 {offsets = [0, 0], sizes = [2, 32], strides = [1, 1]} : vector<2x128xf32> to vector<2x32xf32>
    %175 = vector.extract_strided_slice %172 {offsets = [0, 0], sizes = [16, 32], strides = [1, 1]} : vector<16x128xf32> to vector<16x32xf32>
    %176 = arith.addf %159, %175 : vector<16x32xf32>
    %177 = vector.extract_strided_slice %174 {offsets = [0, 0], sizes = [1, 32], strides = [1, 1]} : vector<2x32xf32> to vector<1x32xf32>
    %178 = vector.extract_strided_slice %174 {offsets = [1, 0], sizes = [1, 32], strides = [1, 1]} : vector<2x32xf32> to vector<1x32xf32>
    %cst_63 = arith.constant dense<0.000000e+00> : vector<16xf32>
    %179 = vector.multi_reduction <add>, %176, %cst_63 [1] : vector<16x32xf32> to vector<16xf32>
    %180 = vector.shape_cast %179 : vector<16xf32> to vector<16x1xf32>
    %cst_64 = arith.constant 3.200000e+01 : f32
    %181 = vector.broadcast %cst_64 : f32 to vector<16x1xf32>
    %182 = arith.divf %180, %181 : vector<16x1xf32>
    %183 = vector.broadcast %182 : vector<16x1xf32> to vector<16x32xf32>
    %184 = arith.subf %176, %183 : vector<16x32xf32>
    %185 = arith.mulf %184, %184 : vector<16x32xf32>
    %cst_65 = arith.constant dense<0.000000e+00> : vector<16xf32>
    %186 = vector.multi_reduction <add>, %185, %cst_65 [1] : vector<16x32xf32> to vector<16xf32>
    %187 = vector.shape_cast %186 : vector<16xf32> to vector<16x1xf32>
    %cst_66 = arith.constant 3.200000e+01 : f32
    %188 = vector.broadcast %cst_66 : f32 to vector<16x1xf32>
    %189 = arith.divf %187, %188 : vector<16x1xf32>
    %190 = vector.broadcast %182 : vector<16x1xf32> to vector<16x32xf32>
    %191 = arith.subf %176, %190 : vector<16x32xf32>
    %cst_67 = arith.constant 9.99999974E-6 : f32
    %192 = vector.broadcast %cst_67 : f32 to vector<16x1xf32>
    %193 = arith.addf %189, %192 : vector<16x1xf32>
    %194 = math.rsqrt %193 : vector<16x1xf32>
    %195 = vector.broadcast %194 : vector<16x1xf32> to vector<16x32xf32>
    %196 = arith.mulf %191, %195 : vector<16x32xf32>
    %197 = vector.broadcast %177 : vector<1x32xf32> to vector<16x32xf32>
    %198 = arith.mulf %196, %197 : vector<16x32xf32>
    %199 = vector.broadcast %178 : vector<1x32xf32> to vector<16x32xf32>
    %200 = arith.addf %198, %199 : vector<16x32xf32>
    %c40_68 = arith.constant 40 : index
    %c0_69 = arith.constant 0 : index
    %201 = vector.load %arg2[%c40_68, %c0_69] : memref<968x128xf32, #tpu.memory_space<vmem>>, vector<16x128xf32>
    %202 = vector.extract_strided_slice %201 {offsets = [0, 0], sizes = [16, 16], strides = [1, 1]} : vector<16x128xf32> to vector<16x16xf32>
    %c264_70 = arith.constant 264 : index
    %c0_71 = arith.constant 0 : index
    %203 = vector.load %arg2[%c264_70, %c0_71] : memref<968x128xf32, #tpu.memory_space<vmem>>, vector<32x128xf32>
    %cst_72 = arith.constant dense<0.000000e+00> : vector<16x128xf32>
    %204 = tpu.matmul %200, %203, %cst_72 {dimension_numbers = #tpu.dot_dimension_numbers<[1], [0], [0], [1], [0, 0, 1, 1], [], []>} : vector<16x32xf32>, vector<32x128xf32>, vector<16x128xf32> -> vector<16x128xf32>
    %c296 = arith.constant 296 : index
    %c0_73 = arith.constant 0 : index
    %205 = vector.load %arg2[%c296, %c0_73] : memref<968x128xf32, #tpu.memory_space<vmem>>, vector<1x128xf32>
    %206 = vector.broadcast %205 : vector<1x128xf32> to vector<16x128xf32>
    %207 = arith.addf %204, %206 : vector<16x128xf32>
    %208 = vector.extract_strided_slice %207 {offsets = [0, 0], sizes = [16, 8], strides = [1, 1]} : vector<16x128xf32> to vector<16x8xf32>
    %209 = vector.extract_strided_slice %207 {offsets = [0, 32], sizes = [16, 8], strides = [1, 1]} : vector<16x128xf32> to vector<16x8xf32>
    %210 = vector.extract_strided_slice %207 {offsets = [0, 64], sizes = [16, 8], strides = [1, 1]} : vector<16x128xf32> to vector<16x8xf32>
    %cst_74 = arith.constant dense<0.000000e+00> : vector<16x16xf32>
    %211 = tpu.matmul %208, %209, %cst_74 {dimension_numbers = #tpu.dot_dimension_numbers<[1], [1], [0], [0], [0, 0, 1, 0], [], []>} : vector<16x8xf32>, vector<16x8xf32>, vector<16x16xf32> -> vector<16x16xf32>
    %cst_75 = arith.constant 0.353553385 : f32
    %212 = vector.broadcast %cst_75 : f32 to vector<16x16xf32>
    %213 = arith.mulf %211, %212 : vector<16x16xf32>
    %214 = arith.addf %213, %202 : vector<16x16xf32>
    %cst_76 = arith.constant dense<0xFF800000> : vector<16xf32>
    %215 = vector.multi_reduction <maximumf>, %214, %cst_76 [1] : vector<16x16xf32> to vector<16xf32>
    %216 = vector.shape_cast %215 : vector<16xf32> to vector<16x1xf32>
    %217 = vector.broadcast %216 : vector<16x1xf32> to vector<16x16xf32>
    %218 = arith.subf %214, %217 : vector<16x16xf32>
    %219 = math.exp %218 : vector<16x16xf32>
    %cst_77 = arith.constant dense<0.000000e+00> : vector<16xf32>
    %220 = vector.multi_reduction <add>, %219, %cst_77 [1] : vector<16x16xf32> to vector<16xf32>
    %221 = vector.shape_cast %220 : vector<16xf32> to vector<16x1xf32>
    %222 = tpu.reciprocal %221 {approx = true} : vector<16x1xf32> -> vector<16x1xf32>
    %223 = vector.broadcast %222 : vector<16x1xf32> to vector<16x16xf32>
    %224 = arith.mulf %219, %223 : vector<16x16xf32>
    %cst_78 = arith.constant dense<0.000000e+00> : vector<16x8xf32>
    %225 = tpu.matmul %224, %210, %cst_78 {dimension_numbers = #tpu.dot_dimension_numbers<[1], [0], [0], [1], [0, 0, 1, 1], [], []>} : vector<16x16xf32>, vector<16x8xf32>, vector<16x8xf32> -> vector<16x8xf32>
    %226 = vector.extract_strided_slice %207 {offsets = [0, 8], sizes = [16, 8], strides = [1, 1]} : vector<16x128xf32> to vector<16x8xf32>
    %227 = vector.extract_strided_slice %207 {offsets = [0, 40], sizes = [16, 8], strides = [1, 1]} : vector<16x128xf32> to vector<16x8xf32>
    %228 = vector.extract_strided_slice %207 {offsets = [0, 72], sizes = [16, 8], strides = [1, 1]} : vector<16x128xf32> to vector<16x8xf32>
    %cst_79 = arith.constant dense<0.000000e+00> : vector<16x16xf32>
    %229 = tpu.matmul %226, %227, %cst_79 {dimension_numbers = #tpu.dot_dimension_numbers<[1], [1], [0], [0], [0, 0, 1, 0], [], []>} : vector<16x8xf32>, vector<16x8xf32>, vector<16x16xf32> -> vector<16x16xf32>
    %cst_80 = arith.constant 0.353553385 : f32
    %230 = vector.broadcast %cst_80 : f32 to vector<16x16xf32>
    %231 = arith.mulf %229, %230 : vector<16x16xf32>
    %232 = arith.addf %231, %202 : vector<16x16xf32>
    %cst_81 = arith.constant dense<0xFF800000> : vector<16xf32>
    %233 = vector.multi_reduction <maximumf>, %232, %cst_81 [1] : vector<16x16xf32> to vector<16xf32>
    %234 = vector.shape_cast %233 : vector<16xf32> to vector<16x1xf32>
    %235 = vector.broadcast %234 : vector<16x1xf32> to vector<16x16xf32>
    %236 = arith.subf %232, %235 : vector<16x16xf32>
    %237 = math.exp %236 : vector<16x16xf32>
    %cst_82 = arith.constant dense<0.000000e+00> : vector<16xf32>
    %238 = vector.multi_reduction <add>, %237, %cst_82 [1] : vector<16x16xf32> to vector<16xf32>
    %239 = vector.shape_cast %238 : vector<16xf32> to vector<16x1xf32>
    %240 = tpu.reciprocal %239 {approx = true} : vector<16x1xf32> -> vector<16x1xf32>
    %241 = vector.broadcast %240 : vector<16x1xf32> to vector<16x16xf32>
    %242 = arith.mulf %237, %241 : vector<16x16xf32>
    %cst_83 = arith.constant dense<0.000000e+00> : vector<16x8xf32>
    %243 = tpu.matmul %242, %228, %cst_83 {dimension_numbers = #tpu.dot_dimension_numbers<[1], [0], [0], [1], [0, 0, 1, 1], [], []>} : vector<16x16xf32>, vector<16x8xf32>, vector<16x8xf32> -> vector<16x8xf32>
    %244 = vector.extract_strided_slice %207 {offsets = [0, 16], sizes = [16, 8], strides = [1, 1]} : vector<16x128xf32> to vector<16x8xf32>
    %245 = vector.extract_strided_slice %207 {offsets = [0, 48], sizes = [16, 8], strides = [1, 1]} : vector<16x128xf32> to vector<16x8xf32>
    %246 = vector.extract_strided_slice %207 {offsets = [0, 80], sizes = [16, 8], strides = [1, 1]} : vector<16x128xf32> to vector<16x8xf32>
    %cst_84 = arith.constant dense<0.000000e+00> : vector<16x16xf32>
    %247 = tpu.matmul %244, %245, %cst_84 {dimension_numbers = #tpu.dot_dimension_numbers<[1], [1], [0], [0], [0, 0, 1, 0], [], []>} : vector<16x8xf32>, vector<16x8xf32>, vector<16x16xf32> -> vector<16x16xf32>
    %cst_85 = arith.constant 0.353553385 : f32
    %248 = vector.broadcast %cst_85 : f32 to vector<16x16xf32>
    %249 = arith.mulf %247, %248 : vector<16x16xf32>
    %250 = arith.addf %249, %202 : vector<16x16xf32>
    %cst_86 = arith.constant dense<0xFF800000> : vector<16xf32>
    %251 = vector.multi_reduction <maximumf>, %250, %cst_86 [1] : vector<16x16xf32> to vector<16xf32>
    %252 = vector.shape_cast %251 : vector<16xf32> to vector<16x1xf32>
    %253 = vector.broadcast %252 : vector<16x1xf32> to vector<16x16xf32>
    %254 = arith.subf %250, %253 : vector<16x16xf32>
    %255 = math.exp %254 : vector<16x16xf32>
    %cst_87 = arith.constant dense<0.000000e+00> : vector<16xf32>
    %256 = vector.multi_reduction <add>, %255, %cst_87 [1] : vector<16x16xf32> to vector<16xf32>
    %257 = vector.shape_cast %256 : vector<16xf32> to vector<16x1xf32>
    %258 = tpu.reciprocal %257 {approx = true} : vector<16x1xf32> -> vector<16x1xf32>
    %259 = vector.broadcast %258 : vector<16x1xf32> to vector<16x16xf32>
    %260 = arith.mulf %255, %259 : vector<16x16xf32>
    %cst_88 = arith.constant dense<0.000000e+00> : vector<16x8xf32>
    %261 = tpu.matmul %260, %246, %cst_88 {dimension_numbers = #tpu.dot_dimension_numbers<[1], [0], [0], [1], [0, 0, 1, 1], [], []>} : vector<16x16xf32>, vector<16x8xf32>, vector<16x8xf32> -> vector<16x8xf32>
    %262 = vector.extract_strided_slice %207 {offsets = [0, 24], sizes = [16, 8], strides = [1, 1]} : vector<16x128xf32> to vector<16x8xf32>
    %263 = vector.extract_strided_slice %207 {offsets = [0, 56], sizes = [16, 8], strides = [1, 1]} : vector<16x128xf32> to vector<16x8xf32>
    %264 = vector.extract_strided_slice %207 {offsets = [0, 88], sizes = [16, 8], strides = [1, 1]} : vector<16x128xf32> to vector<16x8xf32>
    %cst_89 = arith.constant dense<0.000000e+00> : vector<16x16xf32>
    %265 = tpu.matmul %262, %263, %cst_89 {dimension_numbers = #tpu.dot_dimension_numbers<[1], [1], [0], [0], [0, 0, 1, 0], [], []>} : vector<16x8xf32>, vector<16x8xf32>, vector<16x16xf32> -> vector<16x16xf32>
    %cst_90 = arith.constant 0.353553385 : f32
    %266 = vector.broadcast %cst_90 : f32 to vector<16x16xf32>
    %267 = arith.mulf %265, %266 : vector<16x16xf32>
    %268 = arith.addf %267, %202 : vector<16x16xf32>
    %cst_91 = arith.constant dense<0xFF800000> : vector<16xf32>
    %269 = vector.multi_reduction <maximumf>, %268, %cst_91 [1] : vector<16x16xf32> to vector<16xf32>
    %270 = vector.shape_cast %269 : vector<16xf32> to vector<16x1xf32>
    %271 = vector.broadcast %270 : vector<16x1xf32> to vector<16x16xf32>
    %272 = arith.subf %268, %271 : vector<16x16xf32>
    %273 = math.exp %272 : vector<16x16xf32>
    %cst_92 = arith.constant dense<0.000000e+00> : vector<16xf32>
    %274 = vector.multi_reduction <add>, %273, %cst_92 [1] : vector<16x16xf32> to vector<16xf32>
    %275 = vector.shape_cast %274 : vector<16xf32> to vector<16x1xf32>
    %276 = tpu.reciprocal %275 {approx = true} : vector<16x1xf32> -> vector<16x1xf32>
    %277 = vector.broadcast %276 : vector<16x1xf32> to vector<16x16xf32>
    %278 = arith.mulf %273, %277 : vector<16x16xf32>
    %cst_93 = arith.constant dense<0.000000e+00> : vector<16x8xf32>
    %279 = tpu.matmul %278, %264, %cst_93 {dimension_numbers = #tpu.dot_dimension_numbers<[1], [0], [0], [1], [0, 0, 1, 1], [], []>} : vector<16x16xf32>, vector<16x8xf32>, vector<16x8xf32> -> vector<16x8xf32>
    %280 = tpu.concatenate %225, %243, %261, %279 in 1 : vector<16x8xf32>, vector<16x8xf32>, vector<16x8xf32>, vector<16x8xf32> -> vector<16x32xf32>
    %c304 = arith.constant 304 : index
    %c0_94 = arith.constant 0 : index
    %281 = vector.load %arg2[%c304, %c0_94] : memref<968x128xf32, #tpu.memory_space<vmem>>, vector<32x128xf32>
    %cst_95 = arith.constant dense<0.000000e+00> : vector<16x128xf32>
    %282 = tpu.matmul %280, %281, %cst_95 {dimension_numbers = #tpu.dot_dimension_numbers<[1], [0], [0], [1], [0, 0, 1, 1], [], []>} : vector<16x32xf32>, vector<32x128xf32>, vector<16x128xf32> -> vector<16x128xf32>
    %c336 = arith.constant 336 : index
    %c0_96 = arith.constant 0 : index
    %283 = vector.load %arg2[%c336, %c0_96] : memref<968x128xf32, #tpu.memory_space<vmem>>, vector<1x128xf32>
    %284 = vector.broadcast %283 : vector<1x128xf32> to vector<16x128xf32>
    %285 = arith.addf %282, %284 : vector<16x128xf32>
    %286 = vector.extract_strided_slice %285 {offsets = [0, 0], sizes = [16, 32], strides = [1, 1]} : vector<16x128xf32> to vector<16x32xf32>
    %c344 = arith.constant 344 : index
    %c0_97 = arith.constant 0 : index
    %287 = vector.load %arg2[%c344, %c0_97] : memref<968x128xf32, #tpu.memory_space<vmem>>, vector<2x128xf32>
    %288 = vector.extract_strided_slice %287 {offsets = [0, 0], sizes = [2, 32], strides = [1, 1]} : vector<2x128xf32> to vector<2x32xf32>
    %289 = arith.addf %200, %286 : vector<16x32xf32>
    %290 = vector.extract_strided_slice %288 {offsets = [0, 0], sizes = [1, 32], strides = [1, 1]} : vector<2x32xf32> to vector<1x32xf32>
    %291 = vector.extract_strided_slice %288 {offsets = [1, 0], sizes = [1, 32], strides = [1, 1]} : vector<2x32xf32> to vector<1x32xf32>
    %cst_98 = arith.constant dense<0.000000e+00> : vector<16xf32>
    %292 = vector.multi_reduction <add>, %289, %cst_98 [1] : vector<16x32xf32> to vector<16xf32>
    %293 = vector.shape_cast %292 : vector<16xf32> to vector<16x1xf32>
    %cst_99 = arith.constant 3.200000e+01 : f32
    %294 = vector.broadcast %cst_99 : f32 to vector<16x1xf32>
    %295 = arith.divf %293, %294 : vector<16x1xf32>
    %296 = vector.broadcast %295 : vector<16x1xf32> to vector<16x32xf32>
    %297 = arith.subf %289, %296 : vector<16x32xf32>
    %298 = arith.mulf %297, %297 : vector<16x32xf32>
    %cst_100 = arith.constant dense<0.000000e+00> : vector<16xf32>
    %299 = vector.multi_reduction <add>, %298, %cst_100 [1] : vector<16x32xf32> to vector<16xf32>
    %300 = vector.shape_cast %299 : vector<16xf32> to vector<16x1xf32>
    %cst_101 = arith.constant 3.200000e+01 : f32
    %301 = vector.broadcast %cst_101 : f32 to vector<16x1xf32>
    %302 = arith.divf %300, %301 : vector<16x1xf32>
    %303 = vector.broadcast %295 : vector<16x1xf32> to vector<16x32xf32>
    %304 = arith.subf %289, %303 : vector<16x32xf32>
    %cst_102 = arith.constant 9.99999974E-6 : f32
    %305 = vector.broadcast %cst_102 : f32 to vector<16x1xf32>
    %306 = arith.addf %302, %305 : vector<16x1xf32>
    %307 = math.rsqrt %306 : vector<16x1xf32>
    %308 = vector.broadcast %307 : vector<16x1xf32> to vector<16x32xf32>
    %309 = arith.mulf %304, %308 : vector<16x32xf32>
    %310 = vector.broadcast %290 : vector<1x32xf32> to vector<16x32xf32>
    %311 = arith.mulf %309, %310 : vector<16x32xf32>
    %312 = vector.broadcast %291 : vector<1x32xf32> to vector<16x32xf32>
    %313 = arith.addf %311, %312 : vector<16x32xf32>
    %c352 = arith.constant 352 : index
    %c0_103 = arith.constant 0 : index
    %314 = vector.load %arg2[%c352, %c0_103] : memref<968x128xf32, #tpu.memory_space<vmem>>, vector<32x128xf32>
    %cst_104 = arith.constant dense<0.000000e+00> : vector<16x128xf32>
    %315 = tpu.matmul %313, %314, %cst_104 {dimension_numbers = #tpu.dot_dimension_numbers<[1], [0], [0], [1], [0, 0, 1, 1], [], []>} : vector<16x32xf32>, vector<32x128xf32>, vector<16x128xf32> -> vector<16x128xf32>
    %c384 = arith.constant 384 : index
    %c0_105 = arith.constant 0 : index
    %316 = vector.load %arg2[%c384, %c0_105] : memref<968x128xf32, #tpu.memory_space<vmem>>, vector<1x128xf32>
    %317 = vector.broadcast %316 : vector<1x128xf32> to vector<16x128xf32>
    %318 = arith.addf %315, %317 : vector<16x128xf32>
    %cst_106 = arith.constant 0.000000e+00 : f32
    %319 = vector.broadcast %cst_106 : f32 to vector<16x128xf32>
    %320 = arith.maximumf %318, %319 : vector<16x128xf32>
    %321 = vector.extract_strided_slice %320 {offsets = [0, 0], sizes = [16, 64], strides = [1, 1]} : vector<16x128xf32> to vector<16x64xf32>
    %c392 = arith.constant 392 : index
    %c0_107 = arith.constant 0 : index
    %322 = vector.load %arg2[%c392, %c0_107] : memref<968x128xf32, #tpu.memory_space<vmem>>, vector<64x128xf32>
    %cst_108 = arith.constant dense<0.000000e+00> : vector<16x128xf32>
    %323 = tpu.matmul %321, %322, %cst_108 {dimension_numbers = #tpu.dot_dimension_numbers<[1], [0], [0], [1], [0, 0, 1, 1], [], []>} : vector<16x64xf32>, vector<64x128xf32>, vector<16x128xf32> -> vector<16x128xf32>
    %c456 = arith.constant 456 : index
    %c0_109 = arith.constant 0 : index
    %324 = vector.load %arg2[%c456, %c0_109] : memref<968x128xf32, #tpu.memory_space<vmem>>, vector<1x128xf32>
    %325 = vector.broadcast %324 : vector<1x128xf32> to vector<16x128xf32>
    %326 = arith.addf %323, %325 : vector<16x128xf32>
    %c464 = arith.constant 464 : index
    %c0_110 = arith.constant 0 : index
    %327 = vector.load %arg2[%c464, %c0_110] : memref<968x128xf32, #tpu.memory_space<vmem>>, vector<2x128xf32>
    %328 = vector.extract_strided_slice %327 {offsets = [0, 0], sizes = [2, 32], strides = [1, 1]} : vector<2x128xf32> to vector<2x32xf32>
    %329 = vector.extract_strided_slice %326 {offsets = [0, 0], sizes = [16, 32], strides = [1, 1]} : vector<16x128xf32> to vector<16x32xf32>
    %330 = arith.addf %313, %329 : vector<16x32xf32>
    %331 = vector.extract_strided_slice %328 {offsets = [0, 0], sizes = [1, 32], strides = [1, 1]} : vector<2x32xf32> to vector<1x32xf32>
    %332 = vector.extract_strided_slice %328 {offsets = [1, 0], sizes = [1, 32], strides = [1, 1]} : vector<2x32xf32> to vector<1x32xf32>
    %cst_111 = arith.constant dense<0.000000e+00> : vector<16xf32>
    %333 = vector.multi_reduction <add>, %330, %cst_111 [1] : vector<16x32xf32> to vector<16xf32>
    %334 = vector.shape_cast %333 : vector<16xf32> to vector<16x1xf32>
    %cst_112 = arith.constant 3.200000e+01 : f32
    %335 = vector.broadcast %cst_112 : f32 to vector<16x1xf32>
    %336 = arith.divf %334, %335 : vector<16x1xf32>
    %337 = vector.broadcast %336 : vector<16x1xf32> to vector<16x32xf32>
    %338 = arith.subf %330, %337 : vector<16x32xf32>
    %339 = arith.mulf %338, %338 : vector<16x32xf32>
    %cst_113 = arith.constant dense<0.000000e+00> : vector<16xf32>
    %340 = vector.multi_reduction <add>, %339, %cst_113 [1] : vector<16x32xf32> to vector<16xf32>
    %341 = vector.shape_cast %340 : vector<16xf32> to vector<16x1xf32>
    %cst_114 = arith.constant 3.200000e+01 : f32
    %342 = vector.broadcast %cst_114 : f32 to vector<16x1xf32>
    %343 = arith.divf %341, %342 : vector<16x1xf32>
    %344 = vector.broadcast %336 : vector<16x1xf32> to vector<16x32xf32>
    %345 = arith.subf %330, %344 : vector<16x32xf32>
    %cst_115 = arith.constant 9.99999974E-6 : f32
    %346 = vector.broadcast %cst_115 : f32 to vector<16x1xf32>
    %347 = arith.addf %343, %346 : vector<16x1xf32>
    %348 = math.rsqrt %347 : vector<16x1xf32>
    %349 = vector.broadcast %348 : vector<16x1xf32> to vector<16x32xf32>
    %350 = arith.mulf %345, %349 : vector<16x32xf32>
    %351 = vector.broadcast %331 : vector<1x32xf32> to vector<16x32xf32>
    %352 = arith.mulf %350, %351 : vector<16x32xf32>
    %353 = vector.broadcast %332 : vector<1x32xf32> to vector<16x32xf32>
    %354 = arith.addf %352, %353 : vector<16x32xf32>
    %c888 = arith.constant 888 : index
    %c0_116 = arith.constant 0 : index
    %355 = vector.load %arg2[%c888, %c0_116] : memref<968x128xf32, #tpu.memory_space<vmem>>, vector<32x128xf32>
    %cst_117 = arith.constant dense<0.000000e+00> : vector<16x128xf32>
    %356 = tpu.matmul %354, %355, %cst_117 {dimension_numbers = #tpu.dot_dimension_numbers<[1], [0], [0], [1], [0, 0, 1, 1], [], []>} : vector<16x32xf32>, vector<32x128xf32>, vector<16x128xf32> -> vector<16x128xf32>
    %c920 = arith.constant 920 : index
    %c0_118 = arith.constant 0 : index
    %357 = vector.load %arg2[%c920, %c0_118] : memref<968x128xf32, #tpu.memory_space<vmem>>, vector<1x128xf32>
    %358 = vector.broadcast %357 : vector<1x128xf32> to vector<16x128xf32>
    %359 = arith.addf %356, %358 : vector<16x128xf32>
    %c0_119 = arith.constant 0 : index
    %c0_120 = arith.constant 0 : index
    %360 = vector.load %arg3[%c0_119, %c0_120] : memref<16x128xf32, #tpu.memory_space<vmem>>, vector<16x128xf32>
    tpu.vector_store %arg3[%c0_119, %c0_120], %359 {strides = array<i32>} : memref<16x128xf32, #tpu.memory_space<vmem>>, vector<16x128xf32>,
    %c40_121 = arith.constant 40 : index
    %c0_122 = arith.constant 0 : index
    %361 = vector.load %arg2[%c40_121, %c0_122] : memref<968x128xf32, #tpu.memory_space<vmem>>, vector<16x128xf32>
    %362 = vector.extract_strided_slice %361 {offsets = [0, 0], sizes = [16, 16], strides = [1, 1]} : vector<16x128xf32> to vector<16x16xf32>
    %c472 = arith.constant 472 : index
    %c0_123 = arith.constant 0 : index
    %363 = vector.load %arg2[%c472, %c0_123] : memref<968x128xf32, #tpu.memory_space<vmem>>, vector<32x128xf32>
    %cst_124 = arith.constant dense<0.000000e+00> : vector<16x128xf32>
    %364 = tpu.matmul %354, %363, %cst_124 {dimension_numbers = #tpu.dot_dimension_numbers<[1], [0], [0], [1], [0, 0, 1, 1], [], []>} : vector<16x32xf32>, vector<32x128xf32>, vector<16x128xf32> -> vector<16x128xf32>
    %c504 = arith.constant 504 : index
    %c0_125 = arith.constant 0 : index
    %365 = vector.load %arg2[%c504, %c0_125] : memref<968x128xf32, #tpu.memory_space<vmem>>, vector<1x128xf32>
    %366 = vector.broadcast %365 : vector<1x128xf32> to vector<16x128xf32>
    %367 = arith.addf %364, %366 : vector<16x128xf32>
    %368 = vector.extract_strided_slice %367 {offsets = [0, 0], sizes = [16, 8], strides = [1, 1]} : vector<16x128xf32> to vector<16x8xf32>
    %369 = vector.extract_strided_slice %367 {offsets = [0, 32], sizes = [16, 8], strides = [1, 1]} : vector<16x128xf32> to vector<16x8xf32>
    %370 = vector.extract_strided_slice %367 {offsets = [0, 64], sizes = [16, 8], strides = [1, 1]} : vector<16x128xf32> to vector<16x8xf32>
    %cst_126 = arith.constant dense<0.000000e+00> : vector<16x16xf32>
    %371 = tpu.matmul %368, %369, %cst_126 {dimension_numbers = #tpu.dot_dimension_numbers<[1], [1], [0], [0], [0, 0, 1, 0], [], []>} : vector<16x8xf32>, vector<16x8xf32>, vector<16x16xf32> -> vector<16x16xf32>
    %cst_127 = arith.constant 0.353553385 : f32
    %372 = vector.broadcast %cst_127 : f32 to vector<16x16xf32>
    %373 = arith.mulf %371, %372 : vector<16x16xf32>
    %374 = arith.addf %373, %362 : vector<16x16xf32>
    %cst_128 = arith.constant dense<0xFF800000> : vector<16xf32>
    %375 = vector.multi_reduction <maximumf>, %374, %cst_128 [1] : vector<16x16xf32> to vector<16xf32>
    %376 = vector.shape_cast %375 : vector<16xf32> to vector<16x1xf32>
    %377 = vector.broadcast %376 : vector<16x1xf32> to vector<16x16xf32>
    %378 = arith.subf %374, %377 : vector<16x16xf32>
    %379 = math.exp %378 : vector<16x16xf32>
    %cst_129 = arith.constant dense<0.000000e+00> : vector<16xf32>
    %380 = vector.multi_reduction <add>, %379, %cst_129 [1] : vector<16x16xf32> to vector<16xf32>
    %381 = vector.shape_cast %380 : vector<16xf32> to vector<16x1xf32>
    %382 = tpu.reciprocal %381 {approx = true} : vector<16x1xf32> -> vector<16x1xf32>
    %383 = vector.broadcast %382 : vector<16x1xf32> to vector<16x16xf32>
    %384 = arith.mulf %379, %383 : vector<16x16xf32>
    %cst_130 = arith.constant dense<0.000000e+00> : vector<16x8xf32>
    %385 = tpu.matmul %384, %370, %cst_130 {dimension_numbers = #tpu.dot_dimension_numbers<[1], [0], [0], [1], [0, 0, 1, 1], [], []>} : vector<16x16xf32>, vector<16x8xf32>, vector<16x8xf32> -> vector<16x8xf32>
    %386 = vector.extract_strided_slice %367 {offsets = [0, 8], sizes = [16, 8], strides = [1, 1]} : vector<16x128xf32> to vector<16x8xf32>
    %387 = vector.extract_strided_slice %367 {offsets = [0, 40], sizes = [16, 8], strides = [1, 1]} : vector<16x128xf32> to vector<16x8xf32>
    %388 = vector.extract_strided_slice %367 {offsets = [0, 72], sizes = [16, 8], strides = [1, 1]} : vector<16x128xf32> to vector<16x8xf32>
    %cst_131 = arith.constant dense<0.000000e+00> : vector<16x16xf32>
    %389 = tpu.matmul %386, %387, %cst_131 {dimension_numbers = #tpu.dot_dimension_numbers<[1], [1], [0], [0], [0, 0, 1, 0], [], []>} : vector<16x8xf32>, vector<16x8xf32>, vector<16x16xf32> -> vector<16x16xf32>
    %cst_132 = arith.constant 0.353553385 : f32
    %390 = vector.broadcast %cst_132 : f32 to vector<16x16xf32>
    %391 = arith.mulf %389, %390 : vector<16x16xf32>
    %392 = arith.addf %391, %362 : vector<16x16xf32>
    %cst_133 = arith.constant dense<0xFF800000> : vector<16xf32>
    %393 = vector.multi_reduction <maximumf>, %392, %cst_133 [1] : vector<16x16xf32> to vector<16xf32>
    %394 = vector.shape_cast %393 : vector<16xf32> to vector<16x1xf32>
    %395 = vector.broadcast %394 : vector<16x1xf32> to vector<16x16xf32>
    %396 = arith.subf %392, %395 : vector<16x16xf32>
    %397 = math.exp %396 : vector<16x16xf32>
    %cst_134 = arith.constant dense<0.000000e+00> : vector<16xf32>
    %398 = vector.multi_reduction <add>, %397, %cst_134 [1] : vector<16x16xf32> to vector<16xf32>
    %399 = vector.shape_cast %398 : vector<16xf32> to vector<16x1xf32>
    %400 = tpu.reciprocal %399 {approx = true} : vector<16x1xf32> -> vector<16x1xf32>
    %401 = vector.broadcast %400 : vector<16x1xf32> to vector<16x16xf32>
    %402 = arith.mulf %397, %401 : vector<16x16xf32>
    %cst_135 = arith.constant dense<0.000000e+00> : vector<16x8xf32>
    %403 = tpu.matmul %402, %388, %cst_135 {dimension_numbers = #tpu.dot_dimension_numbers<[1], [0], [0], [1], [0, 0, 1, 1], [], []>} : vector<16x16xf32>, vector<16x8xf32>, vector<16x8xf32> -> vector<16x8xf32>
    %404 = vector.extract_strided_slice %367 {offsets = [0, 16], sizes = [16, 8], strides = [1, 1]} : vector<16x128xf32> to vector<16x8xf32>
    %405 = vector.extract_strided_slice %367 {offsets = [0, 48], sizes = [16, 8], strides = [1, 1]} : vector<16x128xf32> to vector<16x8xf32>
    %406 = vector.extract_strided_slice %367 {offsets = [0, 80], sizes = [16, 8], strides = [1, 1]} : vector<16x128xf32> to vector<16x8xf32>
    %cst_136 = arith.constant dense<0.000000e+00> : vector<16x16xf32>
    %407 = tpu.matmul %404, %405, %cst_136 {dimension_numbers = #tpu.dot_dimension_numbers<[1], [1], [0], [0], [0, 0, 1, 0], [], []>} : vector<16x8xf32>, vector<16x8xf32>, vector<16x16xf32> -> vector<16x16xf32>
    %cst_137 = arith.constant 0.353553385 : f32
    %408 = vector.broadcast %cst_137 : f32 to vector<16x16xf32>
    %409 = arith.mulf %407, %408 : vector<16x16xf32>
    %410 = arith.addf %409, %362 : vector<16x16xf32>
    %cst_138 = arith.constant dense<0xFF800000> : vector<16xf32>
    %411 = vector.multi_reduction <maximumf>, %410, %cst_138 [1] : vector<16x16xf32> to vector<16xf32>
    %412 = vector.shape_cast %411 : vector<16xf32> to vector<16x1xf32>
    %413 = vector.broadcast %412 : vector<16x1xf32> to vector<16x16xf32>
    %414 = arith.subf %410, %413 : vector<16x16xf32>
    %415 = math.exp %414 : vector<16x16xf32>
    %cst_139 = arith.constant dense<0.000000e+00> : vector<16xf32>
    %416 = vector.multi_reduction <add>, %415, %cst_139 [1] : vector<16x16xf32> to vector<16xf32>
    %417 = vector.shape_cast %416 : vector<16xf32> to vector<16x1xf32>
    %418 = tpu.reciprocal %417 {approx = true} : vector<16x1xf32> -> vector<16x1xf32>
    %419 = vector.broadcast %418 : vector<16x1xf32> to vector<16x16xf32>
    %420 = arith.mulf %415, %419 : vector<16x16xf32>
    %cst_140 = arith.constant dense<0.000000e+00> : vector<16x8xf32>
    %421 = tpu.matmul %420, %406, %cst_140 {dimension_numbers = #tpu.dot_dimension_numbers<[1], [0], [0], [1], [0, 0, 1, 1], [], []>} : vector<16x16xf32>, vector<16x8xf32>, vector<16x8xf32> -> vector<16x8xf32>
    %422 = vector.extract_strided_slice %367 {offsets = [0, 24], sizes = [16, 8], strides = [1, 1]} : vector<16x128xf32> to vector<16x8xf32>
    %423 = vector.extract_strided_slice %367 {offsets = [0, 56], sizes = [16, 8], strides = [1, 1]} : vector<16x128xf32> to vector<16x8xf32>
    %424 = vector.extract_strided_slice %367 {offsets = [0, 88], sizes = [16, 8], strides = [1, 1]} : vector<16x128xf32> to vector<16x8xf32>
    %cst_141 = arith.constant dense<0.000000e+00> : vector<16x16xf32>
    %425 = tpu.matmul %422, %423, %cst_141 {dimension_numbers = #tpu.dot_dimension_numbers<[1], [1], [0], [0], [0, 0, 1, 0], [], []>} : vector<16x8xf32>, vector<16x8xf32>, vector<16x16xf32> -> vector<16x16xf32>
    %cst_142 = arith.constant 0.353553385 : f32
    %426 = vector.broadcast %cst_142 : f32 to vector<16x16xf32>
    %427 = arith.mulf %425, %426 : vector<16x16xf32>
    %428 = arith.addf %427, %362 : vector<16x16xf32>
    %cst_143 = arith.constant dense<0xFF800000> : vector<16xf32>
    %429 = vector.multi_reduction <maximumf>, %428, %cst_143 [1] : vector<16x16xf32> to vector<16xf32>
    %430 = vector.shape_cast %429 : vector<16xf32> to vector<16x1xf32>
    %431 = vector.broadcast %430 : vector<16x1xf32> to vector<16x16xf32>
    %432 = arith.subf %428, %431 : vector<16x16xf32>
    %433 = math.exp %432 : vector<16x16xf32>
    %cst_144 = arith.constant dense<0.000000e+00> : vector<16xf32>
    %434 = vector.multi_reduction <add>, %433, %cst_144 [1] : vector<16x16xf32> to vector<16xf32>
    %435 = vector.shape_cast %434 : vector<16xf32> to vector<16x1xf32>
    %436 = tpu.reciprocal %435 {approx = true} : vector<16x1xf32> -> vector<16x1xf32>
    %437 = vector.broadcast %436 : vector<16x1xf32> to vector<16x16xf32>
    %438 = arith.mulf %433, %437 : vector<16x16xf32>
    %cst_145 = arith.constant dense<0.000000e+00> : vector<16x8xf32>
    %439 = tpu.matmul %438, %424, %cst_145 {dimension_numbers = #tpu.dot_dimension_numbers<[1], [0], [0], [1], [0, 0, 1, 1], [], []>} : vector<16x16xf32>, vector<16x8xf32>, vector<16x8xf32> -> vector<16x8xf32>
    %440 = tpu.concatenate %385, %403, %421, %439 in 1 : vector<16x8xf32>, vector<16x8xf32>, vector<16x8xf32>, vector<16x8xf32> -> vector<16x32xf32>
    %c512 = arith.constant 512 : index
    %c0_146 = arith.constant 0 : index
    %441 = vector.load %arg2[%c512, %c0_146] : memref<968x128xf32, #tpu.memory_space<vmem>>, vector<32x128xf32>
    %cst_147 = arith.constant dense<0.000000e+00> : vector<16x128xf32>
    %442 = tpu.matmul %440, %441, %cst_147 {dimension_numbers = #tpu.dot_dimension_numbers<[1], [0], [0], [1], [0, 0, 1, 1], [], []>} : vector<16x32xf32>, vector<32x128xf32>, vector<16x128xf32> -> vector<16x128xf32>
    %c544 = arith.constant 544 : index
    %c0_148 = arith.constant 0 : index
    %443 = vector.load %arg2[%c544, %c0_148] : memref<968x128xf32, #tpu.memory_space<vmem>>, vector<1x128xf32>
    %444 = vector.broadcast %443 : vector<1x128xf32> to vector<16x128xf32>
    %445 = arith.addf %442, %444 : vector<16x128xf32>
    %446 = vector.extract_strided_slice %445 {offsets = [0, 0], sizes = [16, 32], strides = [1, 1]} : vector<16x128xf32> to vector<16x32xf32>
    %c552 = arith.constant 552 : index
    %c0_149 = arith.constant 0 : index
    %447 = vector.load %arg2[%c552, %c0_149] : memref<968x128xf32, #tpu.memory_space<vmem>>, vector<2x128xf32>
    %448 = vector.extract_strided_slice %447 {offsets = [0, 0], sizes = [2, 32], strides = [1, 1]} : vector<2x128xf32> to vector<2x32xf32>
    %449 = arith.addf %354, %446 : vector<16x32xf32>
    %450 = vector.extract_strided_slice %448 {offsets = [0, 0], sizes = [1, 32], strides = [1, 1]} : vector<2x32xf32> to vector<1x32xf32>
    %451 = vector.extract_strided_slice %448 {offsets = [1, 0], sizes = [1, 32], strides = [1, 1]} : vector<2x32xf32> to vector<1x32xf32>
    %cst_150 = arith.constant dense<0.000000e+00> : vector<16xf32>
    %452 = vector.multi_reduction <add>, %449, %cst_150 [1] : vector<16x32xf32> to vector<16xf32>
    %453 = vector.shape_cast %452 : vector<16xf32> to vector<16x1xf32>
    %cst_151 = arith.constant 3.200000e+01 : f32
    %454 = vector.broadcast %cst_151 : f32 to vector<16x1xf32>
    %455 = arith.divf %453, %454 : vector<16x1xf32>
    %456 = vector.broadcast %455 : vector<16x1xf32> to vector<16x32xf32>
    %457 = arith.subf %449, %456 : vector<16x32xf32>
    %458 = arith.mulf %457, %457 : vector<16x32xf32>
    %cst_152 = arith.constant dense<0.000000e+00> : vector<16xf32>
    %459 = vector.multi_reduction <add>, %458, %cst_152 [1] : vector<16x32xf32> to vector<16xf32>
    %460 = vector.shape_cast %459 : vector<16xf32> to vector<16x1xf32>
    %cst_153 = arith.constant 3.200000e+01 : f32
    %461 = vector.broadcast %cst_153 : f32 to vector<16x1xf32>
    %462 = arith.divf %460, %461 : vector<16x1xf32>
    %463 = vector.broadcast %455 : vector<16x1xf32> to vector<16x32xf32>
    %464 = arith.subf %449, %463 : vector<16x32xf32>
    %cst_154 = arith.constant 9.99999974E-6 : f32
    %465 = vector.broadcast %cst_154 : f32 to vector<16x1xf32>
    %466 = arith.addf %462, %465 : vector<16x1xf32>
    %467 = math.rsqrt %466 : vector<16x1xf32>
    %468 = vector.broadcast %467 : vector<16x1xf32> to vector<16x32xf32>
    %469 = arith.mulf %464, %468 : vector<16x32xf32>
    %470 = vector.broadcast %450 : vector<1x32xf32> to vector<16x32xf32>
    %471 = arith.mulf %469, %470 : vector<16x32xf32>
    %472 = vector.broadcast %451 : vector<1x32xf32> to vector<16x32xf32>
    %473 = arith.addf %471, %472 : vector<16x32xf32>
    %c16 = arith.constant 16 : index
    %c0_155 = arith.constant 0 : index
    %474 = vector.load %arg2[%c16, %c0_155] : memref<968x128xf32, #tpu.memory_space<vmem>>, vector<8x128xf32>
    %475 = vector.extract_strided_slice %474 {offsets = [0, 0], sizes = [8, 16], strides = [1, 1]} : vector<8x128xf32> to vector<8x16xf32>
    %cst_156 = arith.constant dense<0.000000e+00> : vector<8x32xf32>
    %476 = tpu.matmul %475, %473, %cst_156 {dimension_numbers = #tpu.dot_dimension_numbers<[1], [0], [0], [1], [0, 0, 1, 1], [], []>} : vector<8x16xf32>, vector<16x32xf32>, vector<8x32xf32> -> vector<8x32xf32>
    %c560 = arith.constant 560 : index
    %c0_157 = arith.constant 0 : index
    %477 = vector.load %arg2[%c560, %c0_157] : memref<968x128xf32, #tpu.memory_space<vmem>>, vector<32x128xf32>
    %cst_158 = arith.constant dense<0.000000e+00> : vector<8x128xf32>
    %478 = tpu.matmul %476, %477, %cst_158 {dimension_numbers = #tpu.dot_dimension_numbers<[1], [0], [0], [1], [0, 0, 1, 1], [], []>} : vector<8x32xf32>, vector<32x128xf32>, vector<8x128xf32> -> vector<8x128xf32>
    %c592 = arith.constant 592 : index
    %c0_159 = arith.constant 0 : index
    %479 = vector.load %arg2[%c592, %c0_159] : memref<968x128xf32, #tpu.memory_space<vmem>>, vector<1x128xf32>
    %480 = vector.broadcast %479 : vector<1x128xf32> to vector<8x128xf32>
    %481 = arith.addf %478, %480 : vector<8x128xf32>
    %cst_160 = arith.constant 0.000000e+00 : f32
    %482 = vector.broadcast %cst_160 : f32 to vector<8x128xf32>
    %483 = arith.maximumf %481, %482 : vector<8x128xf32>
    %484 = vector.extract_strided_slice %483 {offsets = [0, 0], sizes = [8, 64], strides = [1, 1]} : vector<8x128xf32> to vector<8x64xf32>
    %c600 = arith.constant 600 : index
    %c0_161 = arith.constant 0 : index
    %485 = vector.load %arg2[%c600, %c0_161] : memref<968x128xf32, #tpu.memory_space<vmem>>, vector<64x128xf32>
    %cst_162 = arith.constant dense<0.000000e+00> : vector<8x128xf32>
    %486 = tpu.matmul %484, %485, %cst_162 {dimension_numbers = #tpu.dot_dimension_numbers<[1], [0], [0], [1], [0, 0, 1, 1], [], []>} : vector<8x64xf32>, vector<64x128xf32>, vector<8x128xf32> -> vector<8x128xf32>
    %c664 = arith.constant 664 : index
    %c0_163 = arith.constant 0 : index
    %487 = vector.load %arg2[%c664, %c0_163] : memref<968x128xf32, #tpu.memory_space<vmem>>, vector<1x128xf32>
    %488 = vector.broadcast %487 : vector<1x128xf32> to vector<8x128xf32>
    %489 = arith.addf %486, %488 : vector<8x128xf32>
    %c672 = arith.constant 672 : index
    %c0_164 = arith.constant 0 : index
    %490 = vector.load %arg2[%c672, %c0_164] : memref<968x128xf32, #tpu.memory_space<vmem>>, vector<2x128xf32>
    %491 = vector.extract_strided_slice %490 {offsets = [0, 0], sizes = [2, 32], strides = [1, 1]} : vector<2x128xf32> to vector<2x32xf32>
    %492 = vector.extract_strided_slice %489 {offsets = [0, 0], sizes = [8, 32], strides = [1, 1]} : vector<8x128xf32> to vector<8x32xf32>
    %493 = arith.addf %476, %492 : vector<8x32xf32>
    %494 = vector.extract_strided_slice %491 {offsets = [0, 0], sizes = [1, 32], strides = [1, 1]} : vector<2x32xf32> to vector<1x32xf32>
    %495 = vector.extract_strided_slice %491 {offsets = [1, 0], sizes = [1, 32], strides = [1, 1]} : vector<2x32xf32> to vector<1x32xf32>
    %cst_165 = arith.constant dense<0.000000e+00> : vector<8xf32>
    %496 = vector.multi_reduction <add>, %493, %cst_165 [1] : vector<8x32xf32> to vector<8xf32>
    %497 = vector.shape_cast %496 : vector<8xf32> to vector<8x1xf32>
    %cst_166 = arith.constant 3.200000e+01 : f32
    %498 = vector.broadcast %cst_166 : f32 to vector<8x1xf32>
    %499 = arith.divf %497, %498 : vector<8x1xf32>
    %500 = vector.broadcast %499 : vector<8x1xf32> to vector<8x32xf32>
    %501 = arith.subf %493, %500 : vector<8x32xf32>
    %502 = arith.mulf %501, %501 : vector<8x32xf32>
    %cst_167 = arith.constant dense<0.000000e+00> : vector<8xf32>
    %503 = vector.multi_reduction <add>, %502, %cst_167 [1] : vector<8x32xf32> to vector<8xf32>
    %504 = vector.shape_cast %503 : vector<8xf32> to vector<8x1xf32>
    %cst_168 = arith.constant 3.200000e+01 : f32
    %505 = vector.broadcast %cst_168 : f32 to vector<8x1xf32>
    %506 = arith.divf %504, %505 : vector<8x1xf32>
    %507 = vector.broadcast %499 : vector<8x1xf32> to vector<8x32xf32>
    %508 = arith.subf %493, %507 : vector<8x32xf32>
    %cst_169 = arith.constant 9.99999974E-6 : f32
    %509 = vector.broadcast %cst_169 : f32 to vector<8x1xf32>
    %510 = arith.addf %506, %509 : vector<8x1xf32>
    %511 = math.rsqrt %510 : vector<8x1xf32>
    %512 = vector.broadcast %511 : vector<8x1xf32> to vector<8x32xf32>
    %513 = arith.mulf %508, %512 : vector<8x32xf32>
    %514 = vector.broadcast %494 : vector<1x32xf32> to vector<8x32xf32>
    %515 = arith.mulf %513, %514 : vector<8x32xf32>
    %516 = vector.broadcast %495 : vector<1x32xf32> to vector<8x32xf32>
    %517 = arith.addf %515, %516 : vector<8x32xf32>
    %c32 = arith.constant 32 : index
    %c0_170 = arith.constant 0 : index
    %518 = vector.load %arg2[%c32, %c0_170] : memref<968x128xf32, #tpu.memory_space<vmem>>, vector<8x128xf32>
    %519 = vector.extract_strided_slice %518 {offsets = [0, 0], sizes = [8, 8], strides = [1, 1]} : vector<8x128xf32> to vector<8x8xf32>
    %c680 = arith.constant 680 : index
    %c0_171 = arith.constant 0 : index
    %520 = vector.load %arg2[%c680, %c0_171] : memref<968x128xf32, #tpu.memory_space<vmem>>, vector<32x128xf32>
    %cst_172 = arith.constant dense<0.000000e+00> : vector<8x128xf32>
    %521 = tpu.matmul %517, %520, %cst_172 {dimension_numbers = #tpu.dot_dimension_numbers<[1], [0], [0], [1], [0, 0, 1, 1], [], []>} : vector<8x32xf32>, vector<32x128xf32>, vector<8x128xf32> -> vector<8x128xf32>
    %c712 = arith.constant 712 : index
    %c0_173 = arith.constant 0 : index
    %522 = vector.load %arg2[%c712, %c0_173] : memref<968x128xf32, #tpu.memory_space<vmem>>, vector<1x128xf32>
    %523 = vector.broadcast %522 : vector<1x128xf32> to vector<8x128xf32>
    %524 = arith.addf %521, %523 : vector<8x128xf32>
    %525 = vector.extract_strided_slice %524 {offsets = [0, 0], sizes = [8, 8], strides = [1, 1]} : vector<8x128xf32> to vector<8x8xf32>
    %526 = vector.extract_strided_slice %524 {offsets = [0, 32], sizes = [8, 8], strides = [1, 1]} : vector<8x128xf32> to vector<8x8xf32>
    %527 = vector.extract_strided_slice %524 {offsets = [0, 64], sizes = [8, 8], strides = [1, 1]} : vector<8x128xf32> to vector<8x8xf32>
    %cst_174 = arith.constant dense<0.000000e+00> : vector<8x8xf32>
    %528 = tpu.matmul %525, %526, %cst_174 {dimension_numbers = #tpu.dot_dimension_numbers<[1], [1], [0], [0], [0, 0, 1, 0], [], []>} : vector<8x8xf32>, vector<8x8xf32>, vector<8x8xf32> -> vector<8x8xf32>
    %cst_175 = arith.constant 0.353553385 : f32
    %529 = vector.broadcast %cst_175 : f32 to vector<8x8xf32>
    %530 = arith.mulf %528, %529 : vector<8x8xf32>
    %531 = arith.addf %530, %519 : vector<8x8xf32>
    %cst_176 = arith.constant dense<0xFF800000> : vector<8xf32>
    %532 = vector.multi_reduction <maximumf>, %531, %cst_176 [1] : vector<8x8xf32> to vector<8xf32>
    %533 = vector.shape_cast %532 : vector<8xf32> to vector<8x1xf32>
    %534 = vector.broadcast %533 : vector<8x1xf32> to vector<8x8xf32>
    %535 = arith.subf %531, %534 : vector<8x8xf32>
    %536 = math.exp %535 : vector<8x8xf32>
    %cst_177 = arith.constant dense<0.000000e+00> : vector<8xf32>
    %537 = vector.multi_reduction <add>, %536, %cst_177 [1] : vector<8x8xf32> to vector<8xf32>
    %538 = vector.shape_cast %537 : vector<8xf32> to vector<8x1xf32>
    %539 = tpu.reciprocal %538 {approx = true} : vector<8x1xf32> -> vector<8x1xf32>
    %540 = vector.broadcast %539 : vector<8x1xf32> to vector<8x8xf32>
    %541 = arith.mulf %536, %540 : vector<8x8xf32>
    %cst_178 = arith.constant dense<0.000000e+00> : vector<8x8xf32>
    %542 = tpu.matmul %541, %527, %cst_178 {dimension_numbers = #tpu.dot_dimension_numbers<[1], [0], [0], [1], [0, 0, 1, 1], [], []>} : vector<8x8xf32>, vector<8x8xf32>, vector<8x8xf32> -> vector<8x8xf32>
    %543 = vector.extract_strided_slice %524 {offsets = [0, 8], sizes = [8, 8], strides = [1, 1]} : vector<8x128xf32> to vector<8x8xf32>
    %544 = vector.extract_strided_slice %524 {offsets = [0, 40], sizes = [8, 8], strides = [1, 1]} : vector<8x128xf32> to vector<8x8xf32>
    %545 = vector.extract_strided_slice %524 {offsets = [0, 72], sizes = [8, 8], strides = [1, 1]} : vector<8x128xf32> to vector<8x8xf32>
    %cst_179 = arith.constant dense<0.000000e+00> : vector<8x8xf32>
    %546 = tpu.matmul %543, %544, %cst_179 {dimension_numbers = #tpu.dot_dimension_numbers<[1], [1], [0], [0], [0, 0, 1, 0], [], []>} : vector<8x8xf32>, vector<8x8xf32>, vector<8x8xf32> -> vector<8x8xf32>
    %cst_180 = arith.constant 0.353553385 : f32
    %547 = vector.broadcast %cst_180 : f32 to vector<8x8xf32>
    %548 = arith.mulf %546, %547 : vector<8x8xf32>
    %549 = arith.addf %548, %519 : vector<8x8xf32>
    %cst_181 = arith.constant dense<0xFF800000> : vector<8xf32>
    %550 = vector.multi_reduction <maximumf>, %549, %cst_181 [1] : vector<8x8xf32> to vector<8xf32>
    %551 = vector.shape_cast %550 : vector<8xf32> to vector<8x1xf32>
    %552 = vector.broadcast %551 : vector<8x1xf32> to vector<8x8xf32>
    %553 = arith.subf %549, %552 : vector<8x8xf32>
    %554 = math.exp %553 : vector<8x8xf32>
    %cst_182 = arith.constant dense<0.000000e+00> : vector<8xf32>
    %555 = vector.multi_reduction <add>, %554, %cst_182 [1] : vector<8x8xf32> to vector<8xf32>
    %556 = vector.shape_cast %555 : vector<8xf32> to vector<8x1xf32>
    %557 = tpu.reciprocal %556 {approx = true} : vector<8x1xf32> -> vector<8x1xf32>
    %558 = vector.broadcast %557 : vector<8x1xf32> to vector<8x8xf32>
    %559 = arith.mulf %554, %558 : vector<8x8xf32>
    %cst_183 = arith.constant dense<0.000000e+00> : vector<8x8xf32>
    %560 = tpu.matmul %559, %545, %cst_183 {dimension_numbers = #tpu.dot_dimension_numbers<[1], [0], [0], [1], [0, 0, 1, 1], [], []>} : vector<8x8xf32>, vector<8x8xf32>, vector<8x8xf32> -> vector<8x8xf32>
    %561 = vector.extract_strided_slice %524 {offsets = [0, 16], sizes = [8, 8], strides = [1, 1]} : vector<8x128xf32> to vector<8x8xf32>
    %562 = vector.extract_strided_slice %524 {offsets = [0, 48], sizes = [8, 8], strides = [1, 1]} : vector<8x128xf32> to vector<8x8xf32>
    %563 = vector.extract_strided_slice %524 {offsets = [0, 80], sizes = [8, 8], strides = [1, 1]} : vector<8x128xf32> to vector<8x8xf32>
    %cst_184 = arith.constant dense<0.000000e+00> : vector<8x8xf32>
    %564 = tpu.matmul %561, %562, %cst_184 {dimension_numbers = #tpu.dot_dimension_numbers<[1], [1], [0], [0], [0, 0, 1, 0], [], []>} : vector<8x8xf32>, vector<8x8xf32>, vector<8x8xf32> -> vector<8x8xf32>
    %cst_185 = arith.constant 0.353553385 : f32
    %565 = vector.broadcast %cst_185 : f32 to vector<8x8xf32>
    %566 = arith.mulf %564, %565 : vector<8x8xf32>
    %567 = arith.addf %566, %519 : vector<8x8xf32>
    %cst_186 = arith.constant dense<0xFF800000> : vector<8xf32>
    %568 = vector.multi_reduction <maximumf>, %567, %cst_186 [1] : vector<8x8xf32> to vector<8xf32>
    %569 = vector.shape_cast %568 : vector<8xf32> to vector<8x1xf32>
    %570 = vector.broadcast %569 : vector<8x1xf32> to vector<8x8xf32>
    %571 = arith.subf %567, %570 : vector<8x8xf32>
    %572 = math.exp %571 : vector<8x8xf32>
    %cst_187 = arith.constant dense<0.000000e+00> : vector<8xf32>
    %573 = vector.multi_reduction <add>, %572, %cst_187 [1] : vector<8x8xf32> to vector<8xf32>
    %574 = vector.shape_cast %573 : vector<8xf32> to vector<8x1xf32>
    %575 = tpu.reciprocal %574 {approx = true} : vector<8x1xf32> -> vector<8x1xf32>
    %576 = vector.broadcast %575 : vector<8x1xf32> to vector<8x8xf32>
    %577 = arith.mulf %572, %576 : vector<8x8xf32>
    %cst_188 = arith.constant dense<0.000000e+00> : vector<8x8xf32>
    %578 = tpu.matmul %577, %563, %cst_188 {dimension_numbers = #tpu.dot_dimension_numbers<[1], [0], [0], [1], [0, 0, 1, 1], [], []>} : vector<8x8xf32>, vector<8x8xf32>, vector<8x8xf32> -> vector<8x8xf32>
    %579 = vector.extract_strided_slice %524 {offsets = [0, 24], sizes = [8, 8], strides = [1, 1]} : vector<8x128xf32> to vector<8x8xf32>
    %580 = vector.extract_strided_slice %524 {offsets = [0, 56], sizes = [8, 8], strides = [1, 1]} : vector<8x128xf32> to vector<8x8xf32>
    %581 = vector.extract_strided_slice %524 {offsets = [0, 88], sizes = [8, 8], strides = [1, 1]} : vector<8x128xf32> to vector<8x8xf32>
    %cst_189 = arith.constant dense<0.000000e+00> : vector<8x8xf32>
    %582 = tpu.matmul %579, %580, %cst_189 {dimension_numbers = #tpu.dot_dimension_numbers<[1], [1], [0], [0], [0, 0, 1, 0], [], []>} : vector<8x8xf32>, vector<8x8xf32>, vector<8x8xf32> -> vector<8x8xf32>
    %cst_190 = arith.constant 0.353553385 : f32
    %583 = vector.broadcast %cst_190 : f32 to vector<8x8xf32>
    %584 = arith.mulf %582, %583 : vector<8x8xf32>
    %585 = arith.addf %584, %519 : vector<8x8xf32>
    %cst_191 = arith.constant dense<0xFF800000> : vector<8xf32>
    %586 = vector.multi_reduction <maximumf>, %585, %cst_191 [1] : vector<8x8xf32> to vector<8xf32>
    %587 = vector.shape_cast %586 : vector<8xf32> to vector<8x1xf32>
    %588 = vector.broadcast %587 : vector<8x1xf32> to vector<8x8xf32>
    %589 = arith.subf %585, %588 : vector<8x8xf32>
    %590 = math.exp %589 : vector<8x8xf32>
    %cst_192 = arith.constant dense<0.000000e+00> : vector<8xf32>
    %591 = vector.multi_reduction <add>, %590, %cst_192 [1] : vector<8x8xf32> to vector<8xf32>
    %592 = vector.shape_cast %591 : vector<8xf32> to vector<8x1xf32>
    %593 = tpu.reciprocal %592 {approx = true} : vector<8x1xf32> -> vector<8x1xf32>
    %594 = vector.broadcast %593 : vector<8x1xf32> to vector<8x8xf32>
    %595 = arith.mulf %590, %594 : vector<8x8xf32>
    %cst_193 = arith.constant dense<0.000000e+00> : vector<8x8xf32>
    %596 = tpu.matmul %595, %581, %cst_193 {dimension_numbers = #tpu.dot_dimension_numbers<[1], [0], [0], [1], [0, 0, 1, 1], [], []>} : vector<8x8xf32>, vector<8x8xf32>, vector<8x8xf32> -> vector<8x8xf32>
    %597 = tpu.concatenate %542, %560, %578, %596 in 1 : vector<8x8xf32>, vector<8x8xf32>, vector<8x8xf32>, vector<8x8xf32> -> vector<8x32xf32>
    %c720 = arith.constant 720 : index
    %c0_194 = arith.constant 0 : index
    %598 = vector.load %arg2[%c720, %c0_194] : memref<968x128xf32, #tpu.memory_space<vmem>>, vector<32x128xf32>
    %cst_195 = arith.constant dense<0.000000e+00> : vector<8x128xf32>
    %599 = tpu.matmul %597, %598, %cst_195 {dimension_numbers = #tpu.dot_dimension_numbers<[1], [0], [0], [1], [0, 0, 1, 1], [], []>} : vector<8x32xf32>, vector<32x128xf32>, vector<8x128xf32> -> vector<8x128xf32>
    %c752 = arith.constant 752 : index
    %c0_196 = arith.constant 0 : index
    %600 = vector.load %arg2[%c752, %c0_196] : memref<968x128xf32, #tpu.memory_space<vmem>>, vector<1x128xf32>
    %601 = vector.broadcast %600 : vector<1x128xf32> to vector<8x128xf32>
    %602 = arith.addf %599, %601 : vector<8x128xf32>
    %603 = vector.extract_strided_slice %602 {offsets = [0, 0], sizes = [8, 32], strides = [1, 1]} : vector<8x128xf32> to vector<8x32xf32>
    %c760 = arith.constant 760 : index
    %c0_197 = arith.constant 0 : index
    %604 = vector.load %arg2[%c760, %c0_197] : memref<968x128xf32, #tpu.memory_space<vmem>>, vector<2x128xf32>
    %605 = vector.extract_strided_slice %604 {offsets = [0, 0], sizes = [2, 32], strides = [1, 1]} : vector<2x128xf32> to vector<2x32xf32>
    %606 = arith.addf %517, %603 : vector<8x32xf32>
    %607 = vector.extract_strided_slice %605 {offsets = [0, 0], sizes = [1, 32], strides = [1, 1]} : vector<2x32xf32> to vector<1x32xf32>
    %608 = vector.extract_strided_slice %605 {offsets = [1, 0], sizes = [1, 32], strides = [1, 1]} : vector<2x32xf32> to vector<1x32xf32>
    %cst_198 = arith.constant dense<0.000000e+00> : vector<8xf32>
    %609 = vector.multi_reduction <add>, %606, %cst_198 [1] : vector<8x32xf32> to vector<8xf32>
    %610 = vector.shape_cast %609 : vector<8xf32> to vector<8x1xf32>
    %cst_199 = arith.constant 3.200000e+01 : f32
    %611 = vector.broadcast %cst_199 : f32 to vector<8x1xf32>
    %612 = arith.divf %610, %611 : vector<8x1xf32>
    %613 = vector.broadcast %612 : vector<8x1xf32> to vector<8x32xf32>
    %614 = arith.subf %606, %613 : vector<8x32xf32>
    %615 = arith.mulf %614, %614 : vector<8x32xf32>
    %cst_200 = arith.constant dense<0.000000e+00> : vector<8xf32>
    %616 = vector.multi_reduction <add>, %615, %cst_200 [1] : vector<8x32xf32> to vector<8xf32>
    %617 = vector.shape_cast %616 : vector<8xf32> to vector<8x1xf32>
    %cst_201 = arith.constant 3.200000e+01 : f32
    %618 = vector.broadcast %cst_201 : f32 to vector<8x1xf32>
    %619 = arith.divf %617, %618 : vector<8x1xf32>
    %620 = vector.broadcast %612 : vector<8x1xf32> to vector<8x32xf32>
    %621 = arith.subf %606, %620 : vector<8x32xf32>
    %cst_202 = arith.constant 9.99999974E-6 : f32
    %622 = vector.broadcast %cst_202 : f32 to vector<8x1xf32>
    %623 = arith.addf %619, %622 : vector<8x1xf32>
    %624 = math.rsqrt %623 : vector<8x1xf32>
    %625 = vector.broadcast %624 : vector<8x1xf32> to vector<8x32xf32>
    %626 = arith.mulf %621, %625 : vector<8x32xf32>
    %627 = vector.broadcast %607 : vector<1x32xf32> to vector<8x32xf32>
    %628 = arith.mulf %626, %627 : vector<8x32xf32>
    %629 = vector.broadcast %608 : vector<1x32xf32> to vector<8x32xf32>
    %630 = arith.addf %628, %629 : vector<8x32xf32>
    %c24 = arith.constant 24 : index
    %c0_203 = arith.constant 0 : index
    %631 = vector.load %arg2[%c24, %c0_203] : memref<968x128xf32, #tpu.memory_space<vmem>>, vector<4x128xf32>
    %632 = vector.extract_strided_slice %631 {offsets = [0, 0], sizes = [4, 8], strides = [1, 1]} : vector<4x128xf32> to vector<4x8xf32>
    %cst_204 = arith.constant dense<0.000000e+00> : vector<4x32xf32>
    %633 = tpu.matmul %632, %630, %cst_204 {dimension_numbers = #tpu.dot_dimension_numbers<[1], [0], [0], [1], [0, 0, 1, 1], [], []>} : vector<4x8xf32>, vector<8x32xf32>, vector<4x32xf32> -> vector<4x32xf32>
    %c768 = arith.constant 768 : index
    %c0_205 = arith.constant 0 : index
    %634 = vector.load %arg2[%c768, %c0_205] : memref<968x128xf32, #tpu.memory_space<vmem>>, vector<32x128xf32>
    %cst_206 = arith.constant dense<0.000000e+00> : vector<4x128xf32>
    %635 = tpu.matmul %633, %634, %cst_206 {dimension_numbers = #tpu.dot_dimension_numbers<[1], [0], [0], [1], [0, 0, 1, 1], [], []>} : vector<4x32xf32>, vector<32x128xf32>, vector<4x128xf32> -> vector<4x128xf32>
    %c800 = arith.constant 800 : index
    %c0_207 = arith.constant 0 : index
    %636 = vector.load %arg2[%c800, %c0_207] : memref<968x128xf32, #tpu.memory_space<vmem>>, vector<1x128xf32>
    %637 = vector.broadcast %636 : vector<1x128xf32> to vector<4x128xf32>
    %638 = arith.addf %635, %637 : vector<4x128xf32>
    %cst_208 = arith.constant 0.000000e+00 : f32
    %639 = vector.broadcast %cst_208 : f32 to vector<4x128xf32>
    %640 = arith.maximumf %638, %639 : vector<4x128xf32>
    %641 = vector.extract_strided_slice %640 {offsets = [0, 0], sizes = [4, 64], strides = [1, 1]} : vector<4x128xf32> to vector<4x64xf32>
    %c808 = arith.constant 808 : index
    %c0_209 = arith.constant 0 : index
    %642 = vector.load %arg2[%c808, %c0_209] : memref<968x128xf32, #tpu.memory_space<vmem>>, vector<64x128xf32>
    %cst_210 = arith.constant dense<0.000000e+00> : vector<4x128xf32>
    %643 = tpu.matmul %641, %642, %cst_210 {dimension_numbers = #tpu.dot_dimension_numbers<[1], [0], [0], [1], [0, 0, 1, 1], [], []>} : vector<4x64xf32>, vector<64x128xf32>, vector<4x128xf32> -> vector<4x128xf32>
    %c872 = arith.constant 872 : index
    %c0_211 = arith.constant 0 : index
    %644 = vector.load %arg2[%c872, %c0_211] : memref<968x128xf32, #tpu.memory_space<vmem>>, vector<1x128xf32>
    %645 = vector.broadcast %644 : vector<1x128xf32> to vector<4x128xf32>
    %646 = arith.addf %643, %645 : vector<4x128xf32>
    %c880 = arith.constant 880 : index
    %c0_212 = arith.constant 0 : index
    %647 = vector.load %arg2[%c880, %c0_212] : memref<968x128xf32, #tpu.memory_space<vmem>>, vector<2x128xf32>
    %648 = vector.extract_strided_slice %647 {offsets = [0, 0], sizes = [2, 32], strides = [1, 1]} : vector<2x128xf32> to vector<2x32xf32>
    %649 = vector.extract_strided_slice %646 {offsets = [0, 0], sizes = [4, 32], strides = [1, 1]} : vector<4x128xf32> to vector<4x32xf32>
    %650 = arith.addf %633, %649 : vector<4x32xf32>
    %651 = vector.extract_strided_slice %648 {offsets = [0, 0], sizes = [1, 32], strides = [1, 1]} : vector<2x32xf32> to vector<1x32xf32>
    %652 = vector.extract_strided_slice %648 {offsets = [1, 0], sizes = [1, 32], strides = [1, 1]} : vector<2x32xf32> to vector<1x32xf32>
    %cst_213 = arith.constant dense<0.000000e+00> : vector<4xf32>
    %653 = vector.multi_reduction <add>, %650, %cst_213 [1] : vector<4x32xf32> to vector<4xf32>
    %654 = vector.shape_cast %653 : vector<4xf32> to vector<4x1xf32>
    %cst_214 = arith.constant 3.200000e+01 : f32
    %655 = vector.broadcast %cst_214 : f32 to vector<4x1xf32>
    %656 = arith.divf %654, %655 : vector<4x1xf32>
    %657 = vector.broadcast %656 : vector<4x1xf32> to vector<4x32xf32>
    %658 = arith.subf %650, %657 : vector<4x32xf32>
    %659 = arith.mulf %658, %658 : vector<4x32xf32>
    %cst_215 = arith.constant dense<0.000000e+00> : vector<4xf32>
    %660 = vector.multi_reduction <add>, %659, %cst_215 [1] : vector<4x32xf32> to vector<4xf32>
    %661 = vector.shape_cast %660 : vector<4xf32> to vector<4x1xf32>
    %cst_216 = arith.constant 3.200000e+01 : f32
    %662 = vector.broadcast %cst_216 : f32 to vector<4x1xf32>
    %663 = arith.divf %661, %662 : vector<4x1xf32>
    %664 = vector.broadcast %656 : vector<4x1xf32> to vector<4x32xf32>
    %665 = arith.subf %650, %664 : vector<4x32xf32>
    %cst_217 = arith.constant 9.99999974E-6 : f32
    %666 = vector.broadcast %cst_217 : f32 to vector<4x1xf32>
    %667 = arith.addf %663, %666 : vector<4x1xf32>
    %668 = math.rsqrt %667 : vector<4x1xf32>
    %669 = vector.broadcast %668 : vector<4x1xf32> to vector<4x32xf32>
    %670 = arith.mulf %665, %669 : vector<4x32xf32>
    %671 = vector.broadcast %651 : vector<1x32xf32> to vector<4x32xf32>
    %672 = arith.mulf %670, %671 : vector<4x32xf32>
    %673 = vector.broadcast %652 : vector<1x32xf32> to vector<4x32xf32>
    %674 = arith.addf %672, %673 : vector<4x32xf32>
    %c928 = arith.constant 928 : index
    %c0_218 = arith.constant 0 : index
    %675 = vector.load %arg2[%c928, %c0_218] : memref<968x128xf32, #tpu.memory_space<vmem>>, vector<32x128xf32>
    %cst_219 = arith.constant dense<0.000000e+00> : vector<4x128xf32>
    %676 = tpu.matmul %674, %675, %cst_219 {dimension_numbers = #tpu.dot_dimension_numbers<[1], [0], [0], [1], [0, 0, 1, 1], [], []>} : vector<4x32xf32>, vector<32x128xf32>, vector<4x128xf32> -> vector<4x128xf32>
    %c960 = arith.constant 960 : index
    %c0_220 = arith.constant 0 : index
    %677 = vector.load %arg2[%c960, %c0_220] : memref<968x128xf32, #tpu.memory_space<vmem>>, vector<1x128xf32>
    %678 = vector.broadcast %677 : vector<1x128xf32> to vector<4x128xf32>
    %679 = arith.addf %676, %678 : vector<4x128xf32>
    %c0_221 = arith.constant 0 : index
    %c0_222 = arith.constant 0 : index
    %680 = vector.load %arg4[%c0_221, %c0_222] : memref<4x128xf32, #tpu.memory_space<vmem>>, vector<4x128xf32>
    tpu.vector_store %arg4[%c0_221, %c0_222], %679 {strides = array<i32>} : memref<4x128xf32, #tpu.memory_space<vmem>>, vector<4x128xf32>,
    return
  }
}

</mosaic_0001>

<llo_original>
// kernel: forward.1
$region0: #{forward.1}
  #allocation0 [shape = 'u32[]', space=smem, size = 0x4, offset = 0x4, fixed_abs, tag = 'smem constant byte address 0x4 - core index']
  #allocation1 [shape = 'u32[144,128]{1,0:T(1,128)}', space=vmem, size = 0x12000, scoped, tag = 'internal scratch']
  %s0 = inlined_call_operand.vmem [shape: f32[16,256], index: 0, kind: input, shape index: {}]
  %s1 = inlined_call_operand.hbm [shape: f32[1056,256], index: 1, kind: input, shape index: {}]
  %s2 = inlined_call_operand.hbm [shape: f32[968,128], index: 2, kind: input, shape index: {}]
  %s3 = inlined_call_operand.vmem [shape: f32[16,128], index: 3, kind: output, shape index: {0}]
  %s4 = inlined_call_operand.vmem [shape: f32[4,128], index: 4, kind: output, shape index: {1}]
  %5 = xla_tuple %s3, %s4
  %s6 = sld [smem:[#allocation0]]
  $region38: #{forward.1} parent=0
    _
  %s8 = ssub.s32 1, %s6
  %s9 = scalar_select 0, %s8, %s6
  $region1: #{forward.1} parent=0
    #allocation2 [shape = 'u8[1081344]{0}', space=vmem, size = 0x108000, scoped, tag = 'input window, operand 1, single buffered']
    #allocation3 [shape = 's32[1]{0}', space=sflag, size = 0x4, scoped, tag = 'scoped memory for forward.1']
    #allocation4 [shape = 'u8[495616]{0}', space=vmem, size = 0x79000, scoped, tag = 'input window, operand 2, single buffered']
    #allocation5 [shape = 's32[1]{0}', space=sflag, size = 0x4, scoped, tag = 'scoped memory for forward.1']
    %10 = vsyncpa [#allocation3], 0
    %11 = vsyncpa [#allocation5], 0
    // Predicated region
    $region2: #{forward.1} parent=1 // pred_check
      _
    $region3: #{forward.1} parent=1 // pred_check_branch
      %13 = sbr.rel (0) target = $region5
    $region4: #{forward.1} parent=1 // pred_region
      _
    $region5: #{forward.1} parent=1 // pred_fallthru
      _
    // Predicated region
    $region6: #{forward.1} parent=1 // pred_check
      _
    $region7: #{forward.1} parent=1 // pred_check_branch
      %15 = sbr.rel (0) target = $region9
    $region8: #{forward.1} parent=1 // pred_region
      %s17 = ssub.s32 33792, 33792
      %18 = vsyncadd [#allocation3], %s17
      %s19 = sshll.u32 [#allocation2], 4
      %s20 = int_to_ptr.vmem [resolvable:$true] %s19
      %25 = dma.hbm_to_vmem [thread:$0]  %s1, 33792, %s20, [#allocation3], 256, 256, 16
    $region9: #{forward.1} parent=1 // pred_fallthru
      _
    // Predicated region
    $region10: #{forward.1} parent=1 // pred_check
      _
    $region11: #{forward.1} parent=1 // pred_check_branch
      %27 = sbr.rel (0) target = $region13
    $region12: #{forward.1} parent=1 // pred_region
      %s29 = ssub.s32 15488, 15488
      %30 = vsyncadd [#allocation5], %s29
      %s31 = sshll.u32 [#allocation4], 4
      %s32 = int_to_ptr.vmem [resolvable:$true] %s31
      %37 = dma.hbm_to_vmem [thread:$0]  %s2, 15488, %s32, [#allocation5], 128, 128, 8
    $region13: #{forward.1} parent=1 // pred_fallthru
      _
    // Predicated region
    $region14: #{forward.1} parent=1 // pred_check
      _
    $region15: #{forward.1} parent=1 // pred_check_branch
      %39 = sbr.rel (0) target = $region17
    $region16: #{forward.1} parent=1 // pred_region
      %40 = dma.done [#allocation3], 33792
    $region17: #{forward.1} parent=1 // pred_fallthru
      _
    // Predicated region
    $region18: #{forward.1} parent=1 // pred_check
      _
    $region19: #{forward.1} parent=1 // pred_check_branch
      %42 = sbr.rel (0) target = $region21
    $region20: #{forward.1} parent=1 // pred_region
      %43 = dma.done [#allocation5], 15488
    $region21: #{forward.1} parent=1 // pred_fallthru
      _
    %v44 = vld [vmem:[%s0] sm:$0xff]
    %v45 = vld [vmem:[%s0 + $0x8] sm:$0xff]
    %v46 = vld [vmem:[%s0 + $0x10] sm:$0xff]
    %v47 = vld [vmem:[%s0 + $0x18] sm:$0xff]
    %v48 = vld [vmem:[#allocation2] sm:$0xff]
    %v49 = vld [vmem:[#allocation2 + $0x8] sm:$0xff]
    %v50 = vld [vmem:[#allocation2 + $0x10] sm:$0xff]
    %v51 = vld [vmem:[#allocation2 + $0x18] sm:$0xff]
    %v52 = vld [vmem:[#allocation2 + $0x20] sm:$0xff]
    %v53 = vld [vmem:[#allocation2 + $0x28] sm:$0xff]
    %v54 = vld [vmem:[#allocation2 + $0x30] sm:$0xff]
    %v55 = vld [vmem:[#allocation2 + $0x38] sm:$0xff]
    %v56 = vld [vmem:[#allocation2 + $0x40] sm:$0xff]
    %v57 = vld [vmem:[#allocation2 + $0x48] sm:$0xff]
    %v58 = vld [vmem:[#allocation2 + $0x50] sm:$0xff]
    %v59 = vld [vmem:[#allocation2 + $0x58] sm:$0xff]
    %v60 = vld [vmem:[#allocation2 + $0x60] sm:$0xff]
    %v61 = vld [vmem:[#allocation2 + $0x68] sm:$0xff]
    %v62 = vld [vmem:[#allocation2 + $0x70] sm:$0xff]
    %v63 = vld [vmem:[#allocation2 + $0x78] sm:$0xff]
    %v64 = vld [vmem:[#allocation2 + $0x80] sm:$0xff]
    %v65 = vld [vmem:[#allocation2 + $0x88] sm:$0xff]
    %v66 = vld [vmem:[#allocation2 + $0x90] sm:$0xff]
    %v67 = vld [vmem:[#allocation2 + $0x98] sm:$0xff]
    %v68 = vld [vmem:[#allocation2 + $0xa0] sm:$0xff]
    %v69 = vld [vmem:[#allocation2 + $0xa8] sm:$0xff]
    %v70 = vld [vmem:[#allocation2 + $0xb0] sm:$0xff]
    %v71 = vld [vmem:[#allocation2 + $0xb8] sm:$0xff]
    %v72 = vld [vmem:[#allocation2 + $0xc0] sm:$0xff]
    %v73 = vld [vmem:[#allocation2 + $0xc8] sm:$0xff]
    %v74 = vld [vmem:[#allocation2 + $0xd0] sm:$0xff]
    %v75 = vld [vmem:[#allocation2 + $0xd8] sm:$0xff]
    %v76 = vld [vmem:[#allocation2 + $0xe0] sm:$0xff]
    %v77 = vld [vmem:[#allocation2 + $0xe8] sm:$0xff]
    %v78 = vld [vmem:[#allocation2 + $0xf0] sm:$0xff]
    %v79 = vld [vmem:[#allocation2 + $0xf8] sm:$0xff]
    %v80 = vld [vmem:[#allocation2 + $0x100] sm:$0xff]
    %v81 = vld [vmem:[#allocation2 + $0x108] sm:$0xff]
    %v82 = vld [vmem:[#allocation2 + $0x110] sm:$0xff]
    %v83 = vld [vmem:[#allocation2 + $0x118] sm:$0xff]
    %v84 = vld [vmem:[#allocation2 + $0x120] sm:$0xff]
    %v85 = vld [vmem:[#allocation2 + $0x128] sm:$0xff]
    %v86 = vld [vmem:[#allocation2 + $0x130] sm:$0xff]
    %v87 = vld [vmem:[#allocation2 + $0x138] sm:$0xff]
    %v88 = vld [vmem:[#allocation2 + $0x140] sm:$0xff]
    %v89 = vld [vmem:[#allocation2 + $0x148] sm:$0xff]
    %v90 = vld [vmem:[#allocation2 + $0x150] sm:$0xff]
    %v91 = vld [vmem:[#allocation2 + $0x158] sm:$0xff]
    %v92 = vld [vmem:[#allocation2 + $0x160] sm:$0xff]
    %v93 = vld [vmem:[#allocation2 + $0x168] sm:$0xff]
    %v94 = vld [vmem:[#allocation2 + $0x170] sm:$0xff]
    %v95 = vld [vmem:[#allocation2 + $0x178] sm:$0xff]
    %v96 = vld [vmem:[#allocation2 + $0x180] sm:$0xff]
    %v97 = vld [vmem:[#allocation2 + $0x188] sm:$0xff]
    %v98 = vld [vmem:[#allocation2 + $0x190] sm:$0xff]
    %v99 = vld [vmem:[#allocation2 + $0x198] sm:$0xff]
    %v100 = vld [vmem:[#allocation2 + $0x1a0] sm:$0xff]
    %v101 = vld [vmem:[#allocation2 + $0x1a8] sm:$0xff]
    %v102 = vld [vmem:[#allocation2 + $0x1b0] sm:$0xff]
    %v103 = vld [vmem:[#allocation2 + $0x1b8] sm:$0xff]
    %v104 = vld [vmem:[#allocation2 + $0x1c0] sm:$0xff]
    %v105 = vld [vmem:[#allocation2 + $0x1c8] sm:$0xff]
    %v106 = vld [vmem:[#allocation2 + $0x1d0] sm:$0xff]
    %v107 = vld [vmem:[#allocation2 + $0x1d8] sm:$0xff]
    %v108 = vld [vmem:[#allocation2 + $0x1e0] sm:$0xff]
    %v109 = vld [vmem:[#allocation2 + $0x1e8] sm:$0xff]
    %v110 = vld [vmem:[#allocation2 + $0x1f0] sm:$0xff]
    %v111 = vld [vmem:[#allocation2 + $0x1f8] sm:$0xff]
    %s112 = scalar_lea.vmem [#allocation2], 512
    %v113 = vld [vmem:[%s112] ss:$8 sm:$0x3]
    %v115 = vlaneseq
    %v116 = vshrl.u32 %v115, 7
    %v117 = vsub.s32 0, %v116
    %v118 = vrot.slane %v113, %v117
    %v119 = vlaneseq
    %v120 = vshrl.u32 %v119, 7
    %v121 = vsub.s32 1, %v120
    %v122 = vrot.slane %v113, %v121
    %125 = vmatprep.subr.mxu0 %v49
    %126 = vmatpush1.msra.mxu0 %v48
    %127 = vmatprep.subr.mxu0 %v51
    %128 = vmatpush1.msra.mxu0 %v50
    %129 = vmatprep.subr.mxu0 %v53
    %130 = vmatpush1.msra.mxu0 %v52
    %131 = vmatprep.subr.mxu0 %v55
    %132 = vmatpush1.msra.mxu0 %v54
    %133 = vmatprep.subr.mxu0 %v57
    %134 = vmatpush1.msra.mxu0 %v56
    %135 = vmatprep.subr.mxu0 %v59
    %136 = vmatpush1.msra.mxu0 %v58
    %137 = vmatprep.subr.mxu0 %v61
    %138 = vmatpush1.msra.mxu0 %v60
    %139 = vmatprep.subr.mxu0 %v63
    %140 = vmatpush1.msra.mxu0 %v62
    %141 = vmatprep.subr.mxu0 %v65
    %142 = vmatpush1.msra.mxu0 %v64
    %143 = vmatprep.subr.mxu0 %v67
    %144 = vmatpush1.msra.mxu0 %v66
    %145 = vmatprep.subr.mxu0 %v69
    %146 = vmatpush1.msra.mxu0 %v68
    %147 = vmatprep.subr.mxu0 %v71
    %148 = vmatpush1.msra.mxu0 %v70
    %149 = vmatprep.subr.mxu0 %v73
    %150 = vmatpush1.msra.mxu0 %v72
    %151 = vmatprep.subr.mxu0 %v75
    %152 = vmatpush1.msra.mxu0 %v74
    %153 = vmatprep.subr.mxu0 %v77
    %154 = vmatpush1.msra.mxu0 %v76
    %155 = vmatprep.subr.mxu0 %v79
    %156 = vmatpush1.msra.mxu0 %v78
    %157 = vmatprep.subr.mxu0 %v81
    %158 = vmatpush1.msra.mxu0 %v80
    %159 = vmatprep.subr.mxu0 %v83
    %160 = vmatpush1.msra.mxu0 %v82
    %161 = vmatprep.subr.mxu0 %v85
    %162 = vmatpush1.msra.mxu0 %v84
    %163 = vmatprep.subr.mxu0 %v87
    %164 = vmatpush1.msra.mxu0 %v86
    %165 = vmatprep.subr.mxu0 %v89
    %166 = vmatpush1.msra.mxu0 %v88
    %167 = vmatprep.subr.mxu0 %v91
    %168 = vmatpush1.msra.mxu0 %v90
    %169 = vmatprep.subr.mxu0 %v93
    %170 = vmatpush1.msra.mxu0 %v92
    %171 = vmatprep.subr.mxu0 %v95
    %172 = vmatpush1.msra.mxu0 %v94
    %173 = vmatprep.subr.mxu0 %v97
    %174 = vmatpush1.msra.mxu0 %v96
    %175 = vmatprep.subr.mxu0 %v99
    %176 = vmatpush1.msra.mxu0 %v98
    %177 = vmatprep.subr.mxu0 %v101
    %178 = vmatpush1.msra.mxu0 %v100
    %179 = vmatprep.subr.mxu0 %v103
    %180 = vmatpush1.msra.mxu0 %v102
    %181 = vmatprep.subr.mxu0 %v105
    %182 = vmatpush1.msra.mxu0 %v104
    %183 = vmatprep.subr.mxu0 %v107
    %184 = vmatpush1.msra.mxu0 %v106
    %185 = vmatprep.subr.mxu0 %v109
    %186 = vmatpush1.msra.mxu0 %v108
    %187 = vmatprep.subr.mxu0 %v111
    %188 = vmatpush1.msra.mxu0 %v110
    %189 = vmatprep.mubr.f32.mxu0 %v45
    %190 = vmatmul.mubr.f32.gmra.mrb[0].mxu0 %v44
    %v191 = vpop.f32.mrb[0].mxu0
    %v192 = vadd.f32 %v118, %v191
    %v193 = vpop.f32.mrb[0].mxu0
    %v194 = vadd.f32 %v122, %v193
    %195 = vmatprep.mubr.f32.mxu0 %v47
    %196 = vmatmul.mubr.f32.gmra.mrb[0].mxu0 %v46
    %v197 = vpop.f32.mrb[0].mxu0
    %v198 = vadd.f32 %v118, %v197
    %v199 = vpop.f32.mrb[0].mxu0
    %v200 = vadd.f32 %v122, %v199
    %201 = vdwg.mxu0
    %vm202 = vcmp.ge.f32.partialorder %v192, 0.0
    %vm203 = vcmp.ge.f32.partialorder %v194, 0.0
    %vm204 = vcmp.ge.f32.partialorder %v198, 0.0
    %vm205 = vcmp.ge.f32.partialorder %v200, 0.0
    %v206 = vmul.f32 %v192, 0.2
    %v207 = vmul.f32 %v194, 0.2
    %v208 = vmul.f32 %v198, 0.2
    %v209 = vmul.f32 %v200, 0.2
    %v210 = vsel %vm202, %v192, %v206
    %v211 = vsel %vm203, %v194, %v207
    %v212 = vsel %vm204, %v198, %v208
    %v213 = vsel %vm205, %v200, %v209
    %v214 = vld [vmem:[#allocation2 + $0x210] sm:$0xff]
    %v215 = vld [vmem:[#allocation2 + $0x218] sm:$0xff]
    %v216 = vld [vmem:[#allocation2 + $0x220] sm:$0xff]
    %v217 = vld [vmem:[#allocation2 + $0x228] sm:$0xff]
    %v218 = vld [vmem:[#allocation2 + $0x230] sm:$0xff]
    %v219 = vld [vmem:[#allocation2 + $0x238] sm:$0xff]
    %v220 = vld [vmem:[#allocation2 + $0x240] sm:$0xff]
    %v221 = vld [vmem:[#allocation2 + $0x248] sm:$0xff]
    %v222 = vld [vmem:[#allocation2 + $0x250] sm:$0xff]
    %v223 = vld [vmem:[#allocation2 + $0x258] sm:$0xff]
    %v224 = vld [vmem:[#allocation2 + $0x260] sm:$0xff]
    %v225 = vld [vmem:[#allocation2 + $0x268] sm:$0xff]
    %v226 = vld [vmem:[#allocation2 + $0x270] sm:$0xff]
    %v227 = vld [vmem:[#allocation2 + $0x278] sm:$0xff]
    %v228 = vld [vmem:[#allocation2 + $0x280] sm:$0xff]
    %v229 = vld [vmem:[#allocation2 + $0x288] sm:$0xff]
    %v230 = vld [vmem:[#allocation2 + $0x290] sm:$0xff]
    %v231 = vld [vmem:[#allocation2 + $0x298] sm:$0xff]
    %v232 = vld [vmem:[#allocation2 + $0x2a0] sm:$0xff]
    %v233 = vld [vmem:[#allocation2 + $0x2a8] sm:$0xff]
    %v234 = vld [vmem:[#allocation2 + $0x2b0] sm:$0xff]
    %v235 = vld [vmem:[#allocation2 + $0x2b8] sm:$0xff]
    %v236 = vld [vmem:[#allocation2 + $0x2c0] sm:$0xff]
    %v237 = vld [vmem:[#allocation2 + $0x2c8] sm:$0xff]
    %v238 = vld [vmem:[#allocation2 + $0x2d0] sm:$0xff]
    %v239 = vld [vmem:[#allocation2 + $0x2d8] sm:$0xff]
    %v240 = vld [vmem:[#allocation2 + $0x2e0] sm:$0xff]
    %v241 = vld [vmem:[#allocation2 + $0x2e8] sm:$0xff]
    %v242 = vld [vmem:[#allocation2 + $0x2f0] sm:$0xff]
    %v243 = vld [vmem:[#allocation2 + $0x2f8] sm:$0xff]
    %v244 = vld [vmem:[#allocation2 + $0x300] sm:$0xff]
    %v245 = vld [vmem:[#allocation2 + $0x308] sm:$0xff]
    %v246 = vld [vmem:[#allocation2 + $0x310] sm:$0xff]
    %v247 = vld [vmem:[#allocation2 + $0x318] sm:$0xff]
    %v248 = vld [vmem:[#allocation2 + $0x320] sm:$0xff]
    %v249 = vld [vmem:[#allocation2 + $0x328] sm:$0xff]
    %v250 = vld [vmem:[#allocation2 + $0x330] sm:$0xff]
    %v251 = vld [vmem:[#allocation2 + $0x338] sm:$0xff]
    %v252 = vld [vmem:[#allocation2 + $0x340] sm:$0xff]
    %v253 = vld [vmem:[#allocation2 + $0x348] sm:$0xff]
    %v254 = vld [vmem:[#allocation2 + $0x350] sm:$0xff]
    %v255 = vld [vmem:[#allocation2 + $0x358] sm:$0xff]
    %v256 = vld [vmem:[#allocation2 + $0x360] sm:$0xff]
    %v257 = vld [vmem:[#allocation2 + $0x368] sm:$0xff]
    %v258 = vld [vmem:[#allocation2 + $0x370] sm:$0xff]
    %v259 = vld [vmem:[#allocation2 + $0x378] sm:$0xff]
    %v260 = vld [vmem:[#allocation2 + $0x380] sm:$0xff]
    %v261 = vld [vmem:[#allocation2 + $0x388] sm:$0xff]
    %v262 = vld [vmem:[#allocation2 + $0x390] sm:$0xff]
    %v263 = vld [vmem:[#allocation2 + $0x398] sm:$0xff]
    %v264 = vld [vmem:[#allocation2 + $0x3a0] sm:$0xff]
    %v265 = vld [vmem:[#allocation2 + $0x3a8] sm:$0xff]
    %v266 = vld [vmem:[#allocation2 + $0x3b0] sm:$0xff]
    %v267 = vld [vmem:[#allocation2 + $0x3b8] sm:$0xff]
    %v268 = vld [vmem:[#allocation2 + $0x3c0] sm:$0xff]
    %v269 = vld [vmem:[#allocation2 + $0x3c8] sm:$0xff]
    %v270 = vld [vmem:[#allocation2 + $0x3d0] sm:$0xff]
    %v271 = vld [vmem:[#allocation2 + $0x3d8] sm:$0xff]
    %v272 = vld [vmem:[#allocation2 + $0x3e0] sm:$0xff]
    %v273 = vld [vmem:[#allocation2 + $0x3e8] sm:$0xff]
    %v274 = vld [vmem:[#allocation2 + $0x3f0] sm:$0xff]
    %v275 = vld [vmem:[#allocation2 + $0x3f8] sm:$0xff]
    %v276 = vld [vmem:[#allocation2 + $0x400] sm:$0xff]
    %v277 = vld [vmem:[#allocation2 + $0x408] sm:$0xff]
    %s278 = scalar_lea.vmem [#allocation2], 1040
    %v279 = vld [vmem:[%s278] ss:$8 sm:$0x3]
    %v281 = vlaneseq
    %v282 = vshrl.u32 %v281, 7
    %v283 = vsub.s32 0, %v282
    %v284 = vrot.slane %v279, %v283
    %v285 = vlaneseq
    %v286 = vshrl.u32 %v285, 7
    %v287 = vsub.s32 1, %v286
    %v288 = vrot.slane %v279, %v287
    %291 = vmatprep.subr.mxu0 %v215
    %292 = vmatpush1.msra.mxu0 %v214
    %293 = vmatprep.subr.mxu0 %v217
    %294 = vmatpush1.msra.mxu0 %v216
    %295 = vmatprep.subr.mxu0 %v219
    %296 = vmatpush1.msra.mxu0 %v218
    %297 = vmatprep.subr.mxu0 %v221
    %298 = vmatpush1.msra.mxu0 %v220
    %299 = vmatprep.subr.mxu0 %v223
    %300 = vmatpush1.msra.mxu0 %v222
    %301 = vmatprep.subr.mxu0 %v225
    %302 = vmatpush1.msra.mxu0 %v224
    %303 = vmatprep.subr.mxu0 %v227
    %304 = vmatpush1.msra.mxu0 %v226
    %305 = vmatprep.subr.mxu0 %v229
    %306 = vmatpush1.msra.mxu0 %v228
    %307 = vmatprep.subr.mxu0 %v231
    %308 = vmatpush1.msra.mxu0 %v230
    %309 = vmatprep.subr.mxu0 %v233
    %310 = vmatpush1.msra.mxu0 %v232
    %311 = vmatprep.subr.mxu0 %v235
    %312 = vmatpush1.msra.mxu0 %v234
    %313 = vmatprep.subr.mxu0 %v237
    %314 = vmatpush1.msra.mxu0 %v236
    %315 = vmatprep.subr.mxu0 %v239
    %316 = vmatpush1.msra.mxu0 %v238
    %317 = vmatprep.subr.mxu0 %v241
    %318 = vmatpush1.msra.mxu0 %v240
    %319 = vmatprep.subr.mxu0 %v243
    %320 = vmatpush1.msra.mxu0 %v242
    %321 = vmatprep.subr.mxu0 %v245
    %322 = vmatpush1.msra.mxu0 %v244
    %323 = vmatprep.subr.mxu0 %v247
    %324 = vmatpush1.msra.mxu0 %v246
    %325 = vmatprep.subr.mxu0 %v249
    %326 = vmatpush1.msra.mxu0 %v248
    %327 = vmatprep.subr.mxu0 %v251
    %328 = vmatpush1.msra.mxu0 %v250
    %329 = vmatprep.subr.mxu0 %v253
    %330 = vmatpush1.msra.mxu0 %v252
    %331 = vmatprep.subr.mxu0 %v255
    %332 = vmatpush1.msra.mxu0 %v254
    %333 = vmatprep.subr.mxu0 %v257
    %334 = vmatpush1.msra.mxu0 %v256
    %335 = vmatprep.subr.mxu0 %v259
    %336 = vmatpush1.msra.mxu0 %v258
    %337 = vmatprep.subr.mxu0 %v261
    %338 = vmatpush1.msra.mxu0 %v260
    %339 = vmatprep.subr.mxu0 %v263
    %340 = vmatpush1.msra.mxu0 %v262
    %341 = vmatprep.subr.mxu0 %v265
    %342 = vmatpush1.msra.mxu0 %v264
    %343 = vmatprep.subr.mxu0 %v267
    %344 = vmatpush1.msra.mxu0 %v266
    %345 = vmatprep.subr.mxu0 %v269
    %346 = vmatpush1.msra.mxu0 %v268
    %347 = vmatprep.subr.mxu0 %v271
    %348 = vmatpush1.msra.mxu0 %v270
    %349 = vmatprep.subr.mxu0 %v273
    %350 = vmatpush1.msra.mxu0 %v272
    %351 = vmatprep.subr.mxu0 %v275
    %352 = vmatpush1.msra.mxu0 %v274
    %353 = vmatprep.subr.mxu0 %v277
    %354 = vmatpush1.msra.mxu0 %v276
    %355 = vmatprep.mubr.f32.mxu0 %v211
    %356 = vmatmul.mubr.f32.gmra.mrb[0].mxu0 %v210
    %v357 = vpop.f32.mrb[0].mxu0
    %v358 = vadd.f32 %v284, %v357
    %v359 = vpop.f32.mrb[0].mxu0
    %v360 = vadd.f32 %v288, %v359
    %361 = vmatprep.mubr.f32.mxu0 %v213
    %362 = vmatmul.mubr.f32.gmra.mrb[0].mxu0 %v212
    %v363 = vpop.f32.mrb[0].mxu0
    %v364 = vadd.f32 %v284, %v363
    %v365 = vpop.f32.mrb[0].mxu0
    %v366 = vadd.f32 %v288, %v365
    %367 = vdwg.mxu0
    %vm368 = vcmp.ge.f32.partialorder %v358, 0.0
    %vm369 = vcmp.ge.f32.partialorder %v360, 0.0
    %vm370 = vcmp.ge.f32.partialorder %v364, 0.0
    %vm371 = vcmp.ge.f32.partialorder %v366, 0.0
    %v372 = vmul.f32 %v358, 0.2
    %v373 = vmul.f32 %v360, 0.2
    %v374 = vmul.f32 %v364, 0.2
    %v375 = vmul.f32 %v366, 0.2
    %v376 = vsel %vm368, %v358, %v372
    %v377 = vsel %vm369, %v360, %v373
    %v378 = vsel %vm370, %v364, %v374
    %v379 = vsel %vm371, %v366, %v375
    %v380 = vld [vmem:[#allocation2 + $0x420] sm:$0xff]
    %v381 = vld [vmem:[#allocation2 + $0x428] sm:$0xff]
    %v382 = vld [vmem:[#allocation2 + $0x430] sm:$0xff]
    %v383 = vld [vmem:[#allocation2 + $0x438] sm:$0xff]
    %v384 = vld [vmem:[#allocation2 + $0x440] sm:$0xff]
    %v385 = vld [vmem:[#allocation2 + $0x448] sm:$0xff]
    %v386 = vld [vmem:[#allocation2 + $0x450] sm:$0xff]
    %v387 = vld [vmem:[#allocation2 + $0x458] sm:$0xff]
    %v388 = vld [vmem:[#allocation2 + $0x460] sm:$0xff]
    %v389 = vld [vmem:[#allocation2 + $0x468] sm:$0xff]
    %v390 = vld [vmem:[#allocation2 + $0x470] sm:$0xff]
    %v391 = vld [vmem:[#allocation2 + $0x478] sm:$0xff]
    %v392 = vld [vmem:[#allocation2 + $0x480] sm:$0xff]
    %v393 = vld [vmem:[#allocation2 + $0x488] sm:$0xff]
    %v394 = vld [vmem:[#allocation2 + $0x490] sm:$0xff]
    %v395 = vld [vmem:[#allocation2 + $0x498] sm:$0xff]
    %v396 = vld [vmem:[#allocation2 + $0x4a0] sm:$0xff]
    %v397 = vld [vmem:[#allocation2 + $0x4a8] sm:$0xff]
    %v398 = vld [vmem:[#allocation2 + $0x4b0] sm:$0xff]
    %v399 = vld [vmem:[#allocation2 + $0x4b8] sm:$0xff]
    %v400 = vld [vmem:[#allocation2 + $0x4c0] sm:$0xff]
    %v401 = vld [vmem:[#allocation2 + $0x4c8] sm:$0xff]
    %v402 = vld [vmem:[#allocation2 + $0x4d0] sm:$0xff]
    %v403 = vld [vmem:[#allocation2 + $0x4d8] sm:$0xff]
    %v404 = vld [vmem:[#allocation2 + $0x4e0] sm:$0xff]
    %v405 = vld [vmem:[#allocation2 + $0x4e8] sm:$0xff]
    %v406 = vld [vmem:[#allocation2 + $0x4f0] sm:$0xff]
    %v407 = vld [vmem:[#allocation2 + $0x4f8] sm:$0xff]
    %v408 = vld [vmem:[#allocation2 + $0x500] sm:$0xff]
    %v409 = vld [vmem:[#allocation2 + $0x508] sm:$0xff]
    %v410 = vld [vmem:[#allocation2 + $0x510] sm:$0xff]
    %v411 = vld [vmem:[#allocation2 + $0x518] sm:$0xff]
    %v412 = vld [vmem:[#allocation2 + $0x520] sm:$0xff]
    %v413 = vld [vmem:[#allocation2 + $0x528] sm:$0xff]
    %v414 = vld [vmem:[#allocation2 + $0x530] sm:$0xff]
    %v415 = vld [vmem:[#allocation2 + $0x538] sm:$0xff]
    %v416 = vld [vmem:[#allocation2 + $0x540] sm:$0xff]
    %v417 = vld [vmem:[#allocation2 + $0x548] sm:$0xff]
    %v418 = vld [vmem:[#allocation2 + $0x550] sm:$0xff]
    %v419 = vld [vmem:[#allocation2 + $0x558] sm:$0xff]
    %v420 = vld [vmem:[#allocation2 + $0x560] sm:$0xff]
    %v421 = vld [vmem:[#allocation2 + $0x568] sm:$0xff]
    %v422 = vld [vmem:[#allocation2 + $0x570] sm:$0xff]
    %v423 = vld [vmem:[#allocation2 + $0x578] sm:$0xff]
    %v424 = vld [vmem:[#allocation2 + $0x580] sm:$0xff]
    %v425 = vld [vmem:[#allocation2 + $0x588] sm:$0xff]
    %v426 = vld [vmem:[#allocation2 + $0x590] sm:$0xff]
    %v427 = vld [vmem:[#allocation2 + $0x598] sm:$0xff]
    %v428 = vld [vmem:[#allocation2 + $0x5a0] sm:$0xff]
    %v429 = vld [vmem:[#allocation2 + $0x5a8] sm:$0xff]
    %v430 = vld [vmem:[#allocation2 + $0x5b0] sm:$0xff]
    %v431 = vld [vmem:[#allocation2 + $0x5b8] sm:$0xff]
    %v432 = vld [vmem:[#allocation2 + $0x5c0] sm:$0xff]
    %v433 = vld [vmem:[#allocation2 + $0x5c8] sm:$0xff]
    %v434 = vld [vmem:[#allocation2 + $0x5d0] sm:$0xff]
    %v435 = vld [vmem:[#allocation2 + $0x5d8] sm:$0xff]
    %v436 = vld [vmem:[#allocation2 + $0x5e0] sm:$0xff]
    %v437 = vld [vmem:[#allocation2 + $0x5e8] sm:$0xff]
    %v438 = vld [vmem:[#allocation2 + $0x5f0] sm:$0xff]
    %v439 = vld [vmem:[#allocation2 + $0x5f8] sm:$0xff]
    %v440 = vld [vmem:[#allocation2 + $0x600] sm:$0xff]
    %v441 = vld [vmem:[#allocation2 + $0x608] sm:$0xff]
    %v442 = vld [vmem:[#allocation2 + $0x610] sm:$0xff]
    %v443 = vld [vmem:[#allocation2 + $0x618] sm:$0xff]
    %s444 = scalar_lea.vmem [#allocation2], 1568
    %v445 = vld [vmem:[%s444] ss:$8 sm:$0x3]
    %v447 = vlaneseq
    %v448 = vshrl.u32 %v447, 7
    %v449 = vsub.s32 0, %v448
    %v450 = vrot.slane %v445, %v449
    %v451 = vlaneseq
    %v452 = vshrl.u32 %v451, 7
    %v453 = vsub.s32 1, %v452
    %v454 = vrot.slane %v445, %v453
    %457 = vmatprep.subr.mxu0 %v381
    %458 = vmatpush1.msra.mxu0 %v380
    %459 = vmatprep.subr.mxu0 %v383
    %460 = vmatpush1.msra.mxu0 %v382
    %461 = vmatprep.subr.mxu0 %v385
    %462 = vmatpush1.msra.mxu0 %v384
    %463 = vmatprep.subr.mxu0 %v387
    %464 = vmatpush1.msra.mxu0 %v386
    %465 = vmatprep.subr.mxu0 %v389
    %466 = vmatpush1.msra.mxu0 %v388
    %467 = vmatprep.subr.mxu0 %v391
    %468 = vmatpush1.msra.mxu0 %v390
    %469 = vmatprep.subr.mxu0 %v393
    %470 = vmatpush1.msra.mxu0 %v392
    %471 = vmatprep.subr.mxu0 %v395
    %472 = vmatpush1.msra.mxu0 %v394
    %473 = vmatprep.subr.mxu0 %v397
    %474 = vmatpush1.msra.mxu0 %v396
    %475 = vmatprep.subr.mxu0 %v399
    %476 = vmatpush1.msra.mxu0 %v398
    %477 = vmatprep.subr.mxu0 %v401
    %478 = vmatpush1.msra.mxu0 %v400
    %479 = vmatprep.subr.mxu0 %v403
    %480 = vmatpush1.msra.mxu0 %v402
    %481 = vmatprep.subr.mxu0 %v405
    %482 = vmatpush1.msra.mxu0 %v404
    %483 = vmatprep.subr.mxu0 %v407
    %484 = vmatpush1.msra.mxu0 %v406
    %485 = vmatprep.subr.mxu0 %v409
    %486 = vmatpush1.msra.mxu0 %v408
    %487 = vmatprep.subr.mxu0 %v411
    %488 = vmatpush1.msra.mxu0 %v410
    %489 = vmatprep.subr.mxu0 %v413
    %490 = vmatpush1.msra.mxu0 %v412
    %491 = vmatprep.subr.mxu0 %v415
    %492 = vmatpush1.msra.mxu0 %v414
    %493 = vmatprep.subr.mxu0 %v417
    %494 = vmatpush1.msra.mxu0 %v416
    %495 = vmatprep.subr.mxu0 %v419
    %496 = vmatpush1.msra.mxu0 %v418
    %497 = vmatprep.subr.mxu0 %v421
    %498 = vmatpush1.msra.mxu0 %v420
    %499 = vmatprep.subr.mxu0 %v423
    %500 = vmatpush1.msra.mxu0 %v422
    %501 = vmatprep.subr.mxu0 %v425
    %502 = vmatpush1.msra.mxu0 %v424
    %503 = vmatprep.subr.mxu0 %v427
    %504 = vmatpush1.msra.mxu0 %v426
    %505 = vmatprep.subr.mxu0 %v429
    %506 = vmatpush1.msra.mxu0 %v428
    %507 = vmatprep.subr.mxu0 %v431
    %508 = vmatpush1.msra.mxu0 %v430
    %509 = vmatprep.subr.mxu0 %v433
    %510 = vmatpush1.msra.mxu0 %v432
    %511 = vmatprep.subr.mxu0 %v435
    %512 = vmatpush1.msra.mxu0 %v434
    %513 = vmatprep.subr.mxu0 %v437
    %514 = vmatpush1.msra.mxu0 %v436
    %515 = vmatprep.subr.mxu0 %v439
    %516 = vmatpush1.msra.mxu0 %v438
    %517 = vmatprep.subr.mxu0 %v441
    %518 = vmatpush1.msra.mxu0 %v440
    %519 = vmatprep.subr.mxu0 %v443
    %520 = vmatpush1.msra.mxu0 %v442
    %521 = vmatprep.mubr.f32.mxu0 %v377
    %522 = vmatmul.mubr.f32.gmra.mrb[0].mxu0 %v376
    %v523 = vpop.f32.mrb[0].mxu0
    %v524 = vadd.f32 %v450, %v523
    %v525 = vpop.f32.mrb[0].mxu0
    %v526 = vadd.f32 %v454, %v525
    %527 = vmatprep.mubr.f32.mxu0 %v379
    %528 = vmatmul.mubr.f32.gmra.mrb[0].mxu0 %v378
    %v529 = vpop.f32.mrb[0].mxu0
    %v530 = vadd.f32 %v450, %v529
    %v531 = vpop.f32.mrb[0].mxu0
    %v532 = vadd.f32 %v454, %v531
    %533 = vdwg.mxu0
    %vm534 = vcmp.ge.f32.partialorder %v524, 0.0
    %vm535 = vcmp.ge.f32.partialorder %v526, 0.0
    %vm536 = vcmp.ge.f32.partialorder %v530, 0.0
    %vm537 = vcmp.ge.f32.partialorder %v532, 0.0
    %v538 = vmul.f32 %v524, 0.2
    %v539 = vmul.f32 %v526, 0.2
    %v540 = vmul.f32 %v530, 0.2
    %v541 = vmul.f32 %v532, 0.2
    %v542 = vsel %vm534, %v524, %v538
    %v543 = vsel %vm535, %v526, %v539
    %v544 = vsel %vm536, %v530, %v540
    %v545 = vsel %vm537, %v532, %v541
    %v546 = vadd.f32 %v210, %v542
    %v547 = vadd.f32 %v211, %v543
    %v548 = vadd.f32 %v212, %v544
    %v549 = vadd.f32 %v213, %v545
    %v550 = vld [vmem:[#allocation2 + $0x630] sm:$0xff]
    %v551 = vld [vmem:[#allocation2 + $0x638] sm:$0xff]
    %v552 = vld [vmem:[#allocation2 + $0x640] sm:$0xff]
    %v553 = vld [vmem:[#allocation2 + $0x648] sm:$0xff]
    %v554 = vld [vmem:[#allocation2 + $0x650] sm:$0xff]
    %v555 = vld [vmem:[#allocation2 + $0x658] sm:$0xff]
    %v556 = vld [vmem:[#allocation2 + $0x660] sm:$0xff]
    %v557 = vld [vmem:[#allocation2 + $0x668] sm:$0xff]
    %v558 = vld [vmem:[#allocation2 + $0x670] sm:$0xff]
    %v559 = vld [vmem:[#allocation2 + $0x678] sm:$0xff]
    %v560 = vld [vmem:[#allocation2 + $0x680] sm:$0xff]
    %v561 = vld [vmem:[#allocation2 + $0x688] sm:$0xff]
    %v562 = vld [vmem:[#allocation2 + $0x690] sm:$0xff]
    %v563 = vld [vmem:[#allocation2 + $0x698] sm:$0xff]
    %v564 = vld [vmem:[#allocation2 + $0x6a0] sm:$0xff]
    %v565 = vld [vmem:[#allocation2 + $0x6a8] sm:$0xff]
    %v566 = vld [vmem:[#allocation2 + $0x6b0] sm:$0xff]
    %v567 = vld [vmem:[#allocation2 + $0x6b8] sm:$0xff]
    %v568 = vld [vmem:[#allocation2 + $0x6c0] sm:$0xff]
    %v569 = vld [vmem:[#allocation2 + $0x6c8] sm:$0xff]
    %v570 = vld [vmem:[#allocation2 + $0x6d0] sm:$0xff]
    %v571 = vld [vmem:[#allocation2 + $0x6d8] sm:$0xff]
    %v572 = vld [vmem:[#allocation2 + $0x6e0] sm:$0xff]
    %v573 = vld [vmem:[#allocation2 + $0x6e8] sm:$0xff]
    %v574 = vld [vmem:[#allocation2 + $0x6f0] sm:$0xff]
    %v575 = vld [vmem:[#allocation2 + $0x6f8] sm:$0xff]
    %v576 = vld [vmem:[#allocation2 + $0x700] sm:$0xff]
    %v577 = vld [vmem:[#allocation2 + $0x708] sm:$0xff]
    %v578 = vld [vmem:[#allocation2 + $0x710] sm:$0xff]
    %v579 = vld [vmem:[#allocation2 + $0x718] sm:$0xff]
    %v580 = vld [vmem:[#allocation2 + $0x720] sm:$0xff]
    %v581 = vld [vmem:[#allocation2 + $0x728] sm:$0xff]
    %v582 = vld [vmem:[#allocation2 + $0x730] sm:$0xff]
    %v583 = vld [vmem:[#allocation2 + $0x738] sm:$0xff]
    %v584 = vld [vmem:[#allocation2 + $0x740] sm:$0xff]
    %v585 = vld [vmem:[#allocation2 + $0x748] sm:$0xff]
    %v586 = vld [vmem:[#allocation2 + $0x750] sm:$0xff]
    %v587 = vld [vmem:[#allocation2 + $0x758] sm:$0xff]
    %v588 = vld [vmem:[#allocation2 + $0x760] sm:$0xff]
    %v589 = vld [vmem:[#allocation2 + $0x768] sm:$0xff]
    %v590 = vld [vmem:[#allocation2 + $0x770] sm:$0xff]
    %v591 = vld [vmem:[#allocation2 + $0x778] sm:$0xff]
    %v592 = vld [vmem:[#allocation2 + $0x780] sm:$0xff]
    %v593 = vld [vmem:[#allocation2 + $0x788] sm:$0xff]
    %v594 = vld [vmem:[#allocation2 + $0x790] sm:$0xff]
    %v595 = vld [vmem:[#allocation2 + $0x798] sm:$0xff]
    %v596 = vld [vmem:[#allocation2 + $0x7a0] sm:$0xff]
    %v597 = vld [vmem:[#allocation2 + $0x7a8] sm:$0xff]
    %v598 = vld [vmem:[#allocation2 + $0x7b0] sm:$0xff]
    %v599 = vld [vmem:[#allocation2 + $0x7b8] sm:$0xff]
    %v600 = vld [vmem:[#allocation2 + $0x7c0] sm:$0xff]
    %v601 = vld [vmem:[#allocation2 + $0x7c8] sm:$0xff]
    %v602 = vld [vmem:[#allocation2 + $0x7d0] sm:$0xff]
    %v603 = vld [vmem:[#allocation2 + $0x7d8] sm:$0xff]
    %v604 = vld [vmem:[#allocation2 + $0x7e0] sm:$0xff]
    %v605 = vld [vmem:[#allocation2 + $0x7e8] sm:$0xff]
    %v606 = vld [vmem:[#allocation2 + $0x7f0] sm:$0xff]
    %v607 = vld [vmem:[#allocation2 + $0x7f8] sm:$0xff]
    %v608 = vld [vmem:[#allocation2 + $0x800] sm:$0xff]
    %v609 = vld [vmem:[#allocation2 + $0x808] sm:$0xff]
    %v610 = vld [vmem:[#allocation2 + $0x810] sm:$0xff]
    %v611 = vld [vmem:[#allocation2 + $0x818] sm:$0xff]
    %v612 = vld [vmem:[#allocation2 + $0x820] sm:$0xff]
    %v613 = vld [vmem:[#allocation2 + $0x828] sm:$0xff]
    %s614 = scalar_lea.vmem [#allocation2], 2096
    %v615 = vld [vmem:[%s614] ss:$8 sm:$0x3]
    %v617 = vlaneseq
    %v618 = vshrl.u32 %v617, 7
    %v619 = vsub.s32 0, %v618
    %v620 = vrot.slane %v615, %v619
    %622 = vmatprep.subr.mxu0 %v551
    %623 = vmatpush1.msra.mxu0 %v550
    %624 = vmatprep.subr.mxu0 %v553
    %625 = vmatpush1.msra.mxu0 %v552
    %626 = vmatprep.subr.mxu0 %v555
    %627 = vmatpush1.msra.mxu0 %v554
    %628 = vmatprep.subr.mxu0 %v557
    %629 = vmatpush1.msra.mxu0 %v556
    %630 = vmatprep.subr.mxu0 %v559
    %631 = vmatpush1.msra.mxu0 %v558
    %632 = vmatprep.subr.mxu0 %v561
    %633 = vmatpush1.msra.mxu0 %v560
    %634 = vmatprep.subr.mxu0 %v563
    %635 = vmatpush1.msra.mxu0 %v562
    %636 = vmatprep.subr.mxu0 %v565
    %637 = vmatpush1.msra.mxu0 %v564
    %638 = vmatprep.subr.mxu0 %v567
    %639 = vmatpush1.msra.mxu0 %v566
    %640 = vmatprep.subr.mxu0 %v569
    %641 = vmatpush1.msra.mxu0 %v568
    %642 = vmatprep.subr.mxu0 %v571
    %643 = vmatpush1.msra.mxu0 %v570
    %644 = vmatprep.subr.mxu0 %v573
    %645 = vmatpush1.msra.mxu0 %v572
    %646 = vmatprep.subr.mxu0 %v575
    %647 = vmatpush1.msra.mxu0 %v574
    %648 = vmatprep.subr.mxu0 %v577
    %649 = vmatpush1.msra.mxu0 %v576
    %650 = vmatprep.subr.mxu0 %v579
    %651 = vmatpush1.msra.mxu0 %v578
    %652 = vmatprep.subr.mxu0 %v581
    %653 = vmatpush1.msra.mxu0 %v580
    %654 = vmatprep.subr.mxu0 %v583
    %655 = vmatpush1.msra.mxu0 %v582
    %656 = vmatprep.subr.mxu0 %v585
    %657 = vmatpush1.msra.mxu0 %v584
    %658 = vmatprep.subr.mxu0 %v587
    %659 = vmatpush1.msra.mxu0 %v586
    %660 = vmatprep.subr.mxu0 %v589
    %661 = vmatpush1.msra.mxu0 %v588
    %662 = vmatprep.subr.mxu0 %v591
    %663 = vmatpush1.msra.mxu0 %v590
    %664 = vmatprep.subr.mxu0 %v593
    %665 = vmatpush1.msra.mxu0 %v592
    %666 = vmatprep.subr.mxu0 %v595
    %667 = vmatpush1.msra.mxu0 %v594
    %668 = vmatprep.subr.mxu0 %v597
    %669 = vmatpush1.msra.mxu0 %v596
    %670 = vmatprep.subr.mxu0 %v599
    %671 = vmatpush1.msra.mxu0 %v598
    %672 = vmatprep.subr.mxu0 %v601
    %673 = vmatpush1.msra.mxu0 %v600
    %674 = vmatprep.subr.mxu0 %v603
    %675 = vmatpush1.msra.mxu0 %v602
    %676 = vmatprep.subr.mxu0 %v605
    %677 = vmatpush1.msra.mxu0 %v604
    %678 = vmatprep.subr.mxu0 %v607
    %679 = vmatpush1.msra.mxu0 %v606
    %680 = vmatprep.subr.mxu0 %v609
    %681 = vmatpush1.msra.mxu0 %v608
    %682 = vmatprep.subr.mxu0 %v611
    %683 = vmatpush1.msra.mxu0 %v610
    %684 = vmatprep.subr.mxu0 %v613
    %685 = vmatpush1.msra.mxu0 %v612
    %686 = vmatprep.mubr.f32.mxu0 %v547
    %687 = vmatmul.mubr.f32.gmra.mrb[0].mxu0 %v546
    %v688 = vpop.f32.mrb[0].mxu0
    %v689 = vadd.f32 %v620, %v688
    %v690 = vpop.f32.mrb[0].mxu0
    %691 = vmatprep.mubr.f32.mxu0 %v549
    %692 = vmatmul.mubr.f32.gmra.mrb[0].mxu0 %v548
    %v693 = vpop.f32.mrb[0].mxu0
    %v694 = vadd.f32 %v620, %v693
    %v695 = vpop.f32.mrb[0].mxu0
    %696 = vdwg.mxu0
    %699 = vrot.lane.b32.xlu0 %v689, 96
    %v700 = vpop.permute.xlu0 %699
    %701 = vrot.lane.b32.xlu0 %v694, 96
    %v702 = vpop.permute.xlu0 %701
    %v705 = vmul.f32 %v689, %v700
    %v706 = vmul.f32 %v694, %v702
    %707 = vrot.lane.b32.xlu0 %v689, 64
    %v708 = vpop.permute.xlu0 %707
    %709 = vrot.lane.b32.xlu0 %v694, 64
    %v710 = vpop.permute.xlu0 %709
    %v713 = vmul.f32 %v705, %v708
    %v714 = vmul.f32 %v706, %v710
    %715 = vrot.lane.b32.xlu0 %v689, 32
    %v716 = vpop.permute.xlu0 %715
    %717 = vrot.lane.b32.xlu0 %v694, 32
    %v718 = vpop.permute.xlu0 %717
    %v721 = vmul.f32 %v713, %v716
    %v722 = vmul.f32 %v714, %v718
    %v723 = vld [vmem:[#allocation4] sm:$0xff]
    %v724 = vld [vmem:[#allocation4 + $0x8] sm:$0xff]
    %v725 = vadd.f32 %v721, %v723
    %v726 = vadd.f32 %v722, %v724
    %v727 = vld [vmem:[#allocation4 + $0x28] sm:$0xff]
    %v728 = vld [vmem:[#allocation4 + $0x30] sm:$0xff]
    %v729 = vld [vmem:[#allocation4 + $0x38] sm:$0xff]
    %v730 = vld [vmem:[#allocation4 + $0x40] sm:$0xff]
    %v731 = vld [vmem:[#allocation4 + $0x48] sm:$0xff]
    %v732 = vld [vmem:[#allocation4 + $0x50] sm:$0xff]
    %v733 = vld [vmem:[#allocation4 + $0x58] sm:$0x1]
    %v734 = vlaneseq
    %v735 = vshrl.u32 %v734, 7
    %v736 = vsub.s32 0, %v735
    %v737 = vrot.slane %v733, %v736
    %vm738 = vcmask 261120
    %v740 = vsel %vm738, %v725, 0
    %v743 = vsel %vm738, %v726, 0
    %745 = vmatprep.subr.mxu0 0.0
    %746 = vmatpush1.msra.mxu0 %v729
    %747 = vmatprep.subr.mxu0 0.0
    %748 = vmatpush1.msra.mxu0 %v730
    %749 = vmatprep.subr.mxu0 0.0
    %750 = vmatpush1.msra.mxu0 %v731
    %751 = vmatprep.subr.mxu0 0.0
    %752 = vmatpush1.msra.mxu0 %v732
    %753 = vmatprep.subr.mxu0 0.0
    %754 = vmatpush1.msra.mxu0 0.0
    %755 = vmatprep.subr.mxu0 0.0
    %756 = vmatpush1.msra.mxu0 0.0
    %757 = vmatprep.subr.mxu0 0.0
    %758 = vmatpush1.msra.mxu0 0.0
    %759 = vmatprep.subr.mxu0 0.0
    %760 = vmatpush1.msra.mxu0 0.0
    %761 = vmatprep.subr.mxu0 0.0
    %762 = vmatpush1.msra.mxu0 0.0
    %763 = vmatprep.subr.mxu0 0.0
    %764 = vmatpush1.msra.mxu0 0.0
    %765 = vmatprep.subr.mxu0 0.0
    %766 = vmatpush1.msra.mxu0 0.0
    %767 = vmatprep.subr.mxu0 0.0
    %768 = vmatpush1.msra.mxu0 0.0
    %769 = vmatprep.subr.mxu0 0.0
    %770 = vmatpush1.msra.mxu0 0.0
    %771 = vmatprep.subr.mxu0 0.0
    %772 = vmatpush1.msra.mxu0 0.0
    %773 = vmatprep.subr.mxu0 0.0
    %774 = vmatpush1.msra.mxu0 0.0
    %775 = vmatprep.subr.mxu0 0.0
    %776 = vmatpush1.msra.mxu0 0.0
    %777 = vmatprep.subr.mxu0 0.0
    %778 = vmatpush1.msra.mxu0 0.0
    %779 = vmatprep.subr.mxu0 0.0
    %780 = vmatpush1.msra.mxu0 0.0
    %781 = vmatprep.subr.mxu0 0.0
    %782 = vmatpush1.msra.mxu0 0.0
    %783 = vmatprep.subr.mxu0 0.0
    %784 = vmatpush1.msra.mxu0 0.0
    %785 = vmatprep.subr.mxu0 0.0
    %786 = vmatpush1.msra.mxu0 0.0
    %787 = vmatprep.subr.mxu0 0.0
    %788 = vmatpush1.msra.mxu0 0.0
    %789 = vmatprep.subr.mxu0 0.0
    %790 = vmatpush1.msra.mxu0 0.0
    %791 = vmatprep.subr.mxu0 0.0
    %792 = vmatpush1.msra.mxu0 0.0
    %793 = vmatprep.subr.mxu0 0.0
    %794 = vmatpush1.msra.mxu0 0.0
    %795 = vmatprep.subr.mxu0 0.0
    %796 = vmatpush1.msra.mxu0 0.0
    %797 = vmatprep.subr.mxu0 0.0
    %798 = vmatpush1.msra.mxu0 0.0
    %799 = vmatprep.subr.mxu0 0.0
    %800 = vmatpush1.msra.mxu0 0.0
    %801 = vmatprep.subr.mxu0 0.0
    %802 = vmatpush1.msra.mxu0 0.0
    %803 = vmatprep.subr.mxu0 0.0
    %804 = vmatpush1.msra.mxu0 0.0
    %805 = vmatprep.subr.mxu0 0.0
    %806 = vmatpush1.msra.mxu0 0.0
    %807 = vmatprep.subr.mxu0 0.0
    %808 = vmatpush1.msra.mxu0 0.0
    %809 = vmatprep.mubr.f32.mxu0 0.0
    %810 = vmatmul.mubr.f32.gmra.mrb[0].mxu0 %v740
    %v811 = vpop.f32.mrb[0].mxu0
    %v812 = vadd.f32 %v737, %v811
    %v813 = vpop.f32.mrb[0].mxu0
    %814 = vmatprep.mubr.f32.mxu0 0.0
    %815 = vmatmul.mubr.f32.gmra.mrb[0].mxu0 %v743
    %v816 = vpop.f32.mrb[0].mxu0
    %v817 = vadd.f32 %v737, %v816
    %v818 = vpop.f32.mrb[0].mxu0
    %819 = vdwg.mxu0
    %822 = vrot.lane.b32.xlu0 %v812, 96
    %v823 = vpop.permute.xlu0 %822
    %824 = vrot.lane.b32.xlu0 %v817, 96
    %v825 = vpop.permute.xlu0 %824
    %vm826 = vcmask 64512
    %v827 = vsel %vm826, %v812, 0
    %v829 = vsel %vm826, %v817, 0
    %v831 = vsel %vm826, %v823, 0
    %v833 = vsel %vm826, %v825, 0
    %835 = vmatprep.subr.mxu0 0.0
    %836 = vmatpush1.xpose.msra.mxu0 %v831
    %837 = vmatprep.subr.mxu0 0.0
    %838 = vmatpush1.xpose.msra.mxu0 %v833
    %839 = vmatprep.subr.mxu0 0.0
    %840 = vmatpush1.xpose.msra.mxu0 0.0
    %841 = vmatprep.subr.mxu0 0.0
    %842 = vmatpush1.xpose.msra.mxu0 0.0
    %843 = vmatprep.subr.mxu0 0.0
    %844 = vmatpush1.xpose.msra.mxu0 0.0
    %845 = vmatprep.subr.mxu0 0.0
    %846 = vmatpush1.xpose.msra.mxu0 0.0
    %847 = vmatprep.subr.mxu0 0.0
    %848 = vmatpush1.xpose.msra.mxu0 0.0
    %849 = vmatprep.subr.mxu0 0.0
    %850 = vmatpush1.xpose.msra.mxu0 0.0
    %851 = vmatprep.subr.mxu0 0.0
    %852 = vmatpush1.xpose.msra.mxu0 0.0
    %853 = vmatprep.subr.mxu0 0.0
    %854 = vmatpush1.xpose.msra.mxu0 0.0
    %855 = vmatprep.subr.mxu0 0.0
    %856 = vmatpush1.xpose.msra.mxu0 0.0
    %857 = vmatprep.subr.mxu0 0.0
    %858 = vmatpush1.xpose.msra.mxu0 0.0
    %859 = vmatprep.subr.mxu0 0.0
    %860 = vmatpush1.xpose.msra.mxu0 0.0
    %861 = vmatprep.subr.mxu0 0.0
    %862 = vmatpush1.xpose.msra.mxu0 0.0
    %863 = vmatprep.subr.mxu0 0.0
    %864 = vmatpush1.xpose.msra.mxu0 0.0
    %865 = vmatprep.subr.mxu0 0.0
    %866 = vmatpush1.xpose.msra.mxu0 0.0
    %867 = vmatprep.subr.mxu0 0.0
    %868 = vmatpush1.xpose.msra.mxu0 0.0
    %869 = vmatprep.subr.mxu0 0.0
    %870 = vmatpush1.xpose.msra.mxu0 0.0
    %871 = vmatprep.subr.mxu0 0.0
    %872 = vmatpush1.xpose.msra.mxu0 0.0
    %873 = vmatprep.subr.mxu0 0.0
    %874 = vmatpush1.xpose.msra.mxu0 0.0
    %875 = vmatprep.subr.mxu0 0.0
    %876 = vmatpush1.xpose.msra.mxu0 0.0
    %877 = vmatprep.subr.mxu0 0.0
    %878 = vmatpush1.xpose.msra.mxu0 0.0
    %879 = vmatprep.subr.mxu0 0.0
    %880 = vmatpush1.xpose.msra.mxu0 0.0
    %881 = vmatprep.subr.mxu0 0.0
    %882 = vmatpush1.xpose.msra.mxu0 0.0
    %883 = vmatprep.subr.mxu0 0.0
    %884 = vmatpush1.xpose.msra.mxu0 0.0
    %885 = vmatprep.subr.mxu0 0.0
    %886 = vmatpush1.xpose.msra.mxu0 0.0
    %887 = vmatprep.subr.mxu0 0.0
    %888 = vmatpush1.xpose.msra.mxu0 0.0
    %889 = vmatprep.subr.mxu0 0.0
    %890 = vmatpush1.xpose.msra.mxu0 0.0
    %891 = vmatprep.subr.mxu0 0.0
    %892 = vmatpush1.xpose.msra.mxu0 0.0
    %893 = vmatprep.subr.mxu0 0.0
    %894 = vmatpush1.xpose.msra.mxu0 0.0
    %895 = vmatprep.subr.mxu0 0.0
    %896 = vmatpush1.xpose.msra.mxu0 0.0
    %897 = vmatprep.subr.mxu0 0.0
    %898 = vmatpush1.xpose.msra.mxu0 0.0
    %899 = vmatprep.mubr.f32.mxu0 0.0
    %900 = vmatmul.mubr.f32.gmra.mrb[0].mxu0 %v827
    %v901 = vpop.f32.mrb[0].mxu0
    %v902 = vadd.f32 0.0, %v901
    %v903 = vpop.f32.mrb[0].mxu0
    %904 = vmatprep.mubr.f32.mxu0 0.0
    %905 = vmatmul.mubr.f32.gmra.mrb[0].mxu0 %v829
    %v906 = vpop.f32.mrb[0].mxu0
    %v907 = vadd.f32 0.0, %v906
    %v908 = vpop.f32.mrb[0].mxu0
    %909 = vdwg.mxu0
    %v910 = vmul.f32 %v902, 0.35355338
    %v911 = vmul.f32 %v907, 0.35355338
    %v912 = vadd.f32 %v910, %v727
    %v913 = vadd.f32 %v911, %v728
    %vm914 = vcmask 130048
    %v915 = vsel %vm914, %v912, -inf
    %916 = vmax.xlane.f32.xlu0 %v915
    %v917 = vpop.xlane.xlu0 %916
    %v918 = vsel %vm914, %v913, -inf
    %919 = vmax.xlane.f32.xlu0 %v918
    %v920 = vpop.xlane.xlu0 %919
    %v921 = vsub.f32 %v912, %v917
    %v922 = vsub.f32 %v913, %v920
    %v923 = vmul.f32 %v921, 1.442695
    %v924 = vpow.pop %v923
    %v925 = vmul.f32 %v922, 1.442695
    %v926 = vpow.pop %v925
    %v927 = vsel %vm914, %v924, 0.0
    %928 = vadd.xlane.f32.xlu0 %v927
    %v929 = vpop.xlane.xlu0 %928
    %v930 = vsel %vm914, %v926, 0.0
    %931 = vadd.xlane.f32.xlu0 %v930
    %v932 = vpop.xlane.xlu0 %931
    %v933 = vrcp.pop %v929
    %v934 = vrcp.pop %v932
    %v935 = vmul.f32 %v924, %v933
    %v936 = vmul.f32 %v926, %v934
    %937 = vrot.lane.b32.xlu0 %v812, 64
    %v938 = vpop.permute.xlu0 %937
    %939 = vrot.lane.b32.xlu0 %v817, 64
    %v940 = vpop.permute.xlu0 %939
    %v944 = vsel %vm914, %v935, 0
    %v947 = vsel %vm914, %v936, 0
    %949 = vmatprep.subr.mxu0 0.0
    %950 = vmatpush1.msra.mxu0 %v938
    %951 = vmatprep.subr.mxu0 0.0
    %952 = vmatpush1.msra.mxu0 %v940
    %953 = vmatprep.subr.mxu0 0.0
    %954 = vmatpush1.msra.mxu0 0.0
    %955 = vmatprep.subr.mxu0 0.0
    %956 = vmatpush1.msra.mxu0 0.0
    %957 = vmatprep.subr.mxu0 0.0
    %958 = vmatpush1.msra.mxu0 0.0
    %959 = vmatprep.subr.mxu0 0.0
    %960 = vmatpush1.msra.mxu0 0.0
    %961 = vmatprep.subr.mxu0 0.0
    %962 = vmatpush1.msra.mxu0 0.0
    %963 = vmatprep.subr.mxu0 0.0
    %964 = vmatpush1.msra.mxu0 0.0
    %965 = vmatprep.subr.mxu0 0.0
    %966 = vmatpush1.msra.mxu0 0.0
    %967 = vmatprep.subr.mxu0 0.0
    %968 = vmatpush1.msra.mxu0 0.0
    %969 = vmatprep.subr.mxu0 0.0
    %970 = vmatpush1.msra.mxu0 0.0
    %971 = vmatprep.subr.mxu0 0.0
    %972 = vmatpush1.msra.mxu0 0.0
    %973 = vmatprep.subr.mxu0 0.0
    %974 = vmatpush1.msra.mxu0 0.0
    %975 = vmatprep.subr.mxu0 0.0
    %976 = vmatpush1.msra.mxu0 0.0
    %977 = vmatprep.subr.mxu0 0.0
    %978 = vmatpush1.msra.mxu0 0.0
    %979 = vmatprep.subr.mxu0 0.0
    %980 = vmatpush1.msra.mxu0 0.0
    %981 = vmatprep.subr.mxu0 0.0
    %982 = vmatpush1.msra.mxu0 0.0
    %983 = vmatprep.subr.mxu0 0.0
    %984 = vmatpush1.msra.mxu0 0.0
    %985 = vmatprep.subr.mxu0 0.0
    %986 = vmatpush1.msra.mxu0 0.0
    %987 = vmatprep.subr.mxu0 0.0
    %988 = vmatpush1.msra.mxu0 0.0
    %989 = vmatprep.subr.mxu0 0.0
    %990 = vmatpush1.msra.mxu0 0.0
    %991 = vmatprep.subr.mxu0 0.0
    %992 = vmatpush1.msra.mxu0 0.0
    %993 = vmatprep.subr.mxu0 0.0
    %994 = vmatpush1.msra.mxu0 0.0
    %995 = vmatprep.subr.mxu0 0.0
    %996 = vmatpush1.msra.mxu0 0.0
    %997 = vmatprep.subr.mxu0 0.0
    %998 = vmatpush1.msra.mxu0 0.0
    %999 = vmatprep.subr.mxu0 0.0
    %1000 = vmatpush1.msra.mxu0 0.0
    %1001 = vmatprep.subr.mxu0 0.0
    %1002 = vmatpush1.msra.mxu0 0.0
    %1003 = vmatprep.subr.mxu0 0.0
    %1004 = vmatpush1.msra.mxu0 0.0
    %1005 = vmatprep.subr.mxu0 0.0
    %1006 = vmatpush1.msra.mxu0 0.0
    %1007 = vmatprep.subr.mxu0 0.0
    %1008 = vmatpush1.msra.mxu0 0.0
    %1009 = vmatprep.subr.mxu0 0.0
    %1010 = vmatpush1.msra.mxu0 0.0
    %1011 = vmatprep.subr.mxu0 0.0
    %1012 = vmatpush1.msra.mxu0 0.0
    %1013 = vmatprep.mubr.f32.mxu0 0.0
    %1014 = vmatmul.mubr.f32.gmra.mrb[0].mxu0 %v944
    %v1015 = vpop.f32.mrb[0].mxu0
    %v1016 = vadd.f32 0.0, %v1015
    %v1017 = vpop.f32.mrb[0].mxu0
    %1018 = vmatprep.mubr.f32.mxu0 0.0
    %1019 = vmatmul.mubr.f32.gmra.mrb[0].mxu0 %v947
    %v1020 = vpop.f32.mrb[0].mxu0
    %v1021 = vadd.f32 0.0, %v1020
    %v1022 = vpop.f32.mrb[0].mxu0
    %1023 = vdwg.mxu0
    %1024 = vrot.lane.b32.xlu0 %v812, 120
    %v1025 = vpop.permute.xlu0 %1024
    %1026 = vrot.lane.b32.xlu0 %v817, 120
    %v1027 = vpop.permute.xlu0 %1026
    %1028 = vrot.lane.b32.xlu0 %v812, 88
    %v1029 = vpop.permute.xlu0 %1028
    %1030 = vrot.lane.b32.xlu0 %v817, 88
    %v1031 = vpop.permute.xlu0 %1030
    %v1032 = vsel %vm826, %v1025, 0
    %v1034 = vsel %vm826, %v1027, 0
    %v1036 = vsel %vm826, %v1029, 0
    %v1038 = vsel %vm826, %v1031, 0
    %1040 = vmatprep.subr.mxu0 0.0
    %1041 = vmatpush1.xpose.msra.mxu0 %v1036
    %1042 = vmatprep.subr.mxu0 0.0
    %1043 = vmatpush1.xpose.msra.mxu0 %v1038
    %1044 = vmatprep.subr.mxu0 0.0
    %1045 = vmatpush1.xpose.msra.mxu0 0.0
    %1046 = vmatprep.subr.mxu0 0.0
    %1047 = vmatpush1.xpose.msra.mxu0 0.0
    %1048 = vmatprep.subr.mxu0 0.0
    %1049 = vmatpush1.xpose.msra.mxu0 0.0
    %1050 = vmatprep.subr.mxu0 0.0
    %1051 = vmatpush1.xpose.msra.mxu0 0.0
    %1052 = vmatprep.subr.mxu0 0.0
    %1053 = vmatpush1.xpose.msra.mxu0 0.0
    %1054 = vmatprep.subr.mxu0 0.0
    %1055 = vmatpush1.xpose.msra.mxu0 0.0
    %1056 = vmatprep.subr.mxu0 0.0
    %1057 = vmatpush1.xpose.msra.mxu0 0.0
    %1058 = vmatprep.subr.mxu0 0.0
    %1059 = vmatpush1.xpose.msra.mxu0 0.0
    %1060 = vmatprep.subr.mxu0 0.0
    %1061 = vmatpush1.xpose.msra.mxu0 0.0
    %1062 = vmatprep.subr.mxu0 0.0
    %1063 = vmatpush1.xpose.msra.mxu0 0.0
    %1064 = vmatprep.subr.mxu0 0.0
    %1065 = vmatpush1.xpose.msra.mxu0 0.0
    %1066 = vmatprep.subr.mxu0 0.0
    %1067 = vmatpush1.xpose.msra.mxu0 0.0
    %1068 = vmatprep.subr.mxu0 0.0
    %1069 = vmatpush1.xpose.msra.mxu0 0.0
    %1070 = vmatprep.subr.mxu0 0.0
    %1071 = vmatpush1.xpose.msra.mxu0 0.0
    %1072 = vmatprep.subr.mxu0 0.0
    %1073 = vmatpush1.xpose.msra.mxu0 0.0
    %1074 = vmatprep.subr.mxu0 0.0
    %1075 = vmatpush1.xpose.msra.mxu0 0.0
    %1076 = vmatprep.subr.mxu0 0.0
    %1077 = vmatpush1.xpose.msra.mxu0 0.0
    %1078 = vmatprep.subr.mxu0 0.0
    %1079 = vmatpush1.xpose.msra.mxu0 0.0
    %1080 = vmatprep.subr.mxu0 0.0
    %1081 = vmatpush1.xpose.msra.mxu0 0.0
    %1082 = vmatprep.subr.mxu0 0.0
    %1083 = vmatpush1.xpose.msra.mxu0 0.0
    %1084 = vmatprep.subr.mxu0 0.0
    %1085 = vmatpush1.xpose.msra.mxu0 0.0
    %1086 = vmatprep.subr.mxu0 0.0
    %1087 = vmatpush1.xpose.msra.mxu0 0.0
    %1088 = vmatprep.subr.mxu0 0.0
    %1089 = vmatpush1.xpose.msra.mxu0 0.0
    %1090 = vmatprep.subr.mxu0 0.0
    %1091 = vmatpush1.xpose.msra.mxu0 0.0
    %1092 = vmatprep.subr.mxu0 0.0
    %1093 = vmatpush1.xpose.msra.mxu0 0.0
    %1094 = vmatprep.subr.mxu0 0.0
    %1095 = vmatpush1.xpose.msra.mxu0 0.0
    %1096 = vmatprep.subr.mxu0 0.0
    %1097 = vmatpush1.xpose.msra.mxu0 0.0
    %1098 = vmatprep.subr.mxu0 0.0
    %1099 = vmatpush1.xpose.msra.mxu0 0.0
    %1100 = vmatprep.subr.mxu0 0.0
    %1101 = vmatpush1.xpose.msra.mxu0 0.0
    %1102 = vmatprep.subr.mxu0 0.0
    %1103 = vmatpush1.xpose.msra.mxu0 0.0
    %1104 = vmatprep.mubr.f32.mxu0 0.0
    %1105 = vmatmul.mubr.f32.gmra.mrb[0].mxu0 %v1032
    %v1106 = vpop.f32.mrb[0].mxu0
    %v1107 = vadd.f32 0.0, %v1106
    %v1108 = vpop.f32.mrb[0].mxu0
    %1109 = vmatprep.mubr.f32.mxu0 0.0
    %1110 = vmatmul.mubr.f32.gmra.mrb[0].mxu0 %v1034
    %v1111 = vpop.f32.mrb[0].mxu0
    %v1112 = vadd.f32 0.0, %v1111
    %v1113 = vpop.f32.mrb[0].mxu0
    %1114 = vdwg.mxu0
    %v1115 = vmul.f32 %v1107, 0.35355338
    %v1116 = vmul.f32 %v1112, 0.35355338
    %v1117 = vadd.f32 %v1115, %v727
    %v1118 = vadd.f32 %v1116, %v728
    %v1119 = vsel %vm914, %v1117, -inf
    %1120 = vmax.xlane.f32.xlu0 %v1119
    %v1121 = vpop.xlane.xlu0 %1120
    %v1122 = vsel %vm914, %v1118, -inf
    %1123 = vmax.xlane.f32.xlu0 %v1122
    %v1124 = vpop.xlane.xlu0 %1123
    %v1125 = vsub.f32 %v1117, %v1121
    %v1126 = vsub.f32 %v1118, %v1124
    %v1127 = vmul.f32 %v1125, 1.442695
    %v1128 = vpow.pop %v1127
    %v1129 = vmul.f32 %v1126, 1.442695
    %v1130 = vpow.pop %v1129
    %v1131 = vsel %vm914, %v1128, 0.0
    %1132 = vadd.xlane.f32.xlu0 %v1131
    %v1133 = vpop.xlane.xlu0 %1132
    %v1134 = vsel %vm914, %v1130, 0.0
    %1135 = vadd.xlane.f32.xlu0 %v1134
    %v1136 = vpop.xlane.xlu0 %1135
    %v1137 = vrcp.pop %v1133
    %v1138 = vrcp.pop %v1136
    %v1139 = vmul.f32 %v1128, %v1137
    %v1140 = vmul.f32 %v1130, %v1138
    %1141 = vrot.lane.b32.xlu0 %v812, 56
    %v1142 = vpop.permute.xlu0 %1141
    %1143 = vrot.lane.b32.xlu0 %v817, 56
    %v1144 = vpop.permute.xlu0 %1143
    %v1148 = vsel %vm914, %v1139, 0
    %v1151 = vsel %vm914, %v1140, 0
    %1153 = vmatprep.subr.mxu0 0.0
    %1154 = vmatpush1.msra.mxu0 %v1142
    %1155 = vmatprep.subr.mxu0 0.0
    %1156 = vmatpush1.msra.mxu0 %v1144
    %1157 = vmatprep.subr.mxu0 0.0
    %1158 = vmatpush1.msra.mxu0 0.0
    %1159 = vmatprep.subr.mxu0 0.0
    %1160 = vmatpush1.msra.mxu0 0.0
    %1161 = vmatprep.subr.mxu0 0.0
    %1162 = vmatpush1.msra.mxu0 0.0
    %1163 = vmatprep.subr.mxu0 0.0
    %1164 = vmatpush1.msra.mxu0 0.0
    %1165 = vmatprep.subr.mxu0 0.0
    %1166 = vmatpush1.msra.mxu0 0.0
    %1167 = vmatprep.subr.mxu0 0.0
    %1168 = vmatpush1.msra.mxu0 0.0
    %1169 = vmatprep.subr.mxu0 0.0
    %1170 = vmatpush1.msra.mxu0 0.0
    %1171 = vmatprep.subr.mxu0 0.0
    %1172 = vmatpush1.msra.mxu0 0.0
    %1173 = vmatprep.subr.mxu0 0.0
    %1174 = vmatpush1.msra.mxu0 0.0
    %1175 = vmatprep.subr.mxu0 0.0
    %1176 = vmatpush1.msra.mxu0 0.0
    %1177 = vmatprep.subr.mxu0 0.0
    %1178 = vmatpush1.msra.mxu0 0.0
    %1179 = vmatprep.subr.mxu0 0.0
    %1180 = vmatpush1.msra.mxu0 0.0
    %1181 = vmatprep.subr.mxu0 0.0
    %1182 = vmatpush1.msra.mxu0 0.0
    %1183 = vmatprep.subr.mxu0 0.0
    %1184 = vmatpush1.msra.mxu0 0.0
    %1185 = vmatprep.subr.mxu0 0.0
    %1186 = vmatpush1.msra.mxu0 0.0
    %1187 = vmatprep.subr.mxu0 0.0
    %1188 = vmatpush1.msra.mxu0 0.0
    %1189 = vmatprep.subr.mxu0 0.0
    %1190 = vmatpush1.msra.mxu0 0.0
    %1191 = vmatprep.subr.mxu0 0.0
    %1192 = vmatpush1.msra.mxu0 0.0
    %1193 = vmatprep.subr.mxu0 0.0
    %1194 = vmatpush1.msra.mxu0 0.0
    %1195 = vmatprep.subr.mxu0 0.0
    %1196 = vmatpush1.msra.mxu0 0.0
    %1197 = vmatprep.subr.mxu0 0.0
    %1198 = vmatpush1.msra.mxu0 0.0
    %1199 = vmatprep.subr.mxu0 0.0
    %1200 = vmatpush1.msra.mxu0 0.0
    %1201 = vmatprep.subr.mxu0 0.0
    %1202 = vmatpush1.msra.mxu0 0.0
    %1203 = vmatprep.subr.mxu0 0.0
    %1204 = vmatpush1.msra.mxu0 0.0
    %1205 = vmatprep.subr.mxu0 0.0
    %1206 = vmatpush1.msra.mxu0 0.0
    %1207 = vmatprep.subr.mxu0 0.0
    %1208 = vmatpush1.msra.mxu0 0.0
    %1209 = vmatprep.subr.mxu0 0.0
    %1210 = vmatpush1.msra.mxu0 0.0
    %1211 = vmatprep.subr.mxu0 0.0
    %1212 = vmatpush1.msra.mxu0 0.0
    %1213 = vmatprep.subr.mxu0 0.0
    %1214 = vmatpush1.msra.mxu0 0.0
    %1215 = vmatprep.subr.mxu0 0.0
    %1216 = vmatpush1.msra.mxu0 0.0
    %1217 = vmatprep.mubr.f32.mxu0 0.0
    %1218 = vmatmul.mubr.f32.gmra.mrb[0].mxu0 %v1148
    %v1219 = vpop.f32.mrb[0].mxu0
    %v1220 = vadd.f32 0.0, %v1219
    %v1221 = vpop.f32.mrb[0].mxu0
    %1222 = vmatprep.mubr.f32.mxu0 0.0
    %1223 = vmatmul.mubr.f32.gmra.mrb[0].mxu0 %v1151
    %v1224 = vpop.f32.mrb[0].mxu0
    %v1225 = vadd.f32 0.0, %v1224
    %v1226 = vpop.f32.mrb[0].mxu0
    %1227 = vdwg.mxu0
    %1228 = vrot.lane.b32.xlu0 %v812, 112
    %v1229 = vpop.permute.xlu0 %1228
    %1230 = vrot.lane.b32.xlu0 %v817, 112
    %v1231 = vpop.permute.xlu0 %1230
    %1232 = vrot.lane.b32.xlu0 %v812, 80
    %v1233 = vpop.permute.xlu0 %1232
    %1234 = vrot.lane.b32.xlu0 %v817, 80
    %v1235 = vpop.permute.xlu0 %1234
    %v1236 = vsel %vm826, %v1229, 0
    %v1238 = vsel %vm826, %v1231, 0
    %v1240 = vsel %vm826, %v1233, 0
    %v1242 = vsel %vm826, %v1235, 0
    %1244 = vmatprep.subr.mxu0 0.0
    %1245 = vmatpush1.xpose.msra.mxu0 %v1240
    %1246 = vmatprep.subr.mxu0 0.0
    %1247 = vmatpush1.xpose.msra.mxu0 %v1242
    %1248 = vmatprep.subr.mxu0 0.0
    %1249 = vmatpush1.xpose.msra.mxu0 0.0
    %1250 = vmatprep.subr.mxu0 0.0
    %1251 = vmatpush1.xpose.msra.mxu0 0.0
    %1252 = vmatprep.subr.mxu0 0.0
    %1253 = vmatpush1.xpose.msra.mxu0 0.0
    %1254 = vmatprep.subr.mxu0 0.0
    %1255 = vmatpush1.xpose.msra.mxu0 0.0
    %1256 = vmatprep.subr.mxu0 0.0
    %1257 = vmatpush1.xpose.msra.mxu0 0.0
    %1258 = vmatprep.subr.mxu0 0.0
    %1259 = vmatpush1.xpose.msra.mxu0 0.0
    %1260 = vmatprep.subr.mxu0 0.0
    %1261 = vmatpush1.xpose.msra.mxu0 0.0
    %1262 = vmatprep.subr.mxu0 0.0
    %1263 = vmatpush1.xpose.msra.mxu0 0.0
    %1264 = vmatprep.subr.mxu0 0.0
    %1265 = vmatpush1.xpose.msra.mxu0 0.0
    %1266 = vmatprep.subr.mxu0 0.0
    %1267 = vmatpush1.xpose.msra.mxu0 0.0
    %1268 = vmatprep.subr.mxu0 0.0
    %1269 = vmatpush1.xpose.msra.mxu0 0.0
    %1270 = vmatprep.subr.mxu0 0.0
    %1271 = vmatpush1.xpose.msra.mxu0 0.0
    %1272 = vmatprep.subr.mxu0 0.0
    %1273 = vmatpush1.xpose.msra.mxu0 0.0
    %1274 = vmatprep.subr.mxu0 0.0
    %1275 = vmatpush1.xpose.msra.mxu0 0.0
    %1276 = vmatprep.subr.mxu0 0.0
    %1277 = vmatpush1.xpose.msra.mxu0 0.0
    %1278 = vmatprep.subr.mxu0 0.0
    %1279 = vmatpush1.xpose.msra.mxu0 0.0
    %1280 = vmatprep.subr.mxu0 0.0
    %1281 = vmatpush1.xpose.msra.mxu0 0.0
    %1282 = vmatprep.subr.mxu0 0.0
    %1283 = vmatpush1.xpose.msra.mxu0 0.0
    %1284 = vmatprep.subr.mxu0 0.0
    %1285 = vmatpush1.xpose.msra.mxu0 0.0
    %1286 = vmatprep.subr.mxu0 0.0
    %1287 = vmatpush1.xpose.msra.mxu0 0.0
    %1288 = vmatprep.subr.mxu0 0.0
    %1289 = vmatpush1.xpose.msra.mxu0 0.0
    %1290 = vmatprep.subr.mxu0 0.0
    %1291 = vmatpush1.xpose.msra.mxu0 0.0
    %1292 = vmatprep.subr.mxu0 0.0
    %1293 = vmatpush1.xpose.msra.mxu0 0.0
    %1294 = vmatprep.subr.mxu0 0.0
    %1295 = vmatpush1.xpose.msra.mxu0 0.0
    %1296 = vmatprep.subr.mxu0 0.0
    %1297 = vmatpush1.xpose.msra.mxu0 0.0
    %1298 = vmatprep.subr.mxu0 0.0
    %1299 = vmatpush1.xpose.msra.mxu0 0.0
    %1300 = vmatprep.subr.mxu0 0.0
    %1301 = vmatpush1.xpose.msra.mxu0 0.0
    %1302 = vmatprep.subr.mxu0 0.0
    %1303 = vmatpush1.xpose.msra.mxu0 0.0
    %1304 = vmatprep.subr.mxu0 0.0
    %1305 = vmatpush1.xpose.msra.mxu0 0.0
    %1306 = vmatprep.subr.mxu0 0.0
    %1307 = vmatpush1.xpose.msra.mxu0 0.0
    %1308 = vmatprep.mubr.f32.mxu0 0.0
    %1309 = vmatmul.mubr.f32.gmra.mrb[0].mxu0 %v1236
    %v1310 = vpop.f32.mrb[0].mxu0
    %v1311 = vadd.f32 0.0, %v1310
    %v1312 = vpop.f32.mrb[0].mxu0
    %1313 = vmatprep.mubr.f32.mxu0 0.0
    %1314 = vmatmul.mubr.f32.gmra.mrb[0].mxu0 %v1238
    %v1315 = vpop.f32.mrb[0].mxu0
    %v1316 = vadd.f32 0.0, %v1315
    %v1317 = vpop.f32.mrb[0].mxu0
    %1318 = vdwg.mxu0
    %v1319 = vmul.f32 %v1311, 0.35355338
    %v1320 = vmul.f32 %v1316, 0.35355338
    %v1321 = vadd.f32 %v1319, %v727
    %v1322 = vadd.f32 %v1320, %v728
    %v1323 = vsel %vm914, %v1321, -inf
    %1324 = vmax.xlane.f32.xlu0 %v1323
    %v1325 = vpop.xlane.xlu0 %1324
    %v1326 = vsel %vm914, %v1322, -inf
    %1327 = vmax.xlane.f32.xlu0 %v1326
    %v1328 = vpop.xlane.xlu0 %1327
    %v1329 = vsub.f32 %v1321, %v1325
    %v1330 = vsub.f32 %v1322, %v1328
    %v1331 = vmul.f32 %v1329, 1.442695
    %v1332 = vpow.pop %v1331
    %v1333 = vmul.f32 %v1330, 1.442695
    %v1334 = vpow.pop %v1333
    %v1335 = vsel %vm914, %v1332, 0.0
    %1336 = vadd.xlane.f32.xlu0 %v1335
    %v1337 = vpop.xlane.xlu0 %1336
    %v1338 = vsel %vm914, %v1334, 0.0
    %1339 = vadd.xlane.f32.xlu0 %v1338
    %v1340 = vpop.xlane.xlu0 %1339
    %v1341 = vrcp.pop %v1337
    %v1342 = vrcp.pop %v1340
    %v1343 = vmul.f32 %v1332, %v1341
    %v1344 = vmul.f32 %v1334, %v1342
    %1345 = vrot.lane.b32.xlu0 %v812, 48
    %v1346 = vpop.permute.xlu0 %1345
    %1347 = vrot.lane.b32.xlu0 %v817, 48
    %v1348 = vpop.permute.xlu0 %1347
    %v1352 = vsel %vm914, %v1343, 0
    %v1355 = vsel %vm914, %v1344, 0
    %1357 = vmatprep.subr.mxu0 0.0
    %1358 = vmatpush1.msra.mxu0 %v1346
    %1359 = vmatprep.subr.mxu0 0.0
    %1360 = vmatpush1.msra.mxu0 %v1348
    %1361 = vmatprep.subr.mxu0 0.0
    %1362 = vmatpush1.msra.mxu0 0.0
    %1363 = vmatprep.subr.mxu0 0.0
    %1364 = vmatpush1.msra.mxu0 0.0
    %1365 = vmatprep.subr.mxu0 0.0
    %1366 = vmatpush1.msra.mxu0 0.0
    %1367 = vmatprep.subr.mxu0 0.0
    %1368 = vmatpush1.msra.mxu0 0.0
    %1369 = vmatprep.subr.mxu0 0.0
    %1370 = vmatpush1.msra.mxu0 0.0
    %1371 = vmatprep.subr.mxu0 0.0
    %1372 = vmatpush1.msra.mxu0 0.0
    %1373 = vmatprep.subr.mxu0 0.0
    %1374 = vmatpush1.msra.mxu0 0.0
    %1375 = vmatprep.subr.mxu0 0.0
    %1376 = vmatpush1.msra.mxu0 0.0
    %1377 = vmatprep.subr.mxu0 0.0
    %1378 = vmatpush1.msra.mxu0 0.0
    %1379 = vmatprep.subr.mxu0 0.0
    %1380 = vmatpush1.msra.mxu0 0.0
    %1381 = vmatprep.subr.mxu0 0.0
    %1382 = vmatpush1.msra.mxu0 0.0
    %1383 = vmatprep.subr.mxu0 0.0
    %1384 = vmatpush1.msra.mxu0 0.0
    %1385 = vmatprep.subr.mxu0 0.0
    %1386 = vmatpush1.msra.mxu0 0.0
    %1387 = vmatprep.subr.mxu0 0.0
    %1388 = vmatpush1.msra.mxu0 0.0
    %1389 = vmatprep.subr.mxu0 0.0
    %1390 = vmatpush1.msra.mxu0 0.0
    %1391 = vmatprep.subr.mxu0 0.0
    %1392 = vmatpush1.msra.mxu0 0.0
    %1393 = vmatprep.subr.mxu0 0.0
    %1394 = vmatpush1.msra.mxu0 0.0
    %1395 = vmatprep.subr.mxu0 0.0
    %1396 = vmatpush1.msra.mxu0 0.0
    %1397 = vmatprep.subr.mxu0 0.0
    %1398 = vmatpush1.msra.mxu0 0.0
    %1399 = vmatprep.subr.mxu0 0.0
    %1400 = vmatpush1.msra.mxu0 0.0
    %1401 = vmatprep.subr.mxu0 0.0
    %1402 = vmatpush1.msra.mxu0 0.0
    %1403 = vmatprep.subr.mxu0 0.0
    %1404 = vmatpush1.msra.mxu0 0.0
    %1405 = vmatprep.subr.mxu0 0.0
    %1406 = vmatpush1.msra.mxu0 0.0
    %1407 = vmatprep.subr.mxu0 0.0
    %1408 = vmatpush1.msra.mxu0 0.0
    %1409 = vmatprep.subr.mxu0 0.0
    %1410 = vmatpush1.msra.mxu0 0.0
    %1411 = vmatprep.subr.mxu0 0.0
    %1412 = vmatpush1.msra.mxu0 0.0
    %1413 = vmatprep.subr.mxu0 0.0
    %1414 = vmatpush1.msra.mxu0 0.0
    %1415 = vmatprep.subr.mxu0 0.0
    %1416 = vmatpush1.msra.mxu0 0.0
    %1417 = vmatprep.subr.mxu0 0.0
    %1418 = vmatpush1.msra.mxu0 0.0
    %1419 = vmatprep.subr.mxu0 0.0
    %1420 = vmatpush1.msra.mxu0 0.0
    %1421 = vmatprep.mubr.f32.mxu0 0.0
    %1422 = vmatmul.mubr.f32.gmra.mrb[0].mxu0 %v1352
    %v1423 = vpop.f32.mrb[0].mxu0
    %v1424 = vadd.f32 0.0, %v1423
    %v1425 = vpop.f32.mrb[0].mxu0
    %1426 = vmatprep.mubr.f32.mxu0 0.0
    %1427 = vmatmul.mubr.f32.gmra.mrb[0].mxu0 %v1355
    %v1428 = vpop.f32.mrb[0].mxu0
    %v1429 = vadd.f32 0.0, %v1428
    %v1430 = vpop.f32.mrb[0].mxu0
    %1431 = vdwg.mxu0
    %1432 = vrot.lane.b32.xlu0 %v812, 104
    %v1433 = vpop.permute.xlu0 %1432
    %1434 = vrot.lane.b32.xlu0 %v817, 104
    %v1435 = vpop.permute.xlu0 %1434
    %1436 = vrot.lane.b32.xlu0 %v812, 72
    %v1437 = vpop.permute.xlu0 %1436
    %1438 = vrot.lane.b32.xlu0 %v817, 72
    %v1439 = vpop.permute.xlu0 %1438
    %v1440 = vsel %vm826, %v1433, 0
    %v1442 = vsel %vm826, %v1435, 0
    %v1444 = vsel %vm826, %v1437, 0
    %v1446 = vsel %vm826, %v1439, 0
    %1448 = vmatprep.subr.mxu0 0.0
    %1449 = vmatpush1.xpose.msra.mxu0 %v1444
    %1450 = vmatprep.subr.mxu0 0.0
    %1451 = vmatpush1.xpose.msra.mxu0 %v1446
    %1452 = vmatprep.subr.mxu0 0.0
    %1453 = vmatpush1.xpose.msra.mxu0 0.0
    %1454 = vmatprep.subr.mxu0 0.0
    %1455 = vmatpush1.xpose.msra.mxu0 0.0
    %1456 = vmatprep.subr.mxu0 0.0
    %1457 = vmatpush1.xpose.msra.mxu0 0.0
    %1458 = vmatprep.subr.mxu0 0.0
    %1459 = vmatpush1.xpose.msra.mxu0 0.0
    %1460 = vmatprep.subr.mxu0 0.0
    %1461 = vmatpush1.xpose.msra.mxu0 0.0
    %1462 = vmatprep.subr.mxu0 0.0
    %1463 = vmatpush1.xpose.msra.mxu0 0.0
    %1464 = vmatprep.subr.mxu0 0.0
    %1465 = vmatpush1.xpose.msra.mxu0 0.0
    %1466 = vmatprep.subr.mxu0 0.0
    %1467 = vmatpush1.xpose.msra.mxu0 0.0
    %1468 = vmatprep.subr.mxu0 0.0
    %1469 = vmatpush1.xpose.msra.mxu0 0.0
    %1470 = vmatprep.subr.mxu0 0.0
    %1471 = vmatpush1.xpose.msra.mxu0 0.0
    %1472 = vmatprep.subr.mxu0 0.0
    %1473 = vmatpush1.xpose.msra.mxu0 0.0
    %1474 = vmatprep.subr.mxu0 0.0
    %1475 = vmatpush1.xpose.msra.mxu0 0.0
    %1476 = vmatprep.subr.mxu0 0.0
    %1477 = vmatpush1.xpose.msra.mxu0 0.0
    %1478 = vmatprep.subr.mxu0 0.0
    %1479 = vmatpush1.xpose.msra.mxu0 0.0
    %1480 = vmatprep.subr.mxu0 0.0
    %1481 = vmatpush1.xpose.msra.mxu0 0.0
    %1482 = vmatprep.subr.mxu0 0.0
    %1483 = vmatpush1.xpose.msra.mxu0 0.0
    %1484 = vmatprep.subr.mxu0 0.0
    %1485 = vmatpush1.xpose.msra.mxu0 0.0
    %1486 = vmatprep.subr.mxu0 0.0
    %1487 = vmatpush1.xpose.msra.mxu0 0.0
    %1488 = vmatprep.subr.mxu0 0.0
    %1489 = vmatpush1.xpose.msra.mxu0 0.0
    %1490 = vmatprep.subr.mxu0 0.0
    %1491 = vmatpush1.xpose.msra.mxu0 0.0
    %1492 = vmatprep.subr.mxu0 0.0
    %1493 = vmatpush1.xpose.msra.mxu0 0.0
    %1494 = vmatprep.subr.mxu0 0.0
    %1495 = vmatpush1.xpose.msra.mxu0 0.0
    %1496 = vmatprep.subr.mxu0 0.0
    %1497 = vmatpush1.xpose.msra.mxu0 0.0
    %1498 = vmatprep.subr.mxu0 0.0
    %1499 = vmatpush1.xpose.msra.mxu0 0.0
    %1500 = vmatprep.subr.mxu0 0.0
    %1501 = vmatpush1.xpose.msra.mxu0 0.0
    %1502 = vmatprep.subr.mxu0 0.0
    %1503 = vmatpush1.xpose.msra.mxu0 0.0
    %1504 = vmatprep.subr.mxu0 0.0
    %1505 = vmatpush1.xpose.msra.mxu0 0.0
    %1506 = vmatprep.subr.mxu0 0.0
    %1507 = vmatpush1.xpose.msra.mxu0 0.0
    %1508 = vmatprep.subr.mxu0 0.0
    %1509 = vmatpush1.xpose.msra.mxu0 0.0
    %1510 = vmatprep.subr.mxu0 0.0
    %1511 = vmatpush1.xpose.msra.mxu0 0.0
    %1512 = vmatprep.mubr.f32.mxu0 0.0
    %1513 = vmatmul.mubr.f32.gmra.mrb[0].mxu0 %v1440
    %v1514 = vpop.f32.mrb[0].mxu0
    %v1515 = vadd.f32 0.0, %v1514
    %v1516 = vpop.f32.mrb[0].mxu0
    %1517 = vmatprep.mubr.f32.mxu0 0.0
    %1518 = vmatmul.mubr.f32.gmra.mrb[0].mxu0 %v1442
    %v1519 = vpop.f32.mrb[0].mxu0
    %v1520 = vadd.f32 0.0, %v1519
    %v1521 = vpop.f32.mrb[0].mxu0
    %1522 = vdwg.mxu0
    %v1523 = vmul.f32 %v1515, 0.35355338
    %v1524 = vmul.f32 %v1520, 0.35355338
    %v1525 = vadd.f32 %v1523, %v727
    %v1526 = vadd.f32 %v1524, %v728
    %v1527 = vsel %vm914, %v1525, -inf
    %1528 = vmax.xlane.f32.xlu0 %v1527
    %v1529 = vpop.xlane.xlu0 %1528
    %v1530 = vsel %vm914, %v1526, -inf
    %1531 = vmax.xlane.f32.xlu0 %v1530
    %v1532 = vpop.xlane.xlu0 %1531
    %v1533 = vsub.f32 %v1525, %v1529
    %v1534 = vsub.f32 %v1526, %v1532
    %v1535 = vmul.f32 %v1533, 1.442695
    %v1536 = vpow.pop %v1535
    %v1537 = vmul.f32 %v1534, 1.442695
    %v1538 = vpow.pop %v1537
    %v1539 = vsel %vm914, %v1536, 0.0
    %1540 = vadd.xlane.f32.xlu0 %v1539
    %v1541 = vpop.xlane.xlu0 %1540
    %v1542 = vsel %vm914, %v1538, 0.0
    %1543 = vadd.xlane.f32.xlu0 %v1542
    %v1544 = vpop.xlane.xlu0 %1543
    %v1545 = vrcp.pop %v1541
    %v1546 = vrcp.pop %v1544
    %v1547 = vmul.f32 %v1536, %v1545
    %v1548 = vmul.f32 %v1538, %v1546
    %1549 = vrot.lane.b32.xlu0 %v812, 40
    %v1550 = vpop.permute.xlu0 %1549
    %1551 = vrot.lane.b32.xlu0 %v817, 40
    %v1552 = vpop.permute.xlu0 %1551
    %v1556 = vsel %vm914, %v1547, 0
    %v1559 = vsel %vm914, %v1548, 0
    %1561 = vmatprep.subr.mxu0 0.0
    %1562 = vmatpush1.msra.mxu0 %v1550
    %1563 = vmatprep.subr.mxu0 0.0
    %1564 = vmatpush1.msra.mxu0 %v1552
    %1565 = vmatprep.subr.mxu0 0.0
    %1566 = vmatpush1.msra.mxu0 0.0
    %1567 = vmatprep.subr.mxu0 0.0
    %1568 = vmatpush1.msra.mxu0 0.0
    %1569 = vmatprep.subr.mxu0 0.0
    %1570 = vmatpush1.msra.mxu0 0.0
    %1571 = vmatprep.subr.mxu0 0.0
    %1572 = vmatpush1.msra.mxu0 0.0
    %1573 = vmatprep.subr.mxu0 0.0
    %1574 = vmatpush1.msra.mxu0 0.0
    %1575 = vmatprep.subr.mxu0 0.0
    %1576 = vmatpush1.msra.mxu0 0.0
    %1577 = vmatprep.subr.mxu0 0.0
    %1578 = vmatpush1.msra.mxu0 0.0
    %1579 = vmatprep.subr.mxu0 0.0
    %1580 = vmatpush1.msra.mxu0 0.0
    %1581 = vmatprep.subr.mxu0 0.0
    %1582 = vmatpush1.msra.mxu0 0.0
    %1583 = vmatprep.subr.mxu0 0.0
    %1584 = vmatpush1.msra.mxu0 0.0
    %1585 = vmatprep.subr.mxu0 0.0
    %1586 = vmatpush1.msra.mxu0 0.0
    %1587 = vmatprep.subr.mxu0 0.0
    %1588 = vmatpush1.msra.mxu0 0.0
    %1589 = vmatprep.subr.mxu0 0.0
    %1590 = vmatpush1.msra.mxu0 0.0
    %1591 = vmatprep.subr.mxu0 0.0
    %1592 = vmatpush1.msra.mxu0 0.0
    %1593 = vmatprep.subr.mxu0 0.0
    %1594 = vmatpush1.msra.mxu0 0.0
    %1595 = vmatprep.subr.mxu0 0.0
    %1596 = vmatpush1.msra.mxu0 0.0
    %1597 = vmatprep.subr.mxu0 0.0
    %1598 = vmatpush1.msra.mxu0 0.0
    %1599 = vmatprep.subr.mxu0 0.0
    %1600 = vmatpush1.msra.mxu0 0.0
    %1601 = vmatprep.subr.mxu0 0.0
    %1602 = vmatpush1.msra.mxu0 0.0
    %1603 = vmatprep.subr.mxu0 0.0
    %1604 = vmatpush1.msra.mxu0 0.0
    %1605 = vmatprep.subr.mxu0 0.0
    %1606 = vmatpush1.msra.mxu0 0.0
    %1607 = vmatprep.subr.mxu0 0.0
    %1608 = vmatpush1.msra.mxu0 0.0
    %1609 = vmatprep.subr.mxu0 0.0
    %1610 = vmatpush1.msra.mxu0 0.0
    %1611 = vmatprep.subr.mxu0 0.0
    %1612 = vmatpush1.msra.mxu0 0.0
    %1613 = vmatprep.subr.mxu0 0.0
    %1614 = vmatpush1.msra.mxu0 0.0
    %1615 = vmatprep.subr.mxu0 0.0
    %1616 = vmatpush1.msra.mxu0 0.0
    %1617 = vmatprep.subr.mxu0 0.0
    %1618 = vmatpush1.msra.mxu0 0.0
    %1619 = vmatprep.subr.mxu0 0.0
    %1620 = vmatpush1.msra.mxu0 0.0
    %1621 = vmatprep.subr.mxu0 0.0
    %1622 = vmatpush1.msra.mxu0 0.0
    %1623 = vmatprep.subr.mxu0 0.0
    %1624 = vmatpush1.msra.mxu0 0.0
    %1625 = vmatprep.mubr.f32.mxu0 0.0
    %1626 = vmatmul.mubr.f32.gmra.mrb[0].mxu0 %v1556
    %v1627 = vpop.f32.mrb[0].mxu0
    %v1628 = vadd.f32 0.0, %v1627
    %v1629 = vpop.f32.mrb[0].mxu0
    %1630 = vmatprep.mubr.f32.mxu0 0.0
    %1631 = vmatmul.mubr.f32.gmra.mrb[0].mxu0 %v1559
    %v1632 = vpop.f32.mrb[0].mxu0
    %v1633 = vadd.f32 0.0, %v1632
    %v1634 = vpop.f32.mrb[0].mxu0
    %1635 = vdwg.mxu0
    %1638 = vrot.lane.b32.xlu0 %v1220, 8
    %v1639 = vpop.permute.xlu0 %1638
    %1640 = vrot.lane.b32.xlu0 %v1225, 8
    %v1641 = vpop.permute.xlu0 %1640
    %1646 = vrot.lane.b32.xlu0 %v1424, 16
    %v1647 = vpop.permute.xlu0 %1646
    %1648 = vrot.lane.b32.xlu0 %v1429, 16
    %v1649 = vpop.permute.xlu0 %1648
    %1654 = vrot.lane.b32.xlu0 %v1628, 24
    %v1655 = vpop.permute.xlu0 %1654
    %1656 = vrot.lane.b32.xlu0 %v1633, 24
    %v1657 = vpop.permute.xlu0 %1656
    %v1660 = vsel %vm826, %v1016, %v1639
    %v1661 = vsel %vm826, %v1021, %v1641
    %v1662 = vsel %vm914, %v1660, %v1647
    %v1663 = vsel %vm914, %v1661, %v1649
    %vm1664 = vcmask 195584
    %v1665 = vsel %vm1664, %v1662, %v1655
    %v1666 = vsel %vm1664, %v1663, %v1657
    %v1667 = vld [vmem:[#allocation4 + $0x60] sm:$0xff]
    %v1668 = vld [vmem:[#allocation4 + $0x68] sm:$0xff]
    %v1669 = vld [vmem:[#allocation4 + $0x70] sm:$0xff]
    %v1670 = vld [vmem:[#allocation4 + $0x78] sm:$0xff]
    %v1671 = vld [vmem:[#allocation4 + $0x80] sm:$0x1]
    %v1672 = vlaneseq
    %v1673 = vshrl.u32 %v1672, 7
    %v1674 = vsub.s32 0, %v1673
    %v1675 = vrot.slane %v1671, %v1674
    %v1677 = vsel %vm738, %v1665, 0
    %v1680 = vsel %vm738, %v1666, 0
    %1682 = vmatprep.subr.mxu0 0.0
    %1683 = vmatpush1.msra.mxu0 %v1667
    %1684 = vmatprep.subr.mxu0 0.0
    %1685 = vmatpush1.msra.mxu0 %v1668
    %1686 = vmatprep.subr.mxu0 0.0
    %1687 = vmatpush1.msra.mxu0 %v1669
    %1688 = vmatprep.subr.mxu0 0.0
    %1689 = vmatpush1.msra.mxu0 %v1670
    %1690 = vmatprep.subr.mxu0 0.0
    %1691 = vmatpush1.msra.mxu0 0.0
    %1692 = vmatprep.subr.mxu0 0.0
    %1693 = vmatpush1.msra.mxu0 0.0
    %1694 = vmatprep.subr.mxu0 0.0
    %1695 = vmatpush1.msra.mxu0 0.0
    %1696 = vmatprep.subr.mxu0 0.0
    %1697 = vmatpush1.msra.mxu0 0.0
    %1698 = vmatprep.subr.mxu0 0.0
    %1699 = vmatpush1.msra.mxu0 0.0
    %1700 = vmatprep.subr.mxu0 0.0
    %1701 = vmatpush1.msra.mxu0 0.0
    %1702 = vmatprep.subr.mxu0 0.0
    %1703 = vmatpush1.msra.mxu0 0.0
    %1704 = vmatprep.subr.mxu0 0.0
    %1705 = vmatpush1.msra.mxu0 0.0
    %1706 = vmatprep.subr.mxu0 0.0
    %1707 = vmatpush1.msra.mxu0 0.0
    %1708 = vmatprep.subr.mxu0 0.0
    %1709 = vmatpush1.msra.mxu0 0.0
    %1710 = vmatprep.subr.mxu0 0.0
    %1711 = vmatpush1.msra.mxu0 0.0
    %1712 = vmatprep.subr.mxu0 0.0
    %1713 = vmatpush1.msra.mxu0 0.0
    %1714 = vmatprep.subr.mxu0 0.0
    %1715 = vmatpush1.msra.mxu0 0.0
    %1716 = vmatprep.subr.mxu0 0.0
    %1717 = vmatpush1.msra.mxu0 0.0
    %1718 = vmatprep.subr.mxu0 0.0
    %1719 = vmatpush1.msra.mxu0 0.0
    %1720 = vmatprep.subr.mxu0 0.0
    %1721 = vmatpush1.msra.mxu0 0.0
    %1722 = vmatprep.subr.mxu0 0.0
    %1723 = vmatpush1.msra.mxu0 0.0
    %1724 = vmatprep.subr.mxu0 0.0
    %1725 = vmatpush1.msra.mxu0 0.0
    %1726 = vmatprep.subr.mxu0 0.0
    %1727 = vmatpush1.msra.mxu0 0.0
    %1728 = vmatprep.subr.mxu0 0.0
    %1729 = vmatpush1.msra.mxu0 0.0
    %1730 = vmatprep.subr.mxu0 0.0
    %1731 = vmatpush1.msra.mxu0 0.0
    %1732 = vmatprep.subr.mxu0 0.0
    %1733 = vmatpush1.msra.mxu0 0.0
    %1734 = vmatprep.subr.mxu0 0.0
    %1735 = vmatpush1.msra.mxu0 0.0
    %1736 = vmatprep.subr.mxu0 0.0
    %1737 = vmatpush1.msra.mxu0 0.0
    %1738 = vmatprep.subr.mxu0 0.0
    %1739 = vmatpush1.msra.mxu0 0.0
    %1740 = vmatprep.subr.mxu0 0.0
    %1741 = vmatpush1.msra.mxu0 0.0
    %1742 = vmatprep.subr.mxu0 0.0
    %1743 = vmatpush1.msra.mxu0 0.0
    %1744 = vmatprep.subr.mxu0 0.0
    %1745 = vmatpush1.msra.mxu0 0.0
    %1746 = vmatprep.mubr.f32.mxu0 0.0
    %1747 = vmatmul.mubr.f32.gmra.mrb[0].mxu0 %v1677
    %v1748 = vpop.f32.mrb[0].mxu0
    %v1749 = vadd.f32 %v1675, %v1748
    %v1750 = vpop.f32.mrb[0].mxu0
    %1751 = vmatprep.mubr.f32.mxu0 0.0
    %1752 = vmatmul.mubr.f32.gmra.mrb[0].mxu0 %v1680
    %v1753 = vpop.f32.mrb[0].mxu0
    %v1754 = vadd.f32 %v1675, %v1753
    %v1755 = vpop.f32.mrb[0].mxu0
    %1756 = vdwg.mxu0
    %v1757 = vld [vmem:[#allocation4 + $0x88] sm:$0x3]
    %v1758 = vadd.f32 %v725, %v1749
    %v1759 = vadd.f32 %v726, %v1754
    %v1760 = vsel %vm738, %v1758, 0.0
    %1761 = vadd.xlane.f32.xlu0 %v1760
    %v1762 = vpop.xlane.xlu0 %1761
    %v1763 = vsel %vm738, %v1759, 0.0
    %1764 = vadd.xlane.f32.xlu0 %v1763
    %v1765 = vpop.xlane.xlu0 %1764
    %v1766 = vrcp.pop 32.0
    %v1767 = vmul.f32 %v1762, %v1766
    %v1768 = vmul.f32 %v1765, %v1766
    %v1769 = vsub.f32 %v1758, %v1767
    %v1770 = vsub.f32 %v1759, %v1768
    %v1771 = vmul.f32 %v1769, %v1769
    %v1772 = vmul.f32 %v1770, %v1770
    %v1773 = vsel %vm738, %v1771, 0.0
    %1774 = vadd.xlane.f32.xlu0 %v1773
    %v1775 = vpop.xlane.xlu0 %1774
    %v1776 = vsel %vm738, %v1772, 0.0
    %1777 = vadd.xlane.f32.xlu0 %v1776
    %v1778 = vpop.xlane.xlu0 %1777
    %v1779 = vmul.f32 %v1775, %v1766
    %v1780 = vmul.f32 %v1778, %v1766
    %v1781 = vadd.f32 %v1779, 1e-05
    %v1782 = vadd.f32 %v1780, 1e-05
    %v1783 = vrsqrt.pop %v1781
    %v1784 = vrsqrt.pop %v1782
    %v1785 = vmul.f32 %v1769, %v1783
    %v1786 = vmul.f32 %v1770, %v1784
    %v1787 = vlaneseq
    %v1788 = vshrl.u32 %v1787, 7
    %v1789 = vsub.s32 0, %v1788
    %v1790 = vrot.slane %v1757, %v1789
    %v1791 = vmul.f32 %v1785, %v1790
    %v1792 = vmul.f32 %v1786, %v1790
    %v1793 = vlaneseq
    %v1794 = vshrl.u32 %v1793, 7
    %v1795 = vsub.s32 1, %v1794
    %v1796 = vrot.slane %v1757, %v1795
    %v1797 = vadd.f32 %v1791, %v1796
    %v1798 = vadd.f32 %v1792, %v1796
    %v1799 = vld [vmem:[#allocation4 + $0x90] sm:$0xff]
    %v1800 = vld [vmem:[#allocation4 + $0x98] sm:$0xff]
    %v1801 = vld [vmem:[#allocation4 + $0xa0] sm:$0xff]
    %v1802 = vld [vmem:[#allocation4 + $0xa8] sm:$0xff]
    %v1803 = vld [vmem:[#allocation4 + $0xb0] sm:$0x1]
    %v1804 = vlaneseq
    %v1805 = vshrl.u32 %v1804, 7
    %v1806 = vsub.s32 0, %v1805
    %v1807 = vrot.slane %v1803, %v1806
    %v1809 = vsel %vm738, %v1797, 0
    %v1812 = vsel %vm738, %v1798, 0
    %1814 = vmatprep.subr.mxu0 0.0
    %1815 = vmatpush1.msra.mxu0 %v1799
    %1816 = vmatprep.subr.mxu0 0.0
    %1817 = vmatpush1.msra.mxu0 %v1800
    %1818 = vmatprep.subr.mxu0 0.0
    %1819 = vmatpush1.msra.mxu0 %v1801
    %1820 = vmatprep.subr.mxu0 0.0
    %1821 = vmatpush1.msra.mxu0 %v1802
    %1822 = vmatprep.subr.mxu0 0.0
    %1823 = vmatpush1.msra.mxu0 0.0
    %1824 = vmatprep.subr.mxu0 0.0
    %1825 = vmatpush1.msra.mxu0 0.0
    %1826 = vmatprep.subr.mxu0 0.0
    %1827 = vmatpush1.msra.mxu0 0.0
    %1828 = vmatprep.subr.mxu0 0.0
    %1829 = vmatpush1.msra.mxu0 0.0
    %1830 = vmatprep.subr.mxu0 0.0
    %1831 = vmatpush1.msra.mxu0 0.0
    %1832 = vmatprep.subr.mxu0 0.0
    %1833 = vmatpush1.msra.mxu0 0.0
    %1834 = vmatprep.subr.mxu0 0.0
    %1835 = vmatpush1.msra.mxu0 0.0
    %1836 = vmatprep.subr.mxu0 0.0
    %1837 = vmatpush1.msra.mxu0 0.0
    %1838 = vmatprep.subr.mxu0 0.0
    %1839 = vmatpush1.msra.mxu0 0.0
    %1840 = vmatprep.subr.mxu0 0.0
    %1841 = vmatpush1.msra.mxu0 0.0
    %1842 = vmatprep.subr.mxu0 0.0
    %1843 = vmatpush1.msra.mxu0 0.0
    %1844 = vmatprep.subr.mxu0 0.0
    %1845 = vmatpush1.msra.mxu0 0.0
    %1846 = vmatprep.subr.mxu0 0.0
    %1847 = vmatpush1.msra.mxu0 0.0
    %1848 = vmatprep.subr.mxu0 0.0
    %1849 = vmatpush1.msra.mxu0 0.0
    %1850 = vmatprep.subr.mxu0 0.0
    %1851 = vmatpush1.msra.mxu0 0.0
    %1852 = vmatprep.subr.mxu0 0.0
    %1853 = vmatpush1.msra.mxu0 0.0
    %1854 = vmatprep.subr.mxu0 0.0
    %1855 = vmatpush1.msra.mxu0 0.0
    %1856 = vmatprep.subr.mxu0 0.0
    %1857 = vmatpush1.msra.mxu0 0.0
    %1858 = vmatprep.subr.mxu0 0.0
    %1859 = vmatpush1.msra.mxu0 0.0
    %1860 = vmatprep.subr.mxu0 0.0
    %1861 = vmatpush1.msra.mxu0 0.0
    %1862 = vmatprep.subr.mxu0 0.0
    %1863 = vmatpush1.msra.mxu0 0.0
    %1864 = vmatprep.subr.mxu0 0.0
    %1865 = vmatpush1.msra.mxu0 0.0
    %1866 = vmatprep.subr.mxu0 0.0
    %1867 = vmatpush1.msra.mxu0 0.0
    %1868 = vmatprep.subr.mxu0 0.0
    %1869 = vmatpush1.msra.mxu0 0.0
    %1870 = vmatprep.subr.mxu0 0.0
    %1871 = vmatpush1.msra.mxu0 0.0
    %1872 = vmatprep.subr.mxu0 0.0
    %1873 = vmatpush1.msra.mxu0 0.0
    %1874 = vmatprep.subr.mxu0 0.0
    %1875 = vmatpush1.msra.mxu0 0.0
    %1876 = vmatprep.subr.mxu0 0.0
    %1877 = vmatpush1.msra.mxu0 0.0
    %1878 = vmatprep.mubr.f32.mxu0 0.0
    %1879 = vmatmul.mubr.f32.gmra.mrb[0].mxu0 %v1809
    %v1880 = vpop.f32.mrb[0].mxu0
    %v1881 = vadd.f32 %v1807, %v1880
    %v1882 = vpop.f32.mrb[0].mxu0
    %1883 = vmatprep.mubr.f32.mxu0 0.0
    %1884 = vmatmul.mubr.f32.gmra.mrb[0].mxu0 %v1812
    %v1885 = vpop.f32.mrb[0].mxu0
    %v1886 = vadd.f32 %v1807, %v1885
    %v1887 = vpop.f32.mrb[0].mxu0
    %1888 = vdwg.mxu0
    %v1889 = vmax.f32 %v1881, 0.0
    %v1890 = vmax.f32 %v1886, 0.0
    %v1891 = vld [vmem:[#allocation4 + $0xb8] sm:$0xff]
    %v1892 = vld [vmem:[#allocation4 + $0xc0] sm:$0xff]
    %v1893 = vld [vmem:[#allocation4 + $0xc8] sm:$0xff]
    %v1894 = vld [vmem:[#allocation4 + $0xd0] sm:$0xff]
    %v1895 = vld [vmem:[#allocation4 + $0xd8] sm:$0xff]
    %v1896 = vld [vmem:[#allocation4 + $0xe0] sm:$0xff]
    %v1897 = vld [vmem:[#allocation4 + $0xe8] sm:$0xff]
    %v1898 = vld [vmem:[#allocation4 + $0xf0] sm:$0xff]
    %v1899 = vld [vmem:[#allocation4 + $0xf8] sm:$0x1]
    %v1900 = vlaneseq
    %v1901 = vshrl.u32 %v1900, 7
    %v1902 = vsub.s32 0, %v1901
    %v1903 = vrot.slane %v1899, %v1902
    %vm1904 = vcmask 523264
    %v1906 = vsel %vm1904, %v1889, 0
    %v1909 = vsel %vm1904, %v1890, 0
    %1911 = vmatprep.subr.mxu0 0.0
    %1912 = vmatpush1.msra.mxu0 %v1891
    %1913 = vmatprep.subr.mxu0 0.0
    %1914 = vmatpush1.msra.mxu0 %v1892
    %1915 = vmatprep.subr.mxu0 0.0
    %1916 = vmatpush1.msra.mxu0 %v1893
    %1917 = vmatprep.subr.mxu0 0.0
    %1918 = vmatpush1.msra.mxu0 %v1894
    %1919 = vmatprep.subr.mxu0 0.0
    %1920 = vmatpush1.msra.mxu0 %v1895
    %1921 = vmatprep.subr.mxu0 0.0
    %1922 = vmatpush1.msra.mxu0 %v1896
    %1923 = vmatprep.subr.mxu0 0.0
    %1924 = vmatpush1.msra.mxu0 %v1897
    %1925 = vmatprep.subr.mxu0 0.0
    %1926 = vmatpush1.msra.mxu0 %v1898
    %1927 = vmatprep.subr.mxu0 0.0
    %1928 = vmatpush1.msra.mxu0 0.0
    %1929 = vmatprep.subr.mxu0 0.0
    %1930 = vmatpush1.msra.mxu0 0.0
    %1931 = vmatprep.subr.mxu0 0.0
    %1932 = vmatpush1.msra.mxu0 0.0
    %1933 = vmatprep.subr.mxu0 0.0
    %1934 = vmatpush1.msra.mxu0 0.0
    %1935 = vmatprep.subr.mxu0 0.0
    %1936 = vmatpush1.msra.mxu0 0.0
    %1937 = vmatprep.subr.mxu0 0.0
    %1938 = vmatpush1.msra.mxu0 0.0
    %1939 = vmatprep.subr.mxu0 0.0
    %1940 = vmatpush1.msra.mxu0 0.0
    %1941 = vmatprep.subr.mxu0 0.0
    %1942 = vmatpush1.msra.mxu0 0.0
    %1943 = vmatprep.subr.mxu0 0.0
    %1944 = vmatpush1.msra.mxu0 0.0
    %1945 = vmatprep.subr.mxu0 0.0
    %1946 = vmatpush1.msra.mxu0 0.0
    %1947 = vmatprep.subr.mxu0 0.0
    %1948 = vmatpush1.msra.mxu0 0.0
    %1949 = vmatprep.subr.mxu0 0.0
    %1950 = vmatpush1.msra.mxu0 0.0
    %1951 = vmatprep.subr.mxu0 0.0
    %1952 = vmatpush1.msra.mxu0 0.0
    %1953 = vmatprep.subr.mxu0 0.0
    %1954 = vmatpush1.msra.mxu0 0.0
    %1955 = vmatprep.subr.mxu0 0.0
    %1956 = vmatpush1.msra.mxu0 0.0
    %1957 = vmatprep.subr.mxu0 0.0
    %1958 = vmatpush1.msra.mxu0 0.0
    %1959 = vmatprep.subr.mxu0 0.0
    %1960 = vmatpush1.msra.mxu0 0.0
    %1961 = vmatprep.subr.mxu0 0.0
    %1962 = vmatpush1.msra.mxu0 0.0
    %1963 = vmatprep.subr.mxu0 0.0
    %1964 = vmatpush1.msra.mxu0 0.0
    %1965 = vmatprep.subr.mxu0 0.0
    %1966 = vmatpush1.msra.mxu0 0.0
    %1967 = vmatprep.subr.mxu0 0.0
    %1968 = vmatpush1.msra.mxu0 0.0
    %1969 = vmatprep.subr.mxu0 0.0
    %1970 = vmatpush1.msra.mxu0 0.0
    %1971 = vmatprep.subr.mxu0 0.0
    %1972 = vmatpush1.msra.mxu0 0.0
    %1973 = vmatprep.subr.mxu0 0.0
    %1974 = vmatpush1.msra.mxu0 0.0
    %1975 = vmatprep.mubr.f32.mxu0 0.0
    %1976 = vmatmul.mubr.f32.gmra.mrb[0].mxu0 %v1906
    %v1977 = vpop.f32.mrb[0].mxu0
    %v1978 = vadd.f32 %v1903, %v1977
    %v1979 = vpop.f32.mrb[0].mxu0
    %1980 = vmatprep.mubr.f32.mxu0 0.0
    %1981 = vmatmul.mubr.f32.gmra.mrb[0].mxu0 %v1909
    %v1982 = vpop.f32.mrb[0].mxu0
    %v1983 = vadd.f32 %v1903, %v1982
    %v1984 = vpop.f32.mrb[0].mxu0
    %1985 = vdwg.mxu0
    %v1986 = vld [vmem:[#allocation4 + $0x100] sm:$0x3]
    %v1987 = vadd.f32 %v1797, %v1978
    %v1988 = vadd.f32 %v1798, %v1983
    %v1989 = vsel %vm738, %v1987, 0.0
    %1990 = vadd.xlane.f32.xlu0 %v1989
    %v1991 = vpop.xlane.xlu0 %1990
    %v1992 = vsel %vm738, %v1988, 0.0
    %1993 = vadd.xlane.f32.xlu0 %v1992
    %v1994 = vpop.xlane.xlu0 %1993
    %v1995 = vmul.f32 %v1991, %v1766
    %v1996 = vmul.f32 %v1994, %v1766
    %v1997 = vsub.f32 %v1987, %v1995
    %v1998 = vsub.f32 %v1988, %v1996
    %v1999 = vmul.f32 %v1997, %v1997
    %v2000 = vmul.f32 %v1998, %v1998
    %v2001 = vsel %vm738, %v1999, 0.0
    %2002 = vadd.xlane.f32.xlu0 %v2001
    %v2003 = vpop.xlane.xlu0 %2002
    %v2004 = vsel %vm738, %v2000, 0.0
    %2005 = vadd.xlane.f32.xlu0 %v2004
    %v2006 = vpop.xlane.xlu0 %2005
    %v2007 = vmul.f32 %v2003, %v1766
    %v2008 = vmul.f32 %v2006, %v1766
    %v2009 = vadd.f32 %v2007, 1e-05
    %v2010 = vadd.f32 %v2008, 1e-05
    %v2011 = vrsqrt.pop %v2009
    %v2012 = vrsqrt.pop %v2010
    %v2013 = vmul.f32 %v1997, %v2011
    %v2014 = vmul.f32 %v1998, %v2012
    %v2015 = vlaneseq
    %v2016 = vshrl.u32 %v2015, 7
    %v2017 = vsub.s32 0, %v2016
    %v2018 = vrot.slane %v1986, %v2017
    %v2019 = vmul.f32 %v2013, %v2018
    %v2020 = vmul.f32 %v2014, %v2018
    %v2021 = vlaneseq
    %v2022 = vshrl.u32 %v2021, 7
    %v2023 = vsub.s32 1, %v2022
    %v2024 = vrot.slane %v1986, %v2023
    %v2025 = vadd.f32 %v2019, %v2024
    %v2026 = vadd.f32 %v2020, %v2024
    %v2027 = vld [vmem:[#allocation4 + $0x108] sm:$0xff]
    %v2028 = vld [vmem:[#allocation4 + $0x110] sm:$0xff]
    %v2029 = vld [vmem:[#allocation4 + $0x118] sm:$0xff]
    %v2030 = vld [vmem:[#allocation4 + $0x120] sm:$0xff]
    %v2031 = vld [vmem:[#allocation4 + $0x128] sm:$0x1]
    %v2032 = vlaneseq
    %v2033 = vshrl.u32 %v2032, 7
    %v2034 = vsub.s32 0, %v2033
    %v2035 = vrot.slane %v2031, %v2034
    %v2037 = vsel %vm738, %v2025, 0
    %v2040 = vsel %vm738, %v2026, 0
    %2042 = vmatprep.subr.mxu0 0.0
    %2043 = vmatpush1.msra.mxu0 %v2027
    %2044 = vmatprep.subr.mxu0 0.0
    %2045 = vmatpush1.msra.mxu0 %v2028
    %2046 = vmatprep.subr.mxu0 0.0
    %2047 = vmatpush1.msra.mxu0 %v2029
    %2048 = vmatprep.subr.mxu0 0.0
    %2049 = vmatpush1.msra.mxu0 %v2030
    %2050 = vmatprep.subr.mxu0 0.0
    %2051 = vmatpush1.msra.mxu0 0.0
    %2052 = vmatprep.subr.mxu0 0.0
    %2053 = vmatpush1.msra.mxu0 0.0
    %2054 = vmatprep.subr.mxu0 0.0
    %2055 = vmatpush1.msra.mxu0 0.0
    %2056 = vmatprep.subr.mxu0 0.0
    %2057 = vmatpush1.msra.mxu0 0.0
    %2058 = vmatprep.subr.mxu0 0.0
    %2059 = vmatpush1.msra.mxu0 0.0
    %2060 = vmatprep.subr.mxu0 0.0
    %2061 = vmatpush1.msra.mxu0 0.0
    %2062 = vmatprep.subr.mxu0 0.0
    %2063 = vmatpush1.msra.mxu0 0.0
    %2064 = vmatprep.subr.mxu0 0.0
    %2065 = vmatpush1.msra.mxu0 0.0
    %2066 = vmatprep.subr.mxu0 0.0
    %2067 = vmatpush1.msra.mxu0 0.0
    %2068 = vmatprep.subr.mxu0 0.0
    %2069 = vmatpush1.msra.mxu0 0.0
    %2070 = vmatprep.subr.mxu0 0.0
    %2071 = vmatpush1.msra.mxu0 0.0
    %2072 = vmatprep.subr.mxu0 0.0
    %2073 = vmatpush1.msra.mxu0 0.0
    %2074 = vmatprep.subr.mxu0 0.0
    %2075 = vmatpush1.msra.mxu0 0.0
    %2076 = vmatprep.subr.mxu0 0.0
    %2077 = vmatpush1.msra.mxu0 0.0
    %2078 = vmatprep.subr.mxu0 0.0
    %2079 = vmatpush1.msra.mxu0 0.0
    %2080 = vmatprep.subr.mxu0 0.0
    %2081 = vmatpush1.msra.mxu0 0.0
    %2082 = vmatprep.subr.mxu0 0.0
    %2083 = vmatpush1.msra.mxu0 0.0
    %2084 = vmatprep.subr.mxu0 0.0
    %2085 = vmatpush1.msra.mxu0 0.0
    %2086 = vmatprep.subr.mxu0 0.0
    %2087 = vmatpush1.msra.mxu0 0.0
    %2088 = vmatprep.subr.mxu0 0.0
    %2089 = vmatpush1.msra.mxu0 0.0
    %2090 = vmatprep.subr.mxu0 0.0
    %2091 = vmatpush1.msra.mxu0 0.0
    %2092 = vmatprep.subr.mxu0 0.0
    %2093 = vmatpush1.msra.mxu0 0.0
    %2094 = vmatprep.subr.mxu0 0.0
    %2095 = vmatpush1.msra.mxu0 0.0
    %2096 = vmatprep.subr.mxu0 0.0
    %2097 = vmatpush1.msra.mxu0 0.0
    %2098 = vmatprep.subr.mxu0 0.0
    %2099 = vmatpush1.msra.mxu0 0.0
    %2100 = vmatprep.subr.mxu0 0.0
    %2101 = vmatpush1.msra.mxu0 0.0
    %2102 = vmatprep.subr.mxu0 0.0
    %2103 = vmatpush1.msra.mxu0 0.0
    %2104 = vmatprep.subr.mxu0 0.0
    %2105 = vmatpush1.msra.mxu0 0.0
    %2106 = vmatprep.mubr.f32.mxu0 0.0
    %2107 = vmatmul.mubr.f32.gmra.mrb[0].mxu0 %v2037
    %v2108 = vpop.f32.mrb[0].mxu0
    %v2109 = vadd.f32 %v2035, %v2108
    %v2110 = vpop.f32.mrb[0].mxu0
    %2111 = vmatprep.mubr.f32.mxu0 0.0
    %2112 = vmatmul.mubr.f32.gmra.mrb[0].mxu0 %v2040
    %v2113 = vpop.f32.mrb[0].mxu0
    %v2114 = vadd.f32 %v2035, %v2113
    %v2115 = vpop.f32.mrb[0].mxu0
    %2116 = vdwg.mxu0
    %2119 = vrot.lane.b32.xlu0 %v2109, 96
    %v2120 = vpop.permute.xlu0 %2119
    %2121 = vrot.lane.b32.xlu0 %v2114, 96
    %v2122 = vpop.permute.xlu0 %2121
    %v2123 = vsel %vm826, %v2109, 0
    %v2125 = vsel %vm826, %v2114, 0
    %v2127 = vsel %vm826, %v2120, 0
    %v2129 = vsel %vm826, %v2122, 0
    %2131 = vmatprep.subr.mxu0 0.0
    %2132 = vmatpush1.xpose.msra.mxu0 %v2127
    %2133 = vmatprep.subr.mxu0 0.0
    %2134 = vmatpush1.xpose.msra.mxu0 %v2129
    %2135 = vmatprep.subr.mxu0 0.0
    %2136 = vmatpush1.xpose.msra.mxu0 0.0
    %2137 = vmatprep.subr.mxu0 0.0
    %2138 = vmatpush1.xpose.msra.mxu0 0.0
    %2139 = vmatprep.subr.mxu0 0.0
    %2140 = vmatpush1.xpose.msra.mxu0 0.0
    %2141 = vmatprep.subr.mxu0 0.0
    %2142 = vmatpush1.xpose.msra.mxu0 0.0
    %2143 = vmatprep.subr.mxu0 0.0
    %2144 = vmatpush1.xpose.msra.mxu0 0.0
    %2145 = vmatprep.subr.mxu0 0.0
    %2146 = vmatpush1.xpose.msra.mxu0 0.0
    %2147 = vmatprep.subr.mxu0 0.0
    %2148 = vmatpush1.xpose.msra.mxu0 0.0
    %2149 = vmatprep.subr.mxu0 0.0
    %2150 = vmatpush1.xpose.msra.mxu0 0.0
    %2151 = vmatprep.subr.mxu0 0.0
    %2152 = vmatpush1.xpose.msra.mxu0 0.0
    %2153 = vmatprep.subr.mxu0 0.0
    %2154 = vmatpush1.xpose.msra.mxu0 0.0
    %2155 = vmatprep.subr.mxu0 0.0
    %2156 = vmatpush1.xpose.msra.mxu0 0.0
    %2157 = vmatprep.subr.mxu0 0.0
    %2158 = vmatpush1.xpose.msra.mxu0 0.0
    %2159 = vmatprep.subr.mxu0 0.0
    %2160 = vmatpush1.xpose.msra.mxu0 0.0
    %2161 = vmatprep.subr.mxu0 0.0
    %2162 = vmatpush1.xpose.msra.mxu0 0.0
    %2163 = vmatprep.subr.mxu0 0.0
    %2164 = vmatpush1.xpose.msra.mxu0 0.0
    %2165 = vmatprep.subr.mxu0 0.0
    %2166 = vmatpush1.xpose.msra.mxu0 0.0
    %2167 = vmatprep.subr.mxu0 0.0
    %2168 = vmatpush1.xpose.msra.mxu0 0.0
    %2169 = vmatprep.subr.mxu0 0.0
    %2170 = vmatpush1.xpose.msra.mxu0 0.0
    %2171 = vmatprep.subr.mxu0 0.0
    %2172 = vmatpush1.xpose.msra.mxu0 0.0
    %2173 = vmatprep.subr.mxu0 0.0
    %2174 = vmatpush1.xpose.msra.mxu0 0.0
    %2175 = vmatprep.subr.mxu0 0.0
    %2176 = vmatpush1.xpose.msra.mxu0 0.0
    %2177 = vmatprep.subr.mxu0 0.0
    %2178 = vmatpush1.xpose.msra.mxu0 0.0
    %2179 = vmatprep.subr.mxu0 0.0
    %2180 = vmatpush1.xpose.msra.mxu0 0.0
    %2181 = vmatprep.subr.mxu0 0.0
    %2182 = vmatpush1.xpose.msra.mxu0 0.0
    %2183 = vmatprep.subr.mxu0 0.0
    %2184 = vmatpush1.xpose.msra.mxu0 0.0
    %2185 = vmatprep.subr.mxu0 0.0
    %2186 = vmatpush1.xpose.msra.mxu0 0.0
    %2187 = vmatprep.subr.mxu0 0.0
    %2188 = vmatpush1.xpose.msra.mxu0 0.0
    %2189 = vmatprep.subr.mxu0 0.0
    %2190 = vmatpush1.xpose.msra.mxu0 0.0
    %2191 = vmatprep.subr.mxu0 0.0
    %2192 = vmatpush1.xpose.msra.mxu0 0.0
    %2193 = vmatprep.subr.mxu0 0.0
    %2194 = vmatpush1.xpose.msra.mxu0 0.0
    %2195 = vmatprep.mubr.f32.mxu0 0.0
    %2196 = vmatmul.mubr.f32.gmra.mrb[0].mxu0 %v2123
    %v2197 = vpop.f32.mrb[0].mxu0
    %v2198 = vadd.f32 0.0, %v2197
    %v2199 = vpop.f32.mrb[0].mxu0
    %2200 = vmatprep.mubr.f32.mxu0 0.0
    %2201 = vmatmul.mubr.f32.gmra.mrb[0].mxu0 %v2125
    %v2202 = vpop.f32.mrb[0].mxu0
    %v2203 = vadd.f32 0.0, %v2202
    %v2204 = vpop.f32.mrb[0].mxu0
    %2205 = vdwg.mxu0
    %v2206 = vmul.f32 %v2198, 0.35355338
    %v2207 = vmul.f32 %v2203, 0.35355338
    %v2208 = vadd.f32 %v2206, %v727
    %v2209 = vadd.f32 %v2207, %v728
    %v2210 = vsel %vm914, %v2208, -inf
    %2211 = vmax.xlane.f32.xlu0 %v2210
    %v2212 = vpop.xlane.xlu0 %2211
    %v2213 = vsel %vm914, %v2209, -inf
    %2214 = vmax.xlane.f32.xlu0 %v2213
    %v2215 = vpop.xlane.xlu0 %2214
    %v2216 = vsub.f32 %v2208, %v2212
    %v2217 = vsub.f32 %v2209, %v2215
    %v2218 = vmul.f32 %v2216, 1.442695
    %v2219 = vpow.pop %v2218
    %v2220 = vmul.f32 %v2217, 1.442695
    %v2221 = vpow.pop %v2220
    %v2222 = vsel %vm914, %v2219, 0.0
    %2223 = vadd.xlane.f32.xlu0 %v2222
    %v2224 = vpop.xlane.xlu0 %2223
    %v2225 = vsel %vm914, %v2221, 0.0
    %2226 = vadd.xlane.f32.xlu0 %v2225
    %v2227 = vpop.xlane.xlu0 %2226
    %v2228 = vrcp.pop %v2224
    %v2229 = vrcp.pop %v2227
    %v2230 = vmul.f32 %v2219, %v2228
    %v2231 = vmul.f32 %v2221, %v2229
    %2232 = vrot.lane.b32.xlu0 %v2109, 64
    %v2233 = vpop.permute.xlu0 %2232
    %2234 = vrot.lane.b32.xlu0 %v2114, 64
    %v2235 = vpop.permute.xlu0 %2234
    %v2239 = vsel %vm914, %v2230, 0
    %v2242 = vsel %vm914, %v2231, 0
    %2244 = vmatprep.subr.mxu0 0.0
    %2245 = vmatpush1.msra.mxu0 %v2233
    %2246 = vmatprep.subr.mxu0 0.0
    %2247 = vmatpush1.msra.mxu0 %v2235
    %2248 = vmatprep.subr.mxu0 0.0
    %2249 = vmatpush1.msra.mxu0 0.0
    %2250 = vmatprep.subr.mxu0 0.0
    %2251 = vmatpush1.msra.mxu0 0.0
    %2252 = vmatprep.subr.mxu0 0.0
    %2253 = vmatpush1.msra.mxu0 0.0
    %2254 = vmatprep.subr.mxu0 0.0
    %2255 = vmatpush1.msra.mxu0 0.0
    %2256 = vmatprep.subr.mxu0 0.0
    %2257 = vmatpush1.msra.mxu0 0.0
    %2258 = vmatprep.subr.mxu0 0.0
    %2259 = vmatpush1.msra.mxu0 0.0
    %2260 = vmatprep.subr.mxu0 0.0
    %2261 = vmatpush1.msra.mxu0 0.0
    %2262 = vmatprep.subr.mxu0 0.0
    %2263 = vmatpush1.msra.mxu0 0.0
    %2264 = vmatprep.subr.mxu0 0.0
    %2265 = vmatpush1.msra.mxu0 0.0
    %2266 = vmatprep.subr.mxu0 0.0
    %2267 = vmatpush1.msra.mxu0 0.0
    %2268 = vmatprep.subr.mxu0 0.0
    %2269 = vmatpush1.msra.mxu0 0.0
    %2270 = vmatprep.subr.mxu0 0.0
    %2271 = vmatpush1.msra.mxu0 0.0
    %2272 = vmatprep.subr.mxu0 0.0
    %2273 = vmatpush1.msra.mxu0 0.0
    %2274 = vmatprep.subr.mxu0 0.0
    %2275 = vmatpush1.msra.mxu0 0.0
    %2276 = vmatprep.subr.mxu0 0.0
    %2277 = vmatpush1.msra.mxu0 0.0
    %2278 = vmatprep.subr.mxu0 0.0
    %2279 = vmatpush1.msra.mxu0 0.0
    %2280 = vmatprep.subr.mxu0 0.0
    %2281 = vmatpush1.msra.mxu0 0.0
    %2282 = vmatprep.subr.mxu0 0.0
    %2283 = vmatpush1.msra.mxu0 0.0
    %2284 = vmatprep.subr.mxu0 0.0
    %2285 = vmatpush1.msra.mxu0 0.0
    %2286 = vmatprep.subr.mxu0 0.0
    %2287 = vmatpush1.msra.mxu0 0.0
    %2288 = vmatprep.subr.mxu0 0.0
    %2289 = vmatpush1.msra.mxu0 0.0
    %2290 = vmatprep.subr.mxu0 0.0
    %2291 = vmatpush1.msra.mxu0 0.0
    %2292 = vmatprep.subr.mxu0 0.0
    %2293 = vmatpush1.msra.mxu0 0.0
    %2294 = vmatprep.subr.mxu0 0.0
    %2295 = vmatpush1.msra.mxu0 0.0
    %2296 = vmatprep.subr.mxu0 0.0
    %2297 = vmatpush1.msra.mxu0 0.0
    %2298 = vmatprep.subr.mxu0 0.0
    %2299 = vmatpush1.msra.mxu0 0.0
    %2300 = vmatprep.subr.mxu0 0.0
    %2301 = vmatpush1.msra.mxu0 0.0
    %2302 = vmatprep.subr.mxu0 0.0
    %2303 = vmatpush1.msra.mxu0 0.0
    %2304 = vmatprep.subr.mxu0 0.0
    %2305 = vmatpush1.msra.mxu0 0.0
    %2306 = vmatprep.subr.mxu0 0.0
    %2307 = vmatpush1.msra.mxu0 0.0
    %2308 = vmatprep.mubr.f32.mxu0 0.0
    %2309 = vmatmul.mubr.f32.gmra.mrb[0].mxu0 %v2239
    %v2310 = vpop.f32.mrb[0].mxu0
    %v2311 = vadd.f32 0.0, %v2310
    %v2312 = vpop.f32.mrb[0].mxu0
    %2313 = vmatprep.mubr.f32.mxu0 0.0
    %2314 = vmatmul.mubr.f32.gmra.mrb[0].mxu0 %v2242
    %v2315 = vpop.f32.mrb[0].mxu0
    %v2316 = vadd.f32 0.0, %v2315
    %v2317 = vpop.f32.mrb[0].mxu0
    %2318 = vdwg.mxu0
    %2319 = vrot.lane.b32.xlu0 %v2109, 120
    %v2320 = vpop.permute.xlu0 %2319
    %2321 = vrot.lane.b32.xlu0 %v2114, 120
    %v2322 = vpop.permute.xlu0 %2321
    %2323 = vrot.lane.b32.xlu0 %v2109, 88
    %v2324 = vpop.permute.xlu0 %2323
    %2325 = vrot.lane.b32.xlu0 %v2114, 88
    %v2326 = vpop.permute.xlu0 %2325
    %v2327 = vsel %vm826, %v2320, 0
    %v2329 = vsel %vm826, %v2322, 0
    %v2331 = vsel %vm826, %v2324, 0
    %v2333 = vsel %vm826, %v2326, 0
    %2335 = vmatprep.subr.mxu0 0.0
    %2336 = vmatpush1.xpose.msra.mxu0 %v2331
    %2337 = vmatprep.subr.mxu0 0.0
    %2338 = vmatpush1.xpose.msra.mxu0 %v2333
    %2339 = vmatprep.subr.mxu0 0.0
    %2340 = vmatpush1.xpose.msra.mxu0 0.0
    %2341 = vmatprep.subr.mxu0 0.0
    %2342 = vmatpush1.xpose.msra.mxu0 0.0
    %2343 = vmatprep.subr.mxu0 0.0
    %2344 = vmatpush1.xpose.msra.mxu0 0.0
    %2345 = vmatprep.subr.mxu0 0.0
    %2346 = vmatpush1.xpose.msra.mxu0 0.0
    %2347 = vmatprep.subr.mxu0 0.0
    %2348 = vmatpush1.xpose.msra.mxu0 0.0
    %2349 = vmatprep.subr.mxu0 0.0
    %2350 = vmatpush1.xpose.msra.mxu0 0.0
    %2351 = vmatprep.subr.mxu0 0.0
    %2352 = vmatpush1.xpose.msra.mxu0 0.0
    %2353 = vmatprep.subr.mxu0 0.0
    %2354 = vmatpush1.xpose.msra.mxu0 0.0
    %2355 = vmatprep.subr.mxu0 0.0
    %2356 = vmatpush1.xpose.msra.mxu0 0.0
    %2357 = vmatprep.subr.mxu0 0.0
    %2358 = vmatpush1.xpose.msra.mxu0 0.0
    %2359 = vmatprep.subr.mxu0 0.0
    %2360 = vmatpush1.xpose.msra.mxu0 0.0
    %2361 = vmatprep.subr.mxu0 0.0
    %2362 = vmatpush1.xpose.msra.mxu0 0.0
    %2363 = vmatprep.subr.mxu0 0.0
    %2364 = vmatpush1.xpose.msra.mxu0 0.0
    %2365 = vmatprep.subr.mxu0 0.0
    %2366 = vmatpush1.xpose.msra.mxu0 0.0
    %2367 = vmatprep.subr.mxu0 0.0
    %2368 = vmatpush1.xpose.msra.mxu0 0.0
    %2369 = vmatprep.subr.mxu0 0.0
    %2370 = vmatpush1.xpose.msra.mxu0 0.0
    %2371 = vmatprep.subr.mxu0 0.0
    %2372 = vmatpush1.xpose.msra.mxu0 0.0
    %2373 = vmatprep.subr.mxu0 0.0
    %2374 = vmatpush1.xpose.msra.mxu0 0.0
    %2375 = vmatprep.subr.mxu0 0.0
    %2376 = vmatpush1.xpose.msra.mxu0 0.0
    %2377 = vmatprep.subr.mxu0 0.0
    %2378 = vmatpush1.xpose.msra.mxu0 0.0
    %2379 = vmatprep.subr.mxu0 0.0
    %2380 = vmatpush1.xpose.msra.mxu0 0.0
    %2381 = vmatprep.subr.mxu0 0.0
    %2382 = vmatpush1.xpose.msra.mxu0 0.0
    %2383 = vmatprep.subr.mxu0 0.0
    %2384 = vmatpush1.xpose.msra.mxu0 0.0
    %2385 = vmatprep.subr.mxu0 0.0
    %2386 = vmatpush1.xpose.msra.mxu0 0.0
    %2387 = vmatprep.subr.mxu0 0.0
    %2388 = vmatpush1.xpose.msra.mxu0 0.0
    %2389 = vmatprep.subr.mxu0 0.0
    %2390 = vmatpush1.xpose.msra.mxu0 0.0
    %2391 = vmatprep.subr.mxu0 0.0
    %2392 = vmatpush1.xpose.msra.mxu0 0.0
    %2393 = vmatprep.subr.mxu0 0.0
    %2394 = vmatpush1.xpose.msra.mxu0 0.0
    %2395 = vmatprep.subr.mxu0 0.0
    %2396 = vmatpush1.xpose.msra.mxu0 0.0
    %2397 = vmatprep.subr.mxu0 0.0
    %2398 = vmatpush1.xpose.msra.mxu0 0.0
    %2399 = vmatprep.mubr.f32.mxu0 0.0
    %2400 = vmatmul.mubr.f32.gmra.mrb[0].mxu0 %v2327
    %v2401 = vpop.f32.mrb[0].mxu0
    %v2402 = vadd.f32 0.0, %v2401
    %v2403 = vpop.f32.mrb[0].mxu0
    %2404 = vmatprep.mubr.f32.mxu0 0.0
    %2405 = vmatmul.mubr.f32.gmra.mrb[0].mxu0 %v2329
    %v2406 = vpop.f32.mrb[0].mxu0
    %v2407 = vadd.f32 0.0, %v2406
    %v2408 = vpop.f32.mrb[0].mxu0
    %2409 = vdwg.mxu0
    %v2410 = vmul.f32 %v2402, 0.35355338
    %v2411 = vmul.f32 %v2407, 0.35355338
    %v2412 = vadd.f32 %v2410, %v727
    %v2413 = vadd.f32 %v2411, %v728
    %v2414 = vsel %vm914, %v2412, -inf
    %2415 = vmax.xlane.f32.xlu0 %v2414
    %v2416 = vpop.xlane.xlu0 %2415
    %v2417 = vsel %vm914, %v2413, -inf
    %2418 = vmax.xlane.f32.xlu0 %v2417
    %v2419 = vpop.xlane.xlu0 %2418
    %v2420 = vsub.f32 %v2412, %v2416
    %v2421 = vsub.f32 %v2413, %v2419
    %v2422 = vmul.f32 %v2420, 1.442695
    %v2423 = vpow.pop %v2422
    %v2424 = vmul.f32 %v2421, 1.442695
    %v2425 = vpow.pop %v2424
    %v2426 = vsel %vm914, %v2423, 0.0
    %2427 = vadd.xlane.f32.xlu0 %v2426
    %v2428 = vpop.xlane.xlu0 %2427
    %v2429 = vsel %vm914, %v2425, 0.0
    %2430 = vadd.xlane.f32.xlu0 %v2429
    %v2431 = vpop.xlane.xlu0 %2430
    %v2432 = vrcp.pop %v2428
    %v2433 = vrcp.pop %v2431
    %v2434 = vmul.f32 %v2423, %v2432
    %v2435 = vmul.f32 %v2425, %v2433
    %2436 = vrot.lane.b32.xlu0 %v2109, 56
    %v2437 = vpop.permute.xlu0 %2436
    %2438 = vrot.lane.b32.xlu0 %v2114, 56
    %v2439 = vpop.permute.xlu0 %2438
    %v2443 = vsel %vm914, %v2434, 0
    %v2446 = vsel %vm914, %v2435, 0
    %2448 = vmatprep.subr.mxu0 0.0
    %2449 = vmatpush1.msra.mxu0 %v2437
    %2450 = vmatprep.subr.mxu0 0.0
    %2451 = vmatpush1.msra.mxu0 %v2439
    %2452 = vmatprep.subr.mxu0 0.0
    %2453 = vmatpush1.msra.mxu0 0.0
    %2454 = vmatprep.subr.mxu0 0.0
    %2455 = vmatpush1.msra.mxu0 0.0
    %2456 = vmatprep.subr.mxu0 0.0
    %2457 = vmatpush1.msra.mxu0 0.0
    %2458 = vmatprep.subr.mxu0 0.0
    %2459 = vmatpush1.msra.mxu0 0.0
    %2460 = vmatprep.subr.mxu0 0.0
    %2461 = vmatpush1.msra.mxu0 0.0
    %2462 = vmatprep.subr.mxu0 0.0
    %2463 = vmatpush1.msra.mxu0 0.0
    %2464 = vmatprep.subr.mxu0 0.0
    %2465 = vmatpush1.msra.mxu0 0.0
    %2466 = vmatprep.subr.mxu0 0.0
    %2467 = vmatpush1.msra.mxu0 0.0
    %2468 = vmatprep.subr.mxu0 0.0
    %2469 = vmatpush1.msra.mxu0 0.0
    %2470 = vmatprep.subr.mxu0 0.0
    %2471 = vmatpush1.msra.mxu0 0.0
    %2472 = vmatprep.subr.mxu0 0.0
    %2473 = vmatpush1.msra.mxu0 0.0
    %2474 = vmatprep.subr.mxu0 0.0
    %2475 = vmatpush1.msra.mxu0 0.0
    %2476 = vmatprep.subr.mxu0 0.0
    %2477 = vmatpush1.msra.mxu0 0.0
    %2478 = vmatprep.subr.mxu0 0.0
    %2479 = vmatpush1.msra.mxu0 0.0
    %2480 = vmatprep.subr.mxu0 0.0
    %2481 = vmatpush1.msra.mxu0 0.0
    %2482 = vmatprep.subr.mxu0 0.0
    %2483 = vmatpush1.msra.mxu0 0.0
    %2484 = vmatprep.subr.mxu0 0.0
    %2485 = vmatpush1.msra.mxu0 0.0
    %2486 = vmatprep.subr.mxu0 0.0
    %2487 = vmatpush1.msra.mxu0 0.0
    %2488 = vmatprep.subr.mxu0 0.0
    %2489 = vmatpush1.msra.mxu0 0.0
    %2490 = vmatprep.subr.mxu0 0.0
    %2491 = vmatpush1.msra.mxu0 0.0
    %2492 = vmatprep.subr.mxu0 0.0
    %2493 = vmatpush1.msra.mxu0 0.0
    %2494 = vmatprep.subr.mxu0 0.0
    %2495 = vmatpush1.msra.mxu0 0.0
    %2496 = vmatprep.subr.mxu0 0.0
    %2497 = vmatpush1.msra.mxu0 0.0
    %2498 = vmatprep.subr.mxu0 0.0
    %2499 = vmatpush1.msra.mxu0 0.0
    %2500 = vmatprep.subr.mxu0 0.0
    %2501 = vmatpush1.msra.mxu0 0.0
    %2502 = vmatprep.subr.mxu0 0.0
    %2503 = vmatpush1.msra.mxu0 0.0
    %2504 = vmatprep.subr.mxu0 0.0
    %2505 = vmatpush1.msra.mxu0 0.0
    %2506 = vmatprep.subr.mxu0 0.0
    %2507 = vmatpush1.msra.mxu0 0.0
    %2508 = vmatprep.subr.mxu0 0.0
    %2509 = vmatpush1.msra.mxu0 0.0
    %2510 = vmatprep.subr.mxu0 0.0
    %2511 = vmatpush1.msra.mxu0 0.0
    %2512 = vmatprep.mubr.f32.mxu0 0.0
    %2513 = vmatmul.mubr.f32.gmra.mrb[0].mxu0 %v2443
    %v2514 = vpop.f32.mrb[0].mxu0
    %v2515 = vadd.f32 0.0, %v2514
    %v2516 = vpop.f32.mrb[0].mxu0
    %2517 = vmatprep.mubr.f32.mxu0 0.0
    %2518 = vmatmul.mubr.f32.gmra.mrb[0].mxu0 %v2446
    %v2519 = vpop.f32.mrb[0].mxu0
    %v2520 = vadd.f32 0.0, %v2519
    %v2521 = vpop.f32.mrb[0].mxu0
    %2522 = vdwg.mxu0
    %2523 = vrot.lane.b32.xlu0 %v2109, 112
    %v2524 = vpop.permute.xlu0 %2523
    %2525 = vrot.lane.b32.xlu0 %v2114, 112
    %v2526 = vpop.permute.xlu0 %2525
    %2527 = vrot.lane.b32.xlu0 %v2109, 80
    %v2528 = vpop.permute.xlu0 %2527
    %2529 = vrot.lane.b32.xlu0 %v2114, 80
    %v2530 = vpop.permute.xlu0 %2529
    %v2531 = vsel %vm826, %v2524, 0
    %v2533 = vsel %vm826, %v2526, 0
    %v2535 = vsel %vm826, %v2528, 0
    %v2537 = vsel %vm826, %v2530, 0
    %2539 = vmatprep.subr.mxu0 0.0
    %2540 = vmatpush1.xpose.msra.mxu0 %v2535
    %2541 = vmatprep.subr.mxu0 0.0
    %2542 = vmatpush1.xpose.msra.mxu0 %v2537
    %2543 = vmatprep.subr.mxu0 0.0
    %2544 = vmatpush1.xpose.msra.mxu0 0.0
    %2545 = vmatprep.subr.mxu0 0.0
    %2546 = vmatpush1.xpose.msra.mxu0 0.0
    %2547 = vmatprep.subr.mxu0 0.0
    %2548 = vmatpush1.xpose.msra.mxu0 0.0
    %2549 = vmatprep.subr.mxu0 0.0
    %2550 = vmatpush1.xpose.msra.mxu0 0.0
    %2551 = vmatprep.subr.mxu0 0.0
    %2552 = vmatpush1.xpose.msra.mxu0 0.0
    %2553 = vmatprep.subr.mxu0 0.0
    %2554 = vmatpush1.xpose.msra.mxu0 0.0
    %2555 = vmatprep.subr.mxu0 0.0
    %2556 = vmatpush1.xpose.msra.mxu0 0.0
    %2557 = vmatprep.subr.mxu0 0.0
    %2558 = vmatpush1.xpose.msra.mxu0 0.0
    %2559 = vmatprep.subr.mxu0 0.0
    %2560 = vmatpush1.xpose.msra.mxu0 0.0
    %2561 = vmatprep.subr.mxu0 0.0
    %2562 = vmatpush1.xpose.msra.mxu0 0.0
    %2563 = vmatprep.subr.mxu0 0.0
    %2564 = vmatpush1.xpose.msra.mxu0 0.0
    %2565 = vmatprep.subr.mxu0 0.0
    %2566 = vmatpush1.xpose.msra.mxu0 0.0
    %2567 = vmatprep.subr.mxu0 0.0
    %2568 = vmatpush1.xpose.msra.mxu0 0.0
    %2569 = vmatprep.subr.mxu0 0.0
    %2570 = vmatpush1.xpose.msra.mxu0 0.0
    %2571 = vmatprep.subr.mxu0 0.0
    %2572 = vmatpush1.xpose.msra.mxu0 0.0
    %2573 = vmatprep.subr.mxu0 0.0
    %2574 = vmatpush1.xpose.msra.mxu0 0.0
    %2575 = vmatprep.subr.mxu0 0.0
    %2576 = vmatpush1.xpose.msra.mxu0 0.0
    %2577 = vmatprep.subr.mxu0 0.0
    %2578 = vmatpush1.xpose.msra.mxu0 0.0
    %2579 = vmatprep.subr.mxu0 0.0
    %2580 = vmatpush1.xpose.msra.mxu0 0.0
    %2581 = vmatprep.subr.mxu0 0.0
    %2582 = vmatpush1.xpose.msra.mxu0 0.0
    %2583 = vmatprep.subr.mxu0 0.0
    %2584 = vmatpush1.xpose.msra.mxu0 0.0
    %2585 = vmatprep.subr.mxu0 0.0
    %2586 = vmatpush1.xpose.msra.mxu0 0.0
    %2587 = vmatprep.subr.mxu0 0.0
    %2588 = vmatpush1.xpose.msra.mxu0 0.0
    %2589 = vmatprep.subr.mxu0 0.0
    %2590 = vmatpush1.xpose.msra.mxu0 0.0
    %2591 = vmatprep.subr.mxu0 0.0
    %2592 = vmatpush1.xpose.msra.mxu0 0.0
    %2593 = vmatprep.subr.mxu0 0.0
    %2594 = vmatpush1.xpose.msra.mxu0 0.0
    %2595 = vmatprep.subr.mxu0 0.0
    %2596 = vmatpush1.xpose.msra.mxu0 0.0
    %2597 = vmatprep.subr.mxu0 0.0
    %2598 = vmatpush1.xpose.msra.mxu0 0.0
    %2599 = vmatprep.subr.mxu0 0.0
    %2600 = vmatpush1.xpose.msra.mxu0 0.0
    %2601 = vmatprep.subr.mxu0 0.0
    %2602 = vmatpush1.xpose.msra.mxu0 0.0
    %2603 = vmatprep.mubr.f32.mxu0 0.0
    %2604 = vmatmul.mubr.f32.gmra.mrb[0].mxu0 %v2531
    %v2605 = vpop.f32.mrb[0].mxu0
    %v2606 = vadd.f32 0.0, %v2605
    %v2607 = vpop.f32.mrb[0].mxu0
    %2608 = vmatprep.mubr.f32.mxu0 0.0
    %2609 = vmatmul.mubr.f32.gmra.mrb[0].mxu0 %v2533
    %v2610 = vpop.f32.mrb[0].mxu0
    %v2611 = vadd.f32 0.0, %v2610
    %v2612 = vpop.f32.mrb[0].mxu0
    %2613 = vdwg.mxu0
    %v2614 = vmul.f32 %v2606, 0.35355338
    %v2615 = vmul.f32 %v2611, 0.35355338
    %v2616 = vadd.f32 %v2614, %v727
    %v2617 = vadd.f32 %v2615, %v728
    %v2618 = vsel %vm914, %v2616, -inf
    %2619 = vmax.xlane.f32.xlu0 %v2618
    %v2620 = vpop.xlane.xlu0 %2619
    %v2621 = vsel %vm914, %v2617, -inf
    %2622 = vmax.xlane.f32.xlu0 %v2621
    %v2623 = vpop.xlane.xlu0 %2622
    %v2624 = vsub.f32 %v2616, %v2620
    %v2625 = vsub.f32 %v2617, %v2623
    %v2626 = vmul.f32 %v2624, 1.442695
    %v2627 = vpow.pop %v2626
    %v2628 = vmul.f32 %v2625, 1.442695
    %v2629 = vpow.pop %v2628
    %v2630 = vsel %vm914, %v2627, 0.0
    %2631 = vadd.xlane.f32.xlu0 %v2630
    %v2632 = vpop.xlane.xlu0 %2631
    %v2633 = vsel %vm914, %v2629, 0.0
    %2634 = vadd.xlane.f32.xlu0 %v2633
    %v2635 = vpop.xlane.xlu0 %2634
    %v2636 = vrcp.pop %v2632
    %v2637 = vrcp.pop %v2635
    %v2638 = vmul.f32 %v2627, %v2636
    %v2639 = vmul.f32 %v2629, %v2637
    %2640 = vrot.lane.b32.xlu0 %v2109, 48
    %v2641 = vpop.permute.xlu0 %2640
    %2642 = vrot.lane.b32.xlu0 %v2114, 48
    %v2643 = vpop.permute.xlu0 %2642
    %v2647 = vsel %vm914, %v2638, 0
    %v2650 = vsel %vm914, %v2639, 0
    %2652 = vmatprep.subr.mxu0 0.0
    %2653 = vmatpush1.msra.mxu0 %v2641
    %2654 = vmatprep.subr.mxu0 0.0
    %2655 = vmatpush1.msra.mxu0 %v2643
    %2656 = vmatprep.subr.mxu0 0.0
    %2657 = vmatpush1.msra.mxu0 0.0
    %2658 = vmatprep.subr.mxu0 0.0
    %2659 = vmatpush1.msra.mxu0 0.0
    %2660 = vmatprep.subr.mxu0 0.0
    %2661 = vmatpush1.msra.mxu0 0.0
    %2662 = vmatprep.subr.mxu0 0.0
    %2663 = vmatpush1.msra.mxu0 0.0
    %2664 = vmatprep.subr.mxu0 0.0
    %2665 = vmatpush1.msra.mxu0 0.0
    %2666 = vmatprep.subr.mxu0 0.0
    %2667 = vmatpush1.msra.mxu0 0.0
    %2668 = vmatprep.subr.mxu0 0.0
    %2669 = vmatpush1.msra.mxu0 0.0
    %2670 = vmatprep.subr.mxu0 0.0
    %2671 = vmatpush1.msra.mxu0 0.0
    %2672 = vmatprep.subr.mxu0 0.0
    %2673 = vmatpush1.msra.mxu0 0.0
    %2674 = vmatprep.subr.mxu0 0.0
    %2675 = vmatpush1.msra.mxu0 0.0
    %2676 = vmatprep.subr.mxu0 0.0
    %2677 = vmatpush1.msra.mxu0 0.0
    %2678 = vmatprep.subr.mxu0 0.0
    %2679 = vmatpush1.msra.mxu0 0.0
    %2680 = vmatprep.subr.mxu0 0.0
    %2681 = vmatpush1.msra.mxu0 0.0
    %2682 = vmatprep.subr.mxu0 0.0
    %2683 = vmatpush1.msra.mxu0 0.0
    %2684 = vmatprep.subr.mxu0 0.0
    %2685 = vmatpush1.msra.mxu0 0.0
    %2686 = vmatprep.subr.mxu0 0.0
    %2687 = vmatpush1.msra.mxu0 0.0
    %2688 = vmatprep.subr.mxu0 0.0
    %2689 = vmatpush1.msra.mxu0 0.0
    %2690 = vmatprep.subr.mxu0 0.0
    %2691 = vmatpush1.msra.mxu0 0.0
    %2692 = vmatprep.subr.mxu0 0.0
    %2693 = vmatpush1.msra.mxu0 0.0
    %2694 = vmatprep.subr.mxu0 0.0
    %2695 = vmatpush1.msra.mxu0 0.0
    %2696 = vmatprep.subr.mxu0 0.0
    %2697 = vmatpush1.msra.mxu0 0.0
    %2698 = vmatprep.subr.mxu0 0.0
    %2699 = vmatpush1.msra.mxu0 0.0
    %2700 = vmatprep.subr.mxu0 0.0
    %2701 = vmatpush1.msra.mxu0 0.0
    %2702 = vmatprep.subr.mxu0 0.0
    %2703 = vmatpush1.msra.mxu0 0.0
    %2704 = vmatprep.subr.mxu0 0.0
    %2705 = vmatpush1.msra.mxu0 0.0
    %2706 = vmatprep.subr.mxu0 0.0
    %2707 = vmatpush1.msra.mxu0 0.0
    %2708 = vmatprep.subr.mxu0 0.0
    %2709 = vmatpush1.msra.mxu0 0.0
    %2710 = vmatprep.subr.mxu0 0.0
    %2711 = vmatpush1.msra.mxu0 0.0
    %2712 = vmatprep.subr.mxu0 0.0
    %2713 = vmatpush1.msra.mxu0 0.0
    %2714 = vmatprep.subr.mxu0 0.0
    %2715 = vmatpush1.msra.mxu0 0.0
    %2716 = vmatprep.mubr.f32.mxu0 0.0
    %2717 = vmatmul.mubr.f32.gmra.mrb[0].mxu0 %v2647
    %v2718 = vpop.f32.mrb[0].mxu0
    %v2719 = vadd.f32 0.0, %v2718
    %v2720 = vpop.f32.mrb[0].mxu0
    %2721 = vmatprep.mubr.f32.mxu0 0.0
    %2722 = vmatmul.mubr.f32.gmra.mrb[0].mxu0 %v2650
    %v2723 = vpop.f32.mrb[0].mxu0
    %v2724 = vadd.f32 0.0, %v2723
    %v2725 = vpop.f32.mrb[0].mxu0
    %2726 = vdwg.mxu0
    %2727 = vrot.lane.b32.xlu0 %v2109, 104
    %v2728 = vpop.permute.xlu0 %2727
    %2729 = vrot.lane.b32.xlu0 %v2114, 104
    %v2730 = vpop.permute.xlu0 %2729
    %2731 = vrot.lane.b32.xlu0 %v2109, 72
    %v2732 = vpop.permute.xlu0 %2731
    %2733 = vrot.lane.b32.xlu0 %v2114, 72
    %v2734 = vpop.permute.xlu0 %2733
    %v2735 = vsel %vm826, %v2728, 0
    %v2737 = vsel %vm826, %v2730, 0
    %v2739 = vsel %vm826, %v2732, 0
    %v2741 = vsel %vm826, %v2734, 0
    %2743 = vmatprep.subr.mxu0 0.0
    %2744 = vmatpush1.xpose.msra.mxu0 %v2739
    %2745 = vmatprep.subr.mxu0 0.0
    %2746 = vmatpush1.xpose.msra.mxu0 %v2741
    %2747 = vmatprep.subr.mxu0 0.0
    %2748 = vmatpush1.xpose.msra.mxu0 0.0
    %2749 = vmatprep.subr.mxu0 0.0
    %2750 = vmatpush1.xpose.msra.mxu0 0.0
    %2751 = vmatprep.subr.mxu0 0.0
    %2752 = vmatpush1.xpose.msra.mxu0 0.0
    %2753 = vmatprep.subr.mxu0 0.0
    %2754 = vmatpush1.xpose.msra.mxu0 0.0
    %2755 = vmatprep.subr.mxu0 0.0
    %2756 = vmatpush1.xpose.msra.mxu0 0.0
    %2757 = vmatprep.subr.mxu0 0.0
    %2758 = vmatpush1.xpose.msra.mxu0 0.0
    %2759 = vmatprep.subr.mxu0 0.0
    %2760 = vmatpush1.xpose.msra.mxu0 0.0
    %2761 = vmatprep.subr.mxu0 0.0
    %2762 = vmatpush1.xpose.msra.mxu0 0.0
    %2763 = vmatprep.subr.mxu0 0.0
    %2764 = vmatpush1.xpose.msra.mxu0 0.0
    %2765 = vmatprep.subr.mxu0 0.0
    %2766 = vmatpush1.xpose.msra.mxu0 0.0
    %2767 = vmatprep.subr.mxu0 0.0
    %2768 = vmatpush1.xpose.msra.mxu0 0.0
    %2769 = vmatprep.subr.mxu0 0.0
    %2770 = vmatpush1.xpose.msra.mxu0 0.0
    %2771 = vmatprep.subr.mxu0 0.0
    %2772 = vmatpush1.xpose.msra.mxu0 0.0
    %2773 = vmatprep.subr.mxu0 0.0
    %2774 = vmatpush1.xpose.msra.mxu0 0.0
    %2775 = vmatprep.subr.mxu0 0.0
    %2776 = vmatpush1.xpose.msra.mxu0 0.0
    %2777 = vmatprep.subr.mxu0 0.0
    %2778 = vmatpush1.xpose.msra.mxu0 0.0
    %2779 = vmatprep.subr.mxu0 0.0
    %2780 = vmatpush1.xpose.msra.mxu0 0.0
    %2781 = vmatprep.subr.mxu0 0.0
    %2782 = vmatpush1.xpose.msra.mxu0 0.0
    %2783 = vmatprep.subr.mxu0 0.0
    %2784 = vmatpush1.xpose.msra.mxu0 0.0
    %2785 = vmatprep.subr.mxu0 0.0
    %2786 = vmatpush1.xpose.msra.mxu0 0.0
    %2787 = vmatprep.subr.mxu0 0.0
    %2788 = vmatpush1.xpose.msra.mxu0 0.0
    %2789 = vmatprep.subr.mxu0 0.0
    %2790 = vmatpush1.xpose.msra.mxu0 0.0
    %2791 = vmatprep.subr.mxu0 0.0
    %2792 = vmatpush1.xpose.msra.mxu0 0.0
    %2793 = vmatprep.subr.mxu0 0.0
    %2794 = vmatpush1.xpose.msra.mxu0 0.0
    %2795 = vmatprep.subr.mxu0 0.0
    %2796 = vmatpush1.xpose.msra.mxu0 0.0
    %2797 = vmatprep.subr.mxu0 0.0
    %2798 = vmatpush1.xpose.msra.mxu0 0.0
    %2799 = vmatprep.subr.mxu0 0.0
    %2800 = vmatpush1.xpose.msra.mxu0 0.0
    %2801 = vmatprep.subr.mxu0 0.0
    %2802 = vmatpush1.xpose.msra.mxu0 0.0
    %2803 = vmatprep.subr.mxu0 0.0
    %2804 = vmatpush1.xpose.msra.mxu0 0.0
    %2805 = vmatprep.subr.mxu0 0.0
    %2806 = vmatpush1.xpose.msra.mxu0 0.0
    %2807 = vmatprep.mubr.f32.mxu0 0.0
    %2808 = vmatmul.mubr.f32.gmra.mrb[0].mxu0 %v2735
    %v2809 = vpop.f32.mrb[0].mxu0
    %v2810 = vadd.f32 0.0, %v2809
    %v2811 = vpop.f32.mrb[0].mxu0
    %2812 = vmatprep.mubr.f32.mxu0 0.0
    %2813 = vmatmul.mubr.f32.gmra.mrb[0].mxu0 %v2737
    %v2814 = vpop.f32.mrb[0].mxu0
    %v2815 = vadd.f32 0.0, %v2814
    %v2816 = vpop.f32.mrb[0].mxu0
    %2817 = vdwg.mxu0
    %v2818 = vmul.f32 %v2810, 0.35355338
    %v2819 = vmul.f32 %v2815, 0.35355338
    %v2820 = vadd.f32 %v2818, %v727
    %v2821 = vadd.f32 %v2819, %v728
    %v2822 = vsel %vm914, %v2820, -inf
    %2823 = vmax.xlane.f32.xlu0 %v2822
    %v2824 = vpop.xlane.xlu0 %2823
    %v2825 = vsel %vm914, %v2821, -inf
    %2826 = vmax.xlane.f32.xlu0 %v2825
    %v2827 = vpop.xlane.xlu0 %2826
    %v2828 = vsub.f32 %v2820, %v2824
    %v2829 = vsub.f32 %v2821, %v2827
    %v2830 = vmul.f32 %v2828, 1.442695
    %v2831 = vpow.pop %v2830
    %v2832 = vmul.f32 %v2829, 1.442695
    %v2833 = vpow.pop %v2832
    %v2834 = vsel %vm914, %v2831, 0.0
    %2835 = vadd.xlane.f32.xlu0 %v2834
    %v2836 = vpop.xlane.xlu0 %2835
    %v2837 = vsel %vm914, %v2833, 0.0
    %2838 = vadd.xlane.f32.xlu0 %v2837
    %v2839 = vpop.xlane.xlu0 %2838
    %v2840 = vrcp.pop %v2836
    %v2841 = vrcp.pop %v2839
    %v2842 = vmul.f32 %v2831, %v2840
    %v2843 = vmul.f32 %v2833, %v2841
    %2844 = vrot.lane.b32.xlu0 %v2109, 40
    %v2845 = vpop.permute.xlu0 %2844
    %2846 = vrot.lane.b32.xlu0 %v2114, 40
    %v2847 = vpop.permute.xlu0 %2846
    %v2851 = vsel %vm914, %v2842, 0
    %v2854 = vsel %vm914, %v2843, 0
    %2856 = vmatprep.subr.mxu0 0.0
    %2857 = vmatpush1.msra.mxu0 %v2845
    %2858 = vmatprep.subr.mxu0 0.0
    %2859 = vmatpush1.msra.mxu0 %v2847
    %2860 = vmatprep.subr.mxu0 0.0
    %2861 = vmatpush1.msra.mxu0 0.0
    %2862 = vmatprep.subr.mxu0 0.0
    %2863 = vmatpush1.msra.mxu0 0.0
    %2864 = vmatprep.subr.mxu0 0.0
    %2865 = vmatpush1.msra.mxu0 0.0
    %2866 = vmatprep.subr.mxu0 0.0
    %2867 = vmatpush1.msra.mxu0 0.0
    %2868 = vmatprep.subr.mxu0 0.0
    %2869 = vmatpush1.msra.mxu0 0.0
    %2870 = vmatprep.subr.mxu0 0.0
    %2871 = vmatpush1.msra.mxu0 0.0
    %2872 = vmatprep.subr.mxu0 0.0
    %2873 = vmatpush1.msra.mxu0 0.0
    %2874 = vmatprep.subr.mxu0 0.0
    %2875 = vmatpush1.msra.mxu0 0.0
    %2876 = vmatprep.subr.mxu0 0.0
    %2877 = vmatpush1.msra.mxu0 0.0
    %2878 = vmatprep.subr.mxu0 0.0
    %2879 = vmatpush1.msra.mxu0 0.0
    %2880 = vmatprep.subr.mxu0 0.0
    %2881 = vmatpush1.msra.mxu0 0.0
    %2882 = vmatprep.subr.mxu0 0.0
    %2883 = vmatpush1.msra.mxu0 0.0
    %2884 = vmatprep.subr.mxu0 0.0
    %2885 = vmatpush1.msra.mxu0 0.0
    %2886 = vmatprep.subr.mxu0 0.0
    %2887 = vmatpush1.msra.mxu0 0.0
    %2888 = vmatprep.subr.mxu0 0.0
    %2889 = vmatpush1.msra.mxu0 0.0
    %2890 = vmatprep.subr.mxu0 0.0
    %2891 = vmatpush1.msra.mxu0 0.0
    %2892 = vmatprep.subr.mxu0 0.0
    %2893 = vmatpush1.msra.mxu0 0.0
    %2894 = vmatprep.subr.mxu0 0.0
    %2895 = vmatpush1.msra.mxu0 0.0
    %2896 = vmatprep.subr.mxu0 0.0
    %2897 = vmatpush1.msra.mxu0 0.0
    %2898 = vmatprep.subr.mxu0 0.0
    %2899 = vmatpush1.msra.mxu0 0.0
    %2900 = vmatprep.subr.mxu0 0.0
    %2901 = vmatpush1.msra.mxu0 0.0
    %2902 = vmatprep.subr.mxu0 0.0
    %2903 = vmatpush1.msra.mxu0 0.0
    %2904 = vmatprep.subr.mxu0 0.0
    %2905 = vmatpush1.msra.mxu0 0.0
    %2906 = vmatprep.subr.mxu0 0.0
    %2907 = vmatpush1.msra.mxu0 0.0
    %2908 = vmatprep.subr.mxu0 0.0
    %2909 = vmatpush1.msra.mxu0 0.0
    %2910 = vmatprep.subr.mxu0 0.0
    %2911 = vmatpush1.msra.mxu0 0.0
    %2912 = vmatprep.subr.mxu0 0.0
    %2913 = vmatpush1.msra.mxu0 0.0
    %2914 = vmatprep.subr.mxu0 0.0
    %2915 = vmatpush1.msra.mxu0 0.0
    %2916 = vmatprep.subr.mxu0 0.0
    %2917 = vmatpush1.msra.mxu0 0.0
    %2918 = vmatprep.subr.mxu0 0.0
    %2919 = vmatpush1.msra.mxu0 0.0
    %2920 = vmatprep.mubr.f32.mxu0 0.0
    %2921 = vmatmul.mubr.f32.gmra.mrb[0].mxu0 %v2851
    %v2922 = vpop.f32.mrb[0].mxu0
    %v2923 = vadd.f32 0.0, %v2922
    %v2924 = vpop.f32.mrb[0].mxu0
    %2925 = vmatprep.mubr.f32.mxu0 0.0
    %2926 = vmatmul.mubr.f32.gmra.mrb[0].mxu0 %v2854
    %v2927 = vpop.f32.mrb[0].mxu0
    %v2928 = vadd.f32 0.0, %v2927
    %v2929 = vpop.f32.mrb[0].mxu0
    %2930 = vdwg.mxu0
    %2933 = vrot.lane.b32.xlu0 %v2515, 8
    %v2934 = vpop.permute.xlu0 %2933
    %2935 = vrot.lane.b32.xlu0 %v2520, 8
    %v2936 = vpop.permute.xlu0 %2935
    %2941 = vrot.lane.b32.xlu0 %v2719, 16
    %v2942 = vpop.permute.xlu0 %2941
    %2943 = vrot.lane.b32.xlu0 %v2724, 16
    %v2944 = vpop.permute.xlu0 %2943
    %2949 = vrot.lane.b32.xlu0 %v2923, 24
    %v2950 = vpop.permute.xlu0 %2949
    %2951 = vrot.lane.b32.xlu0 %v2928, 24
    %v2952 = vpop.permute.xlu0 %2951
    %v2955 = vsel %vm826, %v2311, %v2934
    %v2956 = vsel %vm826, %v2316, %v2936
    %v2957 = vsel %vm914, %v2955, %v2942
    %v2958 = vsel %vm914, %v2956, %v2944
    %v2959 = vsel %vm1664, %v2957, %v2950
    %v2960 = vsel %vm1664, %v2958, %v2952
    %v2961 = vld [vmem:[#allocation4 + $0x130] sm:$0xff]
    %v2962 = vld [vmem:[#allocation4 + $0x138] sm:$0xff]
    %v2963 = vld [vmem:[#allocation4 + $0x140] sm:$0xff]
    %v2964 = vld [vmem:[#allocation4 + $0x148] sm:$0xff]
    %v2965 = vld [vmem:[#allocation4 + $0x150] sm:$0x1]
    %v2966 = vlaneseq
    %v2967 = vshrl.u32 %v2966, 7
    %v2968 = vsub.s32 0, %v2967
    %v2969 = vrot.slane %v2965, %v2968
    %v2971 = vsel %vm738, %v2959, 0
    %v2974 = vsel %vm738, %v2960, 0
    %2976 = vmatprep.subr.mxu0 0.0
    %2977 = vmatpush1.msra.mxu0 %v2961
    %2978 = vmatprep.subr.mxu0 0.0
    %2979 = vmatpush1.msra.mxu0 %v2962
    %2980 = vmatprep.subr.mxu0 0.0
    %2981 = vmatpush1.msra.mxu0 %v2963
    %2982 = vmatprep.subr.mxu0 0.0
    %2983 = vmatpush1.msra.mxu0 %v2964
    %2984 = vmatprep.subr.mxu0 0.0
    %2985 = vmatpush1.msra.mxu0 0.0
    %2986 = vmatprep.subr.mxu0 0.0
    %2987 = vmatpush1.msra.mxu0 0.0
    %2988 = vmatprep.subr.mxu0 0.0
    %2989 = vmatpush1.msra.mxu0 0.0
    %2990 = vmatprep.subr.mxu0 0.0
    %2991 = vmatpush1.msra.mxu0 0.0
    %2992 = vmatprep.subr.mxu0 0.0
    %2993 = vmatpush1.msra.mxu0 0.0
    %2994 = vmatprep.subr.mxu0 0.0
    %2995 = vmatpush1.msra.mxu0 0.0
    %2996 = vmatprep.subr.mxu0 0.0
    %2997 = vmatpush1.msra.mxu0 0.0
    %2998 = vmatprep.subr.mxu0 0.0
    %2999 = vmatpush1.msra.mxu0 0.0
    %3000 = vmatprep.subr.mxu0 0.0
    %3001 = vmatpush1.msra.mxu0 0.0
    %3002 = vmatprep.subr.mxu0 0.0
    %3003 = vmatpush1.msra.mxu0 0.0
    %3004 = vmatprep.subr.mxu0 0.0
    %3005 = vmatpush1.msra.mxu0 0.0
    %3006 = vmatprep.subr.mxu0 0.0
    %3007 = vmatpush1.msra.mxu0 0.0
    %3008 = vmatprep.subr.mxu0 0.0
    %3009 = vmatpush1.msra.mxu0 0.0
    %3010 = vmatprep.subr.mxu0 0.0
    %3011 = vmatpush1.msra.mxu0 0.0
    %3012 = vmatprep.subr.mxu0 0.0
    %3013 = vmatpush1.msra.mxu0 0.0
    %3014 = vmatprep.subr.mxu0 0.0
    %3015 = vmatpush1.msra.mxu0 0.0
    %3016 = vmatprep.subr.mxu0 0.0
    %3017 = vmatpush1.msra.mxu0 0.0
    %3018 = vmatprep.subr.mxu0 0.0
    %3019 = vmatpush1.msra.mxu0 0.0
    %3020 = vmatprep.subr.mxu0 0.0
    %3021 = vmatpush1.msra.mxu0 0.0
    %3022 = vmatprep.subr.mxu0 0.0
    %3023 = vmatpush1.msra.mxu0 0.0
    %3024 = vmatprep.subr.mxu0 0.0
    %3025 = vmatpush1.msra.mxu0 0.0
    %3026 = vmatprep.subr.mxu0 0.0
    %3027 = vmatpush1.msra.mxu0 0.0
    %3028 = vmatprep.subr.mxu0 0.0
    %3029 = vmatpush1.msra.mxu0 0.0
    %3030 = vmatprep.subr.mxu0 0.0
    %3031 = vmatpush1.msra.mxu0 0.0
    %3032 = vmatprep.subr.mxu0 0.0
    %3033 = vmatpush1.msra.mxu0 0.0
    %3034 = vmatprep.subr.mxu0 0.0
    %3035 = vmatpush1.msra.mxu0 0.0
    %3036 = vmatprep.subr.mxu0 0.0
    %3037 = vmatpush1.msra.mxu0 0.0
    %3038 = vmatprep.subr.mxu0 0.0
    %3039 = vmatpush1.msra.mxu0 0.0
    %3040 = vmatprep.mubr.f32.mxu0 0.0
    %3041 = vmatmul.mubr.f32.gmra.mrb[0].mxu0 %v2971
    %v3042 = vpop.f32.mrb[0].mxu0
    %v3043 = vadd.f32 %v2969, %v3042
    %v3044 = vpop.f32.mrb[0].mxu0
    %3045 = vmatprep.mubr.f32.mxu0 0.0
    %3046 = vmatmul.mubr.f32.gmra.mrb[0].mxu0 %v2974
    %v3047 = vpop.f32.mrb[0].mxu0
    %v3048 = vadd.f32 %v2969, %v3047
    %v3049 = vpop.f32.mrb[0].mxu0
    %3050 = vdwg.mxu0
    %v3051 = vld [vmem:[#allocation4 + $0x158] sm:$0x3]
    %v3052 = vadd.f32 %v2025, %v3043
    %v3053 = vadd.f32 %v2026, %v3048
    %v3054 = vsel %vm738, %v3052, 0.0
    %3055 = vadd.xlane.f32.xlu0 %v3054
    %v3056 = vpop.xlane.xlu0 %3055
    %v3057 = vsel %vm738, %v3053, 0.0
    %3058 = vadd.xlane.f32.xlu0 %v3057
    %v3059 = vpop.xlane.xlu0 %3058
    %v3060 = vmul.f32 %v3056, %v1766
    %v3061 = vmul.f32 %v3059, %v1766
    %v3062 = vsub.f32 %v3052, %v3060
    %v3063 = vsub.f32 %v3053, %v3061
    %v3064 = vmul.f32 %v3062, %v3062
    %v3065 = vmul.f32 %v3063, %v3063
    %v3066 = vsel %vm738, %v3064, 0.0
    %3067 = vadd.xlane.f32.xlu0 %v3066
    %v3068 = vpop.xlane.xlu0 %3067
    %v3069 = vsel %vm738, %v3065, 0.0
    %3070 = vadd.xlane.f32.xlu0 %v3069
    %v3071 = vpop.xlane.xlu0 %3070
    %v3072 = vmul.f32 %v3068, %v1766
    %v3073 = vmul.f32 %v3071, %v1766
    %v3074 = vadd.f32 %v3072, 1e-05
    %v3075 = vadd.f32 %v3073, 1e-05
    %v3076 = vrsqrt.pop %v3074
    %v3077 = vrsqrt.pop %v3075
    %v3078 = vmul.f32 %v3062, %v3076
    %v3079 = vmul.f32 %v3063, %v3077
    %v3080 = vlaneseq
    %v3081 = vshrl.u32 %v3080, 7
    %v3082 = vsub.s32 0, %v3081
    %v3083 = vrot.slane %v3051, %v3082
    %v3084 = vmul.f32 %v3078, %v3083
    %v3085 = vmul.f32 %v3079, %v3083
    %v3086 = vlaneseq
    %v3087 = vshrl.u32 %v3086, 7
    %v3088 = vsub.s32 1, %v3087
    %v3089 = vrot.slane %v3051, %v3088
    %v3090 = vadd.f32 %v3084, %v3089
    %v3091 = vadd.f32 %v3085, %v3089
    %v3092 = vld [vmem:[#allocation4 + $0x160] sm:$0xff]
    %v3093 = vld [vmem:[#allocation4 + $0x168] sm:$0xff]
    %v3094 = vld [vmem:[#allocation4 + $0x170] sm:$0xff]
    %v3095 = vld [vmem:[#allocation4 + $0x178] sm:$0xff]
    %v3096 = vld [vmem:[#allocation4 + $0x180] sm:$0x1]
    %v3097 = vlaneseq
    %v3098 = vshrl.u32 %v3097, 7
    %v3099 = vsub.s32 0, %v3098
    %v3100 = vrot.slane %v3096, %v3099
    %v3102 = vsel %vm738, %v3090, 0
    %v3105 = vsel %vm738, %v3091, 0
    %3107 = vmatprep.subr.mxu0 0.0
    %3108 = vmatpush1.msra.mxu0 %v3092
    %3109 = vmatprep.subr.mxu0 0.0
    %3110 = vmatpush1.msra.mxu0 %v3093
    %3111 = vmatprep.subr.mxu0 0.0
    %3112 = vmatpush1.msra.mxu0 %v3094
    %3113 = vmatprep.subr.mxu0 0.0
    %3114 = vmatpush1.msra.mxu0 %v3095
    %3115 = vmatprep.subr.mxu0 0.0
    %3116 = vmatpush1.msra.mxu0 0.0
    %3117 = vmatprep.subr.mxu0 0.0
    %3118 = vmatpush1.msra.mxu0 0.0
    %3119 = vmatprep.subr.mxu0 0.0
    %3120 = vmatpush1.msra.mxu0 0.0
    %3121 = vmatprep.subr.mxu0 0.0
    %3122 = vmatpush1.msra.mxu0 0.0
    %3123 = vmatprep.subr.mxu0 0.0
    %3124 = vmatpush1.msra.mxu0 0.0
    %3125 = vmatprep.subr.mxu0 0.0
    %3126 = vmatpush1.msra.mxu0 0.0
    %3127 = vmatprep.subr.mxu0 0.0
    %3128 = vmatpush1.msra.mxu0 0.0
    %3129 = vmatprep.subr.mxu0 0.0
    %3130 = vmatpush1.msra.mxu0 0.0
    %3131 = vmatprep.subr.mxu0 0.0
    %3132 = vmatpush1.msra.mxu0 0.0
    %3133 = vmatprep.subr.mxu0 0.0
    %3134 = vmatpush1.msra.mxu0 0.0
    %3135 = vmatprep.subr.mxu0 0.0
    %3136 = vmatpush1.msra.mxu0 0.0
    %3137 = vmatprep.subr.mxu0 0.0
    %3138 = vmatpush1.msra.mxu0 0.0
    %3139 = vmatprep.subr.mxu0 0.0
    %3140 = vmatpush1.msra.mxu0 0.0
    %3141 = vmatprep.subr.mxu0 0.0
    %3142 = vmatpush1.msra.mxu0 0.0
    %3143 = vmatprep.subr.mxu0 0.0
    %3144 = vmatpush1.msra.mxu0 0.0
    %3145 = vmatprep.subr.mxu0 0.0
    %3146 = vmatpush1.msra.mxu0 0.0
    %3147 = vmatprep.subr.mxu0 0.0
    %3148 = vmatpush1.msra.mxu0 0.0
    %3149 = vmatprep.subr.mxu0 0.0
    %3150 = vmatpush1.msra.mxu0 0.0
    %3151 = vmatprep.subr.mxu0 0.0
    %3152 = vmatpush1.msra.mxu0 0.0
    %3153 = vmatprep.subr.mxu0 0.0
    %3154 = vmatpush1.msra.mxu0 0.0
    %3155 = vmatprep.subr.mxu0 0.0
    %3156 = vmatpush1.msra.mxu0 0.0
    %3157 = vmatprep.subr.mxu0 0.0
    %3158 = vmatpush1.msra.mxu0 0.0
    %3159 = vmatprep.subr.mxu0 0.0
    %3160 = vmatpush1.msra.mxu0 0.0
    %3161 = vmatprep.subr.mxu0 0.0
    %3162 = vmatpush1.msra.mxu0 0.0
    %3163 = vmatprep.subr.mxu0 0.0
    %3164 = vmatpush1.msra.mxu0 0.0
    %3165 = vmatprep.subr.mxu0 0.0
    %3166 = vmatpush1.msra.mxu0 0.0
    %3167 = vmatprep.subr.mxu0 0.0
    %3168 = vmatpush1.msra.mxu0 0.0
    %3169 = vmatprep.subr.mxu0 0.0
    %3170 = vmatpush1.msra.mxu0 0.0
    %3171 = vmatprep.mubr.f32.mxu0 0.0
    %3172 = vmatmul.mubr.f32.gmra.mrb[0].mxu0 %v3102
    %v3173 = vpop.f32.mrb[0].mxu0
    %v3174 = vadd.f32 %v3100, %v3173
    %v3175 = vpop.f32.mrb[0].mxu0
    %3176 = vmatprep.mubr.f32.mxu0 0.0
    %3177 = vmatmul.mubr.f32.gmra.mrb[0].mxu0 %v3105
    %v3178 = vpop.f32.mrb[0].mxu0
    %v3179 = vadd.f32 %v3100, %v3178
    %v3180 = vpop.f32.mrb[0].mxu0
    %3181 = vdwg.mxu0
    %v3182 = vmax.f32 %v3174, 0.0
    %v3183 = vmax.f32 %v3179, 0.0
    %v3184 = vld [vmem:[#allocation4 + $0x188] sm:$0xff]
    %v3185 = vld [vmem:[#allocation4 + $0x190] sm:$0xff]
    %v3186 = vld [vmem:[#allocation4 + $0x198] sm:$0xff]
    %v3187 = vld [vmem:[#allocation4 + $0x1a0] sm:$0xff]
    %v3188 = vld [vmem:[#allocation4 + $0x1a8] sm:$0xff]
    %v3189 = vld [vmem:[#allocation4 + $0x1b0] sm:$0xff]
    %v3190 = vld [vmem:[#allocation4 + $0x1b8] sm:$0xff]
    %v3191 = vld [vmem:[#allocation4 + $0x1c0] sm:$0xff]
    %v3192 = vld [vmem:[#allocation4 + $0x1c8] sm:$0x1]
    %v3193 = vlaneseq
    %v3194 = vshrl.u32 %v3193, 7
    %v3195 = vsub.s32 0, %v3194
    %v3196 = vrot.slane %v3192, %v3195
    %v3198 = vsel %vm1904, %v3182, 0
    %v3201 = vsel %vm1904, %v3183, 0
    %3203 = vmatprep.subr.mxu0 0.0
    %3204 = vmatpush1.msra.mxu0 %v3184
    %3205 = vmatprep.subr.mxu0 0.0
    %3206 = vmatpush1.msra.mxu0 %v3185
    %3207 = vmatprep.subr.mxu0 0.0
    %3208 = vmatpush1.msra.mxu0 %v3186
    %3209 = vmatprep.subr.mxu0 0.0
    %3210 = vmatpush1.msra.mxu0 %v3187
    %3211 = vmatprep.subr.mxu0 0.0
    %3212 = vmatpush1.msra.mxu0 %v3188
    %3213 = vmatprep.subr.mxu0 0.0
    %3214 = vmatpush1.msra.mxu0 %v3189
    %3215 = vmatprep.subr.mxu0 0.0
    %3216 = vmatpush1.msra.mxu0 %v3190
    %3217 = vmatprep.subr.mxu0 0.0
    %3218 = vmatpush1.msra.mxu0 %v3191
    %3219 = vmatprep.subr.mxu0 0.0
    %3220 = vmatpush1.msra.mxu0 0.0
    %3221 = vmatprep.subr.mxu0 0.0
    %3222 = vmatpush1.msra.mxu0 0.0
    %3223 = vmatprep.subr.mxu0 0.0
    %3224 = vmatpush1.msra.mxu0 0.0
    %3225 = vmatprep.subr.mxu0 0.0
    %3226 = vmatpush1.msra.mxu0 0.0
    %3227 = vmatprep.subr.mxu0 0.0
    %3228 = vmatpush1.msra.mxu0 0.0
    %3229 = vmatprep.subr.mxu0 0.0
    %3230 = vmatpush1.msra.mxu0 0.0
    %3231 = vmatprep.subr.mxu0 0.0
    %3232 = vmatpush1.msra.mxu0 0.0
    %3233 = vmatprep.subr.mxu0 0.0
    %3234 = vmatpush1.msra.mxu0 0.0
    %3235 = vmatprep.subr.mxu0 0.0
    %3236 = vmatpush1.msra.mxu0 0.0
    %3237 = vmatprep.subr.mxu0 0.0
    %3238 = vmatpush1.msra.mxu0 0.0
    %3239 = vmatprep.subr.mxu0 0.0
    %3240 = vmatpush1.msra.mxu0 0.0
    %3241 = vmatprep.subr.mxu0 0.0
    %3242 = vmatpush1.msra.mxu0 0.0
    %3243 = vmatprep.subr.mxu0 0.0
    %3244 = vmatpush1.msra.mxu0 0.0
    %3245 = vmatprep.subr.mxu0 0.0
    %3246 = vmatpush1.msra.mxu0 0.0
    %3247 = vmatprep.subr.mxu0 0.0
    %3248 = vmatpush1.msra.mxu0 0.0
    %3249 = vmatprep.subr.mxu0 0.0
    %3250 = vmatpush1.msra.mxu0 0.0
    %3251 = vmatprep.subr.mxu0 0.0
    %3252 = vmatpush1.msra.mxu0 0.0
    %3253 = vmatprep.subr.mxu0 0.0
    %3254 = vmatpush1.msra.mxu0 0.0
    %3255 = vmatprep.subr.mxu0 0.0
    %3256 = vmatpush1.msra.mxu0 0.0
    %3257 = vmatprep.subr.mxu0 0.0
    %3258 = vmatpush1.msra.mxu0 0.0
    %3259 = vmatprep.subr.mxu0 0.0
    %3260 = vmatpush1.msra.mxu0 0.0
    %3261 = vmatprep.subr.mxu0 0.0
    %3262 = vmatpush1.msra.mxu0 0.0
    %3263 = vmatprep.subr.mxu0 0.0
    %3264 = vmatpush1.msra.mxu0 0.0
    %3265 = vmatprep.subr.mxu0 0.0
    %3266 = vmatpush1.msra.mxu0 0.0
    %3267 = vmatprep.mubr.f32.mxu0 0.0
    %3268 = vmatmul.mubr.f32.gmra.mrb[0].mxu0 %v3198
    %v3269 = vpop.f32.mrb[0].mxu0
    %v3270 = vadd.f32 %v3196, %v3269
    %v3271 = vpop.f32.mrb[0].mxu0
    %3272 = vmatprep.mubr.f32.mxu0 0.0
    %3273 = vmatmul.mubr.f32.gmra.mrb[0].mxu0 %v3201
    %v3274 = vpop.f32.mrb[0].mxu0
    %v3275 = vadd.f32 %v3196, %v3274
    %v3276 = vpop.f32.mrb[0].mxu0
    %3277 = vdwg.mxu0
    %v3278 = vld [vmem:[#allocation4 + $0x1d0] sm:$0x3]
    %v3279 = vadd.f32 %v3090, %v3270
    %v3280 = vadd.f32 %v3091, %v3275
    %v3281 = vsel %vm738, %v3279, 0.0
    %3282 = vadd.xlane.f32.xlu0 %v3281
    %v3283 = vpop.xlane.xlu0 %3282
    %v3284 = vsel %vm738, %v3280, 0.0
    %3285 = vadd.xlane.f32.xlu0 %v3284
    %v3286 = vpop.xlane.xlu0 %3285
    %v3287 = vmul.f32 %v3283, %v1766
    %v3288 = vmul.f32 %v3286, %v1766
    %v3289 = vsub.f32 %v3279, %v3287
    %v3290 = vsub.f32 %v3280, %v3288
    %v3291 = vmul.f32 %v3289, %v3289
    %v3292 = vmul.f32 %v3290, %v3290
    %v3293 = vsel %vm738, %v3291, 0.0
    %3294 = vadd.xlane.f32.xlu0 %v3293
    %v3295 = vpop.xlane.xlu0 %3294
    %v3296 = vsel %vm738, %v3292, 0.0
    %3297 = vadd.xlane.f32.xlu0 %v3296
    %v3298 = vpop.xlane.xlu0 %3297
    %v3299 = vmul.f32 %v3295, %v1766
    %v3300 = vmul.f32 %v3298, %v1766
    %v3301 = vadd.f32 %v3299, 1e-05
    %v3302 = vadd.f32 %v3300, 1e-05
    %v3303 = vrsqrt.pop %v3301
    %v3304 = vrsqrt.pop %v3302
    %v3305 = vmul.f32 %v3289, %v3303
    %v3306 = vmul.f32 %v3290, %v3304
    %v3307 = vlaneseq
    %v3308 = vshrl.u32 %v3307, 7
    %v3309 = vsub.s32 0, %v3308
    %v3310 = vrot.slane %v3278, %v3309
    %v3311 = vmul.f32 %v3305, %v3310
    %v3312 = vmul.f32 %v3306, %v3310
    %v3313 = vlaneseq
    %v3314 = vshrl.u32 %v3313, 7
    %v3315 = vsub.s32 1, %v3314
    %v3316 = vrot.slane %v3278, %v3315
    %v3317 = vadd.f32 %v3311, %v3316
    %v3318 = vadd.f32 %v3312, %v3316
    %v3319 = vld [vmem:[#allocation4 + $0x378] sm:$0xff]
    %v3320 = vld [vmem:[#allocation4 + $0x380] sm:$0xff]
    %v3321 = vld [vmem:[#allocation4 + $0x388] sm:$0xff]
    %v3322 = vld [vmem:[#allocation4 + $0x390] sm:$0xff]
    %v3323 = vld [vmem:[#allocation4 + $0x398] sm:$0x1]
    %v3324 = vlaneseq
    %v3325 = vshrl.u32 %v3324, 7
    %v3326 = vsub.s32 0, %v3325
    %v3327 = vrot.slane %v3323, %v3326
    %v3329 = vsel %vm738, %v3317, 0
    %v3332 = vsel %vm738, %v3318, 0
    %3334 = vmatprep.subr.mxu0 0.0
    %3335 = vmatpush1.msra.mxu0 %v3319
    %3336 = vmatprep.subr.mxu0 0.0
    %3337 = vmatpush1.msra.mxu0 %v3320
    %3338 = vmatprep.subr.mxu0 0.0
    %3339 = vmatpush1.msra.mxu0 %v3321
    %3340 = vmatprep.subr.mxu0 0.0
    %3341 = vmatpush1.msra.mxu0 %v3322
    %3342 = vmatprep.subr.mxu0 0.0
    %3343 = vmatpush1.msra.mxu0 0.0
    %3344 = vmatprep.subr.mxu0 0.0
    %3345 = vmatpush1.msra.mxu0 0.0
    %3346 = vmatprep.subr.mxu0 0.0
    %3347 = vmatpush1.msra.mxu0 0.0
    %3348 = vmatprep.subr.mxu0 0.0
    %3349 = vmatpush1.msra.mxu0 0.0
    %3350 = vmatprep.subr.mxu0 0.0
    %3351 = vmatpush1.msra.mxu0 0.0
    %3352 = vmatprep.subr.mxu0 0.0
    %3353 = vmatpush1.msra.mxu0 0.0
    %3354 = vmatprep.subr.mxu0 0.0
    %3355 = vmatpush1.msra.mxu0 0.0
    %3356 = vmatprep.subr.mxu0 0.0
    %3357 = vmatpush1.msra.mxu0 0.0
    %3358 = vmatprep.subr.mxu0 0.0
    %3359 = vmatpush1.msra.mxu0 0.0
    %3360 = vmatprep.subr.mxu0 0.0
    %3361 = vmatpush1.msra.mxu0 0.0
    %3362 = vmatprep.subr.mxu0 0.0
    %3363 = vmatpush1.msra.mxu0 0.0
    %3364 = vmatprep.subr.mxu0 0.0
    %3365 = vmatpush1.msra.mxu0 0.0
    %3366 = vmatprep.subr.mxu0 0.0
    %3367 = vmatpush1.msra.mxu0 0.0
    %3368 = vmatprep.subr.mxu0 0.0
    %3369 = vmatpush1.msra.mxu0 0.0
    %3370 = vmatprep.subr.mxu0 0.0
    %3371 = vmatpush1.msra.mxu0 0.0
    %3372 = vmatprep.subr.mxu0 0.0
    %3373 = vmatpush1.msra.mxu0 0.0
    %3374 = vmatprep.subr.mxu0 0.0
    %3375 = vmatpush1.msra.mxu0 0.0
    %3376 = vmatprep.subr.mxu0 0.0
    %3377 = vmatpush1.msra.mxu0 0.0
    %3378 = vmatprep.subr.mxu0 0.0
    %3379 = vmatpush1.msra.mxu0 0.0
    %3380 = vmatprep.subr.mxu0 0.0
    %3381 = vmatpush1.msra.mxu0 0.0
    %3382 = vmatprep.subr.mxu0 0.0
    %3383 = vmatpush1.msra.mxu0 0.0
    %3384 = vmatprep.subr.mxu0 0.0
    %3385 = vmatpush1.msra.mxu0 0.0
    %3386 = vmatprep.subr.mxu0 0.0
    %3387 = vmatpush1.msra.mxu0 0.0
    %3388 = vmatprep.subr.mxu0 0.0
    %3389 = vmatpush1.msra.mxu0 0.0
    %3390 = vmatprep.subr.mxu0 0.0
    %3391 = vmatpush1.msra.mxu0 0.0
    %3392 = vmatprep.subr.mxu0 0.0
    %3393 = vmatpush1.msra.mxu0 0.0
    %3394 = vmatprep.subr.mxu0 0.0
    %3395 = vmatpush1.msra.mxu0 0.0
    %3396 = vmatprep.subr.mxu0 0.0
    %3397 = vmatpush1.msra.mxu0 0.0
    %3398 = vmatprep.mubr.f32.mxu0 0.0
    %3399 = vmatmul.mubr.f32.gmra.mrb[0].mxu0 %v3329
    %v3400 = vpop.f32.mrb[0].mxu0
    %v3401 = vadd.f32 %v3327, %v3400
    %v3402 = vpop.f32.mrb[0].mxu0
    %3403 = vmatprep.mubr.f32.mxu0 0.0
    %3404 = vmatmul.mubr.f32.gmra.mrb[0].mxu0 %v3332
    %v3405 = vpop.f32.mrb[0].mxu0
    %v3406 = vadd.f32 %v3327, %v3405
    %v3407 = vpop.f32.mrb[0].mxu0
    %3408 = vdwg.mxu0
    %3409 = vst [vmem:[%s3] sm:$0xff] %v3401
    %3410 = vst [vmem:[%s3 + $0x8] sm:$0xff] %v3406
    %v3411 = vld [vmem:[#allocation4 + $0x28] sm:$0xff]
    %v3412 = vld [vmem:[#allocation4 + $0x30] sm:$0xff]
    %v3413 = vld [vmem:[#allocation4 + $0x1d8] sm:$0xff]
    %v3414 = vld [vmem:[#allocation4 + $0x1e0] sm:$0xff]
    %v3415 = vld [vmem:[#allocation4 + $0x1e8] sm:$0xff]
    %v3416 = vld [vmem:[#allocation4 + $0x1f0] sm:$0xff]
    %v3417 = vld [vmem:[#allocation4 + $0x1f8] sm:$0x1]
    %v3418 = vlaneseq
    %v3419 = vshrl.u32 %v3418, 7
    %v3420 = vsub.s32 0, %v3419
    %v3421 = vrot.slane %v3417, %v3420
    %3422 = vmatprep.subr.mxu0 0.0
    %3423 = vmatpush1.msra.mxu0 %v3413
    %3424 = vmatprep.subr.mxu0 0.0
    %3425 = vmatpush1.msra.mxu0 %v3414
    %3426 = vmatprep.subr.mxu0 0.0
    %3427 = vmatpush1.msra.mxu0 %v3415
    %3428 = vmatprep.subr.mxu0 0.0
    %3429 = vmatpush1.msra.mxu0 %v3416
    %3430 = vmatprep.subr.mxu0 0.0
    %3431 = vmatpush1.msra.mxu0 0.0
    %3432 = vmatprep.subr.mxu0 0.0
    %3433 = vmatpush1.msra.mxu0 0.0
    %3434 = vmatprep.subr.mxu0 0.0
    %3435 = vmatpush1.msra.mxu0 0.0
    %3436 = vmatprep.subr.mxu0 0.0
    %3437 = vmatpush1.msra.mxu0 0.0
    %3438 = vmatprep.subr.mxu0 0.0
    %3439 = vmatpush1.msra.mxu0 0.0
    %3440 = vmatprep.subr.mxu0 0.0
    %3441 = vmatpush1.msra.mxu0 0.0
    %3442 = vmatprep.subr.mxu0 0.0
    %3443 = vmatpush1.msra.mxu0 0.0
    %3444 = vmatprep.subr.mxu0 0.0
    %3445 = vmatpush1.msra.mxu0 0.0
    %3446 = vmatprep.subr.mxu0 0.0
    %3447 = vmatpush1.msra.mxu0 0.0
    %3448 = vmatprep.subr.mxu0 0.0
    %3449 = vmatpush1.msra.mxu0 0.0
    %3450 = vmatprep.subr.mxu0 0.0
    %3451 = vmatpush1.msra.mxu0 0.0
    %3452 = vmatprep.subr.mxu0 0.0
    %3453 = vmatpush1.msra.mxu0 0.0
    %3454 = vmatprep.subr.mxu0 0.0
    %3455 = vmatpush1.msra.mxu0 0.0
    %3456 = vmatprep.subr.mxu0 0.0
    %3457 = vmatpush1.msra.mxu0 0.0
    %3458 = vmatprep.subr.mxu0 0.0
    %3459 = vmatpush1.msra.mxu0 0.0
    %3460 = vmatprep.subr.mxu0 0.0
    %3461 = vmatpush1.msra.mxu0 0.0
    %3462 = vmatprep.subr.mxu0 0.0
    %3463 = vmatpush1.msra.mxu0 0.0
    %3464 = vmatprep.subr.mxu0 0.0
    %3465 = vmatpush1.msra.mxu0 0.0
    %3466 = vmatprep.subr.mxu0 0.0
    %3467 = vmatpush1.msra.mxu0 0.0
    %3468 = vmatprep.subr.mxu0 0.0
    %3469 = vmatpush1.msra.mxu0 0.0
    %3470 = vmatprep.subr.mxu0 0.0
    %3471 = vmatpush1.msra.mxu0 0.0
    %3472 = vmatprep.subr.mxu0 0.0
    %3473 = vmatpush1.msra.mxu0 0.0
    %3474 = vmatprep.subr.mxu0 0.0
    %3475 = vmatpush1.msra.mxu0 0.0
    %3476 = vmatprep.subr.mxu0 0.0
    %3477 = vmatpush1.msra.mxu0 0.0
    %3478 = vmatprep.subr.mxu0 0.0
    %3479 = vmatpush1.msra.mxu0 0.0
    %3480 = vmatprep.subr.mxu0 0.0
    %3481 = vmatpush1.msra.mxu0 0.0
    %3482 = vmatprep.subr.mxu0 0.0
    %3483 = vmatpush1.msra.mxu0 0.0
    %3484 = vmatprep.subr.mxu0 0.0
    %3485 = vmatpush1.msra.mxu0 0.0
    %3486 = vmatprep.mubr.f32.mxu0 0.0
    %3487 = vmatmul.mubr.f32.gmra.mrb[0].mxu0 %v3329
    %v3488 = vpop.f32.mrb[0].mxu0
    %v3489 = vadd.f32 %v3421, %v3488
    %v3490 = vpop.f32.mrb[0].mxu0
    %3491 = vmatprep.mubr.f32.mxu0 0.0
    %3492 = vmatmul.mubr.f32.gmra.mrb[0].mxu0 %v3332
    %v3493 = vpop.f32.mrb[0].mxu0
    %v3494 = vadd.f32 %v3421, %v3493
    %v3495 = vpop.f32.mrb[0].mxu0
    %3496 = vdwg.mxu0
    %3499 = vrot.lane.b32.xlu0 %v3489, 96
    %v3500 = vpop.permute.xlu0 %3499
    %3501 = vrot.lane.b32.xlu0 %v3494, 96
    %v3502 = vpop.permute.xlu0 %3501
    %v3503 = vsel %vm826, %v3489, 0
    %v3505 = vsel %vm826, %v3494, 0
    %v3507 = vsel %vm826, %v3500, 0
    %v3509 = vsel %vm826, %v3502, 0
    %3511 = vmatprep.subr.mxu0 0.0
    %3512 = vmatpush1.xpose.msra.mxu0 %v3507
    %3513 = vmatprep.subr.mxu0 0.0
    %3514 = vmatpush1.xpose.msra.mxu0 %v3509
    %3515 = vmatprep.subr.mxu0 0.0
    %3516 = vmatpush1.xpose.msra.mxu0 0.0
    %3517 = vmatprep.subr.mxu0 0.0
    %3518 = vmatpush1.xpose.msra.mxu0 0.0
    %3519 = vmatprep.subr.mxu0 0.0
    %3520 = vmatpush1.xpose.msra.mxu0 0.0
    %3521 = vmatprep.subr.mxu0 0.0
    %3522 = vmatpush1.xpose.msra.mxu0 0.0
    %3523 = vmatprep.subr.mxu0 0.0
    %3524 = vmatpush1.xpose.msra.mxu0 0.0
    %3525 = vmatprep.subr.mxu0 0.0
    %3526 = vmatpush1.xpose.msra.mxu0 0.0
    %3527 = vmatprep.subr.mxu0 0.0
    %3528 = vmatpush1.xpose.msra.mxu0 0.0
    %3529 = vmatprep.subr.mxu0 0.0
    %3530 = vmatpush1.xpose.msra.mxu0 0.0
    %3531 = vmatprep.subr.mxu0 0.0
    %3532 = vmatpush1.xpose.msra.mxu0 0.0
    %3533 = vmatprep.subr.mxu0 0.0
    %3534 = vmatpush1.xpose.msra.mxu0 0.0
    %3535 = vmatprep.subr.mxu0 0.0
    %3536 = vmatpush1.xpose.msra.mxu0 0.0
    %3537 = vmatprep.subr.mxu0 0.0
    %3538 = vmatpush1.xpose.msra.mxu0 0.0
    %3539 = vmatprep.subr.mxu0 0.0
    %3540 = vmatpush1.xpose.msra.mxu0 0.0
    %3541 = vmatprep.subr.mxu0 0.0
    %3542 = vmatpush1.xpose.msra.mxu0 0.0
    %3543 = vmatprep.subr.mxu0 0.0
    %3544 = vmatpush1.xpose.msra.mxu0 0.0
    %3545 = vmatprep.subr.mxu0 0.0
    %3546 = vmatpush1.xpose.msra.mxu0 0.0
    %3547 = vmatprep.subr.mxu0 0.0
    %3548 = vmatpush1.xpose.msra.mxu0 0.0
    %3549 = vmatprep.subr.mxu0 0.0
    %3550 = vmatpush1.xpose.msra.mxu0 0.0
    %3551 = vmatprep.subr.mxu0 0.0
    %3552 = vmatpush1.xpose.msra.mxu0 0.0
    %3553 = vmatprep.subr.mxu0 0.0
    %3554 = vmatpush1.xpose.msra.mxu0 0.0
    %3555 = vmatprep.subr.mxu0 0.0
    %3556 = vmatpush1.xpose.msra.mxu0 0.0
    %3557 = vmatprep.subr.mxu0 0.0
    %3558 = vmatpush1.xpose.msra.mxu0 0.0
    %3559 = vmatprep.subr.mxu0 0.0
    %3560 = vmatpush1.xpose.msra.mxu0 0.0
    %3561 = vmatprep.subr.mxu0 0.0
    %3562 = vmatpush1.xpose.msra.mxu0 0.0
    %3563 = vmatprep.subr.mxu0 0.0
    %3564 = vmatpush1.xpose.msra.mxu0 0.0
    %3565 = vmatprep.subr.mxu0 0.0
    %3566 = vmatpush1.xpose.msra.mxu0 0.0
    %3567 = vmatprep.subr.mxu0 0.0
    %3568 = vmatpush1.xpose.msra.mxu0 0.0
    %3569 = vmatprep.subr.mxu0 0.0
    %3570 = vmatpush1.xpose.msra.mxu0 0.0
    %3571 = vmatprep.subr.mxu0 0.0
    %3572 = vmatpush1.xpose.msra.mxu0 0.0
    %3573 = vmatprep.subr.mxu0 0.0
    %3574 = vmatpush1.xpose.msra.mxu0 0.0
    %3575 = vmatprep.mubr.f32.mxu0 0.0
    %3576 = vmatmul.mubr.f32.gmra.mrb[0].mxu0 %v3503
    %v3577 = vpop.f32.mrb[0].mxu0
    %v3578 = vadd.f32 0.0, %v3577
    %v3579 = vpop.f32.mrb[0].mxu0
    %3580 = vmatprep.mubr.f32.mxu0 0.0
    %3581 = vmatmul.mubr.f32.gmra.mrb[0].mxu0 %v3505
    %v3582 = vpop.f32.mrb[0].mxu0
    %v3583 = vadd.f32 0.0, %v3582
    %v3584 = vpop.f32.mrb[0].mxu0
    %3585 = vdwg.mxu0
    %v3586 = vmul.f32 %v3578, 0.35355338
    %v3587 = vmul.f32 %v3583, 0.35355338
    %v3588 = vadd.f32 %v3586, %v3411
    %v3589 = vadd.f32 %v3587, %v3412
    %v3590 = vsel %vm914, %v3588, -inf
    %3591 = vmax.xlane.f32.xlu0 %v3590
    %v3592 = vpop.xlane.xlu0 %3591
    %v3593 = vsel %vm914, %v3589, -inf
    %3594 = vmax.xlane.f32.xlu0 %v3593
    %v3595 = vpop.xlane.xlu0 %3594
    %v3596 = vsub.f32 %v3588, %v3592
    %v3597 = vsub.f32 %v3589, %v3595
    %v3598 = vmul.f32 %v3596, 1.442695
    %v3599 = vpow.pop %v3598
    %v3600 = vmul.f32 %v3597, 1.442695
    %v3601 = vpow.pop %v3600
    %v3602 = vsel %vm914, %v3599, 0.0
    %3603 = vadd.xlane.f32.xlu0 %v3602
    %v3604 = vpop.xlane.xlu0 %3603
    %v3605 = vsel %vm914, %v3601, 0.0
    %3606 = vadd.xlane.f32.xlu0 %v3605
    %v3607 = vpop.xlane.xlu0 %3606
    %v3608 = vrcp.pop %v3604
    %v3609 = vrcp.pop %v3607
    %v3610 = vmul.f32 %v3599, %v3608
    %v3611 = vmul.f32 %v3601, %v3609
    %3612 = vrot.lane.b32.xlu0 %v3489, 64
    %v3613 = vpop.permute.xlu0 %3612
    %3614 = vrot.lane.b32.xlu0 %v3494, 64
    %v3615 = vpop.permute.xlu0 %3614
    %v3619 = vsel %vm914, %v3610, 0
    %v3622 = vsel %vm914, %v3611, 0
    %3624 = vmatprep.subr.mxu0 0.0
    %3625 = vmatpush1.msra.mxu0 %v3613
    %3626 = vmatprep.subr.mxu0 0.0
    %3627 = vmatpush1.msra.mxu0 %v3615
    %3628 = vmatprep.subr.mxu0 0.0
    %3629 = vmatpush1.msra.mxu0 0.0
    %3630 = vmatprep.subr.mxu0 0.0
    %3631 = vmatpush1.msra.mxu0 0.0
    %3632 = vmatprep.subr.mxu0 0.0
    %3633 = vmatpush1.msra.mxu0 0.0
    %3634 = vmatprep.subr.mxu0 0.0
    %3635 = vmatpush1.msra.mxu0 0.0
    %3636 = vmatprep.subr.mxu0 0.0
    %3637 = vmatpush1.msra.mxu0 0.0
    %3638 = vmatprep.subr.mxu0 0.0
    %3639 = vmatpush1.msra.mxu0 0.0
    %3640 = vmatprep.subr.mxu0 0.0
    %3641 = vmatpush1.msra.mxu0 0.0
    %3642 = vmatprep.subr.mxu0 0.0
    %3643 = vmatpush1.msra.mxu0 0.0
    %3644 = vmatprep.subr.mxu0 0.0
    %3645 = vmatpush1.msra.mxu0 0.0
    %3646 = vmatprep.subr.mxu0 0.0
    %3647 = vmatpush1.msra.mxu0 0.0
    %3648 = vmatprep.subr.mxu0 0.0
    %3649 = vmatpush1.msra.mxu0 0.0
    %3650 = vmatprep.subr.mxu0 0.0
    %3651 = vmatpush1.msra.mxu0 0.0
    %3652 = vmatprep.subr.mxu0 0.0
    %3653 = vmatpush1.msra.mxu0 0.0
    %3654 = vmatprep.subr.mxu0 0.0
    %3655 = vmatpush1.msra.mxu0 0.0
    %3656 = vmatprep.subr.mxu0 0.0
    %3657 = vmatpush1.msra.mxu0 0.0
    %3658 = vmatprep.subr.mxu0 0.0
    %3659 = vmatpush1.msra.mxu0 0.0
    %3660 = vmatprep.subr.mxu0 0.0
    %3661 = vmatpush1.msra.mxu0 0.0
    %3662 = vmatprep.subr.mxu0 0.0
    %3663 = vmatpush1.msra.mxu0 0.0
    %3664 = vmatprep.subr.mxu0 0.0
    %3665 = vmatpush1.msra.mxu0 0.0
    %3666 = vmatprep.subr.mxu0 0.0
    %3667 = vmatpush1.msra.mxu0 0.0
    %3668 = vmatprep.subr.mxu0 0.0
    %3669 = vmatpush1.msra.mxu0 0.0
    %3670 = vmatprep.subr.mxu0 0.0
    %3671 = vmatpush1.msra.mxu0 0.0
    %3672 = vmatprep.subr.mxu0 0.0
    %3673 = vmatpush1.msra.mxu0 0.0
    %3674 = vmatprep.subr.mxu0 0.0
    %3675 = vmatpush1.msra.mxu0 0.0
    %3676 = vmatprep.subr.mxu0 0.0
    %3677 = vmatpush1.msra.mxu0 0.0
    %3678 = vmatprep.subr.mxu0 0.0
    %3679 = vmatpush1.msra.mxu0 0.0
    %3680 = vmatprep.subr.mxu0 0.0
    %3681 = vmatpush1.msra.mxu0 0.0
    %3682 = vmatprep.subr.mxu0 0.0
    %3683 = vmatpush1.msra.mxu0 0.0
    %3684 = vmatprep.subr.mxu0 0.0
    %3685 = vmatpush1.msra.mxu0 0.0
    %3686 = vmatprep.subr.mxu0 0.0
    %3687 = vmatpush1.msra.mxu0 0.0
    %3688 = vmatprep.mubr.f32.mxu0 0.0
    %3689 = vmatmul.mubr.f32.gmra.mrb[0].mxu0 %v3619
    %v3690 = vpop.f32.mrb[0].mxu0
    %v3691 = vadd.f32 0.0, %v3690
    %v3692 = vpop.f32.mrb[0].mxu0
    %3693 = vmatprep.mubr.f32.mxu0 0.0
    %3694 = vmatmul.mubr.f32.gmra.mrb[0].mxu0 %v3622
    %v3695 = vpop.f32.mrb[0].mxu0
    %v3696 = vadd.f32 0.0, %v3695
    %v3697 = vpop.f32.mrb[0].mxu0
    %3698 = vdwg.mxu0
    %3699 = vrot.lane.b32.xlu0 %v3489, 120
    %v3700 = vpop.permute.xlu0 %3699
    %3701 = vrot.lane.b32.xlu0 %v3494, 120
    %v3702 = vpop.permute.xlu0 %3701
    %3703 = vrot.lane.b32.xlu0 %v3489, 88
    %v3704 = vpop.permute.xlu0 %3703
    %3705 = vrot.lane.b32.xlu0 %v3494, 88
    %v3706 = vpop.permute.xlu0 %3705
    %v3707 = vsel %vm826, %v3700, 0
    %v3709 = vsel %vm826, %v3702, 0
    %v3711 = vsel %vm826, %v3704, 0
    %v3713 = vsel %vm826, %v3706, 0
    %3715 = vmatprep.subr.mxu0 0.0
    %3716 = vmatpush1.xpose.msra.mxu0 %v3711
    %3717 = vmatprep.subr.mxu0 0.0
    %3718 = vmatpush1.xpose.msra.mxu0 %v3713
    %3719 = vmatprep.subr.mxu0 0.0
    %3720 = vmatpush1.xpose.msra.mxu0 0.0
    %3721 = vmatprep.subr.mxu0 0.0
    %3722 = vmatpush1.xpose.msra.mxu0 0.0
    %3723 = vmatprep.subr.mxu0 0.0
    %3724 = vmatpush1.xpose.msra.mxu0 0.0
    %3725 = vmatprep.subr.mxu0 0.0
    %3726 = vmatpush1.xpose.msra.mxu0 0.0
    %3727 = vmatprep.subr.mxu0 0.0
    %3728 = vmatpush1.xpose.msra.mxu0 0.0
    %3729 = vmatprep.subr.mxu0 0.0
    %3730 = vmatpush1.xpose.msra.mxu0 0.0
    %3731 = vmatprep.subr.mxu0 0.0
    %3732 = vmatpush1.xpose.msra.mxu0 0.0
    %3733 = vmatprep.subr.mxu0 0.0
    %3734 = vmatpush1.xpose.msra.mxu0 0.0
    %3735 = vmatprep.subr.mxu0 0.0
    %3736 = vmatpush1.xpose.msra.mxu0 0.0
    %3737 = vmatprep.subr.mxu0 0.0
    %3738 = vmatpush1.xpose.msra.mxu0 0.0
    %3739 = vmatprep.subr.mxu0 0.0
    %3740 = vmatpush1.xpose.msra.mxu0 0.0
    %3741 = vmatprep.subr.mxu0 0.0
    %3742 = vmatpush1.xpose.msra.mxu0 0.0
    %3743 = vmatprep.subr.mxu0 0.0
    %3744 = vmatpush1.xpose.msra.mxu0 0.0
    %3745 = vmatprep.subr.mxu0 0.0
    %3746 = vmatpush1.xpose.msra.mxu0 0.0
    %3747 = vmatprep.subr.mxu0 0.0
    %3748 = vmatpush1.xpose.msra.mxu0 0.0
    %3749 = vmatprep.subr.mxu0 0.0
    %3750 = vmatpush1.xpose.msra.mxu0 0.0
    %3751 = vmatprep.subr.mxu0 0.0
    %3752 = vmatpush1.xpose.msra.mxu0 0.0
    %3753 = vmatprep.subr.mxu0 0.0
    %3754 = vmatpush1.xpose.msra.mxu0 0.0
    %3755 = vmatprep.subr.mxu0 0.0
    %3756 = vmatpush1.xpose.msra.mxu0 0.0
    %3757 = vmatprep.subr.mxu0 0.0
    %3758 = vmatpush1.xpose.msra.mxu0 0.0
    %3759 = vmatprep.subr.mxu0 0.0
    %3760 = vmatpush1.xpose.msra.mxu0 0.0
    %3761 = vmatprep.subr.mxu0 0.0
    %3762 = vmatpush1.xpose.msra.mxu0 0.0
    %3763 = vmatprep.subr.mxu0 0.0
    %3764 = vmatpush1.xpose.msra.mxu0 0.0
    %3765 = vmatprep.subr.mxu0 0.0
    %3766 = vmatpush1.xpose.msra.mxu0 0.0
    %3767 = vmatprep.subr.mxu0 0.0
    %3768 = vmatpush1.xpose.msra.mxu0 0.0
    %3769 = vmatprep.subr.mxu0 0.0
    %3770 = vmatpush1.xpose.msra.mxu0 0.0
    %3771 = vmatprep.subr.mxu0 0.0
    %3772 = vmatpush1.xpose.msra.mxu0 0.0
    %3773 = vmatprep.subr.mxu0 0.0
    %3774 = vmatpush1.xpose.msra.mxu0 0.0
    %3775 = vmatprep.subr.mxu0 0.0
    %3776 = vmatpush1.xpose.msra.mxu0 0.0
    %3777 = vmatprep.subr.mxu0 0.0
    %3778 = vmatpush1.xpose.msra.mxu0 0.0
    %3779 = vmatprep.mubr.f32.mxu0 0.0
    %3780 = vmatmul.mubr.f32.gmra.mrb[0].mxu0 %v3707
    %v3781 = vpop.f32.mrb[0].mxu0
    %v3782 = vadd.f32 0.0, %v3781
    %v3783 = vpop.f32.mrb[0].mxu0
    %3784 = vmatprep.mubr.f32.mxu0 0.0
    %3785 = vmatmul.mubr.f32.gmra.mrb[0].mxu0 %v3709
    %v3786 = vpop.f32.mrb[0].mxu0
    %v3787 = vadd.f32 0.0, %v3786
    %v3788 = vpop.f32.mrb[0].mxu0
    %3789 = vdwg.mxu0
    %v3790 = vmul.f32 %v3782, 0.35355338
    %v3791 = vmul.f32 %v3787, 0.35355338
    %v3792 = vadd.f32 %v3790, %v3411
    %v3793 = vadd.f32 %v3791, %v3412
    %v3794 = vsel %vm914, %v3792, -inf
    %3795 = vmax.xlane.f32.xlu0 %v3794
    %v3796 = vpop.xlane.xlu0 %3795
    %v3797 = vsel %vm914, %v3793, -inf
    %3798 = vmax.xlane.f32.xlu0 %v3797
    %v3799 = vpop.xlane.xlu0 %3798
    %v3800 = vsub.f32 %v3792, %v3796
    %v3801 = vsub.f32 %v3793, %v3799
    %v3802 = vmul.f32 %v3800, 1.442695
    %v3803 = vpow.pop %v3802
    %v3804 = vmul.f32 %v3801, 1.442695
    %v3805 = vpow.pop %v3804
    %v3806 = vsel %vm914, %v3803, 0.0
    %3807 = vadd.xlane.f32.xlu0 %v3806
    %v3808 = vpop.xlane.xlu0 %3807
    %v3809 = vsel %vm914, %v3805, 0.0
    %3810 = vadd.xlane.f32.xlu0 %v3809
    %v3811 = vpop.xlane.xlu0 %3810
    %v3812 = vrcp.pop %v3808
    %v3813 = vrcp.pop %v3811
    %v3814 = vmul.f32 %v3803, %v3812
    %v3815 = vmul.f32 %v3805, %v3813
    %3816 = vrot.lane.b32.xlu0 %v3489, 56
    %v3817 = vpop.permute.xlu0 %3816
    %3818 = vrot.lane.b32.xlu0 %v3494, 56
    %v3819 = vpop.permute.xlu0 %3818
    %v3823 = vsel %vm914, %v3814, 0
    %v3826 = vsel %vm914, %v3815, 0
    %3828 = vmatprep.subr.mxu0 0.0
    %3829 = vmatpush1.msra.mxu0 %v3817
    %3830 = vmatprep.subr.mxu0 0.0
    %3831 = vmatpush1.msra.mxu0 %v3819
    %3832 = vmatprep.subr.mxu0 0.0
    %3833 = vmatpush1.msra.mxu0 0.0
    %3834 = vmatprep.subr.mxu0 0.0
    %3835 = vmatpush1.msra.mxu0 0.0
    %3836 = vmatprep.subr.mxu0 0.0
    %3837 = vmatpush1.msra.mxu0 0.0
    %3838 = vmatprep.subr.mxu0 0.0
    %3839 = vmatpush1.msra.mxu0 0.0
    %3840 = vmatprep.subr.mxu0 0.0
    %3841 = vmatpush1.msra.mxu0 0.0
    %3842 = vmatprep.subr.mxu0 0.0
    %3843 = vmatpush1.msra.mxu0 0.0
    %3844 = vmatprep.subr.mxu0 0.0
    %3845 = vmatpush1.msra.mxu0 0.0
    %3846 = vmatprep.subr.mxu0 0.0
    %3847 = vmatpush1.msra.mxu0 0.0
    %3848 = vmatprep.subr.mxu0 0.0
    %3849 = vmatpush1.msra.mxu0 0.0
    %3850 = vmatprep.subr.mxu0 0.0
    %3851 = vmatpush1.msra.mxu0 0.0
    %3852 = vmatprep.subr.mxu0 0.0
    %3853 = vmatpush1.msra.mxu0 0.0
    %3854 = vmatprep.subr.mxu0 0.0
    %3855 = vmatpush1.msra.mxu0 0.0
    %3856 = vmatprep.subr.mxu0 0.0
    %3857 = vmatpush1.msra.mxu0 0.0
    %3858 = vmatprep.subr.mxu0 0.0
    %3859 = vmatpush1.msra.mxu0 0.0
    %3860 = vmatprep.subr.mxu0 0.0
    %3861 = vmatpush1.msra.mxu0 0.0
    %3862 = vmatprep.subr.mxu0 0.0
    %3863 = vmatpush1.msra.mxu0 0.0
    %3864 = vmatprep.subr.mxu0 0.0
    %3865 = vmatpush1.msra.mxu0 0.0
    %3866 = vmatprep.subr.mxu0 0.0
    %3867 = vmatpush1.msra.mxu0 0.0
    %3868 = vmatprep.subr.mxu0 0.0
    %3869 = vmatpush1.msra.mxu0 0.0
    %3870 = vmatprep.subr.mxu0 0.0
    %3871 = vmatpush1.msra.mxu0 0.0
    %3872 = vmatprep.subr.mxu0 0.0
    %3873 = vmatpush1.msra.mxu0 0.0
    %3874 = vmatprep.subr.mxu0 0.0
    %3875 = vmatpush1.msra.mxu0 0.0
    %3876 = vmatprep.subr.mxu0 0.0
    %3877 = vmatpush1.msra.mxu0 0.0
    %3878 = vmatprep.subr.mxu0 0.0
    %3879 = vmatpush1.msra.mxu0 0.0
    %3880 = vmatprep.subr.mxu0 0.0
    %3881 = vmatpush1.msra.mxu0 0.0
    %3882 = vmatprep.subr.mxu0 0.0
    %3883 = vmatpush1.msra.mxu0 0.0
    %3884 = vmatprep.subr.mxu0 0.0
    %3885 = vmatpush1.msra.mxu0 0.0
    %3886 = vmatprep.subr.mxu0 0.0
    %3887 = vmatpush1.msra.mxu0 0.0
    %3888 = vmatprep.subr.mxu0 0.0
    %3889 = vmatpush1.msra.mxu0 0.0
    %3890 = vmatprep.subr.mxu0 0.0
    %3891 = vmatpush1.msra.mxu0 0.0
    %3892 = vmatprep.mubr.f32.mxu0 0.0
    %3893 = vmatmul.mubr.f32.gmra.mrb[0].mxu0 %v3823
    %v3894 = vpop.f32.mrb[0].mxu0
    %v3895 = vadd.f32 0.0, %v3894
    %v3896 = vpop.f32.mrb[0].mxu0
    %3897 = vmatprep.mubr.f32.mxu0 0.0
    %3898 = vmatmul.mubr.f32.gmra.mrb[0].mxu0 %v3826
    %v3899 = vpop.f32.mrb[0].mxu0
    %v3900 = vadd.f32 0.0, %v3899
    %v3901 = vpop.f32.mrb[0].mxu0
    %3902 = vdwg.mxu0
    %3903 = vrot.lane.b32.xlu0 %v3489, 112
    %v3904 = vpop.permute.xlu0 %3903
    %3905 = vrot.lane.b32.xlu0 %v3494, 112
    %v3906 = vpop.permute.xlu0 %3905
    %3907 = vrot.lane.b32.xlu0 %v3489, 80
    %v3908 = vpop.permute.xlu0 %3907
    %3909 = vrot.lane.b32.xlu0 %v3494, 80
    %v3910 = vpop.permute.xlu0 %3909
    %v3911 = vsel %vm826, %v3904, 0
    %v3913 = vsel %vm826, %v3906, 0
    %v3915 = vsel %vm826, %v3908, 0
    %v3917 = vsel %vm826, %v3910, 0
    %3919 = vmatprep.subr.mxu0 0.0
    %3920 = vmatpush1.xpose.msra.mxu0 %v3915
    %3921 = vmatprep.subr.mxu0 0.0
    %3922 = vmatpush1.xpose.msra.mxu0 %v3917
    %3923 = vmatprep.subr.mxu0 0.0
    %3924 = vmatpush1.xpose.msra.mxu0 0.0
    %3925 = vmatprep.subr.mxu0 0.0
    %3926 = vmatpush1.xpose.msra.mxu0 0.0
    %3927 = vmatprep.subr.mxu0 0.0
    %3928 = vmatpush1.xpose.msra.mxu0 0.0
    %3929 = vmatprep.subr.mxu0 0.0
    %3930 = vmatpush1.xpose.msra.mxu0 0.0
    %3931 = vmatprep.subr.mxu0 0.0
    %3932 = vmatpush1.xpose.msra.mxu0 0.0
    %3933 = vmatprep.subr.mxu0 0.0
    %3934 = vmatpush1.xpose.msra.mxu0 0.0
    %3935 = vmatprep.subr.mxu0 0.0
    %3936 = vmatpush1.xpose.msra.mxu0 0.0
    %3937 = vmatprep.subr.mxu0 0.0
    %3938 = vmatpush1.xpose.msra.mxu0 0.0
    %3939 = vmatprep.subr.mxu0 0.0
    %3940 = vmatpush1.xpose.msra.mxu0 0.0
    %3941 = vmatprep.subr.mxu0 0.0
    %3942 = vmatpush1.xpose.msra.mxu0 0.0
    %3943 = vmatprep.subr.mxu0 0.0
    %3944 = vmatpush1.xpose.msra.mxu0 0.0
    %3945 = vmatprep.subr.mxu0 0.0
    %3946 = vmatpush1.xpose.msra.mxu0 0.0
    %3947 = vmatprep.subr.mxu0 0.0
    %3948 = vmatpush1.xpose.msra.mxu0 0.0
    %3949 = vmatprep.subr.mxu0 0.0
    %3950 = vmatpush1.xpose.msra.mxu0 0.0
    %3951 = vmatprep.subr.mxu0 0.0
    %3952 = vmatpush1.xpose.msra.mxu0 0.0
    %3953 = vmatprep.subr.mxu0 0.0
    %3954 = vmatpush1.xpose.msra.mxu0 0.0
    %3955 = vmatprep.subr.mxu0 0.0
    %3956 = vmatpush1.xpose.msra.mxu0 0.0
    %3957 = vmatprep.subr.mxu0 0.0
    %3958 = vmatpush1.xpose.msra.mxu0 0.0
    %3959 = vmatprep.subr.mxu0 0.0
    %3960 = vmatpush1.xpose.msra.mxu0 0.0
    %3961 = vmatprep.subr.mxu0 0.0
    %3962 = vmatpush1.xpose.msra.mxu0 0.0
    %3963 = vmatprep.subr.mxu0 0.0
    %3964 = vmatpush1.xpose.msra.mxu0 0.0
    %3965 = vmatprep.subr.mxu0 0.0
    %3966 = vmatpush1.xpose.msra.mxu0 0.0
    %3967 = vmatprep.subr.mxu0 0.0
    %3968 = vmatpush1.xpose.msra.mxu0 0.0
    %3969 = vmatprep.subr.mxu0 0.0
    %3970 = vmatpush1.xpose.msra.mxu0 0.0
    %3971 = vmatprep.subr.mxu0 0.0
    %3972 = vmatpush1.xpose.msra.mxu0 0.0
    %3973 = vmatprep.subr.mxu0 0.0
    %3974 = vmatpush1.xpose.msra.mxu0 0.0
    %3975 = vmatprep.subr.mxu0 0.0
    %3976 = vmatpush1.xpose.msra.mxu0 0.0
    %3977 = vmatprep.subr.mxu0 0.0
    %3978 = vmatpush1.xpose.msra.mxu0 0.0
    %3979 = vmatprep.subr.mxu0 0.0
    %3980 = vmatpush1.xpose.msra.mxu0 0.0
    %3981 = vmatprep.subr.mxu0 0.0
    %3982 = vmatpush1.xpose.msra.mxu0 0.0
    %3983 = vmatprep.mubr.f32.mxu0 0.0
    %3984 = vmatmul.mubr.f32.gmra.mrb[0].mxu0 %v3911
    %v3985 = vpop.f32.mrb[0].mxu0
    %v3986 = vadd.f32 0.0, %v3985
    %v3987 = vpop.f32.mrb[0].mxu0
    %3988 = vmatprep.mubr.f32.mxu0 0.0
    %3989 = vmatmul.mubr.f32.gmra.mrb[0].mxu0 %v3913
    %v3990 = vpop.f32.mrb[0].mxu0
    %v3991 = vadd.f32 0.0, %v3990
    %v3992 = vpop.f32.mrb[0].mxu0
    %3993 = vdwg.mxu0
    %v3994 = vmul.f32 %v3986, 0.35355338
    %v3995 = vmul.f32 %v3991, 0.35355338
    %v3996 = vadd.f32 %v3994, %v3411
    %v3997 = vadd.f32 %v3995, %v3412
    %v3998 = vsel %vm914, %v3996, -inf
    %3999 = vmax.xlane.f32.xlu0 %v3998
    %v4000 = vpop.xlane.xlu0 %3999
    %v4001 = vsel %vm914, %v3997, -inf
    %4002 = vmax.xlane.f32.xlu0 %v4001
    %v4003 = vpop.xlane.xlu0 %4002
    %v4004 = vsub.f32 %v3996, %v4000
    %v4005 = vsub.f32 %v3997, %v4003
    %v4006 = vmul.f32 %v4004, 1.442695
    %v4007 = vpow.pop %v4006
    %v4008 = vmul.f32 %v4005, 1.442695
    %v4009 = vpow.pop %v4008
    %v4010 = vsel %vm914, %v4007, 0.0
    %4011 = vadd.xlane.f32.xlu0 %v4010
    %v4012 = vpop.xlane.xlu0 %4011
    %v4013 = vsel %vm914, %v4009, 0.0
    %4014 = vadd.xlane.f32.xlu0 %v4013
    %v4015 = vpop.xlane.xlu0 %4014
    %v4016 = vrcp.pop %v4012
    %v4017 = vrcp.pop %v4015
    %v4018 = vmul.f32 %v4007, %v4016
    %v4019 = vmul.f32 %v4009, %v4017
    %4020 = vrot.lane.b32.xlu0 %v3489, 48
    %v4021 = vpop.permute.xlu0 %4020
    %4022 = vrot.lane.b32.xlu0 %v3494, 48
    %v4023 = vpop.permute.xlu0 %4022
    %v4027 = vsel %vm914, %v4018, 0
    %v4030 = vsel %vm914, %v4019, 0
    %4032 = vmatprep.subr.mxu0 0.0
    %4033 = vmatpush1.msra.mxu0 %v4021
    %4034 = vmatprep.subr.mxu0 0.0
    %4035 = vmatpush1.msra.mxu0 %v4023
    %4036 = vmatprep.subr.mxu0 0.0
    %4037 = vmatpush1.msra.mxu0 0.0
    %4038 = vmatprep.subr.mxu0 0.0
    %4039 = vmatpush1.msra.mxu0 0.0
    %4040 = vmatprep.subr.mxu0 0.0
    %4041 = vmatpush1.msra.mxu0 0.0
    %4042 = vmatprep.subr.mxu0 0.0
    %4043 = vmatpush1.msra.mxu0 0.0
    %4044 = vmatprep.subr.mxu0 0.0
    %4045 = vmatpush1.msra.mxu0 0.0
    %4046 = vmatprep.subr.mxu0 0.0
    %4047 = vmatpush1.msra.mxu0 0.0
    %4048 = vmatprep.subr.mxu0 0.0
    %4049 = vmatpush1.msra.mxu0 0.0
    %4050 = vmatprep.subr.mxu0 0.0
    %4051 = vmatpush1.msra.mxu0 0.0
    %4052 = vmatprep.subr.mxu0 0.0
    %4053 = vmatpush1.msra.mxu0 0.0
    %4054 = vmatprep.subr.mxu0 0.0
    %4055 = vmatpush1.msra.mxu0 0.0
    %4056 = vmatprep.subr.mxu0 0.0
    %4057 = vmatpush1.msra.mxu0 0.0
    %4058 = vmatprep.subr.mxu0 0.0
    %4059 = vmatpush1.msra.mxu0 0.0
    %4060 = vmatprep.subr.mxu0 0.0
    %4061 = vmatpush1.msra.mxu0 0.0
    %4062 = vmatprep.subr.mxu0 0.0
    %4063 = vmatpush1.msra.mxu0 0.0
    %4064 = vmatprep.subr.mxu0 0.0
    %4065 = vmatpush1.msra.mxu0 0.0
    %4066 = vmatprep.subr.mxu0 0.0
    %4067 = vmatpush1.msra.mxu0 0.0
    %4068 = vmatprep.subr.mxu0 0.0
    %4069 = vmatpush1.msra.mxu0 0.0
    %4070 = vmatprep.subr.mxu0 0.0
    %4071 = vmatpush1.msra.mxu0 0.0
    %4072 = vmatprep.subr.mxu0 0.0
    %4073 = vmatpush1.msra.mxu0 0.0
    %4074 = vmatprep.subr.mxu0 0.0
    %4075 = vmatpush1.msra.mxu0 0.0
    %4076 = vmatprep.subr.mxu0 0.0
    %4077 = vmatpush1.msra.mxu0 0.0
    %4078 = vmatprep.subr.mxu0 0.0
    %4079 = vmatpush1.msra.mxu0 0.0
    %4080 = vmatprep.subr.mxu0 0.0
    %4081 = vmatpush1.msra.mxu0 0.0
    %4082 = vmatprep.subr.mxu0 0.0
    %4083 = vmatpush1.msra.mxu0 0.0
    %4084 = vmatprep.subr.mxu0 0.0
    %4085 = vmatpush1.msra.mxu0 0.0
    %4086 = vmatprep.subr.mxu0 0.0
    %4087 = vmatpush1.msra.mxu0 0.0
    %4088 = vmatprep.subr.mxu0 0.0
    %4089 = vmatpush1.msra.mxu0 0.0
    %4090 = vmatprep.subr.mxu0 0.0
    %4091 = vmatpush1.msra.mxu0 0.0
    %4092 = vmatprep.subr.mxu0 0.0
    %4093 = vmatpush1.msra.mxu0 0.0
    %4094 = vmatprep.subr.mxu0 0.0
    %4095 = vmatpush1.msra.mxu0 0.0
    %4096 = vmatprep.mubr.f32.mxu0 0.0
    %4097 = vmatmul.mubr.f32.gmra.mrb[0].mxu0 %v4027
    %v4098 = vpop.f32.mrb[0].mxu0
    %v4099 = vadd.f32 0.0, %v4098
    %v4100 = vpop.f32.mrb[0].mxu0
    %4101 = vmatprep.mubr.f32.mxu0 0.0
    %4102 = vmatmul.mubr.f32.gmra.mrb[0].mxu0 %v4030
    %v4103 = vpop.f32.mrb[0].mxu0
    %v4104 = vadd.f32 0.0, %v4103
    %v4105 = vpop.f32.mrb[0].mxu0
    %4106 = vdwg.mxu0
    %4107 = vrot.lane.b32.xlu0 %v3489, 104
    %v4108 = vpop.permute.xlu0 %4107
    %4109 = vrot.lane.b32.xlu0 %v3494, 104
    %v4110 = vpop.permute.xlu0 %4109
    %4111 = vrot.lane.b32.xlu0 %v3489, 72
    %v4112 = vpop.permute.xlu0 %4111
    %4113 = vrot.lane.b32.xlu0 %v3494, 72
    %v4114 = vpop.permute.xlu0 %4113
    %v4115 = vsel %vm826, %v4108, 0
    %v4117 = vsel %vm826, %v4110, 0
    %v4119 = vsel %vm826, %v4112, 0
    %v4121 = vsel %vm826, %v4114, 0
    %4123 = vmatprep.subr.mxu0 0.0
    %4124 = vmatpush1.xpose.msra.mxu0 %v4119
    %4125 = vmatprep.subr.mxu0 0.0
    %4126 = vmatpush1.xpose.msra.mxu0 %v4121
    %4127 = vmatprep.subr.mxu0 0.0
    %4128 = vmatpush1.xpose.msra.mxu0 0.0
    %4129 = vmatprep.subr.mxu0 0.0
    %4130 = vmatpush1.xpose.msra.mxu0 0.0
    %4131 = vmatprep.subr.mxu0 0.0
    %4132 = vmatpush1.xpose.msra.mxu0 0.0
    %4133 = vmatprep.subr.mxu0 0.0
    %4134 = vmatpush1.xpose.msra.mxu0 0.0
    %4135 = vmatprep.subr.mxu0 0.0
    %4136 = vmatpush1.xpose.msra.mxu0 0.0
    %4137 = vmatprep.subr.mxu0 0.0
    %4138 = vmatpush1.xpose.msra.mxu0 0.0
    %4139 = vmatprep.subr.mxu0 0.0
    %4140 = vmatpush1.xpose.msra.mxu0 0.0
    %4141 = vmatprep.subr.mxu0 0.0
    %4142 = vmatpush1.xpose.msra.mxu0 0.0
    %4143 = vmatprep.subr.mxu0 0.0
    %4144 = vmatpush1.xpose.msra.mxu0 0.0
    %4145 = vmatprep.subr.mxu0 0.0
    %4146 = vmatpush1.xpose.msra.mxu0 0.0
    %4147 = vmatprep.subr.mxu0 0.0
    %4148 = vmatpush1.xpose.msra.mxu0 0.0
    %4149 = vmatprep.subr.mxu0 0.0
    %4150 = vmatpush1.xpose.msra.mxu0 0.0
    %4151 = vmatprep.subr.mxu0 0.0
    %4152 = vmatpush1.xpose.msra.mxu0 0.0
    %4153 = vmatprep.subr.mxu0 0.0
    %4154 = vmatpush1.xpose.msra.mxu0 0.0
    %4155 = vmatprep.subr.mxu0 0.0
    %4156 = vmatpush1.xpose.msra.mxu0 0.0
    %4157 = vmatprep.subr.mxu0 0.0
    %4158 = vmatpush1.xpose.msra.mxu0 0.0
    %4159 = vmatprep.subr.mxu0 0.0
    %4160 = vmatpush1.xpose.msra.mxu0 0.0
    %4161 = vmatprep.subr.mxu0 0.0
    %4162 = vmatpush1.xpose.msra.mxu0 0.0
    %4163 = vmatprep.subr.mxu0 0.0
    %4164 = vmatpush1.xpose.msra.mxu0 0.0
    %4165 = vmatprep.subr.mxu0 0.0
    %4166 = vmatpush1.xpose.msra.mxu0 0.0
    %4167 = vmatprep.subr.mxu0 0.0
    %4168 = vmatpush1.xpose.msra.mxu0 0.0
    %4169 = vmatprep.subr.mxu0 0.0
    %4170 = vmatpush1.xpose.msra.mxu0 0.0
    %4171 = vmatprep.subr.mxu0 0.0
    %4172 = vmatpush1.xpose.msra.mxu0 0.0
    %4173 = vmatprep.subr.mxu0 0.0
    %4174 = vmatpush1.xpose.msra.mxu0 0.0
    %4175 = vmatprep.subr.mxu0 0.0
    %4176 = vmatpush1.xpose.msra.mxu0 0.0
    %4177 = vmatprep.subr.mxu0 0.0
    %4178 = vmatpush1.xpose.msra.mxu0 0.0
    %4179 = vmatprep.subr.mxu0 0.0
    %4180 = vmatpush1.xpose.msra.mxu0 0.0
    %4181 = vmatprep.subr.mxu0 0.0
    %4182 = vmatpush1.xpose.msra.mxu0 0.0
    %4183 = vmatprep.subr.mxu0 0.0
    %4184 = vmatpush1.xpose.msra.mxu0 0.0
    %4185 = vmatprep.subr.mxu0 0.0
    %4186 = vmatpush1.xpose.msra.mxu0 0.0
    %4187 = vmatprep.mubr.f32.mxu0 0.0
    %4188 = vmatmul.mubr.f32.gmra.mrb[0].mxu0 %v4115
    %v4189 = vpop.f32.mrb[0].mxu0
    %v4190 = vadd.f32 0.0, %v4189
    %v4191 = vpop.f32.mrb[0].mxu0
    %4192 = vmatprep.mubr.f32.mxu0 0.0
    %4193 = vmatmul.mubr.f32.gmra.mrb[0].mxu0 %v4117
    %v4194 = vpop.f32.mrb[0].mxu0
    %v4195 = vadd.f32 0.0, %v4194
    %v4196 = vpop.f32.mrb[0].mxu0
    %4197 = vdwg.mxu0
    %v4198 = vmul.f32 %v4190, 0.35355338
    %v4199 = vmul.f32 %v4195, 0.35355338
    %v4200 = vadd.f32 %v4198, %v3411
    %v4201 = vadd.f32 %v4199, %v3412
    %v4202 = vsel %vm914, %v4200, -inf
    %4203 = vmax.xlane.f32.xlu0 %v4202
    %v4204 = vpop.xlane.xlu0 %4203
    %v4205 = vsel %vm914, %v4201, -inf
    %4206 = vmax.xlane.f32.xlu0 %v4205
    %v4207 = vpop.xlane.xlu0 %4206
    %v4208 = vsub.f32 %v4200, %v4204
    %v4209 = vsub.f32 %v4201, %v4207
    %v4210 = vmul.f32 %v4208, 1.442695
    %v4211 = vpow.pop %v4210
    %v4212 = vmul.f32 %v4209, 1.442695
    %v4213 = vpow.pop %v4212
    %v4214 = vsel %vm914, %v4211, 0.0
    %4215 = vadd.xlane.f32.xlu0 %v4214
    %v4216 = vpop.xlane.xlu0 %4215
    %v4217 = vsel %vm914, %v4213, 0.0
    %4218 = vadd.xlane.f32.xlu0 %v4217
    %v4219 = vpop.xlane.xlu0 %4218
    %v4220 = vrcp.pop %v4216
    %v4221 = vrcp.pop %v4219
    %v4222 = vmul.f32 %v4211, %v4220
    %v4223 = vmul.f32 %v4213, %v4221
    %4224 = vrot.lane.b32.xlu0 %v3489, 40
    %v4225 = vpop.permute.xlu0 %4224
    %4226 = vrot.lane.b32.xlu0 %v3494, 40
    %v4227 = vpop.permute.xlu0 %4226
    %v4231 = vsel %vm914, %v4222, 0
    %v4234 = vsel %vm914, %v4223, 0
    %4236 = vmatprep.subr.mxu0 0.0
    %4237 = vmatpush1.msra.mxu0 %v4225
    %4238 = vmatprep.subr.mxu0 0.0
    %4239 = vmatpush1.msra.mxu0 %v4227
    %4240 = vmatprep.subr.mxu0 0.0
    %4241 = vmatpush1.msra.mxu0 0.0
    %4242 = vmatprep.subr.mxu0 0.0
    %4243 = vmatpush1.msra.mxu0 0.0
    %4244 = vmatprep.subr.mxu0 0.0
    %4245 = vmatpush1.msra.mxu0 0.0
    %4246 = vmatprep.subr.mxu0 0.0
    %4247 = vmatpush1.msra.mxu0 0.0
    %4248 = vmatprep.subr.mxu0 0.0
    %4249 = vmatpush1.msra.mxu0 0.0
    %4250 = vmatprep.subr.mxu0 0.0
    %4251 = vmatpush1.msra.mxu0 0.0
    %4252 = vmatprep.subr.mxu0 0.0
    %4253 = vmatpush1.msra.mxu0 0.0
    %4254 = vmatprep.subr.mxu0 0.0
    %4255 = vmatpush1.msra.mxu0 0.0
    %4256 = vmatprep.subr.mxu0 0.0
    %4257 = vmatpush1.msra.mxu0 0.0
    %4258 = vmatprep.subr.mxu0 0.0
    %4259 = vmatpush1.msra.mxu0 0.0
    %4260 = vmatprep.subr.mxu0 0.0
    %4261 = vmatpush1.msra.mxu0 0.0
    %4262 = vmatprep.subr.mxu0 0.0
    %4263 = vmatpush1.msra.mxu0 0.0
    %4264 = vmatprep.subr.mxu0 0.0
    %4265 = vmatpush1.msra.mxu0 0.0
    %4266 = vmatprep.subr.mxu0 0.0
    %4267 = vmatpush1.msra.mxu0 0.0
    %4268 = vmatprep.subr.mxu0 0.0
    %4269 = vmatpush1.msra.mxu0 0.0
    %4270 = vmatprep.subr.mxu0 0.0
    %4271 = vmatpush1.msra.mxu0 0.0
    %4272 = vmatprep.subr.mxu0 0.0
    %4273 = vmatpush1.msra.mxu0 0.0
    %4274 = vmatprep.subr.mxu0 0.0
    %4275 = vmatpush1.msra.mxu0 0.0
    %4276 = vmatprep.subr.mxu0 0.0
    %4277 = vmatpush1.msra.mxu0 0.0
    %4278 = vmatprep.subr.mxu0 0.0
    %4279 = vmatpush1.msra.mxu0 0.0
    %4280 = vmatprep.subr.mxu0 0.0
    %4281 = vmatpush1.msra.mxu0 0.0
    %4282 = vmatprep.subr.mxu0 0.0
    %4283 = vmatpush1.msra.mxu0 0.0
    %4284 = vmatprep.subr.mxu0 0.0
    %4285 = vmatpush1.msra.mxu0 0.0
    %4286 = vmatprep.subr.mxu0 0.0
    %4287 = vmatpush1.msra.mxu0 0.0
    %4288 = vmatprep.subr.mxu0 0.0
    %4289 = vmatpush1.msra.mxu0 0.0
    %4290 = vmatprep.subr.mxu0 0.0
    %4291 = vmatpush1.msra.mxu0 0.0
    %4292 = vmatprep.subr.mxu0 0.0
    %4293 = vmatpush1.msra.mxu0 0.0
    %4294 = vmatprep.subr.mxu0 0.0
    %4295 = vmatpush1.msra.mxu0 0.0
    %4296 = vmatprep.subr.mxu0 0.0
    %4297 = vmatpush1.msra.mxu0 0.0
    %4298 = vmatprep.subr.mxu0 0.0
    %4299 = vmatpush1.msra.mxu0 0.0
    %4300 = vmatprep.mubr.f32.mxu0 0.0
    %4301 = vmatmul.mubr.f32.gmra.mrb[0].mxu0 %v4231
    %v4302 = vpop.f32.mrb[0].mxu0
    %v4303 = vadd.f32 0.0, %v4302
    %v4304 = vpop.f32.mrb[0].mxu0
    %4305 = vmatprep.mubr.f32.mxu0 0.0
    %4306 = vmatmul.mubr.f32.gmra.mrb[0].mxu0 %v4234
    %v4307 = vpop.f32.mrb[0].mxu0
    %v4308 = vadd.f32 0.0, %v4307
    %v4309 = vpop.f32.mrb[0].mxu0
    %4310 = vdwg.mxu0
    %4313 = vrot.lane.b32.xlu0 %v3895, 8
    %v4314 = vpop.permute.xlu0 %4313
    %4315 = vrot.lane.b32.xlu0 %v3900, 8
    %v4316 = vpop.permute.xlu0 %4315
    %4321 = vrot.lane.b32.xlu0 %v4099, 16
    %v4322 = vpop.permute.xlu0 %4321
    %4323 = vrot.lane.b32.xlu0 %v4104, 16
    %v4324 = vpop.permute.xlu0 %4323
    %4329 = vrot.lane.b32.xlu0 %v4303, 24
    %v4330 = vpop.permute.xlu0 %4329
    %4331 = vrot.lane.b32.xlu0 %v4308, 24
    %v4332 = vpop.permute.xlu0 %4331
    %v4335 = vsel %vm826, %v3691, %v4314
    %v4336 = vsel %vm826, %v3696, %v4316
    %v4337 = vsel %vm914, %v4335, %v4322
    %v4338 = vsel %vm914, %v4336, %v4324
    %v4339 = vsel %vm1664, %v4337, %v4330
    %v4340 = vsel %vm1664, %v4338, %v4332
    %v4341 = vld [vmem:[#allocation4 + $0x200] sm:$0xff]
    %v4342 = vld [vmem:[#allocation4 + $0x208] sm:$0xff]
    %v4343 = vld [vmem:[#allocation4 + $0x210] sm:$0xff]
    %v4344 = vld [vmem:[#allocation4 + $0x218] sm:$0xff]
    %v4345 = vld [vmem:[#allocation4 + $0x220] sm:$0x1]
    %v4346 = vlaneseq
    %v4347 = vshrl.u32 %v4346, 7
    %v4348 = vsub.s32 0, %v4347
    %v4349 = vrot.slane %v4345, %v4348
    %v4351 = vsel %vm738, %v4339, 0
    %v4354 = vsel %vm738, %v4340, 0
    %4356 = vmatprep.subr.mxu0 0.0
    %4357 = vmatpush1.msra.mxu0 %v4341
    %4358 = vmatprep.subr.mxu0 0.0
    %4359 = vmatpush1.msra.mxu0 %v4342
    %4360 = vmatprep.subr.mxu0 0.0
    %4361 = vmatpush1.msra.mxu0 %v4343
    %4362 = vmatprep.subr.mxu0 0.0
    %4363 = vmatpush1.msra.mxu0 %v4344
    %4364 = vmatprep.subr.mxu0 0.0
    %4365 = vmatpush1.msra.mxu0 0.0
    %4366 = vmatprep.subr.mxu0 0.0
    %4367 = vmatpush1.msra.mxu0 0.0
    %4368 = vmatprep.subr.mxu0 0.0
    %4369 = vmatpush1.msra.mxu0 0.0
    %4370 = vmatprep.subr.mxu0 0.0
    %4371 = vmatpush1.msra.mxu0 0.0
    %4372 = vmatprep.subr.mxu0 0.0
    %4373 = vmatpush1.msra.mxu0 0.0
    %4374 = vmatprep.subr.mxu0 0.0
    %4375 = vmatpush1.msra.mxu0 0.0
    %4376 = vmatprep.subr.mxu0 0.0
    %4377 = vmatpush1.msra.mxu0 0.0
    %4378 = vmatprep.subr.mxu0 0.0
    %4379 = vmatpush1.msra.mxu0 0.0
    %4380 = vmatprep.subr.mxu0 0.0
    %4381 = vmatpush1.msra.mxu0 0.0
    %4382 = vmatprep.subr.mxu0 0.0
    %4383 = vmatpush1.msra.mxu0 0.0
    %4384 = vmatprep.subr.mxu0 0.0
    %4385 = vmatpush1.msra.mxu0 0.0
    %4386 = vmatprep.subr.mxu0 0.0
    %4387 = vmatpush1.msra.mxu0 0.0
    %4388 = vmatprep.subr.mxu0 0.0
    %4389 = vmatpush1.msra.mxu0 0.0
    %4390 = vmatprep.subr.mxu0 0.0
    %4391 = vmatpush1.msra.mxu0 0.0
    %4392 = vmatprep.subr.mxu0 0.0
    %4393 = vmatpush1.msra.mxu0 0.0
    %4394 = vmatprep.subr.mxu0 0.0
    %4395 = vmatpush1.msra.mxu0 0.0
    %4396 = vmatprep.subr.mxu0 0.0
    %4397 = vmatpush1.msra.mxu0 0.0
    %4398 = vmatprep.subr.mxu0 0.0
    %4399 = vmatpush1.msra.mxu0 0.0
    %4400 = vmatprep.subr.mxu0 0.0
    %4401 = vmatpush1.msra.mxu0 0.0
    %4402 = vmatprep.subr.mxu0 0.0
    %4403 = vmatpush1.msra.mxu0 0.0
    %4404 = vmatprep.subr.mxu0 0.0
    %4405 = vmatpush1.msra.mxu0 0.0
    %4406 = vmatprep.subr.mxu0 0.0
    %4407 = vmatpush1.msra.mxu0 0.0
    %4408 = vmatprep.subr.mxu0 0.0
    %4409 = vmatpush1.msra.mxu0 0.0
    %4410 = vmatprep.subr.mxu0 0.0
    %4411 = vmatpush1.msra.mxu0 0.0
    %4412 = vmatprep.subr.mxu0 0.0
    %4413 = vmatpush1.msra.mxu0 0.0
    %4414 = vmatprep.subr.mxu0 0.0
    %4415 = vmatpush1.msra.mxu0 0.0
    %4416 = vmatprep.subr.mxu0 0.0
    %4417 = vmatpush1.msra.mxu0 0.0
    %4418 = vmatprep.subr.mxu0 0.0
    %4419 = vmatpush1.msra.mxu0 0.0
    %4420 = vmatprep.mubr.f32.mxu0 0.0
    %4421 = vmatmul.mubr.f32.gmra.mrb[0].mxu0 %v4351
    %v4422 = vpop.f32.mrb[0].mxu0
    %v4423 = vadd.f32 %v4349, %v4422
    %v4424 = vpop.f32.mrb[0].mxu0
    %4425 = vmatprep.mubr.f32.mxu0 0.0
    %4426 = vmatmul.mubr.f32.gmra.mrb[0].mxu0 %v4354
    %v4427 = vpop.f32.mrb[0].mxu0
    %v4428 = vadd.f32 %v4349, %v4427
    %v4429 = vpop.f32.mrb[0].mxu0
    %4430 = vdwg.mxu0
    %v4431 = vld [vmem:[#allocation4 + $0x228] sm:$0x3]
    %v4432 = vadd.f32 %v3317, %v4423
    %v4433 = vadd.f32 %v3318, %v4428
    %v4434 = vsel %vm738, %v4432, 0.0
    %4435 = vadd.xlane.f32.xlu0 %v4434
    %v4436 = vpop.xlane.xlu0 %4435
    %v4437 = vsel %vm738, %v4433, 0.0
    %4438 = vadd.xlane.f32.xlu0 %v4437
    %v4439 = vpop.xlane.xlu0 %4438
    %v4440 = vmul.f32 %v4436, %v1766
    %v4441 = vmul.f32 %v4439, %v1766
    %v4442 = vsub.f32 %v4432, %v4440
    %v4443 = vsub.f32 %v4433, %v4441
    %v4444 = vmul.f32 %v4442, %v4442
    %v4445 = vmul.f32 %v4443, %v4443
    %v4446 = vsel %vm738, %v4444, 0.0
    %4447 = vadd.xlane.f32.xlu0 %v4446
    %v4448 = vpop.xlane.xlu0 %4447
    %v4449 = vsel %vm738, %v4445, 0.0
    %4450 = vadd.xlane.f32.xlu0 %v4449
    %v4451 = vpop.xlane.xlu0 %4450
    %v4452 = vmul.f32 %v4448, %v1766
    %v4453 = vmul.f32 %v4451, %v1766
    %v4454 = vadd.f32 %v4452, 1e-05
    %v4455 = vadd.f32 %v4453, 1e-05
    %v4456 = vrsqrt.pop %v4454
    %v4457 = vrsqrt.pop %v4455
    %v4458 = vmul.f32 %v4442, %v4456
    %v4459 = vmul.f32 %v4443, %v4457
    %v4460 = vlaneseq
    %v4461 = vshrl.u32 %v4460, 7
    %v4462 = vsub.s32 0, %v4461
    %v4463 = vrot.slane %v4431, %v4462
    %v4464 = vmul.f32 %v4458, %v4463
    %v4465 = vmul.f32 %v4459, %v4463
    %v4466 = vlaneseq
    %v4467 = vshrl.u32 %v4466, 7
    %v4468 = vsub.s32 1, %v4467
    %v4469 = vrot.slane %v4431, %v4468
    %v4470 = vadd.f32 %v4464, %v4469
    %v4471 = vadd.f32 %v4465, %v4469
    %v4472 = vld [vmem:[#allocation4 + $0x10] sm:$0xff]
    %v4474 = vsel %vm914, %v4472, 0
    %4476 = vmatprep.subr.mxu0 0.0
    %4477 = vmatpush1.msra.mxu0 %v4470
    %4478 = vmatprep.subr.mxu0 0.0
    %4479 = vmatpush1.msra.mxu0 %v4471
    %4480 = vmatprep.subr.mxu0 0.0
    %4481 = vmatpush1.msra.mxu0 0.0
    %4482 = vmatprep.subr.mxu0 0.0
    %4483 = vmatpush1.msra.mxu0 0.0
    %4484 = vmatprep.subr.mxu0 0.0
    %4485 = vmatpush1.msra.mxu0 0.0
    %4486 = vmatprep.subr.mxu0 0.0
    %4487 = vmatpush1.msra.mxu0 0.0
    %4488 = vmatprep.subr.mxu0 0.0
    %4489 = vmatpush1.msra.mxu0 0.0
    %4490 = vmatprep.subr.mxu0 0.0
    %4491 = vmatpush1.msra.mxu0 0.0
    %4492 = vmatprep.subr.mxu0 0.0
    %4493 = vmatpush1.msra.mxu0 0.0
    %4494 = vmatprep.subr.mxu0 0.0
    %4495 = vmatpush1.msra.mxu0 0.0
    %4496 = vmatprep.subr.mxu0 0.0
    %4497 = vmatpush1.msra.mxu0 0.0
    %4498 = vmatprep.subr.mxu0 0.0
    %4499 = vmatpush1.msra.mxu0 0.0
    %4500 = vmatprep.subr.mxu0 0.0
    %4501 = vmatpush1.msra.mxu0 0.0
    %4502 = vmatprep.subr.mxu0 0.0
    %4503 = vmatpush1.msra.mxu0 0.0
    %4504 = vmatprep.subr.mxu0 0.0
    %4505 = vmatpush1.msra.mxu0 0.0
    %4506 = vmatprep.subr.mxu0 0.0
    %4507 = vmatpush1.msra.mxu0 0.0
    %4508 = vmatprep.subr.mxu0 0.0
    %4509 = vmatpush1.msra.mxu0 0.0
    %4510 = vmatprep.subr.mxu0 0.0
    %4511 = vmatpush1.msra.mxu0 0.0
    %4512 = vmatprep.subr.mxu0 0.0
    %4513 = vmatpush1.msra.mxu0 0.0
    %4514 = vmatprep.subr.mxu0 0.0
    %4515 = vmatpush1.msra.mxu0 0.0
    %4516 = vmatprep.subr.mxu0 0.0
    %4517 = vmatpush1.msra.mxu0 0.0
    %4518 = vmatprep.subr.mxu0 0.0
    %4519 = vmatpush1.msra.mxu0 0.0
    %4520 = vmatprep.subr.mxu0 0.0
    %4521 = vmatpush1.msra.mxu0 0.0
    %4522 = vmatprep.subr.mxu0 0.0
    %4523 = vmatpush1.msra.mxu0 0.0
    %4524 = vmatprep.subr.mxu0 0.0
    %4525 = vmatpush1.msra.mxu0 0.0
    %4526 = vmatprep.subr.mxu0 0.0
    %4527 = vmatpush1.msra.mxu0 0.0
    %4528 = vmatprep.subr.mxu0 0.0
    %4529 = vmatpush1.msra.mxu0 0.0
    %4530 = vmatprep.subr.mxu0 0.0
    %4531 = vmatpush1.msra.mxu0 0.0
    %4532 = vmatprep.subr.mxu0 0.0
    %4533 = vmatpush1.msra.mxu0 0.0
    %4534 = vmatprep.subr.mxu0 0.0
    %4535 = vmatpush1.msra.mxu0 0.0
    %4536 = vmatprep.subr.mxu0 0.0
    %4537 = vmatpush1.msra.mxu0 0.0
    %4538 = vmatprep.subr.mxu0 0.0
    %4539 = vmatpush1.msra.mxu0 0.0
    %4540 = vmatprep.mubr.f32.mxu0 0.0
    %4541 = vmatmul.mubr.f32.gmra.mrb[0].mxu0 %v4474
    %v4542 = vpop.f32.mrb[0].mxu0
    %v4543 = vadd.f32 0.0, %v4542
    %v4544 = vpop.f32.mrb[0].mxu0
    %4545 = vdwg.mxu0
    %v4546 = vld [vmem:[#allocation4 + $0x230] sm:$0xff]
    %v4547 = vld [vmem:[#allocation4 + $0x238] sm:$0xff]
    %v4548 = vld [vmem:[#allocation4 + $0x240] sm:$0xff]
    %v4549 = vld [vmem:[#allocation4 + $0x248] sm:$0xff]
    %v4550 = vld [vmem:[#allocation4 + $0x250] sm:$0x1]
    %v4551 = vlaneseq
    %v4552 = vshrl.u32 %v4551, 7
    %v4553 = vsub.s32 0, %v4552
    %v4554 = vrot.slane %v4550, %v4553
    %v4556 = vsel %vm738, %v4543, 0
    %4558 = vmatprep.subr.mxu0 0.0
    %4559 = vmatpush1.msra.mxu0 %v4546
    %4560 = vmatprep.subr.mxu0 0.0
    %4561 = vmatpush1.msra.mxu0 %v4547
    %4562 = vmatprep.subr.mxu0 0.0
    %4563 = vmatpush1.msra.mxu0 %v4548
    %4564 = vmatprep.subr.mxu0 0.0
    %4565 = vmatpush1.msra.mxu0 %v4549
    %4566 = vmatprep.subr.mxu0 0.0
    %4567 = vmatpush1.msra.mxu0 0.0
    %4568 = vmatprep.subr.mxu0 0.0
    %4569 = vmatpush1.msra.mxu0 0.0
    %4570 = vmatprep.subr.mxu0 0.0
    %4571 = vmatpush1.msra.mxu0 0.0
    %4572 = vmatprep.subr.mxu0 0.0
    %4573 = vmatpush1.msra.mxu0 0.0
    %4574 = vmatprep.subr.mxu0 0.0
    %4575 = vmatpush1.msra.mxu0 0.0
    %4576 = vmatprep.subr.mxu0 0.0
    %4577 = vmatpush1.msra.mxu0 0.0
    %4578 = vmatprep.subr.mxu0 0.0
    %4579 = vmatpush1.msra.mxu0 0.0
    %4580 = vmatprep.subr.mxu0 0.0
    %4581 = vmatpush1.msra.mxu0 0.0
    %4582 = vmatprep.subr.mxu0 0.0
    %4583 = vmatpush1.msra.mxu0 0.0
    %4584 = vmatprep.subr.mxu0 0.0
    %4585 = vmatpush1.msra.mxu0 0.0
    %4586 = vmatprep.subr.mxu0 0.0
    %4587 = vmatpush1.msra.mxu0 0.0
    %4588 = vmatprep.subr.mxu0 0.0
    %4589 = vmatpush1.msra.mxu0 0.0
    %4590 = vmatprep.subr.mxu0 0.0
    %4591 = vmatpush1.msra.mxu0 0.0
    %4592 = vmatprep.subr.mxu0 0.0
    %4593 = vmatpush1.msra.mxu0 0.0
    %4594 = vmatprep.subr.mxu0 0.0
    %4595 = vmatpush1.msra.mxu0 0.0
    %4596 = vmatprep.subr.mxu0 0.0
    %4597 = vmatpush1.msra.mxu0 0.0
    %4598 = vmatprep.subr.mxu0 0.0
    %4599 = vmatpush1.msra.mxu0 0.0
    %4600 = vmatprep.subr.mxu0 0.0
    %4601 = vmatpush1.msra.mxu0 0.0
    %4602 = vmatprep.subr.mxu0 0.0
    %4603 = vmatpush1.msra.mxu0 0.0
    %4604 = vmatprep.subr.mxu0 0.0
    %4605 = vmatpush1.msra.mxu0 0.0
    %4606 = vmatprep.subr.mxu0 0.0
    %4607 = vmatpush1.msra.mxu0 0.0
    %4608 = vmatprep.subr.mxu0 0.0
    %4609 = vmatpush1.msra.mxu0 0.0
    %4610 = vmatprep.subr.mxu0 0.0
    %4611 = vmatpush1.msra.mxu0 0.0
    %4612 = vmatprep.subr.mxu0 0.0
    %4613 = vmatpush1.msra.mxu0 0.0
    %4614 = vmatprep.subr.mxu0 0.0
    %4615 = vmatpush1.msra.mxu0 0.0
    %4616 = vmatprep.subr.mxu0 0.0
    %4617 = vmatpush1.msra.mxu0 0.0
    %4618 = vmatprep.subr.mxu0 0.0
    %4619 = vmatpush1.msra.mxu0 0.0
    %4620 = vmatprep.subr.mxu0 0.0
    %4621 = vmatpush1.msra.mxu0 0.0
    %4622 = vmatprep.mubr.f32.mxu0 0.0
    %4623 = vmatmul.mubr.f32.gmra.mrb[0].mxu0 %v4556
    %v4624 = vpop.f32.mrb[0].mxu0
    %v4625 = vadd.f32 %v4554, %v4624
    %v4626 = vpop.f32.mrb[0].mxu0
    %4627 = vdwg.mxu0
    %v4628 = vmax.f32 %v4625, 0.0
    %v4629 = vld [vmem:[#allocation4 + $0x258] sm:$0xff]
    %v4630 = vld [vmem:[#allocation4 + $0x260] sm:$0xff]
    %v4631 = vld [vmem:[#allocation4 + $0x268] sm:$0xff]
    %v4632 = vld [vmem:[#allocation4 + $0x270] sm:$0xff]
    %v4633 = vld [vmem:[#allocation4 + $0x278] sm:$0xff]
    %v4634 = vld [vmem:[#allocation4 + $0x280] sm:$0xff]
    %v4635 = vld [vmem:[#allocation4 + $0x288] sm:$0xff]
    %v4636 = vld [vmem:[#allocation4 + $0x290] sm:$0xff]
    %v4637 = vld [vmem:[#allocation4 + $0x298] sm:$0x1]
    %v4638 = vlaneseq
    %v4639 = vshrl.u32 %v4638, 7
    %v4640 = vsub.s32 0, %v4639
    %v4641 = vrot.slane %v4637, %v4640
    %v4643 = vsel %vm1904, %v4628, 0
    %4645 = vmatprep.subr.mxu0 0.0
    %4646 = vmatpush1.msra.mxu0 %v4629
    %4647 = vmatprep.subr.mxu0 0.0
    %4648 = vmatpush1.msra.mxu0 %v4630
    %4649 = vmatprep.subr.mxu0 0.0
    %4650 = vmatpush1.msra.mxu0 %v4631
    %4651 = vmatprep.subr.mxu0 0.0
    %4652 = vmatpush1.msra.mxu0 %v4632
    %4653 = vmatprep.subr.mxu0 0.0
    %4654 = vmatpush1.msra.mxu0 %v4633
    %4655 = vmatprep.subr.mxu0 0.0
    %4656 = vmatpush1.msra.mxu0 %v4634
    %4657 = vmatprep.subr.mxu0 0.0
    %4658 = vmatpush1.msra.mxu0 %v4635
    %4659 = vmatprep.subr.mxu0 0.0
    %4660 = vmatpush1.msra.mxu0 %v4636
    %4661 = vmatprep.subr.mxu0 0.0
    %4662 = vmatpush1.msra.mxu0 0.0
    %4663 = vmatprep.subr.mxu0 0.0
    %4664 = vmatpush1.msra.mxu0 0.0
    %4665 = vmatprep.subr.mxu0 0.0
    %4666 = vmatpush1.msra.mxu0 0.0
    %4667 = vmatprep.subr.mxu0 0.0
    %4668 = vmatpush1.msra.mxu0 0.0
    %4669 = vmatprep.subr.mxu0 0.0
    %4670 = vmatpush1.msra.mxu0 0.0
    %4671 = vmatprep.subr.mxu0 0.0
    %4672 = vmatpush1.msra.mxu0 0.0
    %4673 = vmatprep.subr.mxu0 0.0
    %4674 = vmatpush1.msra.mxu0 0.0
    %4675 = vmatprep.subr.mxu0 0.0
    %4676 = vmatpush1.msra.mxu0 0.0
    %4677 = vmatprep.subr.mxu0 0.0
    %4678 = vmatpush1.msra.mxu0 0.0
    %4679 = vmatprep.subr.mxu0 0.0
    %4680 = vmatpush1.msra.mxu0 0.0
    %4681 = vmatprep.subr.mxu0 0.0
    %4682 = vmatpush1.msra.mxu0 0.0
    %4683 = vmatprep.subr.mxu0 0.0
    %4684 = vmatpush1.msra.mxu0 0.0
    %4685 = vmatprep.subr.mxu0 0.0
    %4686 = vmatpush1.msra.mxu0 0.0
    %4687 = vmatprep.subr.mxu0 0.0
    %4688 = vmatpush1.msra.mxu0 0.0
    %4689 = vmatprep.subr.mxu0 0.0
    %4690 = vmatpush1.msra.mxu0 0.0
    %4691 = vmatprep.subr.mxu0 0.0
    %4692 = vmatpush1.msra.mxu0 0.0
    %4693 = vmatprep.subr.mxu0 0.0
    %4694 = vmatpush1.msra.mxu0 0.0
    %4695 = vmatprep.subr.mxu0 0.0
    %4696 = vmatpush1.msra.mxu0 0.0
    %4697 = vmatprep.subr.mxu0 0.0
    %4698 = vmatpush1.msra.mxu0 0.0
    %4699 = vmatprep.subr.mxu0 0.0
    %4700 = vmatpush1.msra.mxu0 0.0
    %4701 = vmatprep.subr.mxu0 0.0
    %4702 = vmatpush1.msra.mxu0 0.0
    %4703 = vmatprep.subr.mxu0 0.0
    %4704 = vmatpush1.msra.mxu0 0.0
    %4705 = vmatprep.subr.mxu0 0.0
    %4706 = vmatpush1.msra.mxu0 0.0
    %4707 = vmatprep.subr.mxu0 0.0
    %4708 = vmatpush1.msra.mxu0 0.0
    %4709 = vmatprep.mubr.f32.mxu0 0.0
    %4710 = vmatmul.mubr.f32.gmra.mrb[0].mxu0 %v4643
    %v4711 = vpop.f32.mrb[0].mxu0
    %v4712 = vadd.f32 %v4641, %v4711
    %v4713 = vpop.f32.mrb[0].mxu0
    %4714 = vdwg.mxu0
    %v4715 = vld [vmem:[#allocation4 + $0x2a0] sm:$0x3]
    %v4716 = vadd.f32 %v4543, %v4712
    %v4717 = vsel %vm738, %v4716, 0.0
    %4718 = vadd.xlane.f32.xlu0 %v4717
    %v4719 = vpop.xlane.xlu0 %4718
    %v4720 = vmul.f32 %v4719, %v1766
    %v4721 = vsub.f32 %v4716, %v4720
    %v4722 = vmul.f32 %v4721, %v4721
    %v4723 = vsel %vm738, %v4722, 0.0
    %4724 = vadd.xlane.f32.xlu0 %v4723
    %v4725 = vpop.xlane.xlu0 %4724
    %v4726 = vmul.f32 %v4725, %v1766
    %v4727 = vadd.f32 %v4726, 1e-05
    %v4728 = vrsqrt.pop %v4727
    %v4729 = vmul.f32 %v4721, %v4728
    %v4730 = vlaneseq
    %v4731 = vshrl.u32 %v4730, 7
    %v4732 = vsub.s32 0, %v4731
    %v4733 = vrot.slane %v4715, %v4732
    %v4734 = vmul.f32 %v4729, %v4733
    %v4735 = vlaneseq
    %v4736 = vshrl.u32 %v4735, 7
    %v4737 = vsub.s32 1, %v4736
    %v4738 = vrot.slane %v4715, %v4737
    %v4739 = vadd.f32 %v4734, %v4738
    %v4740 = vld [vmem:[#allocation4 + $0x20] sm:$0xff]
    %v4741 = vld [vmem:[#allocation4 + $0x2a8] sm:$0xff]
    %v4742 = vld [vmem:[#allocation4 + $0x2b0] sm:$0xff]
    %v4743 = vld [vmem:[#allocation4 + $0x2b8] sm:$0xff]
    %v4744 = vld [vmem:[#allocation4 + $0x2c0] sm:$0xff]
    %v4745 = vld [vmem:[#allocation4 + $0x2c8] sm:$0x1]
    %v4746 = vlaneseq
    %v4747 = vshrl.u32 %v4746, 7
    %v4748 = vsub.s32 0, %v4747
    %v4749 = vrot.slane %v4745, %v4748
    %v4751 = vsel %vm738, %v4739, 0
    %4753 = vmatprep.subr.mxu0 0.0
    %4754 = vmatpush1.msra.mxu0 %v4741
    %4755 = vmatprep.subr.mxu0 0.0
    %4756 = vmatpush1.msra.mxu0 %v4742
    %4757 = vmatprep.subr.mxu0 0.0
    %4758 = vmatpush1.msra.mxu0 %v4743
    %4759 = vmatprep.subr.mxu0 0.0
    %4760 = vmatpush1.msra.mxu0 %v4744
    %4761 = vmatprep.subr.mxu0 0.0
    %4762 = vmatpush1.msra.mxu0 0.0
    %4763 = vmatprep.subr.mxu0 0.0
    %4764 = vmatpush1.msra.mxu0 0.0
    %4765 = vmatprep.subr.mxu0 0.0
    %4766 = vmatpush1.msra.mxu0 0.0
    %4767 = vmatprep.subr.mxu0 0.0
    %4768 = vmatpush1.msra.mxu0 0.0
    %4769 = vmatprep.subr.mxu0 0.0
    %4770 = vmatpush1.msra.mxu0 0.0
    %4771 = vmatprep.subr.mxu0 0.0
    %4772 = vmatpush1.msra.mxu0 0.0
    %4773 = vmatprep.subr.mxu0 0.0
    %4774 = vmatpush1.msra.mxu0 0.0
    %4775 = vmatprep.subr.mxu0 0.0
    %4776 = vmatpush1.msra.mxu0 0.0
    %4777 = vmatprep.subr.mxu0 0.0
    %4778 = vmatpush1.msra.mxu0 0.0
    %4779 = vmatprep.subr.mxu0 0.0
    %4780 = vmatpush1.msra.mxu0 0.0
    %4781 = vmatprep.subr.mxu0 0.0
    %4782 = vmatpush1.msra.mxu0 0.0
    %4783 = vmatprep.subr.mxu0 0.0
    %4784 = vmatpush1.msra.mxu0 0.0
    %4785 = vmatprep.subr.mxu0 0.0
    %4786 = vmatpush1.msra.mxu0 0.0
    %4787 = vmatprep.subr.mxu0 0.0
    %4788 = vmatpush1.msra.mxu0 0.0
    %4789 = vmatprep.subr.mxu0 0.0
    %4790 = vmatpush1.msra.mxu0 0.0
    %4791 = vmatprep.subr.mxu0 0.0
    %4792 = vmatpush1.msra.mxu0 0.0
    %4793 = vmatprep.subr.mxu0 0.0
    %4794 = vmatpush1.msra.mxu0 0.0
    %4795 = vmatprep.subr.mxu0 0.0
    %4796 = vmatpush1.msra.mxu0 0.0
    %4797 = vmatprep.subr.mxu0 0.0
    %4798 = vmatpush1.msra.mxu0 0.0
    %4799 = vmatprep.subr.mxu0 0.0
    %4800 = vmatpush1.msra.mxu0 0.0
    %4801 = vmatprep.subr.mxu0 0.0
    %4802 = vmatpush1.msra.mxu0 0.0
    %4803 = vmatprep.subr.mxu0 0.0
    %4804 = vmatpush1.msra.mxu0 0.0
    %4805 = vmatprep.subr.mxu0 0.0
    %4806 = vmatpush1.msra.mxu0 0.0
    %4807 = vmatprep.subr.mxu0 0.0
    %4808 = vmatpush1.msra.mxu0 0.0
    %4809 = vmatprep.subr.mxu0 0.0
    %4810 = vmatpush1.msra.mxu0 0.0
    %4811 = vmatprep.subr.mxu0 0.0
    %4812 = vmatpush1.msra.mxu0 0.0
    %4813 = vmatprep.subr.mxu0 0.0
    %4814 = vmatpush1.msra.mxu0 0.0
    %4815 = vmatprep.subr.mxu0 0.0
    %4816 = vmatpush1.msra.mxu0 0.0
    %4817 = vmatprep.mubr.f32.mxu0 0.0
    %4818 = vmatmul.mubr.f32.gmra.mrb[0].mxu0 %v4751
    %v4819 = vpop.f32.mrb[0].mxu0
    %v4820 = vadd.f32 %v4749, %v4819
    %v4821 = vpop.f32.mrb[0].mxu0
    %4822 = vdwg.mxu0
    %4824 = vrot.lane.b32.xlu0 %v4820, 96
    %v4825 = vpop.permute.xlu0 %4824
    %v4826 = vsel %vm826, %v4820, 0
    %v4828 = vsel %vm826, %v4825, 0
    %4830 = vmatprep.subr.mxu0 0.0
    %4831 = vmatpush1.xpose.msra.mxu0 %v4828
    %4832 = vmatprep.subr.mxu0 0.0
    %4833 = vmatpush1.xpose.msra.mxu0 0.0
    %4834 = vmatprep.subr.mxu0 0.0
    %4835 = vmatpush1.xpose.msra.mxu0 0.0
    %4836 = vmatprep.subr.mxu0 0.0
    %4837 = vmatpush1.xpose.msra.mxu0 0.0
    %4838 = vmatprep.subr.mxu0 0.0
    %4839 = vmatpush1.xpose.msra.mxu0 0.0
    %4840 = vmatprep.subr.mxu0 0.0
    %4841 = vmatpush1.xpose.msra.mxu0 0.0
    %4842 = vmatprep.subr.mxu0 0.0
    %4843 = vmatpush1.xpose.msra.mxu0 0.0
    %4844 = vmatprep.subr.mxu0 0.0
    %4845 = vmatpush1.xpose.msra.mxu0 0.0
    %4846 = vmatprep.subr.mxu0 0.0
    %4847 = vmatpush1.xpose.msra.mxu0 0.0
    %4848 = vmatprep.subr.mxu0 0.0
    %4849 = vmatpush1.xpose.msra.mxu0 0.0
    %4850 = vmatprep.subr.mxu0 0.0
    %4851 = vmatpush1.xpose.msra.mxu0 0.0
    %4852 = vmatprep.subr.mxu0 0.0
    %4853 = vmatpush1.xpose.msra.mxu0 0.0
    %4854 = vmatprep.subr.mxu0 0.0
    %4855 = vmatpush1.xpose.msra.mxu0 0.0
    %4856 = vmatprep.subr.mxu0 0.0
    %4857 = vmatpush1.xpose.msra.mxu0 0.0
    %4858 = vmatprep.subr.mxu0 0.0
    %4859 = vmatpush1.xpose.msra.mxu0 0.0
    %4860 = vmatprep.subr.mxu0 0.0
    %4861 = vmatpush1.xpose.msra.mxu0 0.0
    %4862 = vmatprep.subr.mxu0 0.0
    %4863 = vmatpush1.xpose.msra.mxu0 0.0
    %4864 = vmatprep.subr.mxu0 0.0
    %4865 = vmatpush1.xpose.msra.mxu0 0.0
    %4866 = vmatprep.subr.mxu0 0.0
    %4867 = vmatpush1.xpose.msra.mxu0 0.0
    %4868 = vmatprep.subr.mxu0 0.0
    %4869 = vmatpush1.xpose.msra.mxu0 0.0
    %4870 = vmatprep.subr.mxu0 0.0
    %4871 = vmatpush1.xpose.msra.mxu0 0.0
    %4872 = vmatprep.subr.mxu0 0.0
    %4873 = vmatpush1.xpose.msra.mxu0 0.0
    %4874 = vmatprep.subr.mxu0 0.0
    %4875 = vmatpush1.xpose.msra.mxu0 0.0
    %4876 = vmatprep.subr.mxu0 0.0
    %4877 = vmatpush1.xpose.msra.mxu0 0.0
    %4878 = vmatprep.subr.mxu0 0.0
    %4879 = vmatpush1.xpose.msra.mxu0 0.0
    %4880 = vmatprep.subr.mxu0 0.0
    %4881 = vmatpush1.xpose.msra.mxu0 0.0
    %4882 = vmatprep.subr.mxu0 0.0
    %4883 = vmatpush1.xpose.msra.mxu0 0.0
    %4884 = vmatprep.subr.mxu0 0.0
    %4885 = vmatpush1.xpose.msra.mxu0 0.0
    %4886 = vmatprep.subr.mxu0 0.0
    %4887 = vmatpush1.xpose.msra.mxu0 0.0
    %4888 = vmatprep.subr.mxu0 0.0
    %4889 = vmatpush1.xpose.msra.mxu0 0.0
    %4890 = vmatprep.subr.mxu0 0.0
    %4891 = vmatpush1.xpose.msra.mxu0 0.0
    %4892 = vmatprep.subr.mxu0 0.0
    %4893 = vmatpush1.xpose.msra.mxu0 0.0
    %4894 = vmatprep.mubr.f32.mxu0 0.0
    %4895 = vmatmul.mubr.f32.gmra.mrb[0].mxu0 %v4826
    %v4896 = vpop.f32.mrb[0].mxu0
    %v4897 = vadd.f32 0.0, %v4896
    %v4898 = vpop.f32.mrb[0].mxu0
    %4899 = vdwg.mxu0
    %v4900 = vmul.f32 %v4897, 0.35355338
    %v4901 = vadd.f32 %v4900, %v4740
    %v4902 = vsel %vm826, %v4901, -inf
    %4903 = vmax.xlane.f32.xlu0 %v4902
    %v4904 = vpop.xlane.xlu0 %4903
    %v4905 = vsub.f32 %v4901, %v4904
    %v4906 = vmul.f32 %v4905, 1.442695
    %v4907 = vpow.pop %v4906
    %v4908 = vsel %vm826, %v4907, 0.0
    %4909 = vadd.xlane.f32.xlu0 %v4908
    %v4910 = vpop.xlane.xlu0 %4909
    %v4911 = vrcp.pop %v4910
    %v4912 = vmul.f32 %v4907, %v4911
    %4913 = vrot.lane.b32.xlu0 %v4820, 64
    %v4914 = vpop.permute.xlu0 %4913
    %v4917 = vsel %vm826, %v4912, 0
    %4919 = vmatprep.subr.mxu0 0.0
    %4920 = vmatpush1.msra.mxu0 %v4914
    %4921 = vmatprep.subr.mxu0 0.0
    %4922 = vmatpush1.msra.mxu0 0.0
    %4923 = vmatprep.subr.mxu0 0.0
    %4924 = vmatpush1.msra.mxu0 0.0
    %4925 = vmatprep.subr.mxu0 0.0
    %4926 = vmatpush1.msra.mxu0 0.0
    %4927 = vmatprep.subr.mxu0 0.0
    %4928 = vmatpush1.msra.mxu0 0.0
    %4929 = vmatprep.subr.mxu0 0.0
    %4930 = vmatpush1.msra.mxu0 0.0
    %4931 = vmatprep.subr.mxu0 0.0
    %4932 = vmatpush1.msra.mxu0 0.0
    %4933 = vmatprep.subr.mxu0 0.0
    %4934 = vmatpush1.msra.mxu0 0.0
    %4935 = vmatprep.subr.mxu0 0.0
    %4936 = vmatpush1.msra.mxu0 0.0
    %4937 = vmatprep.subr.mxu0 0.0
    %4938 = vmatpush1.msra.mxu0 0.0
    %4939 = vmatprep.subr.mxu0 0.0
    %4940 = vmatpush1.msra.mxu0 0.0
    %4941 = vmatprep.subr.mxu0 0.0
    %4942 = vmatpush1.msra.mxu0 0.0
    %4943 = vmatprep.subr.mxu0 0.0
    %4944 = vmatpush1.msra.mxu0 0.0
    %4945 = vmatprep.subr.mxu0 0.0
    %4946 = vmatpush1.msra.mxu0 0.0
    %4947 = vmatprep.subr.mxu0 0.0
    %4948 = vmatpush1.msra.mxu0 0.0
    %4949 = vmatprep.subr.mxu0 0.0
    %4950 = vmatpush1.msra.mxu0 0.0
    %4951 = vmatprep.subr.mxu0 0.0
    %4952 = vmatpush1.msra.mxu0 0.0
    %4953 = vmatprep.subr.mxu0 0.0
    %4954 = vmatpush1.msra.mxu0 0.0
    %4955 = vmatprep.subr.mxu0 0.0
    %4956 = vmatpush1.msra.mxu0 0.0
    %4957 = vmatprep.subr.mxu0 0.0
    %4958 = vmatpush1.msra.mxu0 0.0
    %4959 = vmatprep.subr.mxu0 0.0
    %4960 = vmatpush1.msra.mxu0 0.0
    %4961 = vmatprep.subr.mxu0 0.0
    %4962 = vmatpush1.msra.mxu0 0.0
    %4963 = vmatprep.subr.mxu0 0.0
    %4964 = vmatpush1.msra.mxu0 0.0
    %4965 = vmatprep.subr.mxu0 0.0
    %4966 = vmatpush1.msra.mxu0 0.0
    %4967 = vmatprep.subr.mxu0 0.0
    %4968 = vmatpush1.msra.mxu0 0.0
    %4969 = vmatprep.subr.mxu0 0.0
    %4970 = vmatpush1.msra.mxu0 0.0
    %4971 = vmatprep.subr.mxu0 0.0
    %4972 = vmatpush1.msra.mxu0 0.0
    %4973 = vmatprep.subr.mxu0 0.0
    %4974 = vmatpush1.msra.mxu0 0.0
    %4975 = vmatprep.subr.mxu0 0.0
    %4976 = vmatpush1.msra.mxu0 0.0
    %4977 = vmatprep.subr.mxu0 0.0
    %4978 = vmatpush1.msra.mxu0 0.0
    %4979 = vmatprep.subr.mxu0 0.0
    %4980 = vmatpush1.msra.mxu0 0.0
    %4981 = vmatprep.subr.mxu0 0.0
    %4982 = vmatpush1.msra.mxu0 0.0
    %4983 = vmatprep.mubr.f32.mxu0 0.0
    %4984 = vmatmul.mubr.f32.gmra.mrb[0].mxu0 %v4917
    %v4985 = vpop.f32.mrb[0].mxu0
    %v4986 = vadd.f32 0.0, %v4985
    %v4987 = vpop.f32.mrb[0].mxu0
    %4988 = vdwg.mxu0
    %4989 = vrot.lane.b32.xlu0 %v4820, 120
    %v4990 = vpop.permute.xlu0 %4989
    %4991 = vrot.lane.b32.xlu0 %v4820, 88
    %v4992 = vpop.permute.xlu0 %4991
    %v4993 = vsel %vm826, %v4990, 0
    %v4995 = vsel %vm826, %v4992, 0
    %4997 = vmatprep.subr.mxu0 0.0
    %4998 = vmatpush1.xpose.msra.mxu0 %v4995
    %4999 = vmatprep.subr.mxu0 0.0
    %5000 = vmatpush1.xpose.msra.mxu0 0.0
    %5001 = vmatprep.subr.mxu0 0.0
    %5002 = vmatpush1.xpose.msra.mxu0 0.0
    %5003 = vmatprep.subr.mxu0 0.0
    %5004 = vmatpush1.xpose.msra.mxu0 0.0
    %5005 = vmatprep.subr.mxu0 0.0
    %5006 = vmatpush1.xpose.msra.mxu0 0.0
    %5007 = vmatprep.subr.mxu0 0.0
    %5008 = vmatpush1.xpose.msra.mxu0 0.0
    %5009 = vmatprep.subr.mxu0 0.0
    %5010 = vmatpush1.xpose.msra.mxu0 0.0
    %5011 = vmatprep.subr.mxu0 0.0
    %5012 = vmatpush1.xpose.msra.mxu0 0.0
    %5013 = vmatprep.subr.mxu0 0.0
    %5014 = vmatpush1.xpose.msra.mxu0 0.0
    %5015 = vmatprep.subr.mxu0 0.0
    %5016 = vmatpush1.xpose.msra.mxu0 0.0
    %5017 = vmatprep.subr.mxu0 0.0
    %5018 = vmatpush1.xpose.msra.mxu0 0.0
    %5019 = vmatprep.subr.mxu0 0.0
    %5020 = vmatpush1.xpose.msra.mxu0 0.0
    %5021 = vmatprep.subr.mxu0 0.0
    %5022 = vmatpush1.xpose.msra.mxu0 0.0
    %5023 = vmatprep.subr.mxu0 0.0
    %5024 = vmatpush1.xpose.msra.mxu0 0.0
    %5025 = vmatprep.subr.mxu0 0.0
    %5026 = vmatpush1.xpose.msra.mxu0 0.0
    %5027 = vmatprep.subr.mxu0 0.0
    %5028 = vmatpush1.xpose.msra.mxu0 0.0
    %5029 = vmatprep.subr.mxu0 0.0
    %5030 = vmatpush1.xpose.msra.mxu0 0.0
    %5031 = vmatprep.subr.mxu0 0.0
    %5032 = vmatpush1.xpose.msra.mxu0 0.0
    %5033 = vmatprep.subr.mxu0 0.0
    %5034 = vmatpush1.xpose.msra.mxu0 0.0
    %5035 = vmatprep.subr.mxu0 0.0
    %5036 = vmatpush1.xpose.msra.mxu0 0.0
    %5037 = vmatprep.subr.mxu0 0.0
    %5038 = vmatpush1.xpose.msra.mxu0 0.0
    %5039 = vmatprep.subr.mxu0 0.0
    %5040 = vmatpush1.xpose.msra.mxu0 0.0
    %5041 = vmatprep.subr.mxu0 0.0
    %5042 = vmatpush1.xpose.msra.mxu0 0.0
    %5043 = vmatprep.subr.mxu0 0.0
    %5044 = vmatpush1.xpose.msra.mxu0 0.0
    %5045 = vmatprep.subr.mxu0 0.0
    %5046 = vmatpush1.xpose.msra.mxu0 0.0
    %5047 = vmatprep.subr.mxu0 0.0
    %5048 = vmatpush1.xpose.msra.mxu0 0.0
    %5049 = vmatprep.subr.mxu0 0.0
    %5050 = vmatpush1.xpose.msra.mxu0 0.0
    %5051 = vmatprep.subr.mxu0 0.0
    %5052 = vmatpush1.xpose.msra.mxu0 0.0
    %5053 = vmatprep.subr.mxu0 0.0
    %5054 = vmatpush1.xpose.msra.mxu0 0.0
    %5055 = vmatprep.subr.mxu0 0.0
    %5056 = vmatpush1.xpose.msra.mxu0 0.0
    %5057 = vmatprep.subr.mxu0 0.0
    %5058 = vmatpush1.xpose.msra.mxu0 0.0
    %5059 = vmatprep.subr.mxu0 0.0
    %5060 = vmatpush1.xpose.msra.mxu0 0.0
    %5061 = vmatprep.mubr.f32.mxu0 0.0
    %5062 = vmatmul.mubr.f32.gmra.mrb[0].mxu0 %v4993
    %v5063 = vpop.f32.mrb[0].mxu0
    %v5064 = vadd.f32 0.0, %v5063
    %v5065 = vpop.f32.mrb[0].mxu0
    %5066 = vdwg.mxu0
    %v5067 = vmul.f32 %v5064, 0.35355338
    %v5068 = vadd.f32 %v5067, %v4740
    %v5069 = vsel %vm826, %v5068, -inf
    %5070 = vmax.xlane.f32.xlu0 %v5069
    %v5071 = vpop.xlane.xlu0 %5070
    %v5072 = vsub.f32 %v5068, %v5071
    %v5073 = vmul.f32 %v5072, 1.442695
    %v5074 = vpow.pop %v5073
    %v5075 = vsel %vm826, %v5074, 0.0
    %5076 = vadd.xlane.f32.xlu0 %v5075
    %v5077 = vpop.xlane.xlu0 %5076
    %v5078 = vrcp.pop %v5077
    %v5079 = vmul.f32 %v5074, %v5078
    %5080 = vrot.lane.b32.xlu0 %v4820, 56
    %v5081 = vpop.permute.xlu0 %5080
    %v5084 = vsel %vm826, %v5079, 0
    %5086 = vmatprep.subr.mxu0 0.0
    %5087 = vmatpush1.msra.mxu0 %v5081
    %5088 = vmatprep.subr.mxu0 0.0
    %5089 = vmatpush1.msra.mxu0 0.0
    %5090 = vmatprep.subr.mxu0 0.0
    %5091 = vmatpush1.msra.mxu0 0.0
    %5092 = vmatprep.subr.mxu0 0.0
    %5093 = vmatpush1.msra.mxu0 0.0
    %5094 = vmatprep.subr.mxu0 0.0
    %5095 = vmatpush1.msra.mxu0 0.0
    %5096 = vmatprep.subr.mxu0 0.0
    %5097 = vmatpush1.msra.mxu0 0.0
    %5098 = vmatprep.subr.mxu0 0.0
    %5099 = vmatpush1.msra.mxu0 0.0
    %5100 = vmatprep.subr.mxu0 0.0
    %5101 = vmatpush1.msra.mxu0 0.0
    %5102 = vmatprep.subr.mxu0 0.0
    %5103 = vmatpush1.msra.mxu0 0.0
    %5104 = vmatprep.subr.mxu0 0.0
    %5105 = vmatpush1.msra.mxu0 0.0
    %5106 = vmatprep.subr.mxu0 0.0
    %5107 = vmatpush1.msra.mxu0 0.0
    %5108 = vmatprep.subr.mxu0 0.0
    %5109 = vmatpush1.msra.mxu0 0.0
    %5110 = vmatprep.subr.mxu0 0.0
    %5111 = vmatpush1.msra.mxu0 0.0
    %5112 = vmatprep.subr.mxu0 0.0
    %5113 = vmatpush1.msra.mxu0 0.0
    %5114 = vmatprep.subr.mxu0 0.0
    %5115 = vmatpush1.msra.mxu0 0.0
    %5116 = vmatprep.subr.mxu0 0.0
    %5117 = vmatpush1.msra.mxu0 0.0
    %5118 = vmatprep.subr.mxu0 0.0
    %5119 = vmatpush1.msra.mxu0 0.0
    %5120 = vmatprep.subr.mxu0 0.0
    %5121 = vmatpush1.msra.mxu0 0.0
    %5122 = vmatprep.subr.mxu0 0.0
    %5123 = vmatpush1.msra.mxu0 0.0
    %5124 = vmatprep.subr.mxu0 0.0
    %5125 = vmatpush1.msra.mxu0 0.0
    %5126 = vmatprep.subr.mxu0 0.0
    %5127 = vmatpush1.msra.mxu0 0.0
    %5128 = vmatprep.subr.mxu0 0.0
    %5129 = vmatpush1.msra.mxu0 0.0
    %5130 = vmatprep.subr.mxu0 0.0
    %5131 = vmatpush1.msra.mxu0 0.0
    %5132 = vmatprep.subr.mxu0 0.0
    %5133 = vmatpush1.msra.mxu0 0.0
    %5134 = vmatprep.subr.mxu0 0.0
    %5135 = vmatpush1.msra.mxu0 0.0
    %5136 = vmatprep.subr.mxu0 0.0
    %5137 = vmatpush1.msra.mxu0 0.0
    %5138 = vmatprep.subr.mxu0 0.0
    %5139 = vmatpush1.msra.mxu0 0.0
    %5140 = vmatprep.subr.mxu0 0.0
    %5141 = vmatpush1.msra.mxu0 0.0
    %5142 = vmatprep.subr.mxu0 0.0
    %5143 = vmatpush1.msra.mxu0 0.0
    %5144 = vmatprep.subr.mxu0 0.0
    %5145 = vmatpush1.msra.mxu0 0.0
    %5146 = vmatprep.subr.mxu0 0.0
    %5147 = vmatpush1.msra.mxu0 0.0
    %5148 = vmatprep.subr.mxu0 0.0
    %5149 = vmatpush1.msra.mxu0 0.0
    %5150 = vmatprep.mubr.f32.mxu0 0.0
    %5151 = vmatmul.mubr.f32.gmra.mrb[0].mxu0 %v5084
    %v5152 = vpop.f32.mrb[0].mxu0
    %v5153 = vadd.f32 0.0, %v5152
    %v5154 = vpop.f32.mrb[0].mxu0
    %5155 = vdwg.mxu0
    %5156 = vrot.lane.b32.xlu0 %v4820, 112
    %v5157 = vpop.permute.xlu0 %5156
    %5158 = vrot.lane.b32.xlu0 %v4820, 80
    %v5159 = vpop.permute.xlu0 %5158
    %v5160 = vsel %vm826, %v5157, 0
    %v5162 = vsel %vm826, %v5159, 0
    %5164 = vmatprep.subr.mxu0 0.0
    %5165 = vmatpush1.xpose.msra.mxu0 %v5162
    %5166 = vmatprep.subr.mxu0 0.0
    %5167 = vmatpush1.xpose.msra.mxu0 0.0
    %5168 = vmatprep.subr.mxu0 0.0
    %5169 = vmatpush1.xpose.msra.mxu0 0.0
    %5170 = vmatprep.subr.mxu0 0.0
    %5171 = vmatpush1.xpose.msra.mxu0 0.0
    %5172 = vmatprep.subr.mxu0 0.0
    %5173 = vmatpush1.xpose.msra.mxu0 0.0
    %5174 = vmatprep.subr.mxu0 0.0
    %5175 = vmatpush1.xpose.msra.mxu0 0.0
    %5176 = vmatprep.subr.mxu0 0.0
    %5177 = vmatpush1.xpose.msra.mxu0 0.0
    %5178 = vmatprep.subr.mxu0 0.0
    %5179 = vmatpush1.xpose.msra.mxu0 0.0
    %5180 = vmatprep.subr.mxu0 0.0
    %5181 = vmatpush1.xpose.msra.mxu0 0.0
    %5182 = vmatprep.subr.mxu0 0.0
    %5183 = vmatpush1.xpose.msra.mxu0 0.0
    %5184 = vmatprep.subr.mxu0 0.0
    %5185 = vmatpush1.xpose.msra.mxu0 0.0
    %5186 = vmatprep.subr.mxu0 0.0
    %5187 = vmatpush1.xpose.msra.mxu0 0.0
    %5188 = vmatprep.subr.mxu0 0.0
    %5189 = vmatpush1.xpose.msra.mxu0 0.0
    %5190 = vmatprep.subr.mxu0 0.0
    %5191 = vmatpush1.xpose.msra.mxu0 0.0
    %5192 = vmatprep.subr.mxu0 0.0
    %5193 = vmatpush1.xpose.msra.mxu0 0.0
    %5194 = vmatprep.subr.mxu0 0.0
    %5195 = vmatpush1.xpose.msra.mxu0 0.0
    %5196 = vmatprep.subr.mxu0 0.0
    %5197 = vmatpush1.xpose.msra.mxu0 0.0
    %5198 = vmatprep.subr.mxu0 0.0
    %5199 = vmatpush1.xpose.msra.mxu0 0.0
    %5200 = vmatprep.subr.mxu0 0.0
    %5201 = vmatpush1.xpose.msra.mxu0 0.0
    %5202 = vmatprep.subr.mxu0 0.0
    %5203 = vmatpush1.xpose.msra.mxu0 0.0
    %5204 = vmatprep.subr.mxu0 0.0
    %5205 = vmatpush1.xpose.msra.mxu0 0.0
    %5206 = vmatprep.subr.mxu0 0.0
    %5207 = vmatpush1.xpose.msra.mxu0 0.0
    %5208 = vmatprep.subr.mxu0 0.0
    %5209 = vmatpush1.xpose.msra.mxu0 0.0
    %5210 = vmatprep.subr.mxu0 0.0
    %5211 = vmatpush1.xpose.msra.mxu0 0.0
    %5212 = vmatprep.subr.mxu0 0.0
    %5213 = vmatpush1.xpose.msra.mxu0 0.0
    %5214 = vmatprep.subr.mxu0 0.0
    %5215 = vmatpush1.xpose.msra.mxu0 0.0
    %5216 = vmatprep.subr.mxu0 0.0
    %5217 = vmatpush1.xpose.msra.mxu0 0.0
    %5218 = vmatprep.subr.mxu0 0.0
    %5219 = vmatpush1.xpose.msra.mxu0 0.0
    %5220 = vmatprep.subr.mxu0 0.0
    %5221 = vmatpush1.xpose.msra.mxu0 0.0
    %5222 = vmatprep.subr.mxu0 0.0
    %5223 = vmatpush1.xpose.msra.mxu0 0.0
    %5224 = vmatprep.subr.mxu0 0.0
    %5225 = vmatpush1.xpose.msra.mxu0 0.0
    %5226 = vmatprep.subr.mxu0 0.0
    %5227 = vmatpush1.xpose.msra.mxu0 0.0
    %5228 = vmatprep.mubr.f32.mxu0 0.0
    %5229 = vmatmul.mubr.f32.gmra.mrb[0].mxu0 %v5160
    %v5230 = vpop.f32.mrb[0].mxu0
    %v5231 = vadd.f32 0.0, %v5230
    %v5232 = vpop.f32.mrb[0].mxu0
    %5233 = vdwg.mxu0
    %v5234 = vmul.f32 %v5231, 0.35355338
    %v5235 = vadd.f32 %v5234, %v4740
    %v5236 = vsel %vm826, %v5235, -inf
    %5237 = vmax.xlane.f32.xlu0 %v5236
    %v5238 = vpop.xlane.xlu0 %5237
    %v5239 = vsub.f32 %v5235, %v5238
    %v5240 = vmul.f32 %v5239, 1.442695
    %v5241 = vpow.pop %v5240
    %v5242 = vsel %vm826, %v5241, 0.0
    %5243 = vadd.xlane.f32.xlu0 %v5242
    %v5244 = vpop.xlane.xlu0 %5243
    %v5245 = vrcp.pop %v5244
    %v5246 = vmul.f32 %v5241, %v5245
    %5247 = vrot.lane.b32.xlu0 %v4820, 48
    %v5248 = vpop.permute.xlu0 %5247
    %v5251 = vsel %vm826, %v5246, 0
    %5253 = vmatprep.subr.mxu0 0.0
    %5254 = vmatpush1.msra.mxu0 %v5248
    %5255 = vmatprep.subr.mxu0 0.0
    %5256 = vmatpush1.msra.mxu0 0.0
    %5257 = vmatprep.subr.mxu0 0.0
    %5258 = vmatpush1.msra.mxu0 0.0
    %5259 = vmatprep.subr.mxu0 0.0
    %5260 = vmatpush1.msra.mxu0 0.0
    %5261 = vmatprep.subr.mxu0 0.0
    %5262 = vmatpush1.msra.mxu0 0.0
    %5263 = vmatprep.subr.mxu0 0.0
    %5264 = vmatpush1.msra.mxu0 0.0
    %5265 = vmatprep.subr.mxu0 0.0
    %5266 = vmatpush1.msra.mxu0 0.0
    %5267 = vmatprep.subr.mxu0 0.0
    %5268 = vmatpush1.msra.mxu0 0.0
    %5269 = vmatprep.subr.mxu0 0.0
    %5270 = vmatpush1.msra.mxu0 0.0
    %5271 = vmatprep.subr.mxu0 0.0
    %5272 = vmatpush1.msra.mxu0 0.0
    %5273 = vmatprep.subr.mxu0 0.0
    %5274 = vmatpush1.msra.mxu0 0.0
    %5275 = vmatprep.subr.mxu0 0.0
    %5276 = vmatpush1.msra.mxu0 0.0
    %5277 = vmatprep.subr.mxu0 0.0
    %5278 = vmatpush1.msra.mxu0 0.0
    %5279 = vmatprep.subr.mxu0 0.0
    %5280 = vmatpush1.msra.mxu0 0.0
    %5281 = vmatprep.subr.mxu0 0.0
    %5282 = vmatpush1.msra.mxu0 0.0
    %5283 = vmatprep.subr.mxu0 0.0
    %5284 = vmatpush1.msra.mxu0 0.0
    %5285 = vmatprep.subr.mxu0 0.0
    %5286 = vmatpush1.msra.mxu0 0.0
    %5287 = vmatprep.subr.mxu0 0.0
    %5288 = vmatpush1.msra.mxu0 0.0
    %5289 = vmatprep.subr.mxu0 0.0
    %5290 = vmatpush1.msra.mxu0 0.0
    %5291 = vmatprep.subr.mxu0 0.0
    %5292 = vmatpush1.msra.mxu0 0.0
    %5293 = vmatprep.subr.mxu0 0.0
    %5294 = vmatpush1.msra.mxu0 0.0
    %5295 = vmatprep.subr.mxu0 0.0
    %5296 = vmatpush1.msra.mxu0 0.0
    %5297 = vmatprep.subr.mxu0 0.0
    %5298 = vmatpush1.msra.mxu0 0.0
    %5299 = vmatprep.subr.mxu0 0.0
    %5300 = vmatpush1.msra.mxu0 0.0
    %5301 = vmatprep.subr.mxu0 0.0
    %5302 = vmatpush1.msra.mxu0 0.0
    %5303 = vmatprep.subr.mxu0 0.0
    %5304 = vmatpush1.msra.mxu0 0.0
    %5305 = vmatprep.subr.mxu0 0.0
    %5306 = vmatpush1.msra.mxu0 0.0
    %5307 = vmatprep.subr.mxu0 0.0
    %5308 = vmatpush1.msra.mxu0 0.0
    %5309 = vmatprep.subr.mxu0 0.0
    %5310 = vmatpush1.msra.mxu0 0.0
    %5311 = vmatprep.subr.mxu0 0.0
    %5312 = vmatpush1.msra.mxu0 0.0
    %5313 = vmatprep.subr.mxu0 0.0
    %5314 = vmatpush1.msra.mxu0 0.0
    %5315 = vmatprep.subr.mxu0 0.0
    %5316 = vmatpush1.msra.mxu0 0.0
    %5317 = vmatprep.mubr.f32.mxu0 0.0
    %5318 = vmatmul.mubr.f32.gmra.mrb[0].mxu0 %v5251
    %v5319 = vpop.f32.mrb[0].mxu0
    %v5320 = vadd.f32 0.0, %v5319
    %v5321 = vpop.f32.mrb[0].mxu0
    %5322 = vdwg.mxu0
    %5323 = vrot.lane.b32.xlu0 %v4820, 104
    %v5324 = vpop.permute.xlu0 %5323
    %5325 = vrot.lane.b32.xlu0 %v4820, 72
    %v5326 = vpop.permute.xlu0 %5325
    %v5327 = vsel %vm826, %v5324, 0
    %v5329 = vsel %vm826, %v5326, 0
    %5331 = vmatprep.subr.mxu0 0.0
    %5332 = vmatpush1.xpose.msra.mxu0 %v5329
    %5333 = vmatprep.subr.mxu0 0.0
    %5334 = vmatpush1.xpose.msra.mxu0 0.0
    %5335 = vmatprep.subr.mxu0 0.0
    %5336 = vmatpush1.xpose.msra.mxu0 0.0
    %5337 = vmatprep.subr.mxu0 0.0
    %5338 = vmatpush1.xpose.msra.mxu0 0.0
    %5339 = vmatprep.subr.mxu0 0.0
    %5340 = vmatpush1.xpose.msra.mxu0 0.0
    %5341 = vmatprep.subr.mxu0 0.0
    %5342 = vmatpush1.xpose.msra.mxu0 0.0
    %5343 = vmatprep.subr.mxu0 0.0
    %5344 = vmatpush1.xpose.msra.mxu0 0.0
    %5345 = vmatprep.subr.mxu0 0.0
    %5346 = vmatpush1.xpose.msra.mxu0 0.0
    %5347 = vmatprep.subr.mxu0 0.0
    %5348 = vmatpush1.xpose.msra.mxu0 0.0
    %5349 = vmatprep.subr.mxu0 0.0
    %5350 = vmatpush1.xpose.msra.mxu0 0.0
    %5351 = vmatprep.subr.mxu0 0.0
    %5352 = vmatpush1.xpose.msra.mxu0 0.0
    %5353 = vmatprep.subr.mxu0 0.0
    %5354 = vmatpush1.xpose.msra.mxu0 0.0
    %5355 = vmatprep.subr.mxu0 0.0
    %5356 = vmatpush1.xpose.msra.mxu0 0.0
    %5357 = vmatprep.subr.mxu0 0.0
    %5358 = vmatpush1.xpose.msra.mxu0 0.0
    %5359 = vmatprep.subr.mxu0 0.0
    %5360 = vmatpush1.xpose.msra.mxu0 0.0
    %5361 = vmatprep.subr.mxu0 0.0
    %5362 = vmatpush1.xpose.msra.mxu0 0.0
    %5363 = vmatprep.subr.mxu0 0.0
    %5364 = vmatpush1.xpose.msra.mxu0 0.0
    %5365 = vmatprep.subr.mxu0 0.0
    %5366 = vmatpush1.xpose.msra.mxu0 0.0
    %5367 = vmatprep.subr.mxu0 0.0
    %5368 = vmatpush1.xpose.msra.mxu0 0.0
    %5369 = vmatprep.subr.mxu0 0.0
    %5370 = vmatpush1.xpose.msra.mxu0 0.0
    %5371 = vmatprep.subr.mxu0 0.0
    %5372 = vmatpush1.xpose.msra.mxu0 0.0
    %5373 = vmatprep.subr.mxu0 0.0
    %5374 = vmatpush1.xpose.msra.mxu0 0.0
    %5375 = vmatprep.subr.mxu0 0.0
    %5376 = vmatpush1.xpose.msra.mxu0 0.0
    %5377 = vmatprep.subr.mxu0 0.0
    %5378 = vmatpush1.xpose.msra.mxu0 0.0
    %5379 = vmatprep.subr.mxu0 0.0
    %5380 = vmatpush1.xpose.msra.mxu0 0.0
    %5381 = vmatprep.subr.mxu0 0.0
    %5382 = vmatpush1.xpose.msra.mxu0 0.0
    %5383 = vmatprep.subr.mxu0 0.0
    %5384 = vmatpush1.xpose.msra.mxu0 0.0
    %5385 = vmatprep.subr.mxu0 0.0
    %5386 = vmatpush1.xpose.msra.mxu0 0.0
    %5387 = vmatprep.subr.mxu0 0.0
    %5388 = vmatpush1.xpose.msra.mxu0 0.0
    %5389 = vmatprep.subr.mxu0 0.0
    %5390 = vmatpush1.xpose.msra.mxu0 0.0
    %5391 = vmatprep.subr.mxu0 0.0
    %5392 = vmatpush1.xpose.msra.mxu0 0.0
    %5393 = vmatprep.subr.mxu0 0.0
    %5394 = vmatpush1.xpose.msra.mxu0 0.0
    %5395 = vmatprep.mubr.f32.mxu0 0.0
    %5396 = vmatmul.mubr.f32.gmra.mrb[0].mxu0 %v5327
    %v5397 = vpop.f32.mrb[0].mxu0
    %v5398 = vadd.f32 0.0, %v5397
    %v5399 = vpop.f32.mrb[0].mxu0
    %5400 = vdwg.mxu0
    %v5401 = vmul.f32 %v5398, 0.35355338
    %v5402 = vadd.f32 %v5401, %v4740
    %v5403 = vsel %vm826, %v5402, -inf
    %5404 = vmax.xlane.f32.xlu0 %v5403
    %v5405 = vpop.xlane.xlu0 %5404
    %v5406 = vsub.f32 %v5402, %v5405
    %v5407 = vmul.f32 %v5406, 1.442695
    %v5408 = vpow.pop %v5407
    %v5409 = vsel %vm826, %v5408, 0.0
    %5410 = vadd.xlane.f32.xlu0 %v5409
    %v5411 = vpop.xlane.xlu0 %5410
    %v5412 = vrcp.pop %v5411
    %v5413 = vmul.f32 %v5408, %v5412
    %5414 = vrot.lane.b32.xlu0 %v4820, 40
    %v5415 = vpop.permute.xlu0 %5414
    %v5418 = vsel %vm826, %v5413, 0
    %5420 = vmatprep.subr.mxu0 0.0
    %5421 = vmatpush1.msra.mxu0 %v5415
    %5422 = vmatprep.subr.mxu0 0.0
    %5423 = vmatpush1.msra.mxu0 0.0
    %5424 = vmatprep.subr.mxu0 0.0
    %5425 = vmatpush1.msra.mxu0 0.0
    %5426 = vmatprep.subr.mxu0 0.0
    %5427 = vmatpush1.msra.mxu0 0.0
    %5428 = vmatprep.subr.mxu0 0.0
    %5429 = vmatpush1.msra.mxu0 0.0
    %5430 = vmatprep.subr.mxu0 0.0
    %5431 = vmatpush1.msra.mxu0 0.0
    %5432 = vmatprep.subr.mxu0 0.0
    %5433 = vmatpush1.msra.mxu0 0.0
    %5434 = vmatprep.subr.mxu0 0.0
    %5435 = vmatpush1.msra.mxu0 0.0
    %5436 = vmatprep.subr.mxu0 0.0
    %5437 = vmatpush1.msra.mxu0 0.0
    %5438 = vmatprep.subr.mxu0 0.0
    %5439 = vmatpush1.msra.mxu0 0.0
    %5440 = vmatprep.subr.mxu0 0.0
    %5441 = vmatpush1.msra.mxu0 0.0
    %5442 = vmatprep.subr.mxu0 0.0
    %5443 = vmatpush1.msra.mxu0 0.0
    %5444 = vmatprep.subr.mxu0 0.0
    %5445 = vmatpush1.msra.mxu0 0.0
    %5446 = vmatprep.subr.mxu0 0.0
    %5447 = vmatpush1.msra.mxu0 0.0
    %5448 = vmatprep.subr.mxu0 0.0
    %5449 = vmatpush1.msra.mxu0 0.0
    %5450 = vmatprep.subr.mxu0 0.0
    %5451 = vmatpush1.msra.mxu0 0.0
    %5452 = vmatprep.subr.mxu0 0.0
    %5453 = vmatpush1.msra.mxu0 0.0
    %5454 = vmatprep.subr.mxu0 0.0
    %5455 = vmatpush1.msra.mxu0 0.0
    %5456 = vmatprep.subr.mxu0 0.0
    %5457 = vmatpush1.msra.mxu0 0.0
    %5458 = vmatprep.subr.mxu0 0.0
    %5459 = vmatpush1.msra.mxu0 0.0
    %5460 = vmatprep.subr.mxu0 0.0
    %5461 = vmatpush1.msra.mxu0 0.0
    %5462 = vmatprep.subr.mxu0 0.0
    %5463 = vmatpush1.msra.mxu0 0.0
    %5464 = vmatprep.subr.mxu0 0.0
    %5465 = vmatpush1.msra.mxu0 0.0
    %5466 = vmatprep.subr.mxu0 0.0
    %5467 = vmatpush1.msra.mxu0 0.0
    %5468 = vmatprep.subr.mxu0 0.0
    %5469 = vmatpush1.msra.mxu0 0.0
    %5470 = vmatprep.subr.mxu0 0.0
    %5471 = vmatpush1.msra.mxu0 0.0
    %5472 = vmatprep.subr.mxu0 0.0
    %5473 = vmatpush1.msra.mxu0 0.0
    %5474 = vmatprep.subr.mxu0 0.0
    %5475 = vmatpush1.msra.mxu0 0.0
    %5476 = vmatprep.subr.mxu0 0.0
    %5477 = vmatpush1.msra.mxu0 0.0
    %5478 = vmatprep.subr.mxu0 0.0
    %5479 = vmatpush1.msra.mxu0 0.0
    %5480 = vmatprep.subr.mxu0 0.0
    %5481 = vmatpush1.msra.mxu0 0.0
    %5482 = vmatprep.subr.mxu0 0.0
    %5483 = vmatpush1.msra.mxu0 0.0
    %5484 = vmatprep.mubr.f32.mxu0 0.0
    %5485 = vmatmul.mubr.f32.gmra.mrb[0].mxu0 %v5418
    %v5486 = vpop.f32.mrb[0].mxu0
    %v5487 = vadd.f32 0.0, %v5486
    %v5488 = vpop.f32.mrb[0].mxu0
    %5489 = vdwg.mxu0
    %5491 = vrot.lane.b32.xlu0 %v5153, 8
    %v5492 = vpop.permute.xlu0 %5491
    %5495 = vrot.lane.b32.xlu0 %v5320, 16
    %v5496 = vpop.permute.xlu0 %5495
    %5499 = vrot.lane.b32.xlu0 %v5487, 24
    %v5500 = vpop.permute.xlu0 %5499
    %v5502 = vsel %vm826, %v4986, %v5492
    %v5503 = vsel %vm914, %v5502, %v5496
    %v5504 = vsel %vm1664, %v5503, %v5500
    %v5505 = vld [vmem:[#allocation4 + $0x2d0] sm:$0xff]
    %v5506 = vld [vmem:[#allocation4 + $0x2d8] sm:$0xff]
    %v5507 = vld [vmem:[#allocation4 + $0x2e0] sm:$0xff]
    %v5508 = vld [vmem:[#allocation4 + $0x2e8] sm:$0xff]
    %v5509 = vld [vmem:[#allocation4 + $0x2f0] sm:$0x1]
    %v5510 = vlaneseq
    %v5511 = vshrl.u32 %v5510, 7
    %v5512 = vsub.s32 0, %v5511
    %v5513 = vrot.slane %v5509, %v5512
    %v5515 = vsel %vm738, %v5504, 0
    %5517 = vmatprep.subr.mxu0 0.0
    %5518 = vmatpush1.msra.mxu0 %v5505
    %5519 = vmatprep.subr.mxu0 0.0
    %5520 = vmatpush1.msra.mxu0 %v5506
    %5521 = vmatprep.subr.mxu0 0.0
    %5522 = vmatpush1.msra.mxu0 %v5507
    %5523 = vmatprep.subr.mxu0 0.0
    %5524 = vmatpush1.msra.mxu0 %v5508
    %5525 = vmatprep.subr.mxu0 0.0
    %5526 = vmatpush1.msra.mxu0 0.0
    %5527 = vmatprep.subr.mxu0 0.0
    %5528 = vmatpush1.msra.mxu0 0.0
    %5529 = vmatprep.subr.mxu0 0.0
    %5530 = vmatpush1.msra.mxu0 0.0
    %5531 = vmatprep.subr.mxu0 0.0
    %5532 = vmatpush1.msra.mxu0 0.0
    %5533 = vmatprep.subr.mxu0 0.0
    %5534 = vmatpush1.msra.mxu0 0.0
    %5535 = vmatprep.subr.mxu0 0.0
    %5536 = vmatpush1.msra.mxu0 0.0
    %5537 = vmatprep.subr.mxu0 0.0
    %5538 = vmatpush1.msra.mxu0 0.0
    %5539 = vmatprep.subr.mxu0 0.0
    %5540 = vmatpush1.msra.mxu0 0.0
    %5541 = vmatprep.subr.mxu0 0.0
    %5542 = vmatpush1.msra.mxu0 0.0
    %5543 = vmatprep.subr.mxu0 0.0
    %5544 = vmatpush1.msra.mxu0 0.0
    %5545 = vmatprep.subr.mxu0 0.0
    %5546 = vmatpush1.msra.mxu0 0.0
    %5547 = vmatprep.subr.mxu0 0.0
    %5548 = vmatpush1.msra.mxu0 0.0
    %5549 = vmatprep.subr.mxu0 0.0
    %5550 = vmatpush1.msra.mxu0 0.0
    %5551 = vmatprep.subr.mxu0 0.0
    %5552 = vmatpush1.msra.mxu0 0.0
    %5553 = vmatprep.subr.mxu0 0.0
    %5554 = vmatpush1.msra.mxu0 0.0
    %5555 = vmatprep.subr.mxu0 0.0
    %5556 = vmatpush1.msra.mxu0 0.0
    %5557 = vmatprep.subr.mxu0 0.0
    %5558 = vmatpush1.msra.mxu0 0.0
    %5559 = vmatprep.subr.mxu0 0.0
    %5560 = vmatpush1.msra.mxu0 0.0
    %5561 = vmatprep.subr.mxu0 0.0
    %5562 = vmatpush1.msra.mxu0 0.0
    %5563 = vmatprep.subr.mxu0 0.0
    %5564 = vmatpush1.msra.mxu0 0.0
    %5565 = vmatprep.subr.mxu0 0.0
    %5566 = vmatpush1.msra.mxu0 0.0
    %5567 = vmatprep.subr.mxu0 0.0
    %5568 = vmatpush1.msra.mxu0 0.0
    %5569 = vmatprep.subr.mxu0 0.0
    %5570 = vmatpush1.msra.mxu0 0.0
    %5571 = vmatprep.subr.mxu0 0.0
    %5572 = vmatpush1.msra.mxu0 0.0
    %5573 = vmatprep.subr.mxu0 0.0
    %5574 = vmatpush1.msra.mxu0 0.0
    %5575 = vmatprep.subr.mxu0 0.0
    %5576 = vmatpush1.msra.mxu0 0.0
    %5577 = vmatprep.subr.mxu0 0.0
    %5578 = vmatpush1.msra.mxu0 0.0
    %5579 = vmatprep.subr.mxu0 0.0
    %5580 = vmatpush1.msra.mxu0 0.0
    %5581 = vmatprep.mubr.f32.mxu0 0.0
    %5582 = vmatmul.mubr.f32.gmra.mrb[0].mxu0 %v5515
    %v5583 = vpop.f32.mrb[0].mxu0
    %v5584 = vadd.f32 %v5513, %v5583
    %v5585 = vpop.f32.mrb[0].mxu0
    %5586 = vdwg.mxu0
    %v5587 = vld [vmem:[#allocation4 + $0x2f8] sm:$0x3]
    %v5588 = vadd.f32 %v4739, %v5584
    %v5589 = vsel %vm738, %v5588, 0.0
    %5590 = vadd.xlane.f32.xlu0 %v5589
    %v5591 = vpop.xlane.xlu0 %5590
    %v5592 = vmul.f32 %v5591, %v1766
    %v5593 = vsub.f32 %v5588, %v5592
    %v5594 = vmul.f32 %v5593, %v5593
    %v5595 = vsel %vm738, %v5594, 0.0
    %5596 = vadd.xlane.f32.xlu0 %v5595
    %v5597 = vpop.xlane.xlu0 %5596
    %v5598 = vmul.f32 %v5597, %v1766
    %v5599 = vadd.f32 %v5598, 1e-05
    %v5600 = vrsqrt.pop %v5599
    %v5601 = vmul.f32 %v5593, %v5600
    %v5602 = vlaneseq
    %v5603 = vshrl.u32 %v5602, 7
    %v5604 = vsub.s32 0, %v5603
    %v5605 = vrot.slane %v5587, %v5604
    %v5606 = vmul.f32 %v5601, %v5605
    %v5607 = vlaneseq
    %v5608 = vshrl.u32 %v5607, 7
    %v5609 = vsub.s32 1, %v5608
    %v5610 = vrot.slane %v5587, %v5609
    %v5611 = vadd.f32 %v5606, %v5610
    %v5612 = vld [vmem:[#allocation4 + $0x18] sm:$0xf]
    %v5614 = vsel %vm826, %v5612, 0
    %5616 = vmatprep.subr.mxu0 0.0
    %5617 = vmatpush1.msra.mxu0 %v5611
    %5618 = vmatprep.subr.mxu0 0.0
    %5619 = vmatpush1.msra.mxu0 0.0
    %5620 = vmatprep.subr.mxu0 0.0
    %5621 = vmatpush1.msra.mxu0 0.0
    %5622 = vmatprep.subr.mxu0 0.0
    %5623 = vmatpush1.msra.mxu0 0.0
    %5624 = vmatprep.subr.mxu0 0.0
    %5625 = vmatpush1.msra.mxu0 0.0
    %5626 = vmatprep.subr.mxu0 0.0
    %5627 = vmatpush1.msra.mxu0 0.0
    %5628 = vmatprep.subr.mxu0 0.0
    %5629 = vmatpush1.msra.mxu0 0.0
    %5630 = vmatprep.subr.mxu0 0.0
    %5631 = vmatpush1.msra.mxu0 0.0
    %5632 = vmatprep.subr.mxu0 0.0
    %5633 = vmatpush1.msra.mxu0 0.0
    %5634 = vmatprep.subr.mxu0 0.0
    %5635 = vmatpush1.msra.mxu0 0.0
    %5636 = vmatprep.subr.mxu0 0.0
    %5637 = vmatpush1.msra.mxu0 0.0
    %5638 = vmatprep.subr.mxu0 0.0
    %5639 = vmatpush1.msra.mxu0 0.0
    %5640 = vmatprep.subr.mxu0 0.0
    %5641 = vmatpush1.msra.mxu0 0.0
    %5642 = vmatprep.subr.mxu0 0.0
    %5643 = vmatpush1.msra.mxu0 0.0
    %5644 = vmatprep.subr.mxu0 0.0
    %5645 = vmatpush1.msra.mxu0 0.0
    %5646 = vmatprep.subr.mxu0 0.0
    %5647 = vmatpush1.msra.mxu0 0.0
    %5648 = vmatprep.subr.mxu0 0.0
    %5649 = vmatpush1.msra.mxu0 0.0
    %5650 = vmatprep.subr.mxu0 0.0
    %5651 = vmatpush1.msra.mxu0 0.0
    %5652 = vmatprep.subr.mxu0 0.0
    %5653 = vmatpush1.msra.mxu0 0.0
    %5654 = vmatprep.subr.mxu0 0.0
    %5655 = vmatpush1.msra.mxu0 0.0
    %5656 = vmatprep.subr.mxu0 0.0
    %5657 = vmatpush1.msra.mxu0 0.0
    %5658 = vmatprep.subr.mxu0 0.0
    %5659 = vmatpush1.msra.mxu0 0.0
    %5660 = vmatprep.subr.mxu0 0.0
    %5661 = vmatpush1.msra.mxu0 0.0
    %5662 = vmatprep.subr.mxu0 0.0
    %5663 = vmatpush1.msra.mxu0 0.0
    %5664 = vmatprep.subr.mxu0 0.0
    %5665 = vmatpush1.msra.mxu0 0.0
    %5666 = vmatprep.subr.mxu0 0.0
    %5667 = vmatpush1.msra.mxu0 0.0
    %5668 = vmatprep.subr.mxu0 0.0
    %5669 = vmatpush1.msra.mxu0 0.0
    %5670 = vmatprep.subr.mxu0 0.0
    %5671 = vmatpush1.msra.mxu0 0.0
    %5672 = vmatprep.subr.mxu0 0.0
    %5673 = vmatpush1.msra.mxu0 0.0
    %5674 = vmatprep.subr.mxu0 0.0
    %5675 = vmatpush1.msra.mxu0 0.0
    %5676 = vmatprep.subr.mxu0 0.0
    %5677 = vmatpush1.msra.mxu0 0.0
    %5678 = vmatprep.subr.mxu0 0.0
    %5679 = vmatpush1.msra.mxu0 0.0
    %5680 = vmatprep.mubr.f32.mxu0 0.0
    %5681 = vmatmul.mubr.f32.gmra.mrb[0].mxu0 %v5614
    %v5682 = vpop.f32.mrb[0].mxu0
    %v5683 = vadd.f32 0.0, %v5682
    %v5684 = vpop.f32.mrb[0].mxu0
    %5685 = vdwg.mxu0
    %v5686 = vld [vmem:[#allocation4 + $0x300] sm:$0xff]
    %v5687 = vld [vmem:[#allocation4 + $0x308] sm:$0xff]
    %v5688 = vld [vmem:[#allocation4 + $0x310] sm:$0xff]
    %v5689 = vld [vmem:[#allocation4 + $0x318] sm:$0xff]
    %v5690 = vld [vmem:[#allocation4 + $0x320] sm:$0x1]
    %v5691 = vlaneseq
    %v5692 = vshrl.u32 %v5691, 7
    %v5693 = vsub.s32 0, %v5692
    %v5694 = vrot.slane %v5690, %v5693
    %v5696 = vsel %vm738, %v5683, 0
    %5698 = vmatprep.subr.mxu0 0.0
    %5699 = vmatpush1.msra.mxu0 %v5686
    %5700 = vmatprep.subr.mxu0 0.0
    %5701 = vmatpush1.msra.mxu0 %v5687
    %5702 = vmatprep.subr.mxu0 0.0
    %5703 = vmatpush1.msra.mxu0 %v5688
    %5704 = vmatprep.subr.mxu0 0.0
    %5705 = vmatpush1.msra.mxu0 %v5689
    %5706 = vmatprep.subr.mxu0 0.0
    %5707 = vmatpush1.msra.mxu0 0.0
    %5708 = vmatprep.subr.mxu0 0.0
    %5709 = vmatpush1.msra.mxu0 0.0
    %5710 = vmatprep.subr.mxu0 0.0
    %5711 = vmatpush1.msra.mxu0 0.0
    %5712 = vmatprep.subr.mxu0 0.0
    %5713 = vmatpush1.msra.mxu0 0.0
    %5714 = vmatprep.subr.mxu0 0.0
    %5715 = vmatpush1.msra.mxu0 0.0
    %5716 = vmatprep.subr.mxu0 0.0
    %5717 = vmatpush1.msra.mxu0 0.0
    %5718 = vmatprep.subr.mxu0 0.0
    %5719 = vmatpush1.msra.mxu0 0.0
    %5720 = vmatprep.subr.mxu0 0.0
    %5721 = vmatpush1.msra.mxu0 0.0
    %5722 = vmatprep.subr.mxu0 0.0
    %5723 = vmatpush1.msra.mxu0 0.0
    %5724 = vmatprep.subr.mxu0 0.0
    %5725 = vmatpush1.msra.mxu0 0.0
    %5726 = vmatprep.subr.mxu0 0.0
    %5727 = vmatpush1.msra.mxu0 0.0
    %5728 = vmatprep.subr.mxu0 0.0
    %5729 = vmatpush1.msra.mxu0 0.0
    %5730 = vmatprep.subr.mxu0 0.0
    %5731 = vmatpush1.msra.mxu0 0.0
    %5732 = vmatprep.subr.mxu0 0.0
    %5733 = vmatpush1.msra.mxu0 0.0
    %5734 = vmatprep.subr.mxu0 0.0
    %5735 = vmatpush1.msra.mxu0 0.0
    %5736 = vmatprep.subr.mxu0 0.0
    %5737 = vmatpush1.msra.mxu0 0.0
    %5738 = vmatprep.subr.mxu0 0.0
    %5739 = vmatpush1.msra.mxu0 0.0
    %5740 = vmatprep.subr.mxu0 0.0
    %5741 = vmatpush1.msra.mxu0 0.0
    %5742 = vmatprep.subr.mxu0 0.0
    %5743 = vmatpush1.msra.mxu0 0.0
    %5744 = vmatprep.subr.mxu0 0.0
    %5745 = vmatpush1.msra.mxu0 0.0
    %5746 = vmatprep.subr.mxu0 0.0
    %5747 = vmatpush1.msra.mxu0 0.0
    %5748 = vmatprep.subr.mxu0 0.0
    %5749 = vmatpush1.msra.mxu0 0.0
    %5750 = vmatprep.subr.mxu0 0.0
    %5751 = vmatpush1.msra.mxu0 0.0
    %5752 = vmatprep.subr.mxu0 0.0
    %5753 = vmatpush1.msra.mxu0 0.0
    %5754 = vmatprep.subr.mxu0 0.0
    %5755 = vmatpush1.msra.mxu0 0.0
    %5756 = vmatprep.subr.mxu0 0.0
    %5757 = vmatpush1.msra.mxu0 0.0
    %5758 = vmatprep.subr.mxu0 0.0
    %5759 = vmatpush1.msra.mxu0 0.0
    %5760 = vmatprep.subr.mxu0 0.0
    %5761 = vmatpush1.msra.mxu0 0.0
    %5762 = vmatprep.mubr.f32.mxu0 0.0
    %5763 = vmatmul.mubr.f32.gmra.mrb[0].mxu0 %v5696
    %v5764 = vpop.f32.mrb[0].mxu0
    %v5765 = vadd.f32 %v5694, %v5764
    %v5766 = vpop.f32.mrb[0].mxu0
    %5767 = vdwg.mxu0
    %v5768 = vmax.f32 %v5765, 0.0
    %v5769 = vld [vmem:[#allocation4 + $0x328] sm:$0xff]
    %v5770 = vld [vmem:[#allocation4 + $0x330] sm:$0xff]
    %v5771 = vld [vmem:[#allocation4 + $0x338] sm:$0xff]
    %v5772 = vld [vmem:[#allocation4 + $0x340] sm:$0xff]
    %v5773 = vld [vmem:[#allocation4 + $0x348] sm:$0xff]
    %v5774 = vld [vmem:[#allocation4 + $0x350] sm:$0xff]
    %v5775 = vld [vmem:[#allocation4 + $0x358] sm:$0xff]
    %v5776 = vld [vmem:[#allocation4 + $0x360] sm:$0xff]
    %v5777 = vld [vmem:[#allocation4 + $0x368] sm:$0x1]
    %v5778 = vlaneseq
    %v5779 = vshrl.u32 %v5778, 7
    %v5780 = vsub.s32 0, %v5779
    %v5781 = vrot.slane %v5777, %v5780
    %v5783 = vsel %vm1904, %v5768, 0
    %5785 = vmatprep.subr.mxu0 0.0
    %5786 = vmatpush1.msra.mxu0 %v5769
    %5787 = vmatprep.subr.mxu0 0.0
    %5788 = vmatpush1.msra.mxu0 %v5770
    %5789 = vmatprep.subr.mxu0 0.0
    %5790 = vmatpush1.msra.mxu0 %v5771
    %5791 = vmatprep.subr.mxu0 0.0
    %5792 = vmatpush1.msra.mxu0 %v5772
    %5793 = vmatprep.subr.mxu0 0.0
    %5794 = vmatpush1.msra.mxu0 %v5773
    %5795 = vmatprep.subr.mxu0 0.0
    %5796 = vmatpush1.msra.mxu0 %v5774
    %5797 = vmatprep.subr.mxu0 0.0
    %5798 = vmatpush1.msra.mxu0 %v5775
    %5799 = vmatprep.subr.mxu0 0.0
    %5800 = vmatpush1.msra.mxu0 %v5776
    %5801 = vmatprep.subr.mxu0 0.0
    %5802 = vmatpush1.msra.mxu0 0.0
    %5803 = vmatprep.subr.mxu0 0.0
    %5804 = vmatpush1.msra.mxu0 0.0
    %5805 = vmatprep.subr.mxu0 0.0
    %5806 = vmatpush1.msra.mxu0 0.0
    %5807 = vmatprep.subr.mxu0 0.0
    %5808 = vmatpush1.msra.mxu0 0.0
    %5809 = vmatprep.subr.mxu0 0.0
    %5810 = vmatpush1.msra.mxu0 0.0
    %5811 = vmatprep.subr.mxu0 0.0
    %5812 = vmatpush1.msra.mxu0 0.0
    %5813 = vmatprep.subr.mxu0 0.0
    %5814 = vmatpush1.msra.mxu0 0.0
    %5815 = vmatprep.subr.mxu0 0.0
    %5816 = vmatpush1.msra.mxu0 0.0
    %5817 = vmatprep.subr.mxu0 0.0
    %5818 = vmatpush1.msra.mxu0 0.0
    %5819 = vmatprep.subr.mxu0 0.0
    %5820 = vmatpush1.msra.mxu0 0.0
    %5821 = vmatprep.subr.mxu0 0.0
    %5822 = vmatpush1.msra.mxu0 0.0
    %5823 = vmatprep.subr.mxu0 0.0
    %5824 = vmatpush1.msra.mxu0 0.0
    %5825 = vmatprep.subr.mxu0 0.0
    %5826 = vmatpush1.msra.mxu0 0.0
    %5827 = vmatprep.subr.mxu0 0.0
    %5828 = vmatpush1.msra.mxu0 0.0
    %5829 = vmatprep.subr.mxu0 0.0
    %5830 = vmatpush1.msra.mxu0 0.0
    %5831 = vmatprep.subr.mxu0 0.0
    %5832 = vmatpush1.msra.mxu0 0.0
    %5833 = vmatprep.subr.mxu0 0.0
    %5834 = vmatpush1.msra.mxu0 0.0
    %5835 = vmatprep.subr.mxu0 0.0
    %5836 = vmatpush1.msra.mxu0 0.0
    %5837 = vmatprep.subr.mxu0 0.0
    %5838 = vmatpush1.msra.mxu0 0.0
    %5839 = vmatprep.subr.mxu0 0.0
    %5840 = vmatpush1.msra.mxu0 0.0
    %5841 = vmatprep.subr.mxu0 0.0
    %5842 = vmatpush1.msra.mxu0 0.0
    %5843 = vmatprep.subr.mxu0 0.0
    %5844 = vmatpush1.msra.mxu0 0.0
    %5845 = vmatprep.subr.mxu0 0.0
    %5846 = vmatpush1.msra.mxu0 0.0
    %5847 = vmatprep.subr.mxu0 0.0
    %5848 = vmatpush1.msra.mxu0 0.0
    %5849 = vmatprep.mubr.f32.mxu0 0.0
    %5850 = vmatmul.mubr.f32.gmra.mrb[0].mxu0 %v5783
    %v5851 = vpop.f32.mrb[0].mxu0
    %v5852 = vadd.f32 %v5781, %v5851
    %v5853 = vpop.f32.mrb[0].mxu0
    %5854 = vdwg.mxu0
    %v5855 = vld [vmem:[#allocation4 + $0x370] sm:$0x3]
    %v5856 = vadd.f32 %v5683, %v5852
    %vm5857 = vcmask 257024
    %v5858 = vsel %vm5857, %v5856, 0.0
    %5859 = vadd.xlane.f32.xlu0 %v5858
    %v5860 = vpop.xlane.xlu0 %5859
    %v5861 = vmul.f32 %v5860, %v1766
    %v5862 = vsub.f32 %v5856, %v5861
    %v5863 = vmul.f32 %v5862, %v5862
    %v5864 = vsel %vm5857, %v5863, 0.0
    %5865 = vadd.xlane.f32.xlu0 %v5864
    %v5866 = vpop.xlane.xlu0 %5865
    %v5867 = vmul.f32 %v5866, %v1766
    %v5868 = vadd.f32 %v5867, 1e-05
    %v5869 = vrsqrt.pop %v5868
    %v5870 = vmul.f32 %v5862, %v5869
    %v5871 = vlaneseq
    %v5872 = vshrl.u32 %v5871, 7
    %v5873 = vsub.s32 0, %v5872
    %v5874 = vrot.slane %v5855, %v5873
    %v5875 = vmul.f32 %v5870, %v5874
    %v5876 = vlaneseq
    %v5877 = vshrl.u32 %v5876, 7
    %v5878 = vsub.s32 1, %v5877
    %v5879 = vrot.slane %v5855, %v5878
    %v5880 = vadd.f32 %v5875, %v5879
    %v5881 = vld [vmem:[#allocation4 + $0x3a0] sm:$0xff]
    %v5882 = vld [vmem:[#allocation4 + $0x3a8] sm:$0xff]
    %v5883 = vld [vmem:[#allocation4 + $0x3b0] sm:$0xff]
    %v5884 = vld [vmem:[#allocation4 + $0x3b8] sm:$0xff]
    %v5885 = vld [vmem:[#allocation4 + $0x3c0] sm:$0x1]
    %v5886 = vlaneseq
    %v5887 = vshrl.u32 %v5886, 7
    %v5888 = vsub.s32 0, %v5887
    %v5889 = vrot.slane %v5885, %v5888
    %v5891 = vsel %vm738, %v5880, 0
    %5893 = vmatprep.subr.mxu0 0.0
    %5894 = vmatpush1.msra.mxu0 %v5881
    %5895 = vmatprep.subr.mxu0 0.0
    %5896 = vmatpush1.msra.mxu0 %v5882
    %5897 = vmatprep.subr.mxu0 0.0
    %5898 = vmatpush1.msra.mxu0 %v5883
    %5899 = vmatprep.subr.mxu0 0.0
    %5900 = vmatpush1.msra.mxu0 %v5884
    %5901 = vmatprep.subr.mxu0 0.0
    %5902 = vmatpush1.msra.mxu0 0.0
    %5903 = vmatprep.subr.mxu0 0.0
    %5904 = vmatpush1.msra.mxu0 0.0
    %5905 = vmatprep.subr.mxu0 0.0
    %5906 = vmatpush1.msra.mxu0 0.0
    %5907 = vmatprep.subr.mxu0 0.0
    %5908 = vmatpush1.msra.mxu0 0.0
    %5909 = vmatprep.subr.mxu0 0.0
    %5910 = vmatpush1.msra.mxu0 0.0
    %5911 = vmatprep.subr.mxu0 0.0
    %5912 = vmatpush1.msra.mxu0 0.0
    %5913 = vmatprep.subr.mxu0 0.0
    %5914 = vmatpush1.msra.mxu0 0.0
    %5915 = vmatprep.subr.mxu0 0.0
    %5916 = vmatpush1.msra.mxu0 0.0
    %5917 = vmatprep.subr.mxu0 0.0
    %5918 = vmatpush1.msra.mxu0 0.0
    %5919 = vmatprep.subr.mxu0 0.0
    %5920 = vmatpush1.msra.mxu0 0.0
    %5921 = vmatprep.subr.mxu0 0.0
    %5922 = vmatpush1.msra.mxu0 0.0
    %5923 = vmatprep.subr.mxu0 0.0
    %5924 = vmatpush1.msra.mxu0 0.0
    %5925 = vmatprep.subr.mxu0 0.0
    %5926 = vmatpush1.msra.mxu0 0.0
    %5927 = vmatprep.subr.mxu0 0.0
    %5928 = vmatpush1.msra.mxu0 0.0
    %5929 = vmatprep.subr.mxu0 0.0
    %5930 = vmatpush1.msra.mxu0 0.0
    %5931 = vmatprep.subr.mxu0 0.0
    %5932 = vmatpush1.msra.mxu0 0.0
    %5933 = vmatprep.subr.mxu0 0.0
    %5934 = vmatpush1.msra.mxu0 0.0
    %5935 = vmatprep.subr.mxu0 0.0
    %5936 = vmatpush1.msra.mxu0 0.0
    %5937 = vmatprep.subr.mxu0 0.0
    %5938 = vmatpush1.msra.mxu0 0.0
    %5939 = vmatprep.subr.mxu0 0.0
    %5940 = vmatpush1.msra.mxu0 0.0
    %5941 = vmatprep.subr.mxu0 0.0
    %5942 = vmatpush1.msra.mxu0 0.0
    %5943 = vmatprep.subr.mxu0 0.0
    %5944 = vmatpush1.msra.mxu0 0.0
    %5945 = vmatprep.subr.mxu0 0.0
    %5946 = vmatpush1.msra.mxu0 0.0
    %5947 = vmatprep.subr.mxu0 0.0
    %5948 = vmatpush1.msra.mxu0 0.0
    %5949 = vmatprep.subr.mxu0 0.0
    %5950 = vmatpush1.msra.mxu0 0.0
    %5951 = vmatprep.subr.mxu0 0.0
    %5952 = vmatpush1.msra.mxu0 0.0
    %5953 = vmatprep.subr.mxu0 0.0
    %5954 = vmatpush1.msra.mxu0 0.0
    %5955 = vmatprep.subr.mxu0 0.0
    %5956 = vmatpush1.msra.mxu0 0.0
    %5957 = vmatprep.mubr.f32.mxu0 0.0
    %5958 = vmatmul.mubr.f32.gmra.mrb[0].mxu0 %v5891
    %v5959 = vpop.f32.mrb[0].mxu0
    %v5960 = vadd.f32 %v5889, %v5959
    %v5961 = vpop.f32.mrb[0].mxu0
    %5962 = vdwg.mxu0
    %5963 = vst [vmem:[%s4] sm:$0xf] %v5960
    // Predicated region
    $region22: #{forward.1} parent=1 // pred_check
      _
    $region23: #{forward.1} parent=1 // pred_check_branch
      %5965 = sbr.rel (0) target = $region25
    $region24: #{forward.1} parent=1 // pred_region
      _
    $region25: #{forward.1} parent=1 // pred_fallthru
      _
    // Predicated region
    $region26: #{forward.1} parent=1 // pred_check
      _
    $region27: #{forward.1} parent=1 // pred_check_branch
      %5967 = sbr.rel (0) target = $region29
    $region28: #{forward.1} parent=1 // pred_region
      _
    $region29: #{forward.1} parent=1 // pred_fallthru
      _
    // Predicated region
    $region30: #{forward.1} parent=1 // pred_check
      _
    $region31: #{forward.1} parent=1 // pred_check_branch
      %5969 = sbr.rel (0) target = $region33
    $region32: #{forward.1} parent=1 // pred_region
      _
    $region33: #{forward.1} parent=1 // pred_fallthru
      _
    // Predicated region
    $region34: #{forward.1} parent=1 // pred_check
      _
    $region35: #{forward.1} parent=1 // pred_check_branch
      %5971 = sbr.rel (0) target = $region37
    $region36: #{forward.1} parent=1 // pred_region
      _
    $region37: #{forward.1} parent=1 // pred_fallthru
      _
    %5972 = vsyncpa [#allocation3], 1
    %5973 = vsyncpa [#allocation5], 1

</llo_original>
